<compile_context>
chip_gen: v6e
topology: v6e:2x2x1
jax: 0.10.0
libtpu: 0.0.40
codegen_flags: <defaults>
</compile_context>

<pallas_src>
import functools

import numpy as np
import jax
import jax.numpy as jnp
from jax.experimental import pallas as pl
from jax.experimental.pallas import tpu as pltpu

A_PARAM = 0.5               # Laplace prior scale parameter 'a'
MAD_CONST = 1.4826          # R mad() constant
INV_SQRT2 = 0.7071067811865476
INV_SQRT_2PI = 0.3989422804014327
SQRT_PI_OVER_2 = 1.2533141373155003
SQRT_PI_INV = 0.5641895835477563    # 1/sqrt(pi)

_LANES = 128                # lane width of the packed block
_PACK = 1024                # pad N to a multiple of 8*128 (full (8,128) vreg tiles)
_SMALL_ROWS = 64            # rows <= 64 (N <= 8192): latency-bound regime
_MED_ITERS_BIN = 24         # binary counting-median passes (24 f32 mantissa bits)
_MED_ITERS_KARY = 12        # 4-ary passes (3 independent midpoints each), small N
_W_SMALL = (33, 14, 4)      # (candidates, refine steps, exact refine steps), small N
_W_LARGE = (9, 18, 4)       # large N: fewest total full-array passes
_SHARE_MAX_ROWS = 1024      # above this, recompute postmed terms after the w-solve


# ----------------------------------------------------------------------------
# In-kernel special functions (Mosaic has no erf/ndtri primitive, so we use
# exp/log/sqrt + rational approximations: Cody's SPECFUN erfcx and Acklam's
# inverse normal CDF — both far more accurate than float32 eps).
# ----------------------------------------------------------------------------
def _erfcx_nonneg(y, exp_y2=None):
    """erfcx(y) = exp(y^2)*erfc(y) for y >= 0 (Cody rational approximations).

    If exp_y2 (= exp(y^2)) is provided it is reused in the small-argument branch
    (only needs to be correct when y <= 0.46875; inf is fine elsewhere)."""
    A = (3.16112374387056560e0, 1.13864154151050156e2, 3.77485237685302021e2,
         3.20937758913846947e3, 1.85777706184603153e-1)
    B = (2.36012909523441209e1, 2.44024637934444173e2, 1.28261652607737228e3,
         2.84423683343917062e3)
    C = (5.64188496988670089e-1, 8.88314979438837594e0, 6.61191906371416295e1,
         2.98635138197400131e2, 8.81952221241769090e2, 1.71204761263407058e3,
         2.05107837782607147e3, 1.23033935479799725e3, 2.15311535474403846e-8)
    D = (1.57449261107098347e1, 1.17693950891312499e2, 5.37181101862009858e2,
         1.62138957456669019e3, 3.29079923573345963e3, 4.36261909014324716e3,
         3.43936767414372164e3, 1.23033935480374942e3)
    P = (3.05326634961232344e-1, 3.60344899949804439e-1, 1.25781726111229246e-1,
         1.60837851487422766e-2, 6.58749161529837803e-4, 1.63153871373020978e-2)
    Q = (2.56852019228982242e0, 1.87295284992346047e0, 5.27905102951428412e-1,
         6.05183413124413191e-2, 2.33520497626869185e-3)

    # y <= 0.46875 : erfcx = exp(y^2) * (1 - erf(y))
    ys = jnp.minimum(y, 0.46875)
    ysq = ys * ys
    xnum = A[4] * ysq
    xden = ysq
    for i in range(3):
        xnum = (xnum + A[i]) * ysq
        xden = (xden + B[i]) * ysq
    erf_small = ys * (xnum + A[3]) / (xden + B[3])
    exp_small = jnp.exp(ysq) if exp_y2 is None else exp_y2
    res_small = exp_small * (1.0 - erf_small)

    # 0.46875 < y <= 4
    ym = jnp.clip(y, 0.46875, 4.0)
    xnum = C[8] * ym
    xden = ym
    for i in range(7):
        xnum = (xnum + C[i]) * ym
        xden = (xden + D[i]) * ym
    res_mid = (xnum + C[7]) / (xden + D[7])

    # y > 4
    yl = jnp.maximum(y, 4.0)
    iysq = 1.0 / (yl * yl)
    xnum = P[5] * iysq
    xden = iysq
    for i in range(4):
        xnum = (xnum + P[i]) * iysq
        xden = (xden + Q[i]) * iysq
    res_large = iysq * (xnum + P[4]) / (xden + Q[4])
    res_large = (SQRT_PI_INV - res_large) / yl

    return jnp.where(y <= 0.46875, res_small,
                     jnp.where(y <= 4.0, res_mid, res_large))


def _mills_nonneg(z):
    """Mills ratio pnorm(-z)/dnorm(z) for z >= 0 (no exp needed)."""
    return SQRT_PI_OVER_2 * _erfcx_nonneg(z * INV_SQRT2)


def _mills(z):
    """Mills ratio for any z (scalar use only).  May overflow to +inf for very
    negative z; the only consumer clamps beta at 1e20 (same as the R code)."""
    u = z * INV_SQRT2
    au = jnp.abs(u)
    e = _erfcx_nonneg(au)
    e = jnp.where(u >= 0.0, e, 2.0 * jnp.exp(au * au) - e)
    return SQRT_PI_OVER_2 * e


def _qnorm(p):
    """Inverse normal CDF (Acklam's rational approximation, rel. err ~1e-9).
    The tail rational is evaluated once on min(p, 1-p) and the sign flipped."""
    a = (-3.969683028665376e+01, 2.209460984245205e+02, -2.759285104469687e+02,
         1.383577518672690e+02, -3.066479806614716e+01, 2.506628277459239e+00)
    b = (-5.447609879822406e+01, 1.615858368580409e+02, -1.556989798598866e+02,
         6.680131188771972e+01, -1.328068155288572e+01)
    c = (-7.784894002430293e-03, -3.223964580411365e-01, -2.400758277161838e+00,
         -2.549732539343734e+00, 4.374664141464968e+00, 2.938163982698783e+00)
    d = (7.784695709041462e-03, 3.224671290700398e-01, 2.445134137142996e+00,
         3.754408661907416e+00)
    plow = 0.02425
    pc = jnp.clip(p, 1e-30, 1.0 - 1e-6)

    # central region
    q = pc - 0.5
    r = q * q
    x_c = ((((((a[0] * r + a[1]) * r + a[2]) * r + a[3]) * r + a[4]) * r + a[5]) * q /
           (((((b[0] * r + b[1]) * r + b[2]) * r + b[3]) * r + b[4]) * r + 1.0))

    # both tails via a single rational on the smaller tail probability
    pt = jnp.minimum(pc, 1.0 - pc)
    qt = jnp.sqrt(-2.0 * jnp.log(pt))
    x_t = ((((((c[0] * qt + c[1]) * qt + c[2]) * qt + c[3]) * qt + c[4]) * qt + c[5]) /
           ((((d[0] * qt + d[1]) * qt + d[2]) * qt + d[3]) * qt + 1.0))
    x_t = jnp.where(pc > 0.5, -x_t, x_t)

    x = jnp.where(pt < plow, x_t, x_c)
    big = jnp.float32(1e30)  # stands in for +/-inf at the clipped boundaries
    return jnp.where(p >= 1.0, big, jnp.where(p <= 0.0, -big, x))


# ----------------------------------------------------------------------------
# Full-block reductions -> (1,1).  Reduce axis 0 FIRST (VALU vreg adds) and do
# the single cross-lane (XLU) reduce last — only 2 XLU ops per pass.
# ----------------------------------------------------------------------------
def _rsum(v):
    return jnp.sum(jnp.sum(v, axis=0, keepdims=True), axis=1, keepdims=True)


def _rmax(v):
    return jnp.max(jnp.max(v, axis=0, keepdims=True), axis=1, keepdims=True)


# ----------------------------------------------------------------------------
# The kernel: counting-median MAD -> beta.laplace -> wfromx -> postmed.laplace.
# ----------------------------------------------------------------------------
def _ebayes_kernel(x_ref, out_ref, *, n):
    a = A_PARAM
    x = x_ref[...]                                   # (R, 128) packed, zero-padded
    rows, lanes = x.shape
    ax = jnp.abs(x)

    # validity mask for the zero-padded tail
    row_i = jax.lax.broadcasted_iota(jnp.int32, (rows, lanes), 0)
    col_i = jax.lax.broadcasted_iota(jnp.int32, (rows, lanes), 1)
    valid = (row_i * lanes + col_i) < n

    inf32 = jnp.float32(jnp.inf)
    ax_m = jnp.where(valid, ax, inf32)               # pre-masked once: padded never counts
    xmax = _rmax(jnp.where(valid, ax, 0.0))          # (1, 1)

    # ---- sdev = mad(x, center=0) = 1.4826 * median(|x|) ---------------------
    # counting median: value bisection on t with count(|x| <= t).  Small N uses
    # a 4-ary search (3 independent midpoints per pass) to cut the serial
    # reduce->compare->broadcast chain; large N uses plain bisection.
    if rows <= _SMALL_ROWS:
        n_mid, med_iters = 3, _MED_ITERS_KARY
    else:
        n_mid, med_iters = 1, _MED_ITERS_BIN

    def count_le(t):
        return _rsum(jnp.where(ax_m <= t, 1.0, 0.0))

    def order_stat(k):                               # k-th smallest (0-indexed) of |x|
        kp1 = float(k + 1)
        lo = jnp.full_like(xmax, -1.0)
        hi = xmax
        for _ in range(med_iters):
            # invariant: count(<=lo) < k+1 <= count(<=hi)
            span = hi - lo
            mids = [lo + (float(j) / (n_mid + 1)) * span for j in range(1, n_mid + 1)]
            cnts = [count_le(m) for m in mids]       # independent -> good ILP
            new_lo, new_hi = lo, hi
            for m, c in zip(mids, cnts):             # ascending: largest m with c < k+1
                new_lo = jnp.where(c < kp1, m, new_lo)
            for m, c in zip(reversed(mids), reversed(cnts)):  # descending: smallest m with c >= k+1
                new_hi = jnp.where(c >= kp1, m, new_hi)
            lo, hi = new_lo, new_hi
        return hi

    if n % 2 == 1:
        med = order_stat((n - 1) // 2)
    else:
        # torch.median takes the LOWER of the two middle order statistics.
        # TODO(synk): R's mad() averages the two middle values; demo uses odd N.
        med = order_stat(n // 2 - 1)
    s = MAD_CONST * med                              # (1, 1)
    sa = s * a
    inv_s = 1.0 / s

    # ---- beta.laplace(|x|, s, a) with shared erfcx / exp work ---------------
    def laplace_parts():
        axs = ax * inv_s
        xpa = axs + sa                               # always >= 0
        xma = axs - sa                               # >= -s*a
        rat1 = SQRT_PI_OVER_2 * _erfcx_nonneg(xpa * INV_SQRT2)     # mills(xpa)
        u2 = xma * INV_SQRT2
        exp_neg = jnp.exp(-u2 * u2)                  # exp(-xma^2/2)
        inv_exp_neg = 1.0 / exp_neg                  # exp(+xma^2/2) (may -> inf; ok)
        e2 = _erfcx_nonneg(jnp.abs(u2), exp_y2=inv_exp_neg)        # no 2nd exp
        phi = INV_SQRT_2PI * exp_neg                 # dnorm(xma)
        # mills(-xma): may overflow to +inf for huge xma; beta clamp handles it.
        rat2 = SQRT_PI_OVER_2 * jnp.where(xma <= 0.0, e2, 2.0 * inv_exp_neg - e2)
        # pnorm(xma) from the same e2/exp_neg (no extra erfcx, no extra exp)
        cdf = jnp.where(xma >= 0.0, 1.0 - 0.5 * e2 * exp_neg, 0.5 * e2 * exp_neg)
        return xma, rat1, rat2, phi, cdf

    xma0, rat1_0, rat2_0, phi_0, cdf_0 = laplace_parts()
    beta = 0.5 * a * s * (rat1_0 + rat2_0) - 1.0
    beta = jnp.minimum(beta, 1e20)                   # same clamp as the R code
    # hoist 1/beta (exact) out of the w-solve; padded slots contribute ~1e-30 each
    inv_beta = jnp.where(valid, 1.0 / beta, jnp.float32(1e30))

    # ---- wlo = wfromt(sqrt(2 log n) * s)  (universal-threshold lower bound) --
    tos = float(np.sqrt(2.0 * np.log(float(n))))     # tuniv / s
    t_m1 = _mills_nonneg(tos + sa)
    t_m2 = _mills(-(tos - sa))
    t_beta = 0.5 * a * s * (t_m1 + t_m2) - 1.0
    wlo = 1.0 / (a * s * t_m2 - t_beta)              # (1, 1)

    # ---- wfromx: root of sum(beta/(1+w*beta)) = sum(1/(1/beta + w)) = 0 ------
    if rows <= _SMALL_ROWS:
        w_cands, w_refine, w_exact = _W_SMALL        # latency-bound: wide ILP sweep
    else:
        w_cands, w_refine, w_exact = _W_LARGE        # throughput-bound: fewest passes

    def ssum(w, approx):
        t = inv_beta + w
        if approx:
            # sign-only bracketing pass: EUP approximate reciprocal (applied to |t|
            # and sign-restored, so negative-beta terms are handled portably).
            r = pl.reciprocal(jnp.abs(t), approx=True)
            return _rsum(jnp.where(t < 0.0, -r, r))
        return _rsum(1.0 / t)                        # (1, 1), full precision

    # stage 1: sweep of independent geometric candidates in [wlo, 1]
    log_wlo = jnp.log(wlo)
    one = jnp.ones_like(wlo)
    lo_w, hi_w = wlo, one
    s_at_wlo = s_at_one = None
    for kk in range(w_cands):
        if kk == 0:
            wk, exact = wlo, True                    # endpoints exact (boundary override)
        elif kk == w_cands - 1:
            wk, exact = one, True
        else:
            wk, exact = jnp.exp(log_wlo * (1.0 - kk / (w_cands - 1.0))), False
        sk = ssum(wk, approx=not exact)
        if kk == 0:
            s_at_wlo = sk
        if kk == w_cands - 1:
            s_at_one = sk
        # ssum is monotone non-increasing in w -> bracket via max/min
        lo_w = jnp.where(sk > 0.0, jnp.maximum(lo_w, wk), lo_w)
        hi_w = jnp.where(sk <= 0.0, jnp.minimum(hi_w, wk), hi_w)

    # stage 2: serial geometric-bisection refinement (last w_exact steps exact)
    for it in range(w_refine):
        exact = it >= w_refine - w_exact
        wmid = jnp.sqrt(lo_w * hi_w)
        smid = ssum(wmid, approx=not exact)
        lo_w = jnp.where(smid > 0.0, wmid, lo_w)
        hi_w = jnp.where(smid <= 0.0, wmid, hi_w)
    w = jnp.sqrt(lo_w * hi_w)
    w = jnp.where(s_at_one >= 0.0, one, jnp.where(s_at_wlo <= 0.0, wlo, w))

    # ---- postmed.laplace(x, s, w, a): posterior-median shrinkage -------------
    if rows <= _SHARE_MAX_ROWS:
        xma, rat1, phi_xma, cdf_xma = xma0, rat1_0, phi_0, cdf_0
    else:
        # Recompute after the w-solve instead of keeping 4 full-size f32 arrays
        # live through ~30-50 reduction passes (halves peak VMEM; matters on v7x).
        xma, rat1, _, phi_xma, cdf_xma = laplace_parts()

    sx = jnp.where(x > 0.0, 1.0, jnp.where(x < 0.0, -1.0, 0.0))
    # zz = (1/a)*(dnorm(xma)/s)*(1/w + beta.laplace(|x|,s,a)), rewritten using
    # dnorm(xma)*rat2 == pnorm(xma) so it stays finite in float32.
    zz = phi_xma * (1.0 / w - 1.0) / (a * s) + 0.5 * (phi_xma * rat1 + cdf_xma)
    zz = jnp.where(xma > 25.0, jnp.float32(0.5), zz)
    mucor = _qnorm(jnp.minimum(zz, 1.0))
    muhat = sx * jnp.maximum(0.0, xma - mucor) * s
    out_ref[...] = muhat.astype(out_ref.dtype)


# ----------------------------------------------------------------------------
# Wrapper (glue only: dtype cast + packing to a lane-dense (R, 128) block).
# ----------------------------------------------------------------------------
@jax.jit
def ebayesthresh_tpu(x):
    n = x.shape[0]
    xf = x.astype(jnp.float32)
    n_pad = -(-n // _PACK) * _PACK
    rows = n_pad // _LANES
    x_pack = jnp.pad(xf, (0, n_pad - n)).reshape(rows, _LANES)
    # ~48 B/element peak (double-buffered in/out + ~8 live f32 temporaries)
    vmem_limit = int(min(128 << 20, max(32 << 20, rows * _LANES * 48)))
    out = pl.pallas_call(
        functools.partial(_ebayes_kernel, n=n),
        out_shape=jax.ShapeDtypeStruct((rows, _LANES), jnp.float32),
        grid=(1,),
        in_specs=[pl.BlockSpec((rows, _LANES), lambda i: (0, 0))],
        out_specs=pl.BlockSpec((rows, _LANES), lambda i: (0, 0)),
        compiler_params=pltpu.CompilerParams(
            dimension_semantics=("arbitrary",),
            vmem_limit_bytes=vmem_limit),
    )(x_pack)
    return out.reshape(n_pad)[:n]


# ----------------------------------------------------------------------------
# Pure-JAX reference (direct transcription of the R/torch ebayesthresh path).
# ----------------------------------------------------------------------------
def _ebayesthresh_ref(x, a=A_PARAM):
    from jax.scipy.stats import norm
    n = x.shape[0]
    s = MAD_CONST * jnp.median(jnp.abs(x))

    def beta_laplace(xabs):
        xpa = xabs / s + s * a
        xma = xabs / s - s * a
        rat1 = jnp.where(xpa < 35.0, norm.cdf(-xpa) / norm.pdf(xpa), 1.0 / xpa)
        rat2 = jnp.where(xma > -35.0,
                         norm.cdf(xma) / norm.pdf(jnp.minimum(xma, 35.0)),
                         1.0 / jnp.abs(xma))
        return 0.5 * a * s * (rat1 + rat2) - 1.0

    ax = jnp.abs(x)
    beta = jnp.minimum(beta_laplace(ax), 1e20)
    tos = float(np.sqrt(2.0 * np.log(float(n))))
    tma = tos - s * a
    wlo = 1.0 / (a * s * (norm.cdf(tma) / norm.pdf(tma)) - beta_laplace(tos * s))
    shi = jnp.sum(beta / (1.0 + beta))
    slo = jnp.sum(beta / (1.0 + wlo * beta))
    lo, hi = wlo, jnp.float32(1.0)
    for _ in range(30):
        wmid = jnp.sqrt(lo * hi)
        smid = jnp.sum(beta / (1.0 + wmid * beta))
        lo = jnp.where(smid > 0.0, wmid, lo)
        hi = jnp.where(smid <= 0.0, wmid, hi)
    w = jnp.sqrt(lo * hi)
    w = jnp.where(shi >= 0.0, 1.0, jnp.where(slo <= 0.0, wlo, w))

    sx = jnp.sign(x)
    xma = ax / s - s * a
    zz = (1.0 / a) * (norm.pdf(xma) / s) * (1.0 / w + beta_laplace(ax))
    zz = jnp.where(xma > 25.0, 0.5, zz)
    mucor = norm.ppf(jnp.minimum(zz, 1.0))
    return sx * jnp.maximum(0.0, xma - mucor) * s


if __name__ == "__main__":
    N = 255  # odd length -> R / torch median conventions coincide
    key = jax.random.PRNGKey(0)
    noise = jax.random.normal(key, (N,), dtype=jnp.float32)
    bumps = jnp.where(jnp.arange(N) % 13 == 0, 5.0, 0.0).astype(jnp.float32)
    x = noise + bumps  # sparse "signal" spikes on a N(0,1) background

    out = jax.block_until_ready(ebayesthresh_tpu(x))

    ref = _ebayesthresh_ref(x)
    assert out.shape == x.shape and out.dtype == jnp.float32
    assert bool(jnp.all(jnp.isfinite(out)))
    np.testing.assert_allclose(np.asarray(out), np.asarray(ref), rtol=5e-3, atol=5e-3)

    print("KERNEL_OK")
</pallas_src>

<mosaic_0001>
module attributes {stable_mosaic.version = 11 : i64} {
  func.func @_ebayes_kernel(%arg0: i32, %arg1: memref<8x128xf32, #tpu.memory_space<vmem>>, %arg2: memref<8x128xf32, #tpu.memory_space<vmem>>) attributes {dimension_semantics = [#tpu.dimension_semantics<arbitrary>], iteration_bounds = array<i64: 1>, scalar_prefetch = 0 : i64, scratch_operands = 0 : i64, tpu.core_type = #tpu.core_type<tc>, window_params = [{pipeline_mode = #tpu.pipeline_mode<synchronous>, transform_indices = @transform_0, window_bounds = array<i64: 8, 128>}, {pipeline_mode = #tpu.pipeline_mode<synchronous>, transform_indices = @transform_1, window_bounds = array<i64: 8, 128>}]} {
    %c0 = arith.constant 0 : index
    %c0_0 = arith.constant 0 : index
    %0 = vector.load %arg1[%c0, %c0_0] : memref<8x128xf32, #tpu.memory_space<vmem>>, vector<8x128xf32>
    %1 = math.absf %0 : vector<8x128xf32>
    %2 = tpu.iota {dimensions = array<i32: 0>} : vector<8x128xi32>
    %3 = tpu.iota {dimensions = array<i32: 1>} : vector<8x128xi32>
    %c128_i32 = arith.constant 128 : i32
    %4 = vector.broadcast %c128_i32 : i32 to vector<8x128xi32>
    %5 = arith.muli %2, %4 : vector<8x128xi32>
    %6 = arith.addi %5, %3 : vector<8x128xi32>
    %c255_i32 = arith.constant 255 : i32
    %7 = vector.broadcast %c255_i32 : i32 to vector<8x128xi32>
    %8 = arith.cmpi slt, %6, %7 : vector<8x128xi32>
    %cst = arith.constant 0x7F800000 : f32
    %9 = vector.broadcast %cst : f32 to vector<8x128xf32>
    %10 = arith.select %8, %1, %9 : vector<8x128xi1>, vector<8x128xf32>
    %cst_1 = arith.constant 0.000000e+00 : f32
    %11 = vector.broadcast %cst_1 : f32 to vector<8x128xf32>
    %12 = arith.select %8, %1, %11 : vector<8x128xi1>, vector<8x128xf32>
    %cst_2 = arith.constant dense<0xFF800000> : vector<128xf32>
    %13 = vector.multi_reduction <maximumf>, %12, %cst_2 [0] : vector<8x128xf32> to vector<128xf32>
    %14 = vector.shape_cast %13 : vector<128xf32> to vector<1x128xf32>
    %cst_3 = arith.constant dense<0xFF800000> : vector<1xf32>
    %15 = vector.multi_reduction <maximumf>, %14, %cst_3 [1] : vector<1x128xf32> to vector<1xf32>
    %16 = vector.shape_cast %15 : vector<1xf32> to vector<1x1xf32>
    %cst_4 = arith.constant -1.000000e+00 : f32
    %17 = vector.broadcast %cst_4 : f32 to vector<1x1xf32>
    %18 = arith.subf %16, %17 : vector<1x1xf32>
    %cst_5 = arith.constant 2.500000e-01 : f32
    %19 = vector.broadcast %cst_5 : f32 to vector<1x1xf32>
    %20 = arith.mulf %19, %18 : vector<1x1xf32>
    %21 = arith.addf %17, %20 : vector<1x1xf32>
    %cst_6 = arith.constant 5.000000e-01 : f32
    %22 = vector.broadcast %cst_6 : f32 to vector<1x1xf32>
    %23 = arith.mulf %22, %18 : vector<1x1xf32>
    %24 = arith.addf %17, %23 : vector<1x1xf32>
    %cst_7 = arith.constant 7.500000e-01 : f32
    %25 = vector.broadcast %cst_7 : f32 to vector<1x1xf32>
    %26 = arith.mulf %25, %18 : vector<1x1xf32>
    %27 = arith.addf %17, %26 : vector<1x1xf32>
    %28 = vector.broadcast %21 : vector<1x1xf32> to vector<8x128xf32>
    %29 = arith.cmpf ole, %10, %28 : vector<8x128xf32>
    %cst_8 = arith.constant 1.000000e+00 : f32
    %cst_9 = arith.constant 0.000000e+00 : f32
    %30 = vector.broadcast %cst_8 : f32 to vector<8x128xf32>
    %31 = vector.broadcast %cst_9 : f32 to vector<8x128xf32>
    %32 = arith.select %29, %30, %31 : vector<8x128xi1>, vector<8x128xf32>
    %cst_10 = arith.constant dense<0.000000e+00> : vector<128xf32>
    %33 = vector.multi_reduction <add>, %32, %cst_10 [0] : vector<8x128xf32> to vector<128xf32>
    %34 = vector.shape_cast %33 : vector<128xf32> to vector<1x128xf32>
    %cst_11 = arith.constant dense<0.000000e+00> : vector<1xf32>
    %35 = vector.multi_reduction <add>, %34, %cst_11 [1] : vector<1x128xf32> to vector<1xf32>
    %36 = vector.shape_cast %35 : vector<1xf32> to vector<1x1xf32>
    %37 = vector.broadcast %24 : vector<1x1xf32> to vector<8x128xf32>
    %38 = arith.cmpf ole, %10, %37 : vector<8x128xf32>
    %cst_12 = arith.constant 1.000000e+00 : f32
    %cst_13 = arith.constant 0.000000e+00 : f32
    %39 = vector.broadcast %cst_12 : f32 to vector<8x128xf32>
    %40 = vector.broadcast %cst_13 : f32 to vector<8x128xf32>
    %41 = arith.select %38, %39, %40 : vector<8x128xi1>, vector<8x128xf32>
    %cst_14 = arith.constant dense<0.000000e+00> : vector<128xf32>
    %42 = vector.multi_reduction <add>, %41, %cst_14 [0] : vector<8x128xf32> to vector<128xf32>
    %43 = vector.shape_cast %42 : vector<128xf32> to vector<1x128xf32>
    %cst_15 = arith.constant dense<0.000000e+00> : vector<1xf32>
    %44 = vector.multi_reduction <add>, %43, %cst_15 [1] : vector<1x128xf32> to vector<1xf32>
    %45 = vector.shape_cast %44 : vector<1xf32> to vector<1x1xf32>
    %46 = vector.broadcast %27 : vector<1x1xf32> to vector<8x128xf32>
    %47 = arith.cmpf ole, %10, %46 : vector<8x128xf32>
    %cst_16 = arith.constant 1.000000e+00 : f32
    %cst_17 = arith.constant 0.000000e+00 : f32
    %48 = vector.broadcast %cst_16 : f32 to vector<8x128xf32>
    %49 = vector.broadcast %cst_17 : f32 to vector<8x128xf32>
    %50 = arith.select %47, %48, %49 : vector<8x128xi1>, vector<8x128xf32>
    %cst_18 = arith.constant dense<0.000000e+00> : vector<128xf32>
    %51 = vector.multi_reduction <add>, %50, %cst_18 [0] : vector<8x128xf32> to vector<128xf32>
    %52 = vector.shape_cast %51 : vector<128xf32> to vector<1x128xf32>
    %cst_19 = arith.constant dense<0.000000e+00> : vector<1xf32>
    %53 = vector.multi_reduction <add>, %52, %cst_19 [1] : vector<1x128xf32> to vector<1xf32>
    %54 = vector.shape_cast %53 : vector<1xf32> to vector<1x1xf32>
    %cst_20 = arith.constant 1.280000e+02 : f32
    %55 = vector.broadcast %cst_20 : f32 to vector<1x1xf32>
    %56 = arith.cmpf olt, %36, %55 : vector<1x1xf32>
    %57 = arith.select %56, %21, %17 : vector<1x1xi1>, vector<1x1xf32>
    %cst_21 = arith.constant 1.280000e+02 : f32
    %58 = vector.broadcast %cst_21 : f32 to vector<1x1xf32>
    %59 = arith.cmpf olt, %45, %58 : vector<1x1xf32>
    %60 = arith.select %59, %24, %57 : vector<1x1xi1>, vector<1x1xf32>
    %cst_22 = arith.constant 1.280000e+02 : f32
    %61 = vector.broadcast %cst_22 : f32 to vector<1x1xf32>
    %62 = arith.cmpf olt, %54, %61 : vector<1x1xf32>
    %63 = arith.select %62, %27, %60 : vector<1x1xi1>, vector<1x1xf32>
    %cst_23 = arith.constant 1.280000e+02 : f32
    %64 = vector.broadcast %cst_23 : f32 to vector<1x1xf32>
    %65 = arith.cmpf oge, %54, %64 : vector<1x1xf32>
    %66 = arith.select %65, %27, %16 : vector<1x1xi1>, vector<1x1xf32>
    %cst_24 = arith.constant 1.280000e+02 : f32
    %67 = vector.broadcast %cst_24 : f32 to vector<1x1xf32>
    %68 = arith.cmpf oge, %45, %67 : vector<1x1xf32>
    %69 = arith.select %68, %24, %66 : vector<1x1xi1>, vector<1x1xf32>
    %cst_25 = arith.constant 1.280000e+02 : f32
    %70 = vector.broadcast %cst_25 : f32 to vector<1x1xf32>
    %71 = arith.cmpf oge, %36, %70 : vector<1x1xf32>
    %72 = arith.select %71, %21, %69 : vector<1x1xi1>, vector<1x1xf32>
    %73 = arith.subf %72, %63 : vector<1x1xf32>
    %cst_26 = arith.constant 2.500000e-01 : f32
    %74 = vector.broadcast %cst_26 : f32 to vector<1x1xf32>
    %75 = arith.mulf %74, %73 : vector<1x1xf32>
    %76 = arith.addf %63, %75 : vector<1x1xf32>
    %cst_27 = arith.constant 5.000000e-01 : f32
    %77 = vector.broadcast %cst_27 : f32 to vector<1x1xf32>
    %78 = arith.mulf %77, %73 : vector<1x1xf32>
    %79 = arith.addf %63, %78 : vector<1x1xf32>
    %cst_28 = arith.constant 7.500000e-01 : f32
    %80 = vector.broadcast %cst_28 : f32 to vector<1x1xf32>
    %81 = arith.mulf %80, %73 : vector<1x1xf32>
    %82 = arith.addf %63, %81 : vector<1x1xf32>
    %83 = vector.broadcast %76 : vector<1x1xf32> to vector<8x128xf32>
    %84 = arith.cmpf ole, %10, %83 : vector<8x128xf32>
    %cst_29 = arith.constant 1.000000e+00 : f32
    %cst_30 = arith.constant 0.000000e+00 : f32
    %85 = vector.broadcast %cst_29 : f32 to vector<8x128xf32>
    %86 = vector.broadcast %cst_30 : f32 to vector<8x128xf32>
    %87 = arith.select %84, %85, %86 : vector<8x128xi1>, vector<8x128xf32>
    %cst_31 = arith.constant dense<0.000000e+00> : vector<128xf32>
    %88 = vector.multi_reduction <add>, %87, %cst_31 [0] : vector<8x128xf32> to vector<128xf32>
    %89 = vector.shape_cast %88 : vector<128xf32> to vector<1x128xf32>
    %cst_32 = arith.constant dense<0.000000e+00> : vector<1xf32>
    %90 = vector.multi_reduction <add>, %89, %cst_32 [1] : vector<1x128xf32> to vector<1xf32>
    %91 = vector.shape_cast %90 : vector<1xf32> to vector<1x1xf32>
    %92 = vector.broadcast %79 : vector<1x1xf32> to vector<8x128xf32>
    %93 = arith.cmpf ole, %10, %92 : vector<8x128xf32>
    %cst_33 = arith.constant 1.000000e+00 : f32
    %cst_34 = arith.constant 0.000000e+00 : f32
    %94 = vector.broadcast %cst_33 : f32 to vector<8x128xf32>
    %95 = vector.broadcast %cst_34 : f32 to vector<8x128xf32>
    %96 = arith.select %93, %94, %95 : vector<8x128xi1>, vector<8x128xf32>
    %cst_35 = arith.constant dense<0.000000e+00> : vector<128xf32>
    %97 = vector.multi_reduction <add>, %96, %cst_35 [0] : vector<8x128xf32> to vector<128xf32>
    %98 = vector.shape_cast %97 : vector<128xf32> to vector<1x128xf32>
    %cst_36 = arith.constant dense<0.000000e+00> : vector<1xf32>
    %99 = vector.multi_reduction <add>, %98, %cst_36 [1] : vector<1x128xf32> to vector<1xf32>
    %100 = vector.shape_cast %99 : vector<1xf32> to vector<1x1xf32>
    %101 = vector.broadcast %82 : vector<1x1xf32> to vector<8x128xf32>
    %102 = arith.cmpf ole, %10, %101 : vector<8x128xf32>
    %cst_37 = arith.constant 1.000000e+00 : f32
    %cst_38 = arith.constant 0.000000e+00 : f32
    %103 = vector.broadcast %cst_37 : f32 to vector<8x128xf32>
    %104 = vector.broadcast %cst_38 : f32 to vector<8x128xf32>
    %105 = arith.select %102, %103, %104 : vector<8x128xi1>, vector<8x128xf32>
    %cst_39 = arith.constant dense<0.000000e+00> : vector<128xf32>
    %106 = vector.multi_reduction <add>, %105, %cst_39 [0] : vector<8x128xf32> to vector<128xf32>
    %107 = vector.shape_cast %106 : vector<128xf32> to vector<1x128xf32>
    %cst_40 = arith.constant dense<0.000000e+00> : vector<1xf32>
    %108 = vector.multi_reduction <add>, %107, %cst_40 [1] : vector<1x128xf32> to vector<1xf32>
    %109 = vector.shape_cast %108 : vector<1xf32> to vector<1x1xf32>
    %cst_41 = arith.constant 1.280000e+02 : f32
    %110 = vector.broadcast %cst_41 : f32 to vector<1x1xf32>
    %111 = arith.cmpf olt, %91, %110 : vector<1x1xf32>
    %112 = arith.select %111, %76, %63 : vector<1x1xi1>, vector<1x1xf32>
    %cst_42 = arith.constant 1.280000e+02 : f32
    %113 = vector.broadcast %cst_42 : f32 to vector<1x1xf32>
    %114 = arith.cmpf olt, %100, %113 : vector<1x1xf32>
    %115 = arith.select %114, %79, %112 : vector<1x1xi1>, vector<1x1xf32>
    %cst_43 = arith.constant 1.280000e+02 : f32
    %116 = vector.broadcast %cst_43 : f32 to vector<1x1xf32>
    %117 = arith.cmpf olt, %109, %116 : vector<1x1xf32>
    %118 = arith.select %117, %82, %115 : vector<1x1xi1>, vector<1x1xf32>
    %cst_44 = arith.constant 1.280000e+02 : f32
    %119 = vector.broadcast %cst_44 : f32 to vector<1x1xf32>
    %120 = arith.cmpf oge, %109, %119 : vector<1x1xf32>
    %121 = arith.select %120, %82, %72 : vector<1x1xi1>, vector<1x1xf32>
    %cst_45 = arith.constant 1.280000e+02 : f32
    %122 = vector.broadcast %cst_45 : f32 to vector<1x1xf32>
    %123 = arith.cmpf oge, %100, %122 : vector<1x1xf32>
    %124 = arith.select %123, %79, %121 : vector<1x1xi1>, vector<1x1xf32>
    %cst_46 = arith.constant 1.280000e+02 : f32
    %125 = vector.broadcast %cst_46 : f32 to vector<1x1xf32>
    %126 = arith.cmpf oge, %91, %125 : vector<1x1xf32>
    %127 = arith.select %126, %76, %124 : vector<1x1xi1>, vector<1x1xf32>
    %128 = arith.subf %127, %118 : vector<1x1xf32>
    %cst_47 = arith.constant 2.500000e-01 : f32
    %129 = vector.broadcast %cst_47 : f32 to vector<1x1xf32>
    %130 = arith.mulf %129, %128 : vector<1x1xf32>
    %131 = arith.addf %118, %130 : vector<1x1xf32>
    %cst_48 = arith.constant 5.000000e-01 : f32
    %132 = vector.broadcast %cst_48 : f32 to vector<1x1xf32>
    %133 = arith.mulf %132, %128 : vector<1x1xf32>
    %134 = arith.addf %118, %133 : vector<1x1xf32>
    %cst_49 = arith.constant 7.500000e-01 : f32
    %135 = vector.broadcast %cst_49 : f32 to vector<1x1xf32>
    %136 = arith.mulf %135, %128 : vector<1x1xf32>
    %137 = arith.addf %118, %136 : vector<1x1xf32>
    %138 = vector.broadcast %131 : vector<1x1xf32> to vector<8x128xf32>
    %139 = arith.cmpf ole, %10, %138 : vector<8x128xf32>
    %cst_50 = arith.constant 1.000000e+00 : f32
    %cst_51 = arith.constant 0.000000e+00 : f32
    %140 = vector.broadcast %cst_50 : f32 to vector<8x128xf32>
    %141 = vector.broadcast %cst_51 : f32 to vector<8x128xf32>
    %142 = arith.select %139, %140, %141 : vector<8x128xi1>, vector<8x128xf32>
    %cst_52 = arith.constant dense<0.000000e+00> : vector<128xf32>
    %143 = vector.multi_reduction <add>, %142, %cst_52 [0] : vector<8x128xf32> to vector<128xf32>
    %144 = vector.shape_cast %143 : vector<128xf32> to vector<1x128xf32>
    %cst_53 = arith.constant dense<0.000000e+00> : vector<1xf32>
    %145 = vector.multi_reduction <add>, %144, %cst_53 [1] : vector<1x128xf32> to vector<1xf32>
    %146 = vector.shape_cast %145 : vector<1xf32> to vector<1x1xf32>
    %147 = vector.broadcast %134 : vector<1x1xf32> to vector<8x128xf32>
    %148 = arith.cmpf ole, %10, %147 : vector<8x128xf32>
    %cst_54 = arith.constant 1.000000e+00 : f32
    %cst_55 = arith.constant 0.000000e+00 : f32
    %149 = vector.broadcast %cst_54 : f32 to vector<8x128xf32>
    %150 = vector.broadcast %cst_55 : f32 to vector<8x128xf32>
    %151 = arith.select %148, %149, %150 : vector<8x128xi1>, vector<8x128xf32>
    %cst_56 = arith.constant dense<0.000000e+00> : vector<128xf32>
    %152 = vector.multi_reduction <add>, %151, %cst_56 [0] : vector<8x128xf32> to vector<128xf32>
    %153 = vector.shape_cast %152 : vector<128xf32> to vector<1x128xf32>
    %cst_57 = arith.constant dense<0.000000e+00> : vector<1xf32>
    %154 = vector.multi_reduction <add>, %153, %cst_57 [1] : vector<1x128xf32> to vector<1xf32>
    %155 = vector.shape_cast %154 : vector<1xf32> to vector<1x1xf32>
    %156 = vector.broadcast %137 : vector<1x1xf32> to vector<8x128xf32>
    %157 = arith.cmpf ole, %10, %156 : vector<8x128xf32>
    %cst_58 = arith.constant 1.000000e+00 : f32
    %cst_59 = arith.constant 0.000000e+00 : f32
    %158 = vector.broadcast %cst_58 : f32 to vector<8x128xf32>
    %159 = vector.broadcast %cst_59 : f32 to vector<8x128xf32>
    %160 = arith.select %157, %158, %159 : vector<8x128xi1>, vector<8x128xf32>
    %cst_60 = arith.constant dense<0.000000e+00> : vector<128xf32>
    %161 = vector.multi_reduction <add>, %160, %cst_60 [0] : vector<8x128xf32> to vector<128xf32>
    %162 = vector.shape_cast %161 : vector<128xf32> to vector<1x128xf32>
    %cst_61 = arith.constant dense<0.000000e+00> : vector<1xf32>
    %163 = vector.multi_reduction <add>, %162, %cst_61 [1] : vector<1x128xf32> to vector<1xf32>
    %164 = vector.shape_cast %163 : vector<1xf32> to vector<1x1xf32>
    %cst_62 = arith.constant 1.280000e+02 : f32
    %165 = vector.broadcast %cst_62 : f32 to vector<1x1xf32>
    %166 = arith.cmpf olt, %146, %165 : vector<1x1xf32>
    %167 = arith.select %166, %131, %118 : vector<1x1xi1>, vector<1x1xf32>
    %cst_63 = arith.constant 1.280000e+02 : f32
    %168 = vector.broadcast %cst_63 : f32 to vector<1x1xf32>
    %169 = arith.cmpf olt, %155, %168 : vector<1x1xf32>
    %170 = arith.select %169, %134, %167 : vector<1x1xi1>, vector<1x1xf32>
    %cst_64 = arith.constant 1.280000e+02 : f32
    %171 = vector.broadcast %cst_64 : f32 to vector<1x1xf32>
    %172 = arith.cmpf olt, %164, %171 : vector<1x1xf32>
    %173 = arith.select %172, %137, %170 : vector<1x1xi1>, vector<1x1xf32>
    %cst_65 = arith.constant 1.280000e+02 : f32
    %174 = vector.broadcast %cst_65 : f32 to vector<1x1xf32>
    %175 = arith.cmpf oge, %164, %174 : vector<1x1xf32>
    %176 = arith.select %175, %137, %127 : vector<1x1xi1>, vector<1x1xf32>
    %cst_66 = arith.constant 1.280000e+02 : f32
    %177 = vector.broadcast %cst_66 : f32 to vector<1x1xf32>
    %178 = arith.cmpf oge, %155, %177 : vector<1x1xf32>
    %179 = arith.select %178, %134, %176 : vector<1x1xi1>, vector<1x1xf32>
    %cst_67 = arith.constant 1.280000e+02 : f32
    %180 = vector.broadcast %cst_67 : f32 to vector<1x1xf32>
    %181 = arith.cmpf oge, %146, %180 : vector<1x1xf32>
    %182 = arith.select %181, %131, %179 : vector<1x1xi1>, vector<1x1xf32>
    %183 = arith.subf %182, %173 : vector<1x1xf32>
    %cst_68 = arith.constant 2.500000e-01 : f32
    %184 = vector.broadcast %cst_68 : f32 to vector<1x1xf32>
    %185 = arith.mulf %184, %183 : vector<1x1xf32>
    %186 = arith.addf %173, %185 : vector<1x1xf32>
    %cst_69 = arith.constant 5.000000e-01 : f32
    %187 = vector.broadcast %cst_69 : f32 to vector<1x1xf32>
    %188 = arith.mulf %187, %183 : vector<1x1xf32>
    %189 = arith.addf %173, %188 : vector<1x1xf32>
    %cst_70 = arith.constant 7.500000e-01 : f32
    %190 = vector.broadcast %cst_70 : f32 to vector<1x1xf32>
    %191 = arith.mulf %190, %183 : vector<1x1xf32>
    %192 = arith.addf %173, %191 : vector<1x1xf32>
    %193 = vector.broadcast %186 : vector<1x1xf32> to vector<8x128xf32>
    %194 = arith.cmpf ole, %10, %193 : vector<8x128xf32>
    %cst_71 = arith.constant 1.000000e+00 : f32
    %cst_72 = arith.constant 0.000000e+00 : f32
    %195 = vector.broadcast %cst_71 : f32 to vector<8x128xf32>
    %196 = vector.broadcast %cst_72 : f32 to vector<8x128xf32>
    %197 = arith.select %194, %195, %196 : vector<8x128xi1>, vector<8x128xf32>
    %cst_73 = arith.constant dense<0.000000e+00> : vector<128xf32>
    %198 = vector.multi_reduction <add>, %197, %cst_73 [0] : vector<8x128xf32> to vector<128xf32>
    %199 = vector.shape_cast %198 : vector<128xf32> to vector<1x128xf32>
    %cst_74 = arith.constant dense<0.000000e+00> : vector<1xf32>
    %200 = vector.multi_reduction <add>, %199, %cst_74 [1] : vector<1x128xf32> to vector<1xf32>
    %201 = vector.shape_cast %200 : vector<1xf32> to vector<1x1xf32>
    %202 = vector.broadcast %189 : vector<1x1xf32> to vector<8x128xf32>
    %203 = arith.cmpf ole, %10, %202 : vector<8x128xf32>
    %cst_75 = arith.constant 1.000000e+00 : f32
    %cst_76 = arith.constant 0.000000e+00 : f32
    %204 = vector.broadcast %cst_75 : f32 to vector<8x128xf32>
    %205 = vector.broadcast %cst_76 : f32 to vector<8x128xf32>
    %206 = arith.select %203, %204, %205 : vector<8x128xi1>, vector<8x128xf32>
    %cst_77 = arith.constant dense<0.000000e+00> : vector<128xf32>
    %207 = vector.multi_reduction <add>, %206, %cst_77 [0] : vector<8x128xf32> to vector<128xf32>
    %208 = vector.shape_cast %207 : vector<128xf32> to vector<1x128xf32>
    %cst_78 = arith.constant dense<0.000000e+00> : vector<1xf32>
    %209 = vector.multi_reduction <add>, %208, %cst_78 [1] : vector<1x128xf32> to vector<1xf32>
    %210 = vector.shape_cast %209 : vector<1xf32> to vector<1x1xf32>
    %211 = vector.broadcast %192 : vector<1x1xf32> to vector<8x128xf32>
    %212 = arith.cmpf ole, %10, %211 : vector<8x128xf32>
    %cst_79 = arith.constant 1.000000e+00 : f32
    %cst_80 = arith.constant 0.000000e+00 : f32
    %213 = vector.broadcast %cst_79 : f32 to vector<8x128xf32>
    %214 = vector.broadcast %cst_80 : f32 to vector<8x128xf32>
    %215 = arith.select %212, %213, %214 : vector<8x128xi1>, vector<8x128xf32>
    %cst_81 = arith.constant dense<0.000000e+00> : vector<128xf32>
    %216 = vector.multi_reduction <add>, %215, %cst_81 [0] : vector<8x128xf32> to vector<128xf32>
    %217 = vector.shape_cast %216 : vector<128xf32> to vector<1x128xf32>
    %cst_82 = arith.constant dense<0.000000e+00> : vector<1xf32>
    %218 = vector.multi_reduction <add>, %217, %cst_82 [1] : vector<1x128xf32> to vector<1xf32>
    %219 = vector.shape_cast %218 : vector<1xf32> to vector<1x1xf32>
    %cst_83 = arith.constant 1.280000e+02 : f32
    %220 = vector.broadcast %cst_83 : f32 to vector<1x1xf32>
    %221 = arith.cmpf olt, %201, %220 : vector<1x1xf32>
    %222 = arith.select %221, %186, %173 : vector<1x1xi1>, vector<1x1xf32>
    %cst_84 = arith.constant 1.280000e+02 : f32
    %223 = vector.broadcast %cst_84 : f32 to vector<1x1xf32>
    %224 = arith.cmpf olt, %210, %223 : vector<1x1xf32>
    %225 = arith.select %224, %189, %222 : vector<1x1xi1>, vector<1x1xf32>
    %cst_85 = arith.constant 1.280000e+02 : f32
    %226 = vector.broadcast %cst_85 : f32 to vector<1x1xf32>
    %227 = arith.cmpf olt, %219, %226 : vector<1x1xf32>
    %228 = arith.select %227, %192, %225 : vector<1x1xi1>, vector<1x1xf32>
    %cst_86 = arith.constant 1.280000e+02 : f32
    %229 = vector.broadcast %cst_86 : f32 to vector<1x1xf32>
    %230 = arith.cmpf oge, %219, %229 : vector<1x1xf32>
    %231 = arith.select %230, %192, %182 : vector<1x1xi1>, vector<1x1xf32>
    %cst_87 = arith.constant 1.280000e+02 : f32
    %232 = vector.broadcast %cst_87 : f32 to vector<1x1xf32>
    %233 = arith.cmpf oge, %210, %232 : vector<1x1xf32>
    %234 = arith.select %233, %189, %231 : vector<1x1xi1>, vector<1x1xf32>
    %cst_88 = arith.constant 1.280000e+02 : f32
    %235 = vector.broadcast %cst_88 : f32 to vector<1x1xf32>
    %236 = arith.cmpf oge, %201, %235 : vector<1x1xf32>
    %237 = arith.select %236, %186, %234 : vector<1x1xi1>, vector<1x1xf32>
    %238 = arith.subf %237, %228 : vector<1x1xf32>
    %cst_89 = arith.constant 2.500000e-01 : f32
    %239 = vector.broadcast %cst_89 : f32 to vector<1x1xf32>
    %240 = arith.mulf %239, %238 : vector<1x1xf32>
    %241 = arith.addf %228, %240 : vector<1x1xf32>
    %cst_90 = arith.constant 5.000000e-01 : f32
    %242 = vector.broadcast %cst_90 : f32 to vector<1x1xf32>
    %243 = arith.mulf %242, %238 : vector<1x1xf32>
    %244 = arith.addf %228, %243 : vector<1x1xf32>
    %cst_91 = arith.constant 7.500000e-01 : f32
    %245 = vector.broadcast %cst_91 : f32 to vector<1x1xf32>
    %246 = arith.mulf %245, %238 : vector<1x1xf32>
    %247 = arith.addf %228, %246 : vector<1x1xf32>
    %248 = vector.broadcast %241 : vector<1x1xf32> to vector<8x128xf32>
    %249 = arith.cmpf ole, %10, %248 : vector<8x128xf32>
    %cst_92 = arith.constant 1.000000e+00 : f32
    %cst_93 = arith.constant 0.000000e+00 : f32
    %250 = vector.broadcast %cst_92 : f32 to vector<8x128xf32>
    %251 = vector.broadcast %cst_93 : f32 to vector<8x128xf32>
    %252 = arith.select %249, %250, %251 : vector<8x128xi1>, vector<8x128xf32>
    %cst_94 = arith.constant dense<0.000000e+00> : vector<128xf32>
    %253 = vector.multi_reduction <add>, %252, %cst_94 [0] : vector<8x128xf32> to vector<128xf32>
    %254 = vector.shape_cast %253 : vector<128xf32> to vector<1x128xf32>
    %cst_95 = arith.constant dense<0.000000e+00> : vector<1xf32>
    %255 = vector.multi_reduction <add>, %254, %cst_95 [1] : vector<1x128xf32> to vector<1xf32>
    %256 = vector.shape_cast %255 : vector<1xf32> to vector<1x1xf32>
    %257 = vector.broadcast %244 : vector<1x1xf32> to vector<8x128xf32>
    %258 = arith.cmpf ole, %10, %257 : vector<8x128xf32>
    %cst_96 = arith.constant 1.000000e+00 : f32
    %cst_97 = arith.constant 0.000000e+00 : f32
    %259 = vector.broadcast %cst_96 : f32 to vector<8x128xf32>
    %260 = vector.broadcast %cst_97 : f32 to vector<8x128xf32>
    %261 = arith.select %258, %259, %260 : vector<8x128xi1>, vector<8x128xf32>
    %cst_98 = arith.constant dense<0.000000e+00> : vector<128xf32>
    %262 = vector.multi_reduction <add>, %261, %cst_98 [0] : vector<8x128xf32> to vector<128xf32>
    %263 = vector.shape_cast %262 : vector<128xf32> to vector<1x128xf32>
    %cst_99 = arith.constant dense<0.000000e+00> : vector<1xf32>
    %264 = vector.multi_reduction <add>, %263, %cst_99 [1] : vector<1x128xf32> to vector<1xf32>
    %265 = vector.shape_cast %264 : vector<1xf32> to vector<1x1xf32>
    %266 = vector.broadcast %247 : vector<1x1xf32> to vector<8x128xf32>
    %267 = arith.cmpf ole, %10, %266 : vector<8x128xf32>
    %cst_100 = arith.constant 1.000000e+00 : f32
    %cst_101 = arith.constant 0.000000e+00 : f32
    %268 = vector.broadcast %cst_100 : f32 to vector<8x128xf32>
    %269 = vector.broadcast %cst_101 : f32 to vector<8x128xf32>
    %270 = arith.select %267, %268, %269 : vector<8x128xi1>, vector<8x128xf32>
    %cst_102 = arith.constant dense<0.000000e+00> : vector<128xf32>
    %271 = vector.multi_reduction <add>, %270, %cst_102 [0] : vector<8x128xf32> to vector<128xf32>
    %272 = vector.shape_cast %271 : vector<128xf32> to vector<1x128xf32>
    %cst_103 = arith.constant dense<0.000000e+00> : vector<1xf32>
    %273 = vector.multi_reduction <add>, %272, %cst_103 [1] : vector<1x128xf32> to vector<1xf32>
    %274 = vector.shape_cast %273 : vector<1xf32> to vector<1x1xf32>
    %cst_104 = arith.constant 1.280000e+02 : f32
    %275 = vector.broadcast %cst_104 : f32 to vector<1x1xf32>
    %276 = arith.cmpf olt, %256, %275 : vector<1x1xf32>
    %277 = arith.select %276, %241, %228 : vector<1x1xi1>, vector<1x1xf32>
    %cst_105 = arith.constant 1.280000e+02 : f32
    %278 = vector.broadcast %cst_105 : f32 to vector<1x1xf32>
    %279 = arith.cmpf olt, %265, %278 : vector<1x1xf32>
    %280 = arith.select %279, %244, %277 : vector<1x1xi1>, vector<1x1xf32>
    %cst_106 = arith.constant 1.280000e+02 : f32
    %281 = vector.broadcast %cst_106 : f32 to vector<1x1xf32>
    %282 = arith.cmpf olt, %274, %281 : vector<1x1xf32>
    %283 = arith.select %282, %247, %280 : vector<1x1xi1>, vector<1x1xf32>
    %cst_107 = arith.constant 1.280000e+02 : f32
    %284 = vector.broadcast %cst_107 : f32 to vector<1x1xf32>
    %285 = arith.cmpf oge, %274, %284 : vector<1x1xf32>
    %286 = arith.select %285, %247, %237 : vector<1x1xi1>, vector<1x1xf32>
    %cst_108 = arith.constant 1.280000e+02 : f32
    %287 = vector.broadcast %cst_108 : f32 to vector<1x1xf32>
    %288 = arith.cmpf oge, %265, %287 : vector<1x1xf32>
    %289 = arith.select %288, %244, %286 : vector<1x1xi1>, vector<1x1xf32>
    %cst_109 = arith.constant 1.280000e+02 : f32
    %290 = vector.broadcast %cst_109 : f32 to vector<1x1xf32>
    %291 = arith.cmpf oge, %256, %290 : vector<1x1xf32>
    %292 = arith.select %291, %241, %289 : vector<1x1xi1>, vector<1x1xf32>
    %293 = arith.subf %292, %283 : vector<1x1xf32>
    %cst_110 = arith.constant 2.500000e-01 : f32
    %294 = vector.broadcast %cst_110 : f32 to vector<1x1xf32>
    %295 = arith.mulf %294, %293 : vector<1x1xf32>
    %296 = arith.addf %283, %295 : vector<1x1xf32>
    %cst_111 = arith.constant 5.000000e-01 : f32
    %297 = vector.broadcast %cst_111 : f32 to vector<1x1xf32>
    %298 = arith.mulf %297, %293 : vector<1x1xf32>
    %299 = arith.addf %283, %298 : vector<1x1xf32>
    %cst_112 = arith.constant 7.500000e-01 : f32
    %300 = vector.broadcast %cst_112 : f32 to vector<1x1xf32>
    %301 = arith.mulf %300, %293 : vector<1x1xf32>
    %302 = arith.addf %283, %301 : vector<1x1xf32>
    %303 = vector.broadcast %296 : vector<1x1xf32> to vector<8x128xf32>
    %304 = arith.cmpf ole, %10, %303 : vector<8x128xf32>
    %cst_113 = arith.constant 1.000000e+00 : f32
    %cst_114 = arith.constant 0.000000e+00 : f32
    %305 = vector.broadcast %cst_113 : f32 to vector<8x128xf32>
    %306 = vector.broadcast %cst_114 : f32 to vector<8x128xf32>
    %307 = arith.select %304, %305, %306 : vector<8x128xi1>, vector<8x128xf32>
    %cst_115 = arith.constant dense<0.000000e+00> : vector<128xf32>
    %308 = vector.multi_reduction <add>, %307, %cst_115 [0] : vector<8x128xf32> to vector<128xf32>
    %309 = vector.shape_cast %308 : vector<128xf32> to vector<1x128xf32>
    %cst_116 = arith.constant dense<0.000000e+00> : vector<1xf32>
    %310 = vector.multi_reduction <add>, %309, %cst_116 [1] : vector<1x128xf32> to vector<1xf32>
    %311 = vector.shape_cast %310 : vector<1xf32> to vector<1x1xf32>
    %312 = vector.broadcast %299 : vector<1x1xf32> to vector<8x128xf32>
    %313 = arith.cmpf ole, %10, %312 : vector<8x128xf32>
    %cst_117 = arith.constant 1.000000e+00 : f32
    %cst_118 = arith.constant 0.000000e+00 : f32
    %314 = vector.broadcast %cst_117 : f32 to vector<8x128xf32>
    %315 = vector.broadcast %cst_118 : f32 to vector<8x128xf32>
    %316 = arith.select %313, %314, %315 : vector<8x128xi1>, vector<8x128xf32>
    %cst_119 = arith.constant dense<0.000000e+00> : vector<128xf32>
    %317 = vector.multi_reduction <add>, %316, %cst_119 [0] : vector<8x128xf32> to vector<128xf32>
    %318 = vector.shape_cast %317 : vector<128xf32> to vector<1x128xf32>
    %cst_120 = arith.constant dense<0.000000e+00> : vector<1xf32>
    %319 = vector.multi_reduction <add>, %318, %cst_120 [1] : vector<1x128xf32> to vector<1xf32>
    %320 = vector.shape_cast %319 : vector<1xf32> to vector<1x1xf32>
    %321 = vector.broadcast %302 : vector<1x1xf32> to vector<8x128xf32>
    %322 = arith.cmpf ole, %10, %321 : vector<8x128xf32>
    %cst_121 = arith.constant 1.000000e+00 : f32
    %cst_122 = arith.constant 0.000000e+00 : f32
    %323 = vector.broadcast %cst_121 : f32 to vector<8x128xf32>
    %324 = vector.broadcast %cst_122 : f32 to vector<8x128xf32>
    %325 = arith.select %322, %323, %324 : vector<8x128xi1>, vector<8x128xf32>
    %cst_123 = arith.constant dense<0.000000e+00> : vector<128xf32>
    %326 = vector.multi_reduction <add>, %325, %cst_123 [0] : vector<8x128xf32> to vector<128xf32>
    %327 = vector.shape_cast %326 : vector<128xf32> to vector<1x128xf32>
    %cst_124 = arith.constant dense<0.000000e+00> : vector<1xf32>
    %328 = vector.multi_reduction <add>, %327, %cst_124 [1] : vector<1x128xf32> to vector<1xf32>
    %329 = vector.shape_cast %328 : vector<1xf32> to vector<1x1xf32>
    %cst_125 = arith.constant 1.280000e+02 : f32
    %330 = vector.broadcast %cst_125 : f32 to vector<1x1xf32>
    %331 = arith.cmpf olt, %311, %330 : vector<1x1xf32>
    %332 = arith.select %331, %296, %283 : vector<1x1xi1>, vector<1x1xf32>
    %cst_126 = arith.constant 1.280000e+02 : f32
    %333 = vector.broadcast %cst_126 : f32 to vector<1x1xf32>
    %334 = arith.cmpf olt, %320, %333 : vector<1x1xf32>
    %335 = arith.select %334, %299, %332 : vector<1x1xi1>, vector<1x1xf32>
    %cst_127 = arith.constant 1.280000e+02 : f32
    %336 = vector.broadcast %cst_127 : f32 to vector<1x1xf32>
    %337 = arith.cmpf olt, %329, %336 : vector<1x1xf32>
    %338 = arith.select %337, %302, %335 : vector<1x1xi1>, vector<1x1xf32>
    %cst_128 = arith.constant 1.280000e+02 : f32
    %339 = vector.broadcast %cst_128 : f32 to vector<1x1xf32>
    %340 = arith.cmpf oge, %329, %339 : vector<1x1xf32>
    %341 = arith.select %340, %302, %292 : vector<1x1xi1>, vector<1x1xf32>
    %cst_129 = arith.constant 1.280000e+02 : f32
    %342 = vector.broadcast %cst_129 : f32 to vector<1x1xf32>
    %343 = arith.cmpf oge, %320, %342 : vector<1x1xf32>
    %344 = arith.select %343, %299, %341 : vector<1x1xi1>, vector<1x1xf32>
    %cst_130 = arith.constant 1.280000e+02 : f32
    %345 = vector.broadcast %cst_130 : f32 to vector<1x1xf32>
    %346 = arith.cmpf oge, %311, %345 : vector<1x1xf32>
    %347 = arith.select %346, %296, %344 : vector<1x1xi1>, vector<1x1xf32>
    %348 = arith.subf %347, %338 : vector<1x1xf32>
    %cst_131 = arith.constant 2.500000e-01 : f32
    %349 = vector.broadcast %cst_131 : f32 to vector<1x1xf32>
    %350 = arith.mulf %349, %348 : vector<1x1xf32>
    %351 = arith.addf %338, %350 : vector<1x1xf32>
    %cst_132 = arith.constant 5.000000e-01 : f32
    %352 = vector.broadcast %cst_132 : f32 to vector<1x1xf32>
    %353 = arith.mulf %352, %348 : vector<1x1xf32>
    %354 = arith.addf %338, %353 : vector<1x1xf32>
    %cst_133 = arith.constant 7.500000e-01 : f32
    %355 = vector.broadcast %cst_133 : f32 to vector<1x1xf32>
    %356 = arith.mulf %355, %348 : vector<1x1xf32>
    %357 = arith.addf %338, %356 : vector<1x1xf32>
    %358 = vector.broadcast %351 : vector<1x1xf32> to vector<8x128xf32>
    %359 = arith.cmpf ole, %10, %358 : vector<8x128xf32>
    %cst_134 = arith.constant 1.000000e+00 : f32
    %cst_135 = arith.constant 0.000000e+00 : f32
    %360 = vector.broadcast %cst_134 : f32 to vector<8x128xf32>
    %361 = vector.broadcast %cst_135 : f32 to vector<8x128xf32>
    %362 = arith.select %359, %360, %361 : vector<8x128xi1>, vector<8x128xf32>
    %cst_136 = arith.constant dense<0.000000e+00> : vector<128xf32>
    %363 = vector.multi_reduction <add>, %362, %cst_136 [0] : vector<8x128xf32> to vector<128xf32>
    %364 = vector.shape_cast %363 : vector<128xf32> to vector<1x128xf32>
    %cst_137 = arith.constant dense<0.000000e+00> : vector<1xf32>
    %365 = vector.multi_reduction <add>, %364, %cst_137 [1] : vector<1x128xf32> to vector<1xf32>
    %366 = vector.shape_cast %365 : vector<1xf32> to vector<1x1xf32>
    %367 = vector.broadcast %354 : vector<1x1xf32> to vector<8x128xf32>
    %368 = arith.cmpf ole, %10, %367 : vector<8x128xf32>
    %cst_138 = arith.constant 1.000000e+00 : f32
    %cst_139 = arith.constant 0.000000e+00 : f32
    %369 = vector.broadcast %cst_138 : f32 to vector<8x128xf32>
    %370 = vector.broadcast %cst_139 : f32 to vector<8x128xf32>
    %371 = arith.select %368, %369, %370 : vector<8x128xi1>, vector<8x128xf32>
    %cst_140 = arith.constant dense<0.000000e+00> : vector<128xf32>
    %372 = vector.multi_reduction <add>, %371, %cst_140 [0] : vector<8x128xf32> to vector<128xf32>
    %373 = vector.shape_cast %372 : vector<128xf32> to vector<1x128xf32>
    %cst_141 = arith.constant dense<0.000000e+00> : vector<1xf32>
    %374 = vector.multi_reduction <add>, %373, %cst_141 [1] : vector<1x128xf32> to vector<1xf32>
    %375 = vector.shape_cast %374 : vector<1xf32> to vector<1x1xf32>
    %376 = vector.broadcast %357 : vector<1x1xf32> to vector<8x128xf32>
    %377 = arith.cmpf ole, %10, %376 : vector<8x128xf32>
    %cst_142 = arith.constant 1.000000e+00 : f32
    %cst_143 = arith.constant 0.000000e+00 : f32
    %378 = vector.broadcast %cst_142 : f32 to vector<8x128xf32>
    %379 = vector.broadcast %cst_143 : f32 to vector<8x128xf32>
    %380 = arith.select %377, %378, %379 : vector<8x128xi1>, vector<8x128xf32>
    %cst_144 = arith.constant dense<0.000000e+00> : vector<128xf32>
    %381 = vector.multi_reduction <add>, %380, %cst_144 [0] : vector<8x128xf32> to vector<128xf32>
    %382 = vector.shape_cast %381 : vector<128xf32> to vector<1x128xf32>
    %cst_145 = arith.constant dense<0.000000e+00> : vector<1xf32>
    %383 = vector.multi_reduction <add>, %382, %cst_145 [1] : vector<1x128xf32> to vector<1xf32>
    %384 = vector.shape_cast %383 : vector<1xf32> to vector<1x1xf32>
    %cst_146 = arith.constant 1.280000e+02 : f32
    %385 = vector.broadcast %cst_146 : f32 to vector<1x1xf32>
    %386 = arith.cmpf olt, %366, %385 : vector<1x1xf32>
    %387 = arith.select %386, %351, %338 : vector<1x1xi1>, vector<1x1xf32>
    %cst_147 = arith.constant 1.280000e+02 : f32
    %388 = vector.broadcast %cst_147 : f32 to vector<1x1xf32>
    %389 = arith.cmpf olt, %375, %388 : vector<1x1xf32>
    %390 = arith.select %389, %354, %387 : vector<1x1xi1>, vector<1x1xf32>
    %cst_148 = arith.constant 1.280000e+02 : f32
    %391 = vector.broadcast %cst_148 : f32 to vector<1x1xf32>
    %392 = arith.cmpf olt, %384, %391 : vector<1x1xf32>
    %393 = arith.select %392, %357, %390 : vector<1x1xi1>, vector<1x1xf32>
    %cst_149 = arith.constant 1.280000e+02 : f32
    %394 = vector.broadcast %cst_149 : f32 to vector<1x1xf32>
    %395 = arith.cmpf oge, %384, %394 : vector<1x1xf32>
    %396 = arith.select %395, %357, %347 : vector<1x1xi1>, vector<1x1xf32>
    %cst_150 = arith.constant 1.280000e+02 : f32
    %397 = vector.broadcast %cst_150 : f32 to vector<1x1xf32>
    %398 = arith.cmpf oge, %375, %397 : vector<1x1xf32>
    %399 = arith.select %398, %354, %396 : vector<1x1xi1>, vector<1x1xf32>
    %cst_151 = arith.constant 1.280000e+02 : f32
    %400 = vector.broadcast %cst_151 : f32 to vector<1x1xf32>
    %401 = arith.cmpf oge, %366, %400 : vector<1x1xf32>
    %402 = arith.select %401, %351, %399 : vector<1x1xi1>, vector<1x1xf32>
    %403 = arith.subf %402, %393 : vector<1x1xf32>
    %cst_152 = arith.constant 2.500000e-01 : f32
    %404 = vector.broadcast %cst_152 : f32 to vector<1x1xf32>
    %405 = arith.mulf %404, %403 : vector<1x1xf32>
    %406 = arith.addf %393, %405 : vector<1x1xf32>
    %cst_153 = arith.constant 5.000000e-01 : f32
    %407 = vector.broadcast %cst_153 : f32 to vector<1x1xf32>
    %408 = arith.mulf %407, %403 : vector<1x1xf32>
    %409 = arith.addf %393, %408 : vector<1x1xf32>
    %cst_154 = arith.constant 7.500000e-01 : f32
    %410 = vector.broadcast %cst_154 : f32 to vector<1x1xf32>
    %411 = arith.mulf %410, %403 : vector<1x1xf32>
    %412 = arith.addf %393, %411 : vector<1x1xf32>
    %413 = vector.broadcast %406 : vector<1x1xf32> to vector<8x128xf32>
    %414 = arith.cmpf ole, %10, %413 : vector<8x128xf32>
    %cst_155 = arith.constant 1.000000e+00 : f32
    %cst_156 = arith.constant 0.000000e+00 : f32
    %415 = vector.broadcast %cst_155 : f32 to vector<8x128xf32>
    %416 = vector.broadcast %cst_156 : f32 to vector<8x128xf32>
    %417 = arith.select %414, %415, %416 : vector<8x128xi1>, vector<8x128xf32>
    %cst_157 = arith.constant dense<0.000000e+00> : vector<128xf32>
    %418 = vector.multi_reduction <add>, %417, %cst_157 [0] : vector<8x128xf32> to vector<128xf32>
    %419 = vector.shape_cast %418 : vector<128xf32> to vector<1x128xf32>
    %cst_158 = arith.constant dense<0.000000e+00> : vector<1xf32>
    %420 = vector.multi_reduction <add>, %419, %cst_158 [1] : vector<1x128xf32> to vector<1xf32>
    %421 = vector.shape_cast %420 : vector<1xf32> to vector<1x1xf32>
    %422 = vector.broadcast %409 : vector<1x1xf32> to vector<8x128xf32>
    %423 = arith.cmpf ole, %10, %422 : vector<8x128xf32>
    %cst_159 = arith.constant 1.000000e+00 : f32
    %cst_160 = arith.constant 0.000000e+00 : f32
    %424 = vector.broadcast %cst_159 : f32 to vector<8x128xf32>
    %425 = vector.broadcast %cst_160 : f32 to vector<8x128xf32>
    %426 = arith.select %423, %424, %425 : vector<8x128xi1>, vector<8x128xf32>
    %cst_161 = arith.constant dense<0.000000e+00> : vector<128xf32>
    %427 = vector.multi_reduction <add>, %426, %cst_161 [0] : vector<8x128xf32> to vector<128xf32>
    %428 = vector.shape_cast %427 : vector<128xf32> to vector<1x128xf32>
    %cst_162 = arith.constant dense<0.000000e+00> : vector<1xf32>
    %429 = vector.multi_reduction <add>, %428, %cst_162 [1] : vector<1x128xf32> to vector<1xf32>
    %430 = vector.shape_cast %429 : vector<1xf32> to vector<1x1xf32>
    %431 = vector.broadcast %412 : vector<1x1xf32> to vector<8x128xf32>
    %432 = arith.cmpf ole, %10, %431 : vector<8x128xf32>
    %cst_163 = arith.constant 1.000000e+00 : f32
    %cst_164 = arith.constant 0.000000e+00 : f32
    %433 = vector.broadcast %cst_163 : f32 to vector<8x128xf32>
    %434 = vector.broadcast %cst_164 : f32 to vector<8x128xf32>
    %435 = arith.select %432, %433, %434 : vector<8x128xi1>, vector<8x128xf32>
    %cst_165 = arith.constant dense<0.000000e+00> : vector<128xf32>
    %436 = vector.multi_reduction <add>, %435, %cst_165 [0] : vector<8x128xf32> to vector<128xf32>
    %437 = vector.shape_cast %436 : vector<128xf32> to vector<1x128xf32>
    %cst_166 = arith.constant dense<0.000000e+00> : vector<1xf32>
    %438 = vector.multi_reduction <add>, %437, %cst_166 [1] : vector<1x128xf32> to vector<1xf32>
    %439 = vector.shape_cast %438 : vector<1xf32> to vector<1x1xf32>
    %cst_167 = arith.constant 1.280000e+02 : f32
    %440 = vector.broadcast %cst_167 : f32 to vector<1x1xf32>
    %441 = arith.cmpf olt, %421, %440 : vector<1x1xf32>
    %442 = arith.select %441, %406, %393 : vector<1x1xi1>, vector<1x1xf32>
    %cst_168 = arith.constant 1.280000e+02 : f32
    %443 = vector.broadcast %cst_168 : f32 to vector<1x1xf32>
    %444 = arith.cmpf olt, %430, %443 : vector<1x1xf32>
    %445 = arith.select %444, %409, %442 : vector<1x1xi1>, vector<1x1xf32>
    %cst_169 = arith.constant 1.280000e+02 : f32
    %446 = vector.broadcast %cst_169 : f32 to vector<1x1xf32>
    %447 = arith.cmpf olt, %439, %446 : vector<1x1xf32>
    %448 = arith.select %447, %412, %445 : vector<1x1xi1>, vector<1x1xf32>
    %cst_170 = arith.constant 1.280000e+02 : f32
    %449 = vector.broadcast %cst_170 : f32 to vector<1x1xf32>
    %450 = arith.cmpf oge, %439, %449 : vector<1x1xf32>
    %451 = arith.select %450, %412, %402 : vector<1x1xi1>, vector<1x1xf32>
    %cst_171 = arith.constant 1.280000e+02 : f32
    %452 = vector.broadcast %cst_171 : f32 to vector<1x1xf32>
    %453 = arith.cmpf oge, %430, %452 : vector<1x1xf32>
    %454 = arith.select %453, %409, %451 : vector<1x1xi1>, vector<1x1xf32>
    %cst_172 = arith.constant 1.280000e+02 : f32
    %455 = vector.broadcast %cst_172 : f32 to vector<1x1xf32>
    %456 = arith.cmpf oge, %421, %455 : vector<1x1xf32>
    %457 = arith.select %456, %406, %454 : vector<1x1xi1>, vector<1x1xf32>
    %458 = arith.subf %457, %448 : vector<1x1xf32>
    %cst_173 = arith.constant 2.500000e-01 : f32
    %459 = vector.broadcast %cst_173 : f32 to vector<1x1xf32>
    %460 = arith.mulf %459, %458 : vector<1x1xf32>
    %461 = arith.addf %448, %460 : vector<1x1xf32>
    %cst_174 = arith.constant 5.000000e-01 : f32
    %462 = vector.broadcast %cst_174 : f32 to vector<1x1xf32>
    %463 = arith.mulf %462, %458 : vector<1x1xf32>
    %464 = arith.addf %448, %463 : vector<1x1xf32>
    %cst_175 = arith.constant 7.500000e-01 : f32
    %465 = vector.broadcast %cst_175 : f32 to vector<1x1xf32>
    %466 = arith.mulf %465, %458 : vector<1x1xf32>
    %467 = arith.addf %448, %466 : vector<1x1xf32>
    %468 = vector.broadcast %461 : vector<1x1xf32> to vector<8x128xf32>
    %469 = arith.cmpf ole, %10, %468 : vector<8x128xf32>
    %cst_176 = arith.constant 1.000000e+00 : f32
    %cst_177 = arith.constant 0.000000e+00 : f32
    %470 = vector.broadcast %cst_176 : f32 to vector<8x128xf32>
    %471 = vector.broadcast %cst_177 : f32 to vector<8x128xf32>
    %472 = arith.select %469, %470, %471 : vector<8x128xi1>, vector<8x128xf32>
    %cst_178 = arith.constant dense<0.000000e+00> : vector<128xf32>
    %473 = vector.multi_reduction <add>, %472, %cst_178 [0] : vector<8x128xf32> to vector<128xf32>
    %474 = vector.shape_cast %473 : vector<128xf32> to vector<1x128xf32>
    %cst_179 = arith.constant dense<0.000000e+00> : vector<1xf32>
    %475 = vector.multi_reduction <add>, %474, %cst_179 [1] : vector<1x128xf32> to vector<1xf32>
    %476 = vector.shape_cast %475 : vector<1xf32> to vector<1x1xf32>
    %477 = vector.broadcast %464 : vector<1x1xf32> to vector<8x128xf32>
    %478 = arith.cmpf ole, %10, %477 : vector<8x128xf32>
    %cst_180 = arith.constant 1.000000e+00 : f32
    %cst_181 = arith.constant 0.000000e+00 : f32
    %479 = vector.broadcast %cst_180 : f32 to vector<8x128xf32>
    %480 = vector.broadcast %cst_181 : f32 to vector<8x128xf32>
    %481 = arith.select %478, %479, %480 : vector<8x128xi1>, vector<8x128xf32>
    %cst_182 = arith.constant dense<0.000000e+00> : vector<128xf32>
    %482 = vector.multi_reduction <add>, %481, %cst_182 [0] : vector<8x128xf32> to vector<128xf32>
    %483 = vector.shape_cast %482 : vector<128xf32> to vector<1x128xf32>
    %cst_183 = arith.constant dense<0.000000e+00> : vector<1xf32>
    %484 = vector.multi_reduction <add>, %483, %cst_183 [1] : vector<1x128xf32> to vector<1xf32>
    %485 = vector.shape_cast %484 : vector<1xf32> to vector<1x1xf32>
    %486 = vector.broadcast %467 : vector<1x1xf32> to vector<8x128xf32>
    %487 = arith.cmpf ole, %10, %486 : vector<8x128xf32>
    %cst_184 = arith.constant 1.000000e+00 : f32
    %cst_185 = arith.constant 0.000000e+00 : f32
    %488 = vector.broadcast %cst_184 : f32 to vector<8x128xf32>
    %489 = vector.broadcast %cst_185 : f32 to vector<8x128xf32>
    %490 = arith.select %487, %488, %489 : vector<8x128xi1>, vector<8x128xf32>
    %cst_186 = arith.constant dense<0.000000e+00> : vector<128xf32>
    %491 = vector.multi_reduction <add>, %490, %cst_186 [0] : vector<8x128xf32> to vector<128xf32>
    %492 = vector.shape_cast %491 : vector<128xf32> to vector<1x128xf32>
    %cst_187 = arith.constant dense<0.000000e+00> : vector<1xf32>
    %493 = vector.multi_reduction <add>, %492, %cst_187 [1] : vector<1x128xf32> to vector<1xf32>
    %494 = vector.shape_cast %493 : vector<1xf32> to vector<1x1xf32>
    %cst_188 = arith.constant 1.280000e+02 : f32
    %495 = vector.broadcast %cst_188 : f32 to vector<1x1xf32>
    %496 = arith.cmpf olt, %476, %495 : vector<1x1xf32>
    %497 = arith.select %496, %461, %448 : vector<1x1xi1>, vector<1x1xf32>
    %cst_189 = arith.constant 1.280000e+02 : f32
    %498 = vector.broadcast %cst_189 : f32 to vector<1x1xf32>
    %499 = arith.cmpf olt, %485, %498 : vector<1x1xf32>
    %500 = arith.select %499, %464, %497 : vector<1x1xi1>, vector<1x1xf32>
    %cst_190 = arith.constant 1.280000e+02 : f32
    %501 = vector.broadcast %cst_190 : f32 to vector<1x1xf32>
    %502 = arith.cmpf olt, %494, %501 : vector<1x1xf32>
    %503 = arith.select %502, %467, %500 : vector<1x1xi1>, vector<1x1xf32>
    %cst_191 = arith.constant 1.280000e+02 : f32
    %504 = vector.broadcast %cst_191 : f32 to vector<1x1xf32>
    %505 = arith.cmpf oge, %494, %504 : vector<1x1xf32>
    %506 = arith.select %505, %467, %457 : vector<1x1xi1>, vector<1x1xf32>
    %cst_192 = arith.constant 1.280000e+02 : f32
    %507 = vector.broadcast %cst_192 : f32 to vector<1x1xf32>
    %508 = arith.cmpf oge, %485, %507 : vector<1x1xf32>
    %509 = arith.select %508, %464, %506 : vector<1x1xi1>, vector<1x1xf32>
    %cst_193 = arith.constant 1.280000e+02 : f32
    %510 = vector.broadcast %cst_193 : f32 to vector<1x1xf32>
    %511 = arith.cmpf oge, %476, %510 : vector<1x1xf32>
    %512 = arith.select %511, %461, %509 : vector<1x1xi1>, vector<1x1xf32>
    %513 = arith.subf %512, %503 : vector<1x1xf32>
    %cst_194 = arith.constant 2.500000e-01 : f32
    %514 = vector.broadcast %cst_194 : f32 to vector<1x1xf32>
    %515 = arith.mulf %514, %513 : vector<1x1xf32>
    %516 = arith.addf %503, %515 : vector<1x1xf32>
    %cst_195 = arith.constant 5.000000e-01 : f32
    %517 = vector.broadcast %cst_195 : f32 to vector<1x1xf32>
    %518 = arith.mulf %517, %513 : vector<1x1xf32>
    %519 = arith.addf %503, %518 : vector<1x1xf32>
    %cst_196 = arith.constant 7.500000e-01 : f32
    %520 = vector.broadcast %cst_196 : f32 to vector<1x1xf32>
    %521 = arith.mulf %520, %513 : vector<1x1xf32>
    %522 = arith.addf %503, %521 : vector<1x1xf32>
    %523 = vector.broadcast %516 : vector<1x1xf32> to vector<8x128xf32>
    %524 = arith.cmpf ole, %10, %523 : vector<8x128xf32>
    %cst_197 = arith.constant 1.000000e+00 : f32
    %cst_198 = arith.constant 0.000000e+00 : f32
    %525 = vector.broadcast %cst_197 : f32 to vector<8x128xf32>
    %526 = vector.broadcast %cst_198 : f32 to vector<8x128xf32>
    %527 = arith.select %524, %525, %526 : vector<8x128xi1>, vector<8x128xf32>
    %cst_199 = arith.constant dense<0.000000e+00> : vector<128xf32>
    %528 = vector.multi_reduction <add>, %527, %cst_199 [0] : vector<8x128xf32> to vector<128xf32>
    %529 = vector.shape_cast %528 : vector<128xf32> to vector<1x128xf32>
    %cst_200 = arith.constant dense<0.000000e+00> : vector<1xf32>
    %530 = vector.multi_reduction <add>, %529, %cst_200 [1] : vector<1x128xf32> to vector<1xf32>
    %531 = vector.shape_cast %530 : vector<1xf32> to vector<1x1xf32>
    %532 = vector.broadcast %519 : vector<1x1xf32> to vector<8x128xf32>
    %533 = arith.cmpf ole, %10, %532 : vector<8x128xf32>
    %cst_201 = arith.constant 1.000000e+00 : f32
    %cst_202 = arith.constant 0.000000e+00 : f32
    %534 = vector.broadcast %cst_201 : f32 to vector<8x128xf32>
    %535 = vector.broadcast %cst_202 : f32 to vector<8x128xf32>
    %536 = arith.select %533, %534, %535 : vector<8x128xi1>, vector<8x128xf32>
    %cst_203 = arith.constant dense<0.000000e+00> : vector<128xf32>
    %537 = vector.multi_reduction <add>, %536, %cst_203 [0] : vector<8x128xf32> to vector<128xf32>
    %538 = vector.shape_cast %537 : vector<128xf32> to vector<1x128xf32>
    %cst_204 = arith.constant dense<0.000000e+00> : vector<1xf32>
    %539 = vector.multi_reduction <add>, %538, %cst_204 [1] : vector<1x128xf32> to vector<1xf32>
    %540 = vector.shape_cast %539 : vector<1xf32> to vector<1x1xf32>
    %541 = vector.broadcast %522 : vector<1x1xf32> to vector<8x128xf32>
    %542 = arith.cmpf ole, %10, %541 : vector<8x128xf32>
    %cst_205 = arith.constant 1.000000e+00 : f32
    %cst_206 = arith.constant 0.000000e+00 : f32
    %543 = vector.broadcast %cst_205 : f32 to vector<8x128xf32>
    %544 = vector.broadcast %cst_206 : f32 to vector<8x128xf32>
    %545 = arith.select %542, %543, %544 : vector<8x128xi1>, vector<8x128xf32>
    %cst_207 = arith.constant dense<0.000000e+00> : vector<128xf32>
    %546 = vector.multi_reduction <add>, %545, %cst_207 [0] : vector<8x128xf32> to vector<128xf32>
    %547 = vector.shape_cast %546 : vector<128xf32> to vector<1x128xf32>
    %cst_208 = arith.constant dense<0.000000e+00> : vector<1xf32>
    %548 = vector.multi_reduction <add>, %547, %cst_208 [1] : vector<1x128xf32> to vector<1xf32>
    %549 = vector.shape_cast %548 : vector<1xf32> to vector<1x1xf32>
    %cst_209 = arith.constant 1.280000e+02 : f32
    %550 = vector.broadcast %cst_209 : f32 to vector<1x1xf32>
    %551 = arith.cmpf olt, %531, %550 : vector<1x1xf32>
    %552 = arith.select %551, %516, %503 : vector<1x1xi1>, vector<1x1xf32>
    %cst_210 = arith.constant 1.280000e+02 : f32
    %553 = vector.broadcast %cst_210 : f32 to vector<1x1xf32>
    %554 = arith.cmpf olt, %540, %553 : vector<1x1xf32>
    %555 = arith.select %554, %519, %552 : vector<1x1xi1>, vector<1x1xf32>
    %cst_211 = arith.constant 1.280000e+02 : f32
    %556 = vector.broadcast %cst_211 : f32 to vector<1x1xf32>
    %557 = arith.cmpf olt, %549, %556 : vector<1x1xf32>
    %558 = arith.select %557, %522, %555 : vector<1x1xi1>, vector<1x1xf32>
    %cst_212 = arith.constant 1.280000e+02 : f32
    %559 = vector.broadcast %cst_212 : f32 to vector<1x1xf32>
    %560 = arith.cmpf oge, %549, %559 : vector<1x1xf32>
    %561 = arith.select %560, %522, %512 : vector<1x1xi1>, vector<1x1xf32>
    %cst_213 = arith.constant 1.280000e+02 : f32
    %562 = vector.broadcast %cst_213 : f32 to vector<1x1xf32>
    %563 = arith.cmpf oge, %540, %562 : vector<1x1xf32>
    %564 = arith.select %563, %519, %561 : vector<1x1xi1>, vector<1x1xf32>
    %cst_214 = arith.constant 1.280000e+02 : f32
    %565 = vector.broadcast %cst_214 : f32 to vector<1x1xf32>
    %566 = arith.cmpf oge, %531, %565 : vector<1x1xf32>
    %567 = arith.select %566, %516, %564 : vector<1x1xi1>, vector<1x1xf32>
    %568 = arith.subf %567, %558 : vector<1x1xf32>
    %cst_215 = arith.constant 2.500000e-01 : f32
    %569 = vector.broadcast %cst_215 : f32 to vector<1x1xf32>
    %570 = arith.mulf %569, %568 : vector<1x1xf32>
    %571 = arith.addf %558, %570 : vector<1x1xf32>
    %cst_216 = arith.constant 5.000000e-01 : f32
    %572 = vector.broadcast %cst_216 : f32 to vector<1x1xf32>
    %573 = arith.mulf %572, %568 : vector<1x1xf32>
    %574 = arith.addf %558, %573 : vector<1x1xf32>
    %cst_217 = arith.constant 7.500000e-01 : f32
    %575 = vector.broadcast %cst_217 : f32 to vector<1x1xf32>
    %576 = arith.mulf %575, %568 : vector<1x1xf32>
    %577 = arith.addf %558, %576 : vector<1x1xf32>
    %578 = vector.broadcast %571 : vector<1x1xf32> to vector<8x128xf32>
    %579 = arith.cmpf ole, %10, %578 : vector<8x128xf32>
    %cst_218 = arith.constant 1.000000e+00 : f32
    %cst_219 = arith.constant 0.000000e+00 : f32
    %580 = vector.broadcast %cst_218 : f32 to vector<8x128xf32>
    %581 = vector.broadcast %cst_219 : f32 to vector<8x128xf32>
    %582 = arith.select %579, %580, %581 : vector<8x128xi1>, vector<8x128xf32>
    %cst_220 = arith.constant dense<0.000000e+00> : vector<128xf32>
    %583 = vector.multi_reduction <add>, %582, %cst_220 [0] : vector<8x128xf32> to vector<128xf32>
    %584 = vector.shape_cast %583 : vector<128xf32> to vector<1x128xf32>
    %cst_221 = arith.constant dense<0.000000e+00> : vector<1xf32>
    %585 = vector.multi_reduction <add>, %584, %cst_221 [1] : vector<1x128xf32> to vector<1xf32>
    %586 = vector.shape_cast %585 : vector<1xf32> to vector<1x1xf32>
    %587 = vector.broadcast %574 : vector<1x1xf32> to vector<8x128xf32>
    %588 = arith.cmpf ole, %10, %587 : vector<8x128xf32>
    %cst_222 = arith.constant 1.000000e+00 : f32
    %cst_223 = arith.constant 0.000000e+00 : f32
    %589 = vector.broadcast %cst_222 : f32 to vector<8x128xf32>
    %590 = vector.broadcast %cst_223 : f32 to vector<8x128xf32>
    %591 = arith.select %588, %589, %590 : vector<8x128xi1>, vector<8x128xf32>
    %cst_224 = arith.constant dense<0.000000e+00> : vector<128xf32>
    %592 = vector.multi_reduction <add>, %591, %cst_224 [0] : vector<8x128xf32> to vector<128xf32>
    %593 = vector.shape_cast %592 : vector<128xf32> to vector<1x128xf32>
    %cst_225 = arith.constant dense<0.000000e+00> : vector<1xf32>
    %594 = vector.multi_reduction <add>, %593, %cst_225 [1] : vector<1x128xf32> to vector<1xf32>
    %595 = vector.shape_cast %594 : vector<1xf32> to vector<1x1xf32>
    %596 = vector.broadcast %577 : vector<1x1xf32> to vector<8x128xf32>
    %597 = arith.cmpf ole, %10, %596 : vector<8x128xf32>
    %cst_226 = arith.constant 1.000000e+00 : f32
    %cst_227 = arith.constant 0.000000e+00 : f32
    %598 = vector.broadcast %cst_226 : f32 to vector<8x128xf32>
    %599 = vector.broadcast %cst_227 : f32 to vector<8x128xf32>
    %600 = arith.select %597, %598, %599 : vector<8x128xi1>, vector<8x128xf32>
    %cst_228 = arith.constant dense<0.000000e+00> : vector<128xf32>
    %601 = vector.multi_reduction <add>, %600, %cst_228 [0] : vector<8x128xf32> to vector<128xf32>
    %602 = vector.shape_cast %601 : vector<128xf32> to vector<1x128xf32>
    %cst_229 = arith.constant dense<0.000000e+00> : vector<1xf32>
    %603 = vector.multi_reduction <add>, %602, %cst_229 [1] : vector<1x128xf32> to vector<1xf32>
    %604 = vector.shape_cast %603 : vector<1xf32> to vector<1x1xf32>
    %cst_230 = arith.constant 1.280000e+02 : f32
    %605 = vector.broadcast %cst_230 : f32 to vector<1x1xf32>
    %606 = arith.cmpf olt, %586, %605 : vector<1x1xf32>
    %607 = arith.select %606, %571, %558 : vector<1x1xi1>, vector<1x1xf32>
    %cst_231 = arith.constant 1.280000e+02 : f32
    %608 = vector.broadcast %cst_231 : f32 to vector<1x1xf32>
    %609 = arith.cmpf olt, %595, %608 : vector<1x1xf32>
    %610 = arith.select %609, %574, %607 : vector<1x1xi1>, vector<1x1xf32>
    %cst_232 = arith.constant 1.280000e+02 : f32
    %611 = vector.broadcast %cst_232 : f32 to vector<1x1xf32>
    %612 = arith.cmpf olt, %604, %611 : vector<1x1xf32>
    %613 = arith.select %612, %577, %610 : vector<1x1xi1>, vector<1x1xf32>
    %cst_233 = arith.constant 1.280000e+02 : f32
    %614 = vector.broadcast %cst_233 : f32 to vector<1x1xf32>
    %615 = arith.cmpf oge, %604, %614 : vector<1x1xf32>
    %616 = arith.select %615, %577, %567 : vector<1x1xi1>, vector<1x1xf32>
    %cst_234 = arith.constant 1.280000e+02 : f32
    %617 = vector.broadcast %cst_234 : f32 to vector<1x1xf32>
    %618 = arith.cmpf oge, %595, %617 : vector<1x1xf32>
    %619 = arith.select %618, %574, %616 : vector<1x1xi1>, vector<1x1xf32>
    %cst_235 = arith.constant 1.280000e+02 : f32
    %620 = vector.broadcast %cst_235 : f32 to vector<1x1xf32>
    %621 = arith.cmpf oge, %586, %620 : vector<1x1xf32>
    %622 = arith.select %621, %571, %619 : vector<1x1xi1>, vector<1x1xf32>
    %623 = arith.subf %622, %613 : vector<1x1xf32>
    %cst_236 = arith.constant 2.500000e-01 : f32
    %624 = vector.broadcast %cst_236 : f32 to vector<1x1xf32>
    %625 = arith.mulf %624, %623 : vector<1x1xf32>
    %626 = arith.addf %613, %625 : vector<1x1xf32>
    %cst_237 = arith.constant 5.000000e-01 : f32
    %627 = vector.broadcast %cst_237 : f32 to vector<1x1xf32>
    %628 = arith.mulf %627, %623 : vector<1x1xf32>
    %629 = arith.addf %613, %628 : vector<1x1xf32>
    %cst_238 = arith.constant 7.500000e-01 : f32
    %630 = vector.broadcast %cst_238 : f32 to vector<1x1xf32>
    %631 = arith.mulf %630, %623 : vector<1x1xf32>
    %632 = arith.addf %613, %631 : vector<1x1xf32>
    %633 = vector.broadcast %626 : vector<1x1xf32> to vector<8x128xf32>
    %634 = arith.cmpf ole, %10, %633 : vector<8x128xf32>
    %cst_239 = arith.constant 1.000000e+00 : f32
    %cst_240 = arith.constant 0.000000e+00 : f32
    %635 = vector.broadcast %cst_239 : f32 to vector<8x128xf32>
    %636 = vector.broadcast %cst_240 : f32 to vector<8x128xf32>
    %637 = arith.select %634, %635, %636 : vector<8x128xi1>, vector<8x128xf32>
    %cst_241 = arith.constant dense<0.000000e+00> : vector<128xf32>
    %638 = vector.multi_reduction <add>, %637, %cst_241 [0] : vector<8x128xf32> to vector<128xf32>
    %639 = vector.shape_cast %638 : vector<128xf32> to vector<1x128xf32>
    %cst_242 = arith.constant dense<0.000000e+00> : vector<1xf32>
    %640 = vector.multi_reduction <add>, %639, %cst_242 [1] : vector<1x128xf32> to vector<1xf32>
    %641 = vector.shape_cast %640 : vector<1xf32> to vector<1x1xf32>
    %642 = vector.broadcast %629 : vector<1x1xf32> to vector<8x128xf32>
    %643 = arith.cmpf ole, %10, %642 : vector<8x128xf32>
    %cst_243 = arith.constant 1.000000e+00 : f32
    %cst_244 = arith.constant 0.000000e+00 : f32
    %644 = vector.broadcast %cst_243 : f32 to vector<8x128xf32>
    %645 = vector.broadcast %cst_244 : f32 to vector<8x128xf32>
    %646 = arith.select %643, %644, %645 : vector<8x128xi1>, vector<8x128xf32>
    %cst_245 = arith.constant dense<0.000000e+00> : vector<128xf32>
    %647 = vector.multi_reduction <add>, %646, %cst_245 [0] : vector<8x128xf32> to vector<128xf32>
    %648 = vector.shape_cast %647 : vector<128xf32> to vector<1x128xf32>
    %cst_246 = arith.constant dense<0.000000e+00> : vector<1xf32>
    %649 = vector.multi_reduction <add>, %648, %cst_246 [1] : vector<1x128xf32> to vector<1xf32>
    %650 = vector.shape_cast %649 : vector<1xf32> to vector<1x1xf32>
    %651 = vector.broadcast %632 : vector<1x1xf32> to vector<8x128xf32>
    %652 = arith.cmpf ole, %10, %651 : vector<8x128xf32>
    %cst_247 = arith.constant 1.000000e+00 : f32
    %cst_248 = arith.constant 0.000000e+00 : f32
    %653 = vector.broadcast %cst_247 : f32 to vector<8x128xf32>
    %654 = vector.broadcast %cst_248 : f32 to vector<8x128xf32>
    %655 = arith.select %652, %653, %654 : vector<8x128xi1>, vector<8x128xf32>
    %cst_249 = arith.constant dense<0.000000e+00> : vector<128xf32>
    %656 = vector.multi_reduction <add>, %655, %cst_249 [0] : vector<8x128xf32> to vector<128xf32>
    %657 = vector.shape_cast %656 : vector<128xf32> to vector<1x128xf32>
    %cst_250 = arith.constant dense<0.000000e+00> : vector<1xf32>
    %658 = vector.multi_reduction <add>, %657, %cst_250 [1] : vector<1x128xf32> to vector<1xf32>
    %659 = vector.shape_cast %658 : vector<1xf32> to vector<1x1xf32>
    %cst_251 = arith.constant 1.280000e+02 : f32
    %660 = vector.broadcast %cst_251 : f32 to vector<1x1xf32>
    %661 = arith.cmpf oge, %659, %660 : vector<1x1xf32>
    %662 = arith.select %661, %632, %622 : vector<1x1xi1>, vector<1x1xf32>
    %cst_252 = arith.constant 1.280000e+02 : f32
    %663 = vector.broadcast %cst_252 : f32 to vector<1x1xf32>
    %664 = arith.cmpf oge, %650, %663 : vector<1x1xf32>
    %665 = arith.select %664, %629, %662 : vector<1x1xi1>, vector<1x1xf32>
    %cst_253 = arith.constant 1.280000e+02 : f32
    %666 = vector.broadcast %cst_253 : f32 to vector<1x1xf32>
    %667 = arith.cmpf oge, %641, %666 : vector<1x1xf32>
    %668 = arith.select %667, %626, %665 : vector<1x1xi1>, vector<1x1xf32>
    %cst_254 = arith.constant 1.482600e+00 : f32
    %669 = vector.broadcast %cst_254 : f32 to vector<1x1xf32>
    %670 = arith.mulf %669, %668 : vector<1x1xf32>
    %cst_255 = arith.constant 5.000000e-01 : f32
    %671 = vector.broadcast %cst_255 : f32 to vector<1x1xf32>
    %672 = arith.mulf %670, %671 : vector<1x1xf32>
    %cst_256 = arith.constant 1.000000e+00 : f32
    %673 = vector.broadcast %cst_256 : f32 to vector<1x1xf32>
    %674 = arith.divf %673, %670 : vector<1x1xf32>
    %675 = vector.broadcast %674 : vector<1x1xf32> to vector<8x128xf32>
    %676 = arith.mulf %1, %675 : vector<8x128xf32>
    %677 = vector.broadcast %672 : vector<1x1xf32> to vector<8x128xf32>
    %678 = arith.addf %676, %677 : vector<8x128xf32>
    %679 = vector.broadcast %672 : vector<1x1xf32> to vector<8x128xf32>
    %680 = arith.subf %676, %679 : vector<8x128xf32>
    %cst_257 = arith.constant 0.707106769 : f32
    %681 = vector.broadcast %cst_257 : f32 to vector<8x128xf32>
    %682 = arith.mulf %678, %681 : vector<8x128xf32>
    %cst_258 = arith.constant 4.687500e-01 : f32
    %683 = vector.broadcast %cst_258 : f32 to vector<8x128xf32>
    %684 = arith.minimumf %682, %683 : vector<8x128xf32>
    %685 = arith.mulf %684, %684 : vector<8x128xf32>
    %cst_259 = arith.constant 0.185777709 : f32
    %686 = vector.broadcast %cst_259 : f32 to vector<8x128xf32>
    %687 = arith.mulf %686, %685 : vector<8x128xf32>
    %cst_260 = arith.constant 3.16112375 : f32
    %688 = vector.broadcast %cst_260 : f32 to vector<8x128xf32>
    %689 = arith.addf %687, %688 : vector<8x128xf32>
    %690 = arith.mulf %689, %685 : vector<8x128xf32>
    %cst_261 = arith.constant 23.6012917 : f32
    %691 = vector.broadcast %cst_261 : f32 to vector<8x128xf32>
    %692 = arith.addf %685, %691 : vector<8x128xf32>
    %693 = arith.mulf %692, %685 : vector<8x128xf32>
    %cst_262 = arith.constant 113.864151 : f32
    %694 = vector.broadcast %cst_262 : f32 to vector<8x128xf32>
    %695 = arith.addf %690, %694 : vector<8x128xf32>
    %696 = arith.mulf %695, %685 : vector<8x128xf32>
    %cst_263 = arith.constant 244.024643 : f32
    %697 = vector.broadcast %cst_263 : f32 to vector<8x128xf32>
    %698 = arith.addf %693, %697 : vector<8x128xf32>
    %699 = arith.mulf %698, %685 : vector<8x128xf32>
    %cst_264 = arith.constant 377.485229 : f32
    %700 = vector.broadcast %cst_264 : f32 to vector<8x128xf32>
    %701 = arith.addf %696, %700 : vector<8x128xf32>
    %702 = arith.mulf %701, %685 : vector<8x128xf32>
    %cst_265 = arith.constant 1282.61658 : f32
    %703 = vector.broadcast %cst_265 : f32 to vector<8x128xf32>
    %704 = arith.addf %699, %703 : vector<8x128xf32>
    %705 = arith.mulf %704, %685 : vector<8x128xf32>
    %cst_266 = arith.constant 3209.37769 : f32
    %706 = vector.broadcast %cst_266 : f32 to vector<8x128xf32>
    %707 = arith.addf %702, %706 : vector<8x128xf32>
    %708 = arith.mulf %684, %707 : vector<8x128xf32>
    %cst_267 = arith.constant 2844.23682 : f32
    %709 = vector.broadcast %cst_267 : f32 to vector<8x128xf32>
    %710 = arith.addf %705, %709 : vector<8x128xf32>
    %711 = arith.divf %708, %710 : vector<8x128xf32>
    %712 = math.exp %685 : vector<8x128xf32>
    %cst_268 = arith.constant 1.000000e+00 : f32
    %713 = vector.broadcast %cst_268 : f32 to vector<8x128xf32>
    %714 = arith.subf %713, %711 : vector<8x128xf32>
    %715 = arith.mulf %712, %714 : vector<8x128xf32>
    %cst_269 = arith.constant 4.687500e-01 : f32
    %cst_270 = arith.constant 4.000000e+00 : f32
    %716 = vector.broadcast %cst_269 : f32 to vector<8x128xf32>
    %717 = arith.maximumf %716, %682 : vector<8x128xf32>
    %718 = vector.broadcast %cst_270 : f32 to vector<8x128xf32>
    %719 = arith.minimumf %718, %717 : vector<8x128xf32>
    %cst_271 = arith.constant 2.15311537E-8 : f32
    %720 = vector.broadcast %cst_271 : f32 to vector<8x128xf32>
    %721 = arith.mulf %720, %719 : vector<8x128xf32>
    %cst_272 = arith.constant 0.56418848 : f32
    %722 = vector.broadcast %cst_272 : f32 to vector<8x128xf32>
    %723 = arith.addf %721, %722 : vector<8x128xf32>
    %724 = arith.mulf %723, %719 : vector<8x128xf32>
    %cst_273 = arith.constant 15.7449265 : f32
    %725 = vector.broadcast %cst_273 : f32 to vector<8x128xf32>
    %726 = arith.addf %719, %725 : vector<8x128xf32>
    %727 = arith.mulf %726, %719 : vector<8x128xf32>
    %cst_274 = arith.constant 8.883150e+00 : f32
    %728 = vector.broadcast %cst_274 : f32 to vector<8x128xf32>
    %729 = arith.addf %724, %728 : vector<8x128xf32>
    %730 = arith.mulf %729, %719 : vector<8x128xf32>
    %cst_275 = arith.constant 117.693954 : f32
    %731 = vector.broadcast %cst_275 : f32 to vector<8x128xf32>
    %732 = arith.addf %727, %731 : vector<8x128xf32>
    %733 = arith.mulf %732, %719 : vector<8x128xf32>
    %cst_276 = arith.constant 66.119194 : f32
    %734 = vector.broadcast %cst_276 : f32 to vector<8x128xf32>
    %735 = arith.addf %730, %734 : vector<8x128xf32>
    %736 = arith.mulf %735, %719 : vector<8x128xf32>
    %cst_277 = arith.constant 537.181091 : f32
    %737 = vector.broadcast %cst_277 : f32 to vector<8x128xf32>
    %738 = arith.addf %733, %737 : vector<8x128xf32>
    %739 = arith.mulf %738, %719 : vector<8x128xf32>
    %cst_278 = arith.constant 298.635132 : f32
    %740 = vector.broadcast %cst_278 : f32 to vector<8x128xf32>
    %741 = arith.addf %736, %740 : vector<8x128xf32>
    %742 = arith.mulf %741, %719 : vector<8x128xf32>
    %cst_279 = arith.constant 1621.38953 : f32
    %743 = vector.broadcast %cst_279 : f32 to vector<8x128xf32>
    %744 = arith.addf %739, %743 : vector<8x128xf32>
    %745 = arith.mulf %744, %719 : vector<8x128xf32>
    %cst_280 = arith.constant 881.952209 : f32
    %746 = vector.broadcast %cst_280 : f32 to vector<8x128xf32>
    %747 = arith.addf %742, %746 : vector<8x128xf32>
    %748 = arith.mulf %747, %719 : vector<8x128xf32>
    %cst_281 = arith.constant 3290.79932 : f32
    %749 = vector.broadcast %cst_281 : f32 to vector<8x128xf32>
    %750 = arith.addf %745, %749 : vector<8x128xf32>
    %751 = arith.mulf %750, %719 : vector<8x128xf32>
    %cst_282 = arith.constant 1712.04761 : f32
    %752 = vector.broadcast %cst_282 : f32 to vector<8x128xf32>
    %753 = arith.addf %748, %752 : vector<8x128xf32>
    %754 = arith.mulf %753, %719 : vector<8x128xf32>
    %cst_283 = arith.constant 4362.61914 : f32
    %755 = vector.broadcast %cst_283 : f32 to vector<8x128xf32>
    %756 = arith.addf %751, %755 : vector<8x128xf32>
    %757 = arith.mulf %756, %719 : vector<8x128xf32>
    %cst_284 = arith.constant 2051.07837 : f32
    %758 = vector.broadcast %cst_284 : f32 to vector<8x128xf32>
    %759 = arith.addf %754, %758 : vector<8x128xf32>
    %760 = arith.mulf %759, %719 : vector<8x128xf32>
    %cst_285 = arith.constant 3439.36768 : f32
    %761 = vector.broadcast %cst_285 : f32 to vector<8x128xf32>
    %762 = arith.addf %757, %761 : vector<8x128xf32>
    %763 = arith.mulf %762, %719 : vector<8x128xf32>
    %cst_286 = arith.constant 1230.33936 : f32
    %764 = vector.broadcast %cst_286 : f32 to vector<8x128xf32>
    %765 = arith.addf %760, %764 : vector<8x128xf32>
    %cst_287 = arith.constant 1230.33936 : f32
    %766 = vector.broadcast %cst_287 : f32 to vector<8x128xf32>
    %767 = arith.addf %763, %766 : vector<8x128xf32>
    %768 = arith.divf %765, %767 : vector<8x128xf32>
    %cst_288 = arith.constant 4.000000e+00 : f32
    %769 = vector.broadcast %cst_288 : f32 to vector<8x128xf32>
    %770 = arith.maximumf %682, %769 : vector<8x128xf32>
    %771 = arith.mulf %770, %770 : vector<8x128xf32>
    %cst_289 = arith.constant 1.000000e+00 : f32
    %772 = vector.broadcast %cst_289 : f32 to vector<8x128xf32>
    %773 = arith.divf %772, %771 : vector<8x128xf32>
    %cst_290 = arith.constant 0.0163153876 : f32
    %774 = vector.broadcast %cst_290 : f32 to vector<8x128xf32>
    %775 = arith.mulf %774, %773 : vector<8x128xf32>
    %cst_291 = arith.constant 0.305326641 : f32
    %776 = vector.broadcast %cst_291 : f32 to vector<8x128xf32>
    %777 = arith.addf %775, %776 : vector<8x128xf32>
    %778 = arith.mulf %777, %773 : vector<8x128xf32>
    %cst_292 = arith.constant 2.56852031 : f32
    %779 = vector.broadcast %cst_292 : f32 to vector<8x128xf32>
    %780 = arith.addf %773, %779 : vector<8x128xf32>
    %781 = arith.mulf %780, %773 : vector<8x128xf32>
    %cst_293 = arith.constant 0.360344887 : f32
    %782 = vector.broadcast %cst_293 : f32 to vector<8x128xf32>
    %783 = arith.addf %778, %782 : vector<8x128xf32>
    %784 = arith.mulf %783, %773 : vector<8x128xf32>
    %cst_294 = arith.constant 1.87295282 : f32
    %785 = vector.broadcast %cst_294 : f32 to vector<8x128xf32>
    %786 = arith.addf %781, %785 : vector<8x128xf32>
    %787 = arith.mulf %786, %773 : vector<8x128xf32>
    %cst_295 = arith.constant 0.12578173 : f32
    %788 = vector.broadcast %cst_295 : f32 to vector<8x128xf32>
    %789 = arith.addf %784, %788 : vector<8x128xf32>
    %790 = arith.mulf %789, %773 : vector<8x128xf32>
    %cst_296 = arith.constant 0.527905107 : f32
    %791 = vector.broadcast %cst_296 : f32 to vector<8x128xf32>
    %792 = arith.addf %787, %791 : vector<8x128xf32>
    %793 = arith.mulf %792, %773 : vector<8x128xf32>
    %cst_297 = arith.constant 0.0160837844 : f32
    %794 = vector.broadcast %cst_297 : f32 to vector<8x128xf32>
    %795 = arith.addf %790, %794 : vector<8x128xf32>
    %796 = arith.mulf %795, %773 : vector<8x128xf32>
    %cst_298 = arith.constant 0.060518343 : f32
    %797 = vector.broadcast %cst_298 : f32 to vector<8x128xf32>
    %798 = arith.addf %793, %797 : vector<8x128xf32>
    %799 = arith.mulf %798, %773 : vector<8x128xf32>
    %cst_299 = arith.constant 6.58749137E-4 : f32
    %800 = vector.broadcast %cst_299 : f32 to vector<8x128xf32>
    %801 = arith.addf %796, %800 : vector<8x128xf32>
    %802 = arith.mulf %773, %801 : vector<8x128xf32>
    %cst_300 = arith.constant 0.00233520498 : f32
    %803 = vector.broadcast %cst_300 : f32 to vector<8x128xf32>
    %804 = arith.addf %799, %803 : vector<8x128xf32>
    %805 = arith.divf %802, %804 : vector<8x128xf32>
    %cst_301 = arith.constant 0.564189613 : f32
    %806 = vector.broadcast %cst_301 : f32 to vector<8x128xf32>
    %807 = arith.subf %806, %805 : vector<8x128xf32>
    %808 = arith.divf %807, %770 : vector<8x128xf32>
    %cst_302 = arith.constant 4.687500e-01 : f32
    %809 = vector.broadcast %cst_302 : f32 to vector<8x128xf32>
    %810 = arith.cmpf ole, %682, %809 : vector<8x128xf32>
    %cst_303 = arith.constant 4.000000e+00 : f32
    %811 = vector.broadcast %cst_303 : f32 to vector<8x128xf32>
    %812 = arith.cmpf ole, %682, %811 : vector<8x128xf32>
    %813 = arith.select %812, %768, %808 : vector<8x128xi1>, vector<8x128xf32>
    %814 = arith.select %810, %715, %813 : vector<8x128xi1>, vector<8x128xf32>
    %cst_304 = arith.constant 1.25331414 : f32
    %815 = vector.broadcast %cst_304 : f32 to vector<8x128xf32>
    %816 = arith.mulf %815, %814 : vector<8x128xf32>
    %cst_305 = arith.constant 0.707106769 : f32
    %817 = vector.broadcast %cst_305 : f32 to vector<8x128xf32>
    %818 = arith.mulf %680, %817 : vector<8x128xf32>
    %cst_306 = arith.constant 0.000000e+00 : f32
    %819 = vector.broadcast %cst_306 : f32 to vector<8x128xf32>
    %820 = arith.subf %819, %818 : vector<8x128xf32>
    %821 = arith.mulf %820, %818 : vector<8x128xf32>
    %822 = math.exp %821 : vector<8x128xf32>
    %cst_307 = arith.constant 1.000000e+00 : f32
    %823 = vector.broadcast %cst_307 : f32 to vector<8x128xf32>
    %824 = arith.divf %823, %822 : vector<8x128xf32>
    %825 = math.absf %818 : vector<8x128xf32>
    %cst_308 = arith.constant 4.687500e-01 : f32
    %826 = vector.broadcast %cst_308 : f32 to vector<8x128xf32>
    %827 = arith.minimumf %825, %826 : vector<8x128xf32>
    %828 = arith.mulf %827, %827 : vector<8x128xf32>
    %cst_309 = arith.constant 0.185777709 : f32
    %829 = vector.broadcast %cst_309 : f32 to vector<8x128xf32>
    %830 = arith.mulf %829, %828 : vector<8x128xf32>
    %cst_310 = arith.constant 3.16112375 : f32
    %831 = vector.broadcast %cst_310 : f32 to vector<8x128xf32>
    %832 = arith.addf %830, %831 : vector<8x128xf32>
    %833 = arith.mulf %832, %828 : vector<8x128xf32>
    %cst_311 = arith.constant 23.6012917 : f32
    %834 = vector.broadcast %cst_311 : f32 to vector<8x128xf32>
    %835 = arith.addf %828, %834 : vector<8x128xf32>
    %836 = arith.mulf %835, %828 : vector<8x128xf32>
    %cst_312 = arith.constant 113.864151 : f32
    %837 = vector.broadcast %cst_312 : f32 to vector<8x128xf32>
    %838 = arith.addf %833, %837 : vector<8x128xf32>
    %839 = arith.mulf %838, %828 : vector<8x128xf32>
    %cst_313 = arith.constant 244.024643 : f32
    %840 = vector.broadcast %cst_313 : f32 to vector<8x128xf32>
    %841 = arith.addf %836, %840 : vector<8x128xf32>
    %842 = arith.mulf %841, %828 : vector<8x128xf32>
    %cst_314 = arith.constant 377.485229 : f32
    %843 = vector.broadcast %cst_314 : f32 to vector<8x128xf32>
    %844 = arith.addf %839, %843 : vector<8x128xf32>
    %845 = arith.mulf %844, %828 : vector<8x128xf32>
    %cst_315 = arith.constant 1282.61658 : f32
    %846 = vector.broadcast %cst_315 : f32 to vector<8x128xf32>
    %847 = arith.addf %842, %846 : vector<8x128xf32>
    %848 = arith.mulf %847, %828 : vector<8x128xf32>
    %cst_316 = arith.constant 3209.37769 : f32
    %849 = vector.broadcast %cst_316 : f32 to vector<8x128xf32>
    %850 = arith.addf %845, %849 : vector<8x128xf32>
    %851 = arith.mulf %827, %850 : vector<8x128xf32>
    %cst_317 = arith.constant 2844.23682 : f32
    %852 = vector.broadcast %cst_317 : f32 to vector<8x128xf32>
    %853 = arith.addf %848, %852 : vector<8x128xf32>
    %854 = arith.divf %851, %853 : vector<8x128xf32>
    %cst_318 = arith.constant 1.000000e+00 : f32
    %855 = vector.broadcast %cst_318 : f32 to vector<8x128xf32>
    %856 = arith.subf %855, %854 : vector<8x128xf32>
    %857 = arith.mulf %824, %856 : vector<8x128xf32>
    %cst_319 = arith.constant 4.687500e-01 : f32
    %cst_320 = arith.constant 4.000000e+00 : f32
    %858 = vector.broadcast %cst_319 : f32 to vector<8x128xf32>
    %859 = arith.maximumf %858, %825 : vector<8x128xf32>
    %860 = vector.broadcast %cst_320 : f32 to vector<8x128xf32>
    %861 = arith.minimumf %860, %859 : vector<8x128xf32>
    %cst_321 = arith.constant 2.15311537E-8 : f32
    %862 = vector.broadcast %cst_321 : f32 to vector<8x128xf32>
    %863 = arith.mulf %862, %861 : vector<8x128xf32>
    %cst_322 = arith.constant 0.56418848 : f32
    %864 = vector.broadcast %cst_322 : f32 to vector<8x128xf32>
    %865 = arith.addf %863, %864 : vector<8x128xf32>
    %866 = arith.mulf %865, %861 : vector<8x128xf32>
    %cst_323 = arith.constant 15.7449265 : f32
    %867 = vector.broadcast %cst_323 : f32 to vector<8x128xf32>
    %868 = arith.addf %861, %867 : vector<8x128xf32>
    %869 = arith.mulf %868, %861 : vector<8x128xf32>
    %cst_324 = arith.constant 8.883150e+00 : f32
    %870 = vector.broadcast %cst_324 : f32 to vector<8x128xf32>
    %871 = arith.addf %866, %870 : vector<8x128xf32>
    %872 = arith.mulf %871, %861 : vector<8x128xf32>
    %cst_325 = arith.constant 117.693954 : f32
    %873 = vector.broadcast %cst_325 : f32 to vector<8x128xf32>
    %874 = arith.addf %869, %873 : vector<8x128xf32>
    %875 = arith.mulf %874, %861 : vector<8x128xf32>
    %cst_326 = arith.constant 66.119194 : f32
    %876 = vector.broadcast %cst_326 : f32 to vector<8x128xf32>
    %877 = arith.addf %872, %876 : vector<8x128xf32>
    %878 = arith.mulf %877, %861 : vector<8x128xf32>
    %cst_327 = arith.constant 537.181091 : f32
    %879 = vector.broadcast %cst_327 : f32 to vector<8x128xf32>
    %880 = arith.addf %875, %879 : vector<8x128xf32>
    %881 = arith.mulf %880, %861 : vector<8x128xf32>
    %cst_328 = arith.constant 298.635132 : f32
    %882 = vector.broadcast %cst_328 : f32 to vector<8x128xf32>
    %883 = arith.addf %878, %882 : vector<8x128xf32>
    %884 = arith.mulf %883, %861 : vector<8x128xf32>
    %cst_329 = arith.constant 1621.38953 : f32
    %885 = vector.broadcast %cst_329 : f32 to vector<8x128xf32>
    %886 = arith.addf %881, %885 : vector<8x128xf32>
    %887 = arith.mulf %886, %861 : vector<8x128xf32>
    %cst_330 = arith.constant 881.952209 : f32
    %888 = vector.broadcast %cst_330 : f32 to vector<8x128xf32>
    %889 = arith.addf %884, %888 : vector<8x128xf32>
    %890 = arith.mulf %889, %861 : vector<8x128xf32>
    %cst_331 = arith.constant 3290.79932 : f32
    %891 = vector.broadcast %cst_331 : f32 to vector<8x128xf32>
    %892 = arith.addf %887, %891 : vector<8x128xf32>
    %893 = arith.mulf %892, %861 : vector<8x128xf32>
    %cst_332 = arith.constant 1712.04761 : f32
    %894 = vector.broadcast %cst_332 : f32 to vector<8x128xf32>
    %895 = arith.addf %890, %894 : vector<8x128xf32>
    %896 = arith.mulf %895, %861 : vector<8x128xf32>
    %cst_333 = arith.constant 4362.61914 : f32
    %897 = vector.broadcast %cst_333 : f32 to vector<8x128xf32>
    %898 = arith.addf %893, %897 : vector<8x128xf32>
    %899 = arith.mulf %898, %861 : vector<8x128xf32>
    %cst_334 = arith.constant 2051.07837 : f32
    %900 = vector.broadcast %cst_334 : f32 to vector<8x128xf32>
    %901 = arith.addf %896, %900 : vector<8x128xf32>
    %902 = arith.mulf %901, %861 : vector<8x128xf32>
    %cst_335 = arith.constant 3439.36768 : f32
    %903 = vector.broadcast %cst_335 : f32 to vector<8x128xf32>
    %904 = arith.addf %899, %903 : vector<8x128xf32>
    %905 = arith.mulf %904, %861 : vector<8x128xf32>
    %cst_336 = arith.constant 1230.33936 : f32
    %906 = vector.broadcast %cst_336 : f32 to vector<8x128xf32>
    %907 = arith.addf %902, %906 : vector<8x128xf32>
    %cst_337 = arith.constant 1230.33936 : f32
    %908 = vector.broadcast %cst_337 : f32 to vector<8x128xf32>
    %909 = arith.addf %905, %908 : vector<8x128xf32>
    %910 = arith.divf %907, %909 : vector<8x128xf32>
    %cst_338 = arith.constant 4.000000e+00 : f32
    %911 = vector.broadcast %cst_338 : f32 to vector<8x128xf32>
    %912 = arith.maximumf %825, %911 : vector<8x128xf32>
    %913 = arith.mulf %912, %912 : vector<8x128xf32>
    %cst_339 = arith.constant 1.000000e+00 : f32
    %914 = vector.broadcast %cst_339 : f32 to vector<8x128xf32>
    %915 = arith.divf %914, %913 : vector<8x128xf32>
    %cst_340 = arith.constant 0.0163153876 : f32
    %916 = vector.broadcast %cst_340 : f32 to vector<8x128xf32>
    %917 = arith.mulf %916, %915 : vector<8x128xf32>
    %cst_341 = arith.constant 0.305326641 : f32
    %918 = vector.broadcast %cst_341 : f32 to vector<8x128xf32>
    %919 = arith.addf %917, %918 : vector<8x128xf32>
    %920 = arith.mulf %919, %915 : vector<8x128xf32>
    %cst_342 = arith.constant 2.56852031 : f32
    %921 = vector.broadcast %cst_342 : f32 to vector<8x128xf32>
    %922 = arith.addf %915, %921 : vector<8x128xf32>
    %923 = arith.mulf %922, %915 : vector<8x128xf32>
    %cst_343 = arith.constant 0.360344887 : f32
    %924 = vector.broadcast %cst_343 : f32 to vector<8x128xf32>
    %925 = arith.addf %920, %924 : vector<8x128xf32>
    %926 = arith.mulf %925, %915 : vector<8x128xf32>
    %cst_344 = arith.constant 1.87295282 : f32
    %927 = vector.broadcast %cst_344 : f32 to vector<8x128xf32>
    %928 = arith.addf %923, %927 : vector<8x128xf32>
    %929 = arith.mulf %928, %915 : vector<8x128xf32>
    %cst_345 = arith.constant 0.12578173 : f32
    %930 = vector.broadcast %cst_345 : f32 to vector<8x128xf32>
    %931 = arith.addf %926, %930 : vector<8x128xf32>
    %932 = arith.mulf %931, %915 : vector<8x128xf32>
    %cst_346 = arith.constant 0.527905107 : f32
    %933 = vector.broadcast %cst_346 : f32 to vector<8x128xf32>
    %934 = arith.addf %929, %933 : vector<8x128xf32>
    %935 = arith.mulf %934, %915 : vector<8x128xf32>
    %cst_347 = arith.constant 0.0160837844 : f32
    %936 = vector.broadcast %cst_347 : f32 to vector<8x128xf32>
    %937 = arith.addf %932, %936 : vector<8x128xf32>
    %938 = arith.mulf %937, %915 : vector<8x128xf32>
    %cst_348 = arith.constant 0.060518343 : f32
    %939 = vector.broadcast %cst_348 : f32 to vector<8x128xf32>
    %940 = arith.addf %935, %939 : vector<8x128xf32>
    %941 = arith.mulf %940, %915 : vector<8x128xf32>
    %cst_349 = arith.constant 6.58749137E-4 : f32
    %942 = vector.broadcast %cst_349 : f32 to vector<8x128xf32>
    %943 = arith.addf %938, %942 : vector<8x128xf32>
    %944 = arith.mulf %915, %943 : vector<8x128xf32>
    %cst_350 = arith.constant 0.00233520498 : f32
    %945 = vector.broadcast %cst_350 : f32 to vector<8x128xf32>
    %946 = arith.addf %941, %945 : vector<8x128xf32>
    %947 = arith.divf %944, %946 : vector<8x128xf32>
    %cst_351 = arith.constant 0.564189613 : f32
    %948 = vector.broadcast %cst_351 : f32 to vector<8x128xf32>
    %949 = arith.subf %948, %947 : vector<8x128xf32>
    %950 = arith.divf %949, %912 : vector<8x128xf32>
    %cst_352 = arith.constant 4.687500e-01 : f32
    %951 = vector.broadcast %cst_352 : f32 to vector<8x128xf32>
    %952 = arith.cmpf ole, %825, %951 : vector<8x128xf32>
    %cst_353 = arith.constant 4.000000e+00 : f32
    %953 = vector.broadcast %cst_353 : f32 to vector<8x128xf32>
    %954 = arith.cmpf ole, %825, %953 : vector<8x128xf32>
    %955 = arith.select %954, %910, %950 : vector<8x128xi1>, vector<8x128xf32>
    %956 = arith.select %952, %857, %955 : vector<8x128xi1>, vector<8x128xf32>
    %cst_354 = arith.constant 0.398942292 : f32
    %957 = vector.broadcast %cst_354 : f32 to vector<8x128xf32>
    %958 = arith.mulf %957, %822 : vector<8x128xf32>
    %cst_355 = arith.constant 0.000000e+00 : f32
    %959 = vector.broadcast %cst_355 : f32 to vector<8x128xf32>
    %960 = arith.cmpf ole, %680, %959 : vector<8x128xf32>
    %cst_356 = arith.constant 2.000000e+00 : f32
    %961 = vector.broadcast %cst_356 : f32 to vector<8x128xf32>
    %962 = arith.mulf %961, %824 : vector<8x128xf32>
    %963 = arith.subf %962, %956 : vector<8x128xf32>
    %964 = arith.select %960, %956, %963 : vector<8x128xi1>, vector<8x128xf32>
    %cst_357 = arith.constant 1.25331414 : f32
    %965 = vector.broadcast %cst_357 : f32 to vector<8x128xf32>
    %966 = arith.mulf %965, %964 : vector<8x128xf32>
    %cst_358 = arith.constant 0.000000e+00 : f32
    %967 = vector.broadcast %cst_358 : f32 to vector<8x128xf32>
    %968 = arith.cmpf oge, %680, %967 : vector<8x128xf32>
    %cst_359 = arith.constant 5.000000e-01 : f32
    %969 = vector.broadcast %cst_359 : f32 to vector<8x128xf32>
    %970 = arith.mulf %969, %956 : vector<8x128xf32>
    %971 = arith.mulf %970, %822 : vector<8x128xf32>
    %cst_360 = arith.constant 1.000000e+00 : f32
    %972 = vector.broadcast %cst_360 : f32 to vector<8x128xf32>
    %973 = arith.subf %972, %971 : vector<8x128xf32>
    %cst_361 = arith.constant 5.000000e-01 : f32
    %974 = vector.broadcast %cst_361 : f32 to vector<8x128xf32>
    %975 = arith.mulf %974, %956 : vector<8x128xf32>
    %976 = arith.mulf %975, %822 : vector<8x128xf32>
    %977 = arith.select %968, %973, %976 : vector<8x128xi1>, vector<8x128xf32>
    %cst_362 = arith.constant 2.500000e-01 : f32
    %978 = vector.broadcast %cst_362 : f32 to vector<1x1xf32>
    %979 = arith.mulf %978, %670 : vector<1x1xf32>
    %980 = arith.addf %816, %966 : vector<8x128xf32>
    %981 = vector.broadcast %979 : vector<1x1xf32> to vector<8x128xf32>
    %982 = arith.mulf %981, %980 : vector<8x128xf32>
    %cst_363 = arith.constant 1.000000e+00 : f32
    %983 = vector.broadcast %cst_363 : f32 to vector<8x128xf32>
    %984 = arith.subf %982, %983 : vector<8x128xf32>
    %cst_364 = arith.constant 1.000000e+20 : f32
    %985 = vector.broadcast %cst_364 : f32 to vector<8x128xf32>
    %986 = arith.minimumf %984, %985 : vector<8x128xf32>
    %cst_365 = arith.constant 1.000000e+00 : f32
    %987 = vector.broadcast %cst_365 : f32 to vector<8x128xf32>
    %988 = arith.divf %987, %986 : vector<8x128xf32>
    %cst_366 = arith.constant 1.000000e+30 : f32
    %989 = vector.broadcast %cst_366 : f32 to vector<8x128xf32>
    %990 = arith.select %8, %988, %989 : vector<8x128xi1>, vector<8x128xf32>
    %cst_367 = arith.constant 3.32904291 : f32
    %991 = vector.broadcast %cst_367 : f32 to vector<1x1xf32>
    %992 = arith.addf %991, %672 : vector<1x1xf32>
    %cst_368 = arith.constant 0.707106769 : f32
    %993 = vector.broadcast %cst_368 : f32 to vector<1x1xf32>
    %994 = arith.mulf %992, %993 : vector<1x1xf32>
    %cst_369 = arith.constant 4.687500e-01 : f32
    %995 = vector.broadcast %cst_369 : f32 to vector<1x1xf32>
    %996 = arith.minimumf %994, %995 : vector<1x1xf32>
    %997 = arith.mulf %996, %996 : vector<1x1xf32>
    %cst_370 = arith.constant 0.185777709 : f32
    %998 = vector.broadcast %cst_370 : f32 to vector<1x1xf32>
    %999 = arith.mulf %998, %997 : vector<1x1xf32>
    %cst_371 = arith.constant 3.16112375 : f32
    %1000 = vector.broadcast %cst_371 : f32 to vector<1x1xf32>
    %1001 = arith.addf %999, %1000 : vector<1x1xf32>
    %1002 = arith.mulf %1001, %997 : vector<1x1xf32>
    %cst_372 = arith.constant 23.6012917 : f32
    %1003 = vector.broadcast %cst_372 : f32 to vector<1x1xf32>
    %1004 = arith.addf %997, %1003 : vector<1x1xf32>
    %1005 = arith.mulf %1004, %997 : vector<1x1xf32>
    %cst_373 = arith.constant 113.864151 : f32
    %1006 = vector.broadcast %cst_373 : f32 to vector<1x1xf32>
    %1007 = arith.addf %1002, %1006 : vector<1x1xf32>
    %1008 = arith.mulf %1007, %997 : vector<1x1xf32>
    %cst_374 = arith.constant 244.024643 : f32
    %1009 = vector.broadcast %cst_374 : f32 to vector<1x1xf32>
    %1010 = arith.addf %1005, %1009 : vector<1x1xf32>
    %1011 = arith.mulf %1010, %997 : vector<1x1xf32>
    %cst_375 = arith.constant 377.485229 : f32
    %1012 = vector.broadcast %cst_375 : f32 to vector<1x1xf32>
    %1013 = arith.addf %1008, %1012 : vector<1x1xf32>
    %1014 = arith.mulf %1013, %997 : vector<1x1xf32>
    %cst_376 = arith.constant 1282.61658 : f32
    %1015 = vector.broadcast %cst_376 : f32 to vector<1x1xf32>
    %1016 = arith.addf %1011, %1015 : vector<1x1xf32>
    %1017 = arith.mulf %1016, %997 : vector<1x1xf32>
    %cst_377 = arith.constant 3209.37769 : f32
    %1018 = vector.broadcast %cst_377 : f32 to vector<1x1xf32>
    %1019 = arith.addf %1014, %1018 : vector<1x1xf32>
    %1020 = arith.mulf %996, %1019 : vector<1x1xf32>
    %cst_378 = arith.constant 2844.23682 : f32
    %1021 = vector.broadcast %cst_378 : f32 to vector<1x1xf32>
    %1022 = arith.addf %1017, %1021 : vector<1x1xf32>
    %1023 = arith.divf %1020, %1022 : vector<1x1xf32>
    %1024 = math.exp %997 : vector<1x1xf32>
    %cst_379 = arith.constant 1.000000e+00 : f32
    %1025 = vector.broadcast %cst_379 : f32 to vector<1x1xf32>
    %1026 = arith.subf %1025, %1023 : vector<1x1xf32>
    %1027 = arith.mulf %1024, %1026 : vector<1x1xf32>
    %cst_380 = arith.constant 4.687500e-01 : f32
    %cst_381 = arith.constant 4.000000e+00 : f32
    %1028 = vector.broadcast %cst_380 : f32 to vector<1x1xf32>
    %1029 = arith.maximumf %1028, %994 : vector<1x1xf32>
    %1030 = vector.broadcast %cst_381 : f32 to vector<1x1xf32>
    %1031 = arith.minimumf %1030, %1029 : vector<1x1xf32>
    %cst_382 = arith.constant 2.15311537E-8 : f32
    %1032 = vector.broadcast %cst_382 : f32 to vector<1x1xf32>
    %1033 = arith.mulf %1032, %1031 : vector<1x1xf32>
    %cst_383 = arith.constant 0.56418848 : f32
    %1034 = vector.broadcast %cst_383 : f32 to vector<1x1xf32>
    %1035 = arith.addf %1033, %1034 : vector<1x1xf32>
    %1036 = arith.mulf %1035, %1031 : vector<1x1xf32>
    %cst_384 = arith.constant 15.7449265 : f32
    %1037 = vector.broadcast %cst_384 : f32 to vector<1x1xf32>
    %1038 = arith.addf %1031, %1037 : vector<1x1xf32>
    %1039 = arith.mulf %1038, %1031 : vector<1x1xf32>
    %cst_385 = arith.constant 8.883150e+00 : f32
    %1040 = vector.broadcast %cst_385 : f32 to vector<1x1xf32>
    %1041 = arith.addf %1036, %1040 : vector<1x1xf32>
    %1042 = arith.mulf %1041, %1031 : vector<1x1xf32>
    %cst_386 = arith.constant 117.693954 : f32
    %1043 = vector.broadcast %cst_386 : f32 to vector<1x1xf32>
    %1044 = arith.addf %1039, %1043 : vector<1x1xf32>
    %1045 = arith.mulf %1044, %1031 : vector<1x1xf32>
    %cst_387 = arith.constant 66.119194 : f32
    %1046 = vector.broadcast %cst_387 : f32 to vector<1x1xf32>
    %1047 = arith.addf %1042, %1046 : vector<1x1xf32>
    %1048 = arith.mulf %1047, %1031 : vector<1x1xf32>
    %cst_388 = arith.constant 537.181091 : f32
    %1049 = vector.broadcast %cst_388 : f32 to vector<1x1xf32>
    %1050 = arith.addf %1045, %1049 : vector<1x1xf32>
    %1051 = arith.mulf %1050, %1031 : vector<1x1xf32>
    %cst_389 = arith.constant 298.635132 : f32
    %1052 = vector.broadcast %cst_389 : f32 to vector<1x1xf32>
    %1053 = arith.addf %1048, %1052 : vector<1x1xf32>
    %1054 = arith.mulf %1053, %1031 : vector<1x1xf32>
    %cst_390 = arith.constant 1621.38953 : f32
    %1055 = vector.broadcast %cst_390 : f32 to vector<1x1xf32>
    %1056 = arith.addf %1051, %1055 : vector<1x1xf32>
    %1057 = arith.mulf %1056, %1031 : vector<1x1xf32>
    %cst_391 = arith.constant 881.952209 : f32
    %1058 = vector.broadcast %cst_391 : f32 to vector<1x1xf32>
    %1059 = arith.addf %1054, %1058 : vector<1x1xf32>
    %1060 = arith.mulf %1059, %1031 : vector<1x1xf32>
    %cst_392 = arith.constant 3290.79932 : f32
    %1061 = vector.broadcast %cst_392 : f32 to vector<1x1xf32>
    %1062 = arith.addf %1057, %1061 : vector<1x1xf32>
    %1063 = arith.mulf %1062, %1031 : vector<1x1xf32>
    %cst_393 = arith.constant 1712.04761 : f32
    %1064 = vector.broadcast %cst_393 : f32 to vector<1x1xf32>
    %1065 = arith.addf %1060, %1064 : vector<1x1xf32>
    %1066 = arith.mulf %1065, %1031 : vector<1x1xf32>
    %cst_394 = arith.constant 4362.61914 : f32
    %1067 = vector.broadcast %cst_394 : f32 to vector<1x1xf32>
    %1068 = arith.addf %1063, %1067 : vector<1x1xf32>
    %1069 = arith.mulf %1068, %1031 : vector<1x1xf32>
    %cst_395 = arith.constant 2051.07837 : f32
    %1070 = vector.broadcast %cst_395 : f32 to vector<1x1xf32>
    %1071 = arith.addf %1066, %1070 : vector<1x1xf32>
    %1072 = arith.mulf %1071, %1031 : vector<1x1xf32>
    %cst_396 = arith.constant 3439.36768 : f32
    %1073 = vector.broadcast %cst_396 : f32 to vector<1x1xf32>
    %1074 = arith.addf %1069, %1073 : vector<1x1xf32>
    %1075 = arith.mulf %1074, %1031 : vector<1x1xf32>
    %cst_397 = arith.constant 1230.33936 : f32
    %1076 = vector.broadcast %cst_397 : f32 to vector<1x1xf32>
    %1077 = arith.addf %1072, %1076 : vector<1x1xf32>
    %cst_398 = arith.constant 1230.33936 : f32
    %1078 = vector.broadcast %cst_398 : f32 to vector<1x1xf32>
    %1079 = arith.addf %1075, %1078 : vector<1x1xf32>
    %1080 = arith.divf %1077, %1079 : vector<1x1xf32>
    %cst_399 = arith.constant 4.000000e+00 : f32
    %1081 = vector.broadcast %cst_399 : f32 to vector<1x1xf32>
    %1082 = arith.maximumf %994, %1081 : vector<1x1xf32>
    %1083 = arith.mulf %1082, %1082 : vector<1x1xf32>
    %cst_400 = arith.constant 1.000000e+00 : f32
    %1084 = vector.broadcast %cst_400 : f32 to vector<1x1xf32>
    %1085 = arith.divf %1084, %1083 : vector<1x1xf32>
    %cst_401 = arith.constant 0.0163153876 : f32
    %1086 = vector.broadcast %cst_401 : f32 to vector<1x1xf32>
    %1087 = arith.mulf %1086, %1085 : vector<1x1xf32>
    %cst_402 = arith.constant 0.305326641 : f32
    %1088 = vector.broadcast %cst_402 : f32 to vector<1x1xf32>
    %1089 = arith.addf %1087, %1088 : vector<1x1xf32>
    %1090 = arith.mulf %1089, %1085 : vector<1x1xf32>
    %cst_403 = arith.constant 2.56852031 : f32
    %1091 = vector.broadcast %cst_403 : f32 to vector<1x1xf32>
    %1092 = arith.addf %1085, %1091 : vector<1x1xf32>
    %1093 = arith.mulf %1092, %1085 : vector<1x1xf32>
    %cst_404 = arith.constant 0.360344887 : f32
    %1094 = vector.broadcast %cst_404 : f32 to vector<1x1xf32>
    %1095 = arith.addf %1090, %1094 : vector<1x1xf32>
    %1096 = arith.mulf %1095, %1085 : vector<1x1xf32>
    %cst_405 = arith.constant 1.87295282 : f32
    %1097 = vector.broadcast %cst_405 : f32 to vector<1x1xf32>
    %1098 = arith.addf %1093, %1097 : vector<1x1xf32>
    %1099 = arith.mulf %1098, %1085 : vector<1x1xf32>
    %cst_406 = arith.constant 0.12578173 : f32
    %1100 = vector.broadcast %cst_406 : f32 to vector<1x1xf32>
    %1101 = arith.addf %1096, %1100 : vector<1x1xf32>
    %1102 = arith.mulf %1101, %1085 : vector<1x1xf32>
    %cst_407 = arith.constant 0.527905107 : f32
    %1103 = vector.broadcast %cst_407 : f32 to vector<1x1xf32>
    %1104 = arith.addf %1099, %1103 : vector<1x1xf32>
    %1105 = arith.mulf %1104, %1085 : vector<1x1xf32>
    %cst_408 = arith.constant 0.0160837844 : f32
    %1106 = vector.broadcast %cst_408 : f32 to vector<1x1xf32>
    %1107 = arith.addf %1102, %1106 : vector<1x1xf32>
    %1108 = arith.mulf %1107, %1085 : vector<1x1xf32>
    %cst_409 = arith.constant 0.060518343 : f32
    %1109 = vector.broadcast %cst_409 : f32 to vector<1x1xf32>
    %1110 = arith.addf %1105, %1109 : vector<1x1xf32>
    %1111 = arith.mulf %1110, %1085 : vector<1x1xf32>
    %cst_410 = arith.constant 6.58749137E-4 : f32
    %1112 = vector.broadcast %cst_410 : f32 to vector<1x1xf32>
    %1113 = arith.addf %1108, %1112 : vector<1x1xf32>
    %1114 = arith.mulf %1085, %1113 : vector<1x1xf32>
    %cst_411 = arith.constant 0.00233520498 : f32
    %1115 = vector.broadcast %cst_411 : f32 to vector<1x1xf32>
    %1116 = arith.addf %1111, %1115 : vector<1x1xf32>
    %1117 = arith.divf %1114, %1116 : vector<1x1xf32>
    %cst_412 = arith.constant 0.564189613 : f32
    %1118 = vector.broadcast %cst_412 : f32 to vector<1x1xf32>
    %1119 = arith.subf %1118, %1117 : vector<1x1xf32>
    %1120 = arith.divf %1119, %1082 : vector<1x1xf32>
    %cst_413 = arith.constant 4.687500e-01 : f32
    %1121 = vector.broadcast %cst_413 : f32 to vector<1x1xf32>
    %1122 = arith.cmpf ole, %994, %1121 : vector<1x1xf32>
    %cst_414 = arith.constant 4.000000e+00 : f32
    %1123 = vector.broadcast %cst_414 : f32 to vector<1x1xf32>
    %1124 = arith.cmpf ole, %994, %1123 : vector<1x1xf32>
    %1125 = arith.select %1124, %1080, %1120 : vector<1x1xi1>, vector<1x1xf32>
    %1126 = arith.select %1122, %1027, %1125 : vector<1x1xi1>, vector<1x1xf32>
    %cst_415 = arith.constant 1.25331414 : f32
    %1127 = vector.broadcast %cst_415 : f32 to vector<1x1xf32>
    %1128 = arith.mulf %1127, %1126 : vector<1x1xf32>
    %cst_416 = arith.constant 3.32904291 : f32
    %1129 = vector.broadcast %cst_416 : f32 to vector<1x1xf32>
    %1130 = arith.subf %1129, %672 : vector<1x1xf32>
    %cst_417 = arith.constant 0.000000e+00 : f32
    %1131 = vector.broadcast %cst_417 : f32 to vector<1x1xf32>
    %1132 = arith.subf %1131, %1130 : vector<1x1xf32>
    %cst_418 = arith.constant 0.707106769 : f32
    %1133 = vector.broadcast %cst_418 : f32 to vector<1x1xf32>
    %1134 = arith.mulf %1132, %1133 : vector<1x1xf32>
    %1135 = math.absf %1134 : vector<1x1xf32>
    %cst_419 = arith.constant 4.687500e-01 : f32
    %1136 = vector.broadcast %cst_419 : f32 to vector<1x1xf32>
    %1137 = arith.minimumf %1135, %1136 : vector<1x1xf32>
    %1138 = arith.mulf %1137, %1137 : vector<1x1xf32>
    %cst_420 = arith.constant 0.185777709 : f32
    %1139 = vector.broadcast %cst_420 : f32 to vector<1x1xf32>
    %1140 = arith.mulf %1139, %1138 : vector<1x1xf32>
    %cst_421 = arith.constant 3.16112375 : f32
    %1141 = vector.broadcast %cst_421 : f32 to vector<1x1xf32>
    %1142 = arith.addf %1140, %1141 : vector<1x1xf32>
    %1143 = arith.mulf %1142, %1138 : vector<1x1xf32>
    %cst_422 = arith.constant 23.6012917 : f32
    %1144 = vector.broadcast %cst_422 : f32 to vector<1x1xf32>
    %1145 = arith.addf %1138, %1144 : vector<1x1xf32>
    %1146 = arith.mulf %1145, %1138 : vector<1x1xf32>
    %cst_423 = arith.constant 113.864151 : f32
    %1147 = vector.broadcast %cst_423 : f32 to vector<1x1xf32>
    %1148 = arith.addf %1143, %1147 : vector<1x1xf32>
    %1149 = arith.mulf %1148, %1138 : vector<1x1xf32>
    %cst_424 = arith.constant 244.024643 : f32
    %1150 = vector.broadcast %cst_424 : f32 to vector<1x1xf32>
    %1151 = arith.addf %1146, %1150 : vector<1x1xf32>
    %1152 = arith.mulf %1151, %1138 : vector<1x1xf32>
    %cst_425 = arith.constant 377.485229 : f32
    %1153 = vector.broadcast %cst_425 : f32 to vector<1x1xf32>
    %1154 = arith.addf %1149, %1153 : vector<1x1xf32>
    %1155 = arith.mulf %1154, %1138 : vector<1x1xf32>
    %cst_426 = arith.constant 1282.61658 : f32
    %1156 = vector.broadcast %cst_426 : f32 to vector<1x1xf32>
    %1157 = arith.addf %1152, %1156 : vector<1x1xf32>
    %1158 = arith.mulf %1157, %1138 : vector<1x1xf32>
    %cst_427 = arith.constant 3209.37769 : f32
    %1159 = vector.broadcast %cst_427 : f32 to vector<1x1xf32>
    %1160 = arith.addf %1155, %1159 : vector<1x1xf32>
    %1161 = arith.mulf %1137, %1160 : vector<1x1xf32>
    %cst_428 = arith.constant 2844.23682 : f32
    %1162 = vector.broadcast %cst_428 : f32 to vector<1x1xf32>
    %1163 = arith.addf %1158, %1162 : vector<1x1xf32>
    %1164 = arith.divf %1161, %1163 : vector<1x1xf32>
    %1165 = math.exp %1138 : vector<1x1xf32>
    %cst_429 = arith.constant 1.000000e+00 : f32
    %1166 = vector.broadcast %cst_429 : f32 to vector<1x1xf32>
    %1167 = arith.subf %1166, %1164 : vector<1x1xf32>
    %1168 = arith.mulf %1165, %1167 : vector<1x1xf32>
    %cst_430 = arith.constant 4.687500e-01 : f32
    %cst_431 = arith.constant 4.000000e+00 : f32
    %1169 = vector.broadcast %cst_430 : f32 to vector<1x1xf32>
    %1170 = arith.maximumf %1169, %1135 : vector<1x1xf32>
    %1171 = vector.broadcast %cst_431 : f32 to vector<1x1xf32>
    %1172 = arith.minimumf %1171, %1170 : vector<1x1xf32>
    %cst_432 = arith.constant 2.15311537E-8 : f32
    %1173 = vector.broadcast %cst_432 : f32 to vector<1x1xf32>
    %1174 = arith.mulf %1173, %1172 : vector<1x1xf32>
    %cst_433 = arith.constant 0.56418848 : f32
    %1175 = vector.broadcast %cst_433 : f32 to vector<1x1xf32>
    %1176 = arith.addf %1174, %1175 : vector<1x1xf32>
    %1177 = arith.mulf %1176, %1172 : vector<1x1xf32>
    %cst_434 = arith.constant 15.7449265 : f32
    %1178 = vector.broadcast %cst_434 : f32 to vector<1x1xf32>
    %1179 = arith.addf %1172, %1178 : vector<1x1xf32>
    %1180 = arith.mulf %1179, %1172 : vector<1x1xf32>
    %cst_435 = arith.constant 8.883150e+00 : f32
    %1181 = vector.broadcast %cst_435 : f32 to vector<1x1xf32>
    %1182 = arith.addf %1177, %1181 : vector<1x1xf32>
    %1183 = arith.mulf %1182, %1172 : vector<1x1xf32>
    %cst_436 = arith.constant 117.693954 : f32
    %1184 = vector.broadcast %cst_436 : f32 to vector<1x1xf32>
    %1185 = arith.addf %1180, %1184 : vector<1x1xf32>
    %1186 = arith.mulf %1185, %1172 : vector<1x1xf32>
    %cst_437 = arith.constant 66.119194 : f32
    %1187 = vector.broadcast %cst_437 : f32 to vector<1x1xf32>
    %1188 = arith.addf %1183, %1187 : vector<1x1xf32>
    %1189 = arith.mulf %1188, %1172 : vector<1x1xf32>
    %cst_438 = arith.constant 537.181091 : f32
    %1190 = vector.broadcast %cst_438 : f32 to vector<1x1xf32>
    %1191 = arith.addf %1186, %1190 : vector<1x1xf32>
    %1192 = arith.mulf %1191, %1172 : vector<1x1xf32>
    %cst_439 = arith.constant 298.635132 : f32
    %1193 = vector.broadcast %cst_439 : f32 to vector<1x1xf32>
    %1194 = arith.addf %1189, %1193 : vector<1x1xf32>
    %1195 = arith.mulf %1194, %1172 : vector<1x1xf32>
    %cst_440 = arith.constant 1621.38953 : f32
    %1196 = vector.broadcast %cst_440 : f32 to vector<1x1xf32>
    %1197 = arith.addf %1192, %1196 : vector<1x1xf32>
    %1198 = arith.mulf %1197, %1172 : vector<1x1xf32>
    %cst_441 = arith.constant 881.952209 : f32
    %1199 = vector.broadcast %cst_441 : f32 to vector<1x1xf32>
    %1200 = arith.addf %1195, %1199 : vector<1x1xf32>
    %1201 = arith.mulf %1200, %1172 : vector<1x1xf32>
    %cst_442 = arith.constant 3290.79932 : f32
    %1202 = vector.broadcast %cst_442 : f32 to vector<1x1xf32>
    %1203 = arith.addf %1198, %1202 : vector<1x1xf32>
    %1204 = arith.mulf %1203, %1172 : vector<1x1xf32>
    %cst_443 = arith.constant 1712.04761 : f32
    %1205 = vector.broadcast %cst_443 : f32 to vector<1x1xf32>
    %1206 = arith.addf %1201, %1205 : vector<1x1xf32>
    %1207 = arith.mulf %1206, %1172 : vector<1x1xf32>
    %cst_444 = arith.constant 4362.61914 : f32
    %1208 = vector.broadcast %cst_444 : f32 to vector<1x1xf32>
    %1209 = arith.addf %1204, %1208 : vector<1x1xf32>
    %1210 = arith.mulf %1209, %1172 : vector<1x1xf32>
    %cst_445 = arith.constant 2051.07837 : f32
    %1211 = vector.broadcast %cst_445 : f32 to vector<1x1xf32>
    %1212 = arith.addf %1207, %1211 : vector<1x1xf32>
    %1213 = arith.mulf %1212, %1172 : vector<1x1xf32>
    %cst_446 = arith.constant 3439.36768 : f32
    %1214 = vector.broadcast %cst_446 : f32 to vector<1x1xf32>
    %1215 = arith.addf %1210, %1214 : vector<1x1xf32>
    %1216 = arith.mulf %1215, %1172 : vector<1x1xf32>
    %cst_447 = arith.constant 1230.33936 : f32
    %1217 = vector.broadcast %cst_447 : f32 to vector<1x1xf32>
    %1218 = arith.addf %1213, %1217 : vector<1x1xf32>
    %cst_448 = arith.constant 1230.33936 : f32
    %1219 = vector.broadcast %cst_448 : f32 to vector<1x1xf32>
    %1220 = arith.addf %1216, %1219 : vector<1x1xf32>
    %1221 = arith.divf %1218, %1220 : vector<1x1xf32>
    %cst_449 = arith.constant 4.000000e+00 : f32
    %1222 = vector.broadcast %cst_449 : f32 to vector<1x1xf32>
    %1223 = arith.maximumf %1135, %1222 : vector<1x1xf32>
    %1224 = arith.mulf %1223, %1223 : vector<1x1xf32>
    %cst_450 = arith.constant 1.000000e+00 : f32
    %1225 = vector.broadcast %cst_450 : f32 to vector<1x1xf32>
    %1226 = arith.divf %1225, %1224 : vector<1x1xf32>
    %cst_451 = arith.constant 0.0163153876 : f32
    %1227 = vector.broadcast %cst_451 : f32 to vector<1x1xf32>
    %1228 = arith.mulf %1227, %1226 : vector<1x1xf32>
    %cst_452 = arith.constant 0.305326641 : f32
    %1229 = vector.broadcast %cst_452 : f32 to vector<1x1xf32>
    %1230 = arith.addf %1228, %1229 : vector<1x1xf32>
    %1231 = arith.mulf %1230, %1226 : vector<1x1xf32>
    %cst_453 = arith.constant 2.56852031 : f32
    %1232 = vector.broadcast %cst_453 : f32 to vector<1x1xf32>
    %1233 = arith.addf %1226, %1232 : vector<1x1xf32>
    %1234 = arith.mulf %1233, %1226 : vector<1x1xf32>
    %cst_454 = arith.constant 0.360344887 : f32
    %1235 = vector.broadcast %cst_454 : f32 to vector<1x1xf32>
    %1236 = arith.addf %1231, %1235 : vector<1x1xf32>
    %1237 = arith.mulf %1236, %1226 : vector<1x1xf32>
    %cst_455 = arith.constant 1.87295282 : f32
    %1238 = vector.broadcast %cst_455 : f32 to vector<1x1xf32>
    %1239 = arith.addf %1234, %1238 : vector<1x1xf32>
    %1240 = arith.mulf %1239, %1226 : vector<1x1xf32>
    %cst_456 = arith.constant 0.12578173 : f32
    %1241 = vector.broadcast %cst_456 : f32 to vector<1x1xf32>
    %1242 = arith.addf %1237, %1241 : vector<1x1xf32>
    %1243 = arith.mulf %1242, %1226 : vector<1x1xf32>
    %cst_457 = arith.constant 0.527905107 : f32
    %1244 = vector.broadcast %cst_457 : f32 to vector<1x1xf32>
    %1245 = arith.addf %1240, %1244 : vector<1x1xf32>
    %1246 = arith.mulf %1245, %1226 : vector<1x1xf32>
    %cst_458 = arith.constant 0.0160837844 : f32
    %1247 = vector.broadcast %cst_458 : f32 to vector<1x1xf32>
    %1248 = arith.addf %1243, %1247 : vector<1x1xf32>
    %1249 = arith.mulf %1248, %1226 : vector<1x1xf32>
    %cst_459 = arith.constant 0.060518343 : f32
    %1250 = vector.broadcast %cst_459 : f32 to vector<1x1xf32>
    %1251 = arith.addf %1246, %1250 : vector<1x1xf32>
    %1252 = arith.mulf %1251, %1226 : vector<1x1xf32>
    %cst_460 = arith.constant 6.58749137E-4 : f32
    %1253 = vector.broadcast %cst_460 : f32 to vector<1x1xf32>
    %1254 = arith.addf %1249, %1253 : vector<1x1xf32>
    %1255 = arith.mulf %1226, %1254 : vector<1x1xf32>
    %cst_461 = arith.constant 0.00233520498 : f32
    %1256 = vector.broadcast %cst_461 : f32 to vector<1x1xf32>
    %1257 = arith.addf %1252, %1256 : vector<1x1xf32>
    %1258 = arith.divf %1255, %1257 : vector<1x1xf32>
    %cst_462 = arith.constant 0.564189613 : f32
    %1259 = vector.broadcast %cst_462 : f32 to vector<1x1xf32>
    %1260 = arith.subf %1259, %1258 : vector<1x1xf32>
    %1261 = arith.divf %1260, %1223 : vector<1x1xf32>
    %cst_463 = arith.constant 4.687500e-01 : f32
    %1262 = vector.broadcast %cst_463 : f32 to vector<1x1xf32>
    %1263 = arith.cmpf ole, %1135, %1262 : vector<1x1xf32>
    %cst_464 = arith.constant 4.000000e+00 : f32
    %1264 = vector.broadcast %cst_464 : f32 to vector<1x1xf32>
    %1265 = arith.cmpf ole, %1135, %1264 : vector<1x1xf32>
    %1266 = arith.select %1265, %1221, %1261 : vector<1x1xi1>, vector<1x1xf32>
    %1267 = arith.select %1263, %1168, %1266 : vector<1x1xi1>, vector<1x1xf32>
    %cst_465 = arith.constant 0.000000e+00 : f32
    %1268 = vector.broadcast %cst_465 : f32 to vector<1x1xf32>
    %1269 = arith.cmpf oge, %1134, %1268 : vector<1x1xf32>
    %1270 = arith.mulf %1135, %1135 : vector<1x1xf32>
    %1271 = math.exp %1270 : vector<1x1xf32>
    %cst_466 = arith.constant 2.000000e+00 : f32
    %1272 = vector.broadcast %cst_466 : f32 to vector<1x1xf32>
    %1273 = arith.mulf %1272, %1271 : vector<1x1xf32>
    %1274 = arith.subf %1273, %1267 : vector<1x1xf32>
    %1275 = arith.select %1269, %1267, %1274 : vector<1x1xi1>, vector<1x1xf32>
    %cst_467 = arith.constant 1.25331414 : f32
    %1276 = vector.broadcast %cst_467 : f32 to vector<1x1xf32>
    %1277 = arith.mulf %1276, %1275 : vector<1x1xf32>
    %cst_468 = arith.constant 2.500000e-01 : f32
    %1278 = vector.broadcast %cst_468 : f32 to vector<1x1xf32>
    %1279 = arith.mulf %1278, %670 : vector<1x1xf32>
    %1280 = arith.addf %1128, %1277 : vector<1x1xf32>
    %1281 = arith.mulf %1279, %1280 : vector<1x1xf32>
    %cst_469 = arith.constant 1.000000e+00 : f32
    %1282 = vector.broadcast %cst_469 : f32 to vector<1x1xf32>
    %1283 = arith.subf %1281, %1282 : vector<1x1xf32>
    %cst_470 = arith.constant 5.000000e-01 : f32
    %1284 = vector.broadcast %cst_470 : f32 to vector<1x1xf32>
    %1285 = arith.mulf %1284, %670 : vector<1x1xf32>
    %1286 = arith.mulf %1285, %1277 : vector<1x1xf32>
    %1287 = arith.subf %1286, %1283 : vector<1x1xf32>
    %cst_471 = arith.constant 1.000000e+00 : f32
    %1288 = vector.broadcast %cst_471 : f32 to vector<1x1xf32>
    %1289 = arith.divf %1288, %1287 : vector<1x1xf32>
    %1290 = math.log %1289 : vector<1x1xf32>
    %cst_472 = arith.constant 1.000000e+00 : f32
    %1291 = vector.broadcast %cst_472 : f32 to vector<1x1xf32>
    %1292 = vector.broadcast %1289 : vector<1x1xf32> to vector<8x128xf32>
    %1293 = arith.addf %990, %1292 : vector<8x128xf32>
    %cst_473 = arith.constant 1.000000e+00 : f32
    %1294 = vector.broadcast %cst_473 : f32 to vector<8x128xf32>
    %1295 = arith.divf %1294, %1293 : vector<8x128xf32>
    %cst_474 = arith.constant dense<0.000000e+00> : vector<128xf32>
    %1296 = vector.multi_reduction <add>, %1295, %cst_474 [0] : vector<8x128xf32> to vector<128xf32>
    %1297 = vector.shape_cast %1296 : vector<128xf32> to vector<1x128xf32>
    %cst_475 = arith.constant dense<0.000000e+00> : vector<1xf32>
    %1298 = vector.multi_reduction <add>, %1297, %cst_475 [1] : vector<1x128xf32> to vector<1xf32>
    %1299 = vector.shape_cast %1298 : vector<1xf32> to vector<1x1xf32>
    %cst_476 = arith.constant 0.000000e+00 : f32
    %1300 = vector.broadcast %cst_476 : f32 to vector<1x1xf32>
    %1301 = arith.cmpf ogt, %1299, %1300 : vector<1x1xf32>
    %1302 = arith.maximumf %1289, %1289 : vector<1x1xf32>
    %1303 = arith.select %1301, %1302, %1289 : vector<1x1xi1>, vector<1x1xf32>
    %cst_477 = arith.constant 0.000000e+00 : f32
    %1304 = vector.broadcast %cst_477 : f32 to vector<1x1xf32>
    %1305 = arith.cmpf ole, %1299, %1304 : vector<1x1xf32>
    %1306 = arith.minimumf %1291, %1289 : vector<1x1xf32>
    %1307 = arith.select %1305, %1306, %1291 : vector<1x1xi1>, vector<1x1xf32>
    %cst_478 = arith.constant 9.687500e-01 : f32
    %1308 = vector.broadcast %cst_478 : f32 to vector<1x1xf32>
    %1309 = arith.mulf %1290, %1308 : vector<1x1xf32>
    %1310 = math.exp %1309 : vector<1x1xf32>
    %1311 = vector.broadcast %1310 : vector<1x1xf32> to vector<8x128xf32>
    %1312 = arith.addf %990, %1311 : vector<8x128xf32>
    %1313 = math.absf %1312 : vector<8x128xf32>
    %1314 = tpu.reciprocal %1313 {approx = true} : vector<8x128xf32> -> vector<8x128xf32>
    %cst_479 = arith.constant 0.000000e+00 : f32
    %1315 = vector.broadcast %cst_479 : f32 to vector<8x128xf32>
    %1316 = arith.cmpf olt, %1312, %1315 : vector<8x128xf32>
    %cst_480 = arith.constant 0.000000e+00 : f32
    %1317 = vector.broadcast %cst_480 : f32 to vector<8x128xf32>
    %1318 = arith.subf %1317, %1314 : vector<8x128xf32>
    %1319 = arith.select %1316, %1318, %1314 : vector<8x128xi1>, vector<8x128xf32>
    %cst_481 = arith.constant dense<0.000000e+00> : vector<128xf32>
    %1320 = vector.multi_reduction <add>, %1319, %cst_481 [0] : vector<8x128xf32> to vector<128xf32>
    %1321 = vector.shape_cast %1320 : vector<128xf32> to vector<1x128xf32>
    %cst_482 = arith.constant dense<0.000000e+00> : vector<1xf32>
    %1322 = vector.multi_reduction <add>, %1321, %cst_482 [1] : vector<1x128xf32> to vector<1xf32>
    %1323 = vector.shape_cast %1322 : vector<1xf32> to vector<1x1xf32>
    %cst_483 = arith.constant 0.000000e+00 : f32
    %1324 = vector.broadcast %cst_483 : f32 to vector<1x1xf32>
    %1325 = arith.cmpf ogt, %1323, %1324 : vector<1x1xf32>
    %1326 = arith.maximumf %1303, %1310 : vector<1x1xf32>
    %1327 = arith.select %1325, %1326, %1303 : vector<1x1xi1>, vector<1x1xf32>
    %cst_484 = arith.constant 0.000000e+00 : f32
    %1328 = vector.broadcast %cst_484 : f32 to vector<1x1xf32>
    %1329 = arith.cmpf ole, %1323, %1328 : vector<1x1xf32>
    %1330 = arith.minimumf %1307, %1310 : vector<1x1xf32>
    %1331 = arith.select %1329, %1330, %1307 : vector<1x1xi1>, vector<1x1xf32>
    %cst_485 = arith.constant 9.375000e-01 : f32
    %1332 = vector.broadcast %cst_485 : f32 to vector<1x1xf32>
    %1333 = arith.mulf %1290, %1332 : vector<1x1xf32>
    %1334 = math.exp %1333 : vector<1x1xf32>
    %1335 = vector.broadcast %1334 : vector<1x1xf32> to vector<8x128xf32>
    %1336 = arith.addf %990, %1335 : vector<8x128xf32>
    %1337 = math.absf %1336 : vector<8x128xf32>
    %1338 = tpu.reciprocal %1337 {approx = true} : vector<8x128xf32> -> vector<8x128xf32>
    %cst_486 = arith.constant 0.000000e+00 : f32
    %1339 = vector.broadcast %cst_486 : f32 to vector<8x128xf32>
    %1340 = arith.cmpf olt, %1336, %1339 : vector<8x128xf32>
    %cst_487 = arith.constant 0.000000e+00 : f32
    %1341 = vector.broadcast %cst_487 : f32 to vector<8x128xf32>
    %1342 = arith.subf %1341, %1338 : vector<8x128xf32>
    %1343 = arith.select %1340, %1342, %1338 : vector<8x128xi1>, vector<8x128xf32>
    %cst_488 = arith.constant dense<0.000000e+00> : vector<128xf32>
    %1344 = vector.multi_reduction <add>, %1343, %cst_488 [0] : vector<8x128xf32> to vector<128xf32>
    %1345 = vector.shape_cast %1344 : vector<128xf32> to vector<1x128xf32>
    %cst_489 = arith.constant dense<0.000000e+00> : vector<1xf32>
    %1346 = vector.multi_reduction <add>, %1345, %cst_489 [1] : vector<1x128xf32> to vector<1xf32>
    %1347 = vector.shape_cast %1346 : vector<1xf32> to vector<1x1xf32>
    %cst_490 = arith.constant 0.000000e+00 : f32
    %1348 = vector.broadcast %cst_490 : f32 to vector<1x1xf32>
    %1349 = arith.cmpf ogt, %1347, %1348 : vector<1x1xf32>
    %1350 = arith.maximumf %1327, %1334 : vector<1x1xf32>
    %1351 = arith.select %1349, %1350, %1327 : vector<1x1xi1>, vector<1x1xf32>
    %cst_491 = arith.constant 0.000000e+00 : f32
    %1352 = vector.broadcast %cst_491 : f32 to vector<1x1xf32>
    %1353 = arith.cmpf ole, %1347, %1352 : vector<1x1xf32>
    %1354 = arith.minimumf %1331, %1334 : vector<1x1xf32>
    %1355 = arith.select %1353, %1354, %1331 : vector<1x1xi1>, vector<1x1xf32>
    %cst_492 = arith.constant 9.062500e-01 : f32
    %1356 = vector.broadcast %cst_492 : f32 to vector<1x1xf32>
    %1357 = arith.mulf %1290, %1356 : vector<1x1xf32>
    %1358 = math.exp %1357 : vector<1x1xf32>
    %1359 = vector.broadcast %1358 : vector<1x1xf32> to vector<8x128xf32>
    %1360 = arith.addf %990, %1359 : vector<8x128xf32>
    %1361 = math.absf %1360 : vector<8x128xf32>
    %1362 = tpu.reciprocal %1361 {approx = true} : vector<8x128xf32> -> vector<8x128xf32>
    %cst_493 = arith.constant 0.000000e+00 : f32
    %1363 = vector.broadcast %cst_493 : f32 to vector<8x128xf32>
    %1364 = arith.cmpf olt, %1360, %1363 : vector<8x128xf32>
    %cst_494 = arith.constant 0.000000e+00 : f32
    %1365 = vector.broadcast %cst_494 : f32 to vector<8x128xf32>
    %1366 = arith.subf %1365, %1362 : vector<8x128xf32>
    %1367 = arith.select %1364, %1366, %1362 : vector<8x128xi1>, vector<8x128xf32>
    %cst_495 = arith.constant dense<0.000000e+00> : vector<128xf32>
    %1368 = vector.multi_reduction <add>, %1367, %cst_495 [0] : vector<8x128xf32> to vector<128xf32>
    %1369 = vector.shape_cast %1368 : vector<128xf32> to vector<1x128xf32>
    %cst_496 = arith.constant dense<0.000000e+00> : vector<1xf32>
    %1370 = vector.multi_reduction <add>, %1369, %cst_496 [1] : vector<1x128xf32> to vector<1xf32>
    %1371 = vector.shape_cast %1370 : vector<1xf32> to vector<1x1xf32>
    %cst_497 = arith.constant 0.000000e+00 : f32
    %1372 = vector.broadcast %cst_497 : f32 to vector<1x1xf32>
    %1373 = arith.cmpf ogt, %1371, %1372 : vector<1x1xf32>
    %1374 = arith.maximumf %1351, %1358 : vector<1x1xf32>
    %1375 = arith.select %1373, %1374, %1351 : vector<1x1xi1>, vector<1x1xf32>
    %cst_498 = arith.constant 0.000000e+00 : f32
    %1376 = vector.broadcast %cst_498 : f32 to vector<1x1xf32>
    %1377 = arith.cmpf ole, %1371, %1376 : vector<1x1xf32>
    %1378 = arith.minimumf %1355, %1358 : vector<1x1xf32>
    %1379 = arith.select %1377, %1378, %1355 : vector<1x1xi1>, vector<1x1xf32>
    %cst_499 = arith.constant 8.750000e-01 : f32
    %1380 = vector.broadcast %cst_499 : f32 to vector<1x1xf32>
    %1381 = arith.mulf %1290, %1380 : vector<1x1xf32>
    %1382 = math.exp %1381 : vector<1x1xf32>
    %1383 = vector.broadcast %1382 : vector<1x1xf32> to vector<8x128xf32>
    %1384 = arith.addf %990, %1383 : vector<8x128xf32>
    %1385 = math.absf %1384 : vector<8x128xf32>
    %1386 = tpu.reciprocal %1385 {approx = true} : vector<8x128xf32> -> vector<8x128xf32>
    %cst_500 = arith.constant 0.000000e+00 : f32
    %1387 = vector.broadcast %cst_500 : f32 to vector<8x128xf32>
    %1388 = arith.cmpf olt, %1384, %1387 : vector<8x128xf32>
    %cst_501 = arith.constant 0.000000e+00 : f32
    %1389 = vector.broadcast %cst_501 : f32 to vector<8x128xf32>
    %1390 = arith.subf %1389, %1386 : vector<8x128xf32>
    %1391 = arith.select %1388, %1390, %1386 : vector<8x128xi1>, vector<8x128xf32>
    %cst_502 = arith.constant dense<0.000000e+00> : vector<128xf32>
    %1392 = vector.multi_reduction <add>, %1391, %cst_502 [0] : vector<8x128xf32> to vector<128xf32>
    %1393 = vector.shape_cast %1392 : vector<128xf32> to vector<1x128xf32>
    %cst_503 = arith.constant dense<0.000000e+00> : vector<1xf32>
    %1394 = vector.multi_reduction <add>, %1393, %cst_503 [1] : vector<1x128xf32> to vector<1xf32>
    %1395 = vector.shape_cast %1394 : vector<1xf32> to vector<1x1xf32>
    %cst_504 = arith.constant 0.000000e+00 : f32
    %1396 = vector.broadcast %cst_504 : f32 to vector<1x1xf32>
    %1397 = arith.cmpf ogt, %1395, %1396 : vector<1x1xf32>
    %1398 = arith.maximumf %1375, %1382 : vector<1x1xf32>
    %1399 = arith.select %1397, %1398, %1375 : vector<1x1xi1>, vector<1x1xf32>
    %cst_505 = arith.constant 0.000000e+00 : f32
    %1400 = vector.broadcast %cst_505 : f32 to vector<1x1xf32>
    %1401 = arith.cmpf ole, %1395, %1400 : vector<1x1xf32>
    %1402 = arith.minimumf %1379, %1382 : vector<1x1xf32>
    %1403 = arith.select %1401, %1402, %1379 : vector<1x1xi1>, vector<1x1xf32>
    %cst_506 = arith.constant 8.437500e-01 : f32
    %1404 = vector.broadcast %cst_506 : f32 to vector<1x1xf32>
    %1405 = arith.mulf %1290, %1404 : vector<1x1xf32>
    %1406 = math.exp %1405 : vector<1x1xf32>
    %1407 = vector.broadcast %1406 : vector<1x1xf32> to vector<8x128xf32>
    %1408 = arith.addf %990, %1407 : vector<8x128xf32>
    %1409 = math.absf %1408 : vector<8x128xf32>
    %1410 = tpu.reciprocal %1409 {approx = true} : vector<8x128xf32> -> vector<8x128xf32>
    %cst_507 = arith.constant 0.000000e+00 : f32
    %1411 = vector.broadcast %cst_507 : f32 to vector<8x128xf32>
    %1412 = arith.cmpf olt, %1408, %1411 : vector<8x128xf32>
    %cst_508 = arith.constant 0.000000e+00 : f32
    %1413 = vector.broadcast %cst_508 : f32 to vector<8x128xf32>
    %1414 = arith.subf %1413, %1410 : vector<8x128xf32>
    %1415 = arith.select %1412, %1414, %1410 : vector<8x128xi1>, vector<8x128xf32>
    %cst_509 = arith.constant dense<0.000000e+00> : vector<128xf32>
    %1416 = vector.multi_reduction <add>, %1415, %cst_509 [0] : vector<8x128xf32> to vector<128xf32>
    %1417 = vector.shape_cast %1416 : vector<128xf32> to vector<1x128xf32>
    %cst_510 = arith.constant dense<0.000000e+00> : vector<1xf32>
    %1418 = vector.multi_reduction <add>, %1417, %cst_510 [1] : vector<1x128xf32> to vector<1xf32>
    %1419 = vector.shape_cast %1418 : vector<1xf32> to vector<1x1xf32>
    %cst_511 = arith.constant 0.000000e+00 : f32
    %1420 = vector.broadcast %cst_511 : f32 to vector<1x1xf32>
    %1421 = arith.cmpf ogt, %1419, %1420 : vector<1x1xf32>
    %1422 = arith.maximumf %1399, %1406 : vector<1x1xf32>
    %1423 = arith.select %1421, %1422, %1399 : vector<1x1xi1>, vector<1x1xf32>
    %cst_512 = arith.constant 0.000000e+00 : f32
    %1424 = vector.broadcast %cst_512 : f32 to vector<1x1xf32>
    %1425 = arith.cmpf ole, %1419, %1424 : vector<1x1xf32>
    %1426 = arith.minimumf %1403, %1406 : vector<1x1xf32>
    %1427 = arith.select %1425, %1426, %1403 : vector<1x1xi1>, vector<1x1xf32>
    %cst_513 = arith.constant 8.125000e-01 : f32
    %1428 = vector.broadcast %cst_513 : f32 to vector<1x1xf32>
    %1429 = arith.mulf %1290, %1428 : vector<1x1xf32>
    %1430 = math.exp %1429 : vector<1x1xf32>
    %1431 = vector.broadcast %1430 : vector<1x1xf32> to vector<8x128xf32>
    %1432 = arith.addf %990, %1431 : vector<8x128xf32>
    %1433 = math.absf %1432 : vector<8x128xf32>
    %1434 = tpu.reciprocal %1433 {approx = true} : vector<8x128xf32> -> vector<8x128xf32>
    %cst_514 = arith.constant 0.000000e+00 : f32
    %1435 = vector.broadcast %cst_514 : f32 to vector<8x128xf32>
    %1436 = arith.cmpf olt, %1432, %1435 : vector<8x128xf32>
    %cst_515 = arith.constant 0.000000e+00 : f32
    %1437 = vector.broadcast %cst_515 : f32 to vector<8x128xf32>
    %1438 = arith.subf %1437, %1434 : vector<8x128xf32>
    %1439 = arith.select %1436, %1438, %1434 : vector<8x128xi1>, vector<8x128xf32>
    %cst_516 = arith.constant dense<0.000000e+00> : vector<128xf32>
    %1440 = vector.multi_reduction <add>, %1439, %cst_516 [0] : vector<8x128xf32> to vector<128xf32>
    %1441 = vector.shape_cast %1440 : vector<128xf32> to vector<1x128xf32>
    %cst_517 = arith.constant dense<0.000000e+00> : vector<1xf32>
    %1442 = vector.multi_reduction <add>, %1441, %cst_517 [1] : vector<1x128xf32> to vector<1xf32>
    %1443 = vector.shape_cast %1442 : vector<1xf32> to vector<1x1xf32>
    %cst_518 = arith.constant 0.000000e+00 : f32
    %1444 = vector.broadcast %cst_518 : f32 to vector<1x1xf32>
    %1445 = arith.cmpf ogt, %1443, %1444 : vector<1x1xf32>
    %1446 = arith.maximumf %1423, %1430 : vector<1x1xf32>
    %1447 = arith.select %1445, %1446, %1423 : vector<1x1xi1>, vector<1x1xf32>
    %cst_519 = arith.constant 0.000000e+00 : f32
    %1448 = vector.broadcast %cst_519 : f32 to vector<1x1xf32>
    %1449 = arith.cmpf ole, %1443, %1448 : vector<1x1xf32>
    %1450 = arith.minimumf %1427, %1430 : vector<1x1xf32>
    %1451 = arith.select %1449, %1450, %1427 : vector<1x1xi1>, vector<1x1xf32>
    %cst_520 = arith.constant 7.812500e-01 : f32
    %1452 = vector.broadcast %cst_520 : f32 to vector<1x1xf32>
    %1453 = arith.mulf %1290, %1452 : vector<1x1xf32>
    %1454 = math.exp %1453 : vector<1x1xf32>
    %1455 = vector.broadcast %1454 : vector<1x1xf32> to vector<8x128xf32>
    %1456 = arith.addf %990, %1455 : vector<8x128xf32>
    %1457 = math.absf %1456 : vector<8x128xf32>
    %1458 = tpu.reciprocal %1457 {approx = true} : vector<8x128xf32> -> vector<8x128xf32>
    %cst_521 = arith.constant 0.000000e+00 : f32
    %1459 = vector.broadcast %cst_521 : f32 to vector<8x128xf32>
    %1460 = arith.cmpf olt, %1456, %1459 : vector<8x128xf32>
    %cst_522 = arith.constant 0.000000e+00 : f32
    %1461 = vector.broadcast %cst_522 : f32 to vector<8x128xf32>
    %1462 = arith.subf %1461, %1458 : vector<8x128xf32>
    %1463 = arith.select %1460, %1462, %1458 : vector<8x128xi1>, vector<8x128xf32>
    %cst_523 = arith.constant dense<0.000000e+00> : vector<128xf32>
    %1464 = vector.multi_reduction <add>, %1463, %cst_523 [0] : vector<8x128xf32> to vector<128xf32>
    %1465 = vector.shape_cast %1464 : vector<128xf32> to vector<1x128xf32>
    %cst_524 = arith.constant dense<0.000000e+00> : vector<1xf32>
    %1466 = vector.multi_reduction <add>, %1465, %cst_524 [1] : vector<1x128xf32> to vector<1xf32>
    %1467 = vector.shape_cast %1466 : vector<1xf32> to vector<1x1xf32>
    %cst_525 = arith.constant 0.000000e+00 : f32
    %1468 = vector.broadcast %cst_525 : f32 to vector<1x1xf32>
    %1469 = arith.cmpf ogt, %1467, %1468 : vector<1x1xf32>
    %1470 = arith.maximumf %1447, %1454 : vector<1x1xf32>
    %1471 = arith.select %1469, %1470, %1447 : vector<1x1xi1>, vector<1x1xf32>
    %cst_526 = arith.constant 0.000000e+00 : f32
    %1472 = vector.broadcast %cst_526 : f32 to vector<1x1xf32>
    %1473 = arith.cmpf ole, %1467, %1472 : vector<1x1xf32>
    %1474 = arith.minimumf %1451, %1454 : vector<1x1xf32>
    %1475 = arith.select %1473, %1474, %1451 : vector<1x1xi1>, vector<1x1xf32>
    %cst_527 = arith.constant 7.500000e-01 : f32
    %1476 = vector.broadcast %cst_527 : f32 to vector<1x1xf32>
    %1477 = arith.mulf %1290, %1476 : vector<1x1xf32>
    %1478 = math.exp %1477 : vector<1x1xf32>
    %1479 = vector.broadcast %1478 : vector<1x1xf32> to vector<8x128xf32>
    %1480 = arith.addf %990, %1479 : vector<8x128xf32>
    %1481 = math.absf %1480 : vector<8x128xf32>
    %1482 = tpu.reciprocal %1481 {approx = true} : vector<8x128xf32> -> vector<8x128xf32>
    %cst_528 = arith.constant 0.000000e+00 : f32
    %1483 = vector.broadcast %cst_528 : f32 to vector<8x128xf32>
    %1484 = arith.cmpf olt, %1480, %1483 : vector<8x128xf32>
    %cst_529 = arith.constant 0.000000e+00 : f32
    %1485 = vector.broadcast %cst_529 : f32 to vector<8x128xf32>
    %1486 = arith.subf %1485, %1482 : vector<8x128xf32>
    %1487 = arith.select %1484, %1486, %1482 : vector<8x128xi1>, vector<8x128xf32>
    %cst_530 = arith.constant dense<0.000000e+00> : vector<128xf32>
    %1488 = vector.multi_reduction <add>, %1487, %cst_530 [0] : vector<8x128xf32> to vector<128xf32>
    %1489 = vector.shape_cast %1488 : vector<128xf32> to vector<1x128xf32>
    %cst_531 = arith.constant dense<0.000000e+00> : vector<1xf32>
    %1490 = vector.multi_reduction <add>, %1489, %cst_531 [1] : vector<1x128xf32> to vector<1xf32>
    %1491 = vector.shape_cast %1490 : vector<1xf32> to vector<1x1xf32>
    %cst_532 = arith.constant 0.000000e+00 : f32
    %1492 = vector.broadcast %cst_532 : f32 to vector<1x1xf32>
    %1493 = arith.cmpf ogt, %1491, %1492 : vector<1x1xf32>
    %1494 = arith.maximumf %1471, %1478 : vector<1x1xf32>
    %1495 = arith.select %1493, %1494, %1471 : vector<1x1xi1>, vector<1x1xf32>
    %cst_533 = arith.constant 0.000000e+00 : f32
    %1496 = vector.broadcast %cst_533 : f32 to vector<1x1xf32>
    %1497 = arith.cmpf ole, %1491, %1496 : vector<1x1xf32>
    %1498 = arith.minimumf %1475, %1478 : vector<1x1xf32>
    %1499 = arith.select %1497, %1498, %1475 : vector<1x1xi1>, vector<1x1xf32>
    %cst_534 = arith.constant 7.187500e-01 : f32
    %1500 = vector.broadcast %cst_534 : f32 to vector<1x1xf32>
    %1501 = arith.mulf %1290, %1500 : vector<1x1xf32>
    %1502 = math.exp %1501 : vector<1x1xf32>
    %1503 = vector.broadcast %1502 : vector<1x1xf32> to vector<8x128xf32>
    %1504 = arith.addf %990, %1503 : vector<8x128xf32>
    %1505 = math.absf %1504 : vector<8x128xf32>
    %1506 = tpu.reciprocal %1505 {approx = true} : vector<8x128xf32> -> vector<8x128xf32>
    %cst_535 = arith.constant 0.000000e+00 : f32
    %1507 = vector.broadcast %cst_535 : f32 to vector<8x128xf32>
    %1508 = arith.cmpf olt, %1504, %1507 : vector<8x128xf32>
    %cst_536 = arith.constant 0.000000e+00 : f32
    %1509 = vector.broadcast %cst_536 : f32 to vector<8x128xf32>
    %1510 = arith.subf %1509, %1506 : vector<8x128xf32>
    %1511 = arith.select %1508, %1510, %1506 : vector<8x128xi1>, vector<8x128xf32>
    %cst_537 = arith.constant dense<0.000000e+00> : vector<128xf32>
    %1512 = vector.multi_reduction <add>, %1511, %cst_537 [0] : vector<8x128xf32> to vector<128xf32>
    %1513 = vector.shape_cast %1512 : vector<128xf32> to vector<1x128xf32>
    %cst_538 = arith.constant dense<0.000000e+00> : vector<1xf32>
    %1514 = vector.multi_reduction <add>, %1513, %cst_538 [1] : vector<1x128xf32> to vector<1xf32>
    %1515 = vector.shape_cast %1514 : vector<1xf32> to vector<1x1xf32>
    %cst_539 = arith.constant 0.000000e+00 : f32
    %1516 = vector.broadcast %cst_539 : f32 to vector<1x1xf32>
    %1517 = arith.cmpf ogt, %1515, %1516 : vector<1x1xf32>
    %1518 = arith.maximumf %1495, %1502 : vector<1x1xf32>
    %1519 = arith.select %1517, %1518, %1495 : vector<1x1xi1>, vector<1x1xf32>
    %cst_540 = arith.constant 0.000000e+00 : f32
    %1520 = vector.broadcast %cst_540 : f32 to vector<1x1xf32>
    %1521 = arith.cmpf ole, %1515, %1520 : vector<1x1xf32>
    %1522 = arith.minimumf %1499, %1502 : vector<1x1xf32>
    %1523 = arith.select %1521, %1522, %1499 : vector<1x1xi1>, vector<1x1xf32>
    %cst_541 = arith.constant 6.875000e-01 : f32
    %1524 = vector.broadcast %cst_541 : f32 to vector<1x1xf32>
    %1525 = arith.mulf %1290, %1524 : vector<1x1xf32>
    %1526 = math.exp %1525 : vector<1x1xf32>
    %1527 = vector.broadcast %1526 : vector<1x1xf32> to vector<8x128xf32>
    %1528 = arith.addf %990, %1527 : vector<8x128xf32>
    %1529 = math.absf %1528 : vector<8x128xf32>
    %1530 = tpu.reciprocal %1529 {approx = true} : vector<8x128xf32> -> vector<8x128xf32>
    %cst_542 = arith.constant 0.000000e+00 : f32
    %1531 = vector.broadcast %cst_542 : f32 to vector<8x128xf32>
    %1532 = arith.cmpf olt, %1528, %1531 : vector<8x128xf32>
    %cst_543 = arith.constant 0.000000e+00 : f32
    %1533 = vector.broadcast %cst_543 : f32 to vector<8x128xf32>
    %1534 = arith.subf %1533, %1530 : vector<8x128xf32>
    %1535 = arith.select %1532, %1534, %1530 : vector<8x128xi1>, vector<8x128xf32>
    %cst_544 = arith.constant dense<0.000000e+00> : vector<128xf32>
    %1536 = vector.multi_reduction <add>, %1535, %cst_544 [0] : vector<8x128xf32> to vector<128xf32>
    %1537 = vector.shape_cast %1536 : vector<128xf32> to vector<1x128xf32>
    %cst_545 = arith.constant dense<0.000000e+00> : vector<1xf32>
    %1538 = vector.multi_reduction <add>, %1537, %cst_545 [1] : vector<1x128xf32> to vector<1xf32>
    %1539 = vector.shape_cast %1538 : vector<1xf32> to vector<1x1xf32>
    %cst_546 = arith.constant 0.000000e+00 : f32
    %1540 = vector.broadcast %cst_546 : f32 to vector<1x1xf32>
    %1541 = arith.cmpf ogt, %1539, %1540 : vector<1x1xf32>
    %1542 = arith.maximumf %1519, %1526 : vector<1x1xf32>
    %1543 = arith.select %1541, %1542, %1519 : vector<1x1xi1>, vector<1x1xf32>
    %cst_547 = arith.constant 0.000000e+00 : f32
    %1544 = vector.broadcast %cst_547 : f32 to vector<1x1xf32>
    %1545 = arith.cmpf ole, %1539, %1544 : vector<1x1xf32>
    %1546 = arith.minimumf %1523, %1526 : vector<1x1xf32>
    %1547 = arith.select %1545, %1546, %1523 : vector<1x1xi1>, vector<1x1xf32>
    %cst_548 = arith.constant 6.562500e-01 : f32
    %1548 = vector.broadcast %cst_548 : f32 to vector<1x1xf32>
    %1549 = arith.mulf %1290, %1548 : vector<1x1xf32>
    %1550 = math.exp %1549 : vector<1x1xf32>
    %1551 = vector.broadcast %1550 : vector<1x1xf32> to vector<8x128xf32>
    %1552 = arith.addf %990, %1551 : vector<8x128xf32>
    %1553 = math.absf %1552 : vector<8x128xf32>
    %1554 = tpu.reciprocal %1553 {approx = true} : vector<8x128xf32> -> vector<8x128xf32>
    %cst_549 = arith.constant 0.000000e+00 : f32
    %1555 = vector.broadcast %cst_549 : f32 to vector<8x128xf32>
    %1556 = arith.cmpf olt, %1552, %1555 : vector<8x128xf32>
    %cst_550 = arith.constant 0.000000e+00 : f32
    %1557 = vector.broadcast %cst_550 : f32 to vector<8x128xf32>
    %1558 = arith.subf %1557, %1554 : vector<8x128xf32>
    %1559 = arith.select %1556, %1558, %1554 : vector<8x128xi1>, vector<8x128xf32>
    %cst_551 = arith.constant dense<0.000000e+00> : vector<128xf32>
    %1560 = vector.multi_reduction <add>, %1559, %cst_551 [0] : vector<8x128xf32> to vector<128xf32>
    %1561 = vector.shape_cast %1560 : vector<128xf32> to vector<1x128xf32>
    %cst_552 = arith.constant dense<0.000000e+00> : vector<1xf32>
    %1562 = vector.multi_reduction <add>, %1561, %cst_552 [1] : vector<1x128xf32> to vector<1xf32>
    %1563 = vector.shape_cast %1562 : vector<1xf32> to vector<1x1xf32>
    %cst_553 = arith.constant 0.000000e+00 : f32
    %1564 = vector.broadcast %cst_553 : f32 to vector<1x1xf32>
    %1565 = arith.cmpf ogt, %1563, %1564 : vector<1x1xf32>
    %1566 = arith.maximumf %1543, %1550 : vector<1x1xf32>
    %1567 = arith.select %1565, %1566, %1543 : vector<1x1xi1>, vector<1x1xf32>
    %cst_554 = arith.constant 0.000000e+00 : f32
    %1568 = vector.broadcast %cst_554 : f32 to vector<1x1xf32>
    %1569 = arith.cmpf ole, %1563, %1568 : vector<1x1xf32>
    %1570 = arith.minimumf %1547, %1550 : vector<1x1xf32>
    %1571 = arith.select %1569, %1570, %1547 : vector<1x1xi1>, vector<1x1xf32>
    %cst_555 = arith.constant 6.250000e-01 : f32
    %1572 = vector.broadcast %cst_555 : f32 to vector<1x1xf32>
    %1573 = arith.mulf %1290, %1572 : vector<1x1xf32>
    %1574 = math.exp %1573 : vector<1x1xf32>
    %1575 = vector.broadcast %1574 : vector<1x1xf32> to vector<8x128xf32>
    %1576 = arith.addf %990, %1575 : vector<8x128xf32>
    %1577 = math.absf %1576 : vector<8x128xf32>
    %1578 = tpu.reciprocal %1577 {approx = true} : vector<8x128xf32> -> vector<8x128xf32>
    %cst_556 = arith.constant 0.000000e+00 : f32
    %1579 = vector.broadcast %cst_556 : f32 to vector<8x128xf32>
    %1580 = arith.cmpf olt, %1576, %1579 : vector<8x128xf32>
    %cst_557 = arith.constant 0.000000e+00 : f32
    %1581 = vector.broadcast %cst_557 : f32 to vector<8x128xf32>
    %1582 = arith.subf %1581, %1578 : vector<8x128xf32>
    %1583 = arith.select %1580, %1582, %1578 : vector<8x128xi1>, vector<8x128xf32>
    %cst_558 = arith.constant dense<0.000000e+00> : vector<128xf32>
    %1584 = vector.multi_reduction <add>, %1583, %cst_558 [0] : vector<8x128xf32> to vector<128xf32>
    %1585 = vector.shape_cast %1584 : vector<128xf32> to vector<1x128xf32>
    %cst_559 = arith.constant dense<0.000000e+00> : vector<1xf32>
    %1586 = vector.multi_reduction <add>, %1585, %cst_559 [1] : vector<1x128xf32> to vector<1xf32>
    %1587 = vector.shape_cast %1586 : vector<1xf32> to vector<1x1xf32>
    %cst_560 = arith.constant 0.000000e+00 : f32
    %1588 = vector.broadcast %cst_560 : f32 to vector<1x1xf32>
    %1589 = arith.cmpf ogt, %1587, %1588 : vector<1x1xf32>
    %1590 = arith.maximumf %1567, %1574 : vector<1x1xf32>
    %1591 = arith.select %1589, %1590, %1567 : vector<1x1xi1>, vector<1x1xf32>
    %cst_561 = arith.constant 0.000000e+00 : f32
    %1592 = vector.broadcast %cst_561 : f32 to vector<1x1xf32>
    %1593 = arith.cmpf ole, %1587, %1592 : vector<1x1xf32>
    %1594 = arith.minimumf %1571, %1574 : vector<1x1xf32>
    %1595 = arith.select %1593, %1594, %1571 : vector<1x1xi1>, vector<1x1xf32>
    %cst_562 = arith.constant 5.937500e-01 : f32
    %1596 = vector.broadcast %cst_562 : f32 to vector<1x1xf32>
    %1597 = arith.mulf %1290, %1596 : vector<1x1xf32>
    %1598 = math.exp %1597 : vector<1x1xf32>
    %1599 = vector.broadcast %1598 : vector<1x1xf32> to vector<8x128xf32>
    %1600 = arith.addf %990, %1599 : vector<8x128xf32>
    %1601 = math.absf %1600 : vector<8x128xf32>
    %1602 = tpu.reciprocal %1601 {approx = true} : vector<8x128xf32> -> vector<8x128xf32>
    %cst_563 = arith.constant 0.000000e+00 : f32
    %1603 = vector.broadcast %cst_563 : f32 to vector<8x128xf32>
    %1604 = arith.cmpf olt, %1600, %1603 : vector<8x128xf32>
    %cst_564 = arith.constant 0.000000e+00 : f32
    %1605 = vector.broadcast %cst_564 : f32 to vector<8x128xf32>
    %1606 = arith.subf %1605, %1602 : vector<8x128xf32>
    %1607 = arith.select %1604, %1606, %1602 : vector<8x128xi1>, vector<8x128xf32>
    %cst_565 = arith.constant dense<0.000000e+00> : vector<128xf32>
    %1608 = vector.multi_reduction <add>, %1607, %cst_565 [0] : vector<8x128xf32> to vector<128xf32>
    %1609 = vector.shape_cast %1608 : vector<128xf32> to vector<1x128xf32>
    %cst_566 = arith.constant dense<0.000000e+00> : vector<1xf32>
    %1610 = vector.multi_reduction <add>, %1609, %cst_566 [1] : vector<1x128xf32> to vector<1xf32>
    %1611 = vector.shape_cast %1610 : vector<1xf32> to vector<1x1xf32>
    %cst_567 = arith.constant 0.000000e+00 : f32
    %1612 = vector.broadcast %cst_567 : f32 to vector<1x1xf32>
    %1613 = arith.cmpf ogt, %1611, %1612 : vector<1x1xf32>
    %1614 = arith.maximumf %1591, %1598 : vector<1x1xf32>
    %1615 = arith.select %1613, %1614, %1591 : vector<1x1xi1>, vector<1x1xf32>
    %cst_568 = arith.constant 0.000000e+00 : f32
    %1616 = vector.broadcast %cst_568 : f32 to vector<1x1xf32>
    %1617 = arith.cmpf ole, %1611, %1616 : vector<1x1xf32>
    %1618 = arith.minimumf %1595, %1598 : vector<1x1xf32>
    %1619 = arith.select %1617, %1618, %1595 : vector<1x1xi1>, vector<1x1xf32>
    %cst_569 = arith.constant 5.625000e-01 : f32
    %1620 = vector.broadcast %cst_569 : f32 to vector<1x1xf32>
    %1621 = arith.mulf %1290, %1620 : vector<1x1xf32>
    %1622 = math.exp %1621 : vector<1x1xf32>
    %1623 = vector.broadcast %1622 : vector<1x1xf32> to vector<8x128xf32>
    %1624 = arith.addf %990, %1623 : vector<8x128xf32>
    %1625 = math.absf %1624 : vector<8x128xf32>
    %1626 = tpu.reciprocal %1625 {approx = true} : vector<8x128xf32> -> vector<8x128xf32>
    %cst_570 = arith.constant 0.000000e+00 : f32
    %1627 = vector.broadcast %cst_570 : f32 to vector<8x128xf32>
    %1628 = arith.cmpf olt, %1624, %1627 : vector<8x128xf32>
    %cst_571 = arith.constant 0.000000e+00 : f32
    %1629 = vector.broadcast %cst_571 : f32 to vector<8x128xf32>
    %1630 = arith.subf %1629, %1626 : vector<8x128xf32>
    %1631 = arith.select %1628, %1630, %1626 : vector<8x128xi1>, vector<8x128xf32>
    %cst_572 = arith.constant dense<0.000000e+00> : vector<128xf32>
    %1632 = vector.multi_reduction <add>, %1631, %cst_572 [0] : vector<8x128xf32> to vector<128xf32>
    %1633 = vector.shape_cast %1632 : vector<128xf32> to vector<1x128xf32>
    %cst_573 = arith.constant dense<0.000000e+00> : vector<1xf32>
    %1634 = vector.multi_reduction <add>, %1633, %cst_573 [1] : vector<1x128xf32> to vector<1xf32>
    %1635 = vector.shape_cast %1634 : vector<1xf32> to vector<1x1xf32>
    %cst_574 = arith.constant 0.000000e+00 : f32
    %1636 = vector.broadcast %cst_574 : f32 to vector<1x1xf32>
    %1637 = arith.cmpf ogt, %1635, %1636 : vector<1x1xf32>
    %1638 = arith.maximumf %1615, %1622 : vector<1x1xf32>
    %1639 = arith.select %1637, %1638, %1615 : vector<1x1xi1>, vector<1x1xf32>
    %cst_575 = arith.constant 0.000000e+00 : f32
    %1640 = vector.broadcast %cst_575 : f32 to vector<1x1xf32>
    %1641 = arith.cmpf ole, %1635, %1640 : vector<1x1xf32>
    %1642 = arith.minimumf %1619, %1622 : vector<1x1xf32>
    %1643 = arith.select %1641, %1642, %1619 : vector<1x1xi1>, vector<1x1xf32>
    %cst_576 = arith.constant 5.312500e-01 : f32
    %1644 = vector.broadcast %cst_576 : f32 to vector<1x1xf32>
    %1645 = arith.mulf %1290, %1644 : vector<1x1xf32>
    %1646 = math.exp %1645 : vector<1x1xf32>
    %1647 = vector.broadcast %1646 : vector<1x1xf32> to vector<8x128xf32>
    %1648 = arith.addf %990, %1647 : vector<8x128xf32>
    %1649 = math.absf %1648 : vector<8x128xf32>
    %1650 = tpu.reciprocal %1649 {approx = true} : vector<8x128xf32> -> vector<8x128xf32>
    %cst_577 = arith.constant 0.000000e+00 : f32
    %1651 = vector.broadcast %cst_577 : f32 to vector<8x128xf32>
    %1652 = arith.cmpf olt, %1648, %1651 : vector<8x128xf32>
    %cst_578 = arith.constant 0.000000e+00 : f32
    %1653 = vector.broadcast %cst_578 : f32 to vector<8x128xf32>
    %1654 = arith.subf %1653, %1650 : vector<8x128xf32>
    %1655 = arith.select %1652, %1654, %1650 : vector<8x128xi1>, vector<8x128xf32>
    %cst_579 = arith.constant dense<0.000000e+00> : vector<128xf32>
    %1656 = vector.multi_reduction <add>, %1655, %cst_579 [0] : vector<8x128xf32> to vector<128xf32>
    %1657 = vector.shape_cast %1656 : vector<128xf32> to vector<1x128xf32>
    %cst_580 = arith.constant dense<0.000000e+00> : vector<1xf32>
    %1658 = vector.multi_reduction <add>, %1657, %cst_580 [1] : vector<1x128xf32> to vector<1xf32>
    %1659 = vector.shape_cast %1658 : vector<1xf32> to vector<1x1xf32>
    %cst_581 = arith.constant 0.000000e+00 : f32
    %1660 = vector.broadcast %cst_581 : f32 to vector<1x1xf32>
    %1661 = arith.cmpf ogt, %1659, %1660 : vector<1x1xf32>
    %1662 = arith.maximumf %1639, %1646 : vector<1x1xf32>
    %1663 = arith.select %1661, %1662, %1639 : vector<1x1xi1>, vector<1x1xf32>
    %cst_582 = arith.constant 0.000000e+00 : f32
    %1664 = vector.broadcast %cst_582 : f32 to vector<1x1xf32>
    %1665 = arith.cmpf ole, %1659, %1664 : vector<1x1xf32>
    %1666 = arith.minimumf %1643, %1646 : vector<1x1xf32>
    %1667 = arith.select %1665, %1666, %1643 : vector<1x1xi1>, vector<1x1xf32>
    %cst_583 = arith.constant 5.000000e-01 : f32
    %1668 = vector.broadcast %cst_583 : f32 to vector<1x1xf32>
    %1669 = arith.mulf %1290, %1668 : vector<1x1xf32>
    %1670 = math.exp %1669 : vector<1x1xf32>
    %1671 = vector.broadcast %1670 : vector<1x1xf32> to vector<8x128xf32>
    %1672 = arith.addf %990, %1671 : vector<8x128xf32>
    %1673 = math.absf %1672 : vector<8x128xf32>
    %1674 = tpu.reciprocal %1673 {approx = true} : vector<8x128xf32> -> vector<8x128xf32>
    %cst_584 = arith.constant 0.000000e+00 : f32
    %1675 = vector.broadcast %cst_584 : f32 to vector<8x128xf32>
    %1676 = arith.cmpf olt, %1672, %1675 : vector<8x128xf32>
    %cst_585 = arith.constant 0.000000e+00 : f32
    %1677 = vector.broadcast %cst_585 : f32 to vector<8x128xf32>
    %1678 = arith.subf %1677, %1674 : vector<8x128xf32>
    %1679 = arith.select %1676, %1678, %1674 : vector<8x128xi1>, vector<8x128xf32>
    %cst_586 = arith.constant dense<0.000000e+00> : vector<128xf32>
    %1680 = vector.multi_reduction <add>, %1679, %cst_586 [0] : vector<8x128xf32> to vector<128xf32>
    %1681 = vector.shape_cast %1680 : vector<128xf32> to vector<1x128xf32>
    %cst_587 = arith.constant dense<0.000000e+00> : vector<1xf32>
    %1682 = vector.multi_reduction <add>, %1681, %cst_587 [1] : vector<1x128xf32> to vector<1xf32>
    %1683 = vector.shape_cast %1682 : vector<1xf32> to vector<1x1xf32>
    %cst_588 = arith.constant 0.000000e+00 : f32
    %1684 = vector.broadcast %cst_588 : f32 to vector<1x1xf32>
    %1685 = arith.cmpf ogt, %1683, %1684 : vector<1x1xf32>
    %1686 = arith.maximumf %1663, %1670 : vector<1x1xf32>
    %1687 = arith.select %1685, %1686, %1663 : vector<1x1xi1>, vector<1x1xf32>
    %cst_589 = arith.constant 0.000000e+00 : f32
    %1688 = vector.broadcast %cst_589 : f32 to vector<1x1xf32>
    %1689 = arith.cmpf ole, %1683, %1688 : vector<1x1xf32>
    %1690 = arith.minimumf %1667, %1670 : vector<1x1xf32>
    %1691 = arith.select %1689, %1690, %1667 : vector<1x1xi1>, vector<1x1xf32>
    %cst_590 = arith.constant 4.687500e-01 : f32
    %1692 = vector.broadcast %cst_590 : f32 to vector<1x1xf32>
    %1693 = arith.mulf %1290, %1692 : vector<1x1xf32>
    %1694 = math.exp %1693 : vector<1x1xf32>
    %1695 = vector.broadcast %1694 : vector<1x1xf32> to vector<8x128xf32>
    %1696 = arith.addf %990, %1695 : vector<8x128xf32>
    %1697 = math.absf %1696 : vector<8x128xf32>
    %1698 = tpu.reciprocal %1697 {approx = true} : vector<8x128xf32> -> vector<8x128xf32>
    %cst_591 = arith.constant 0.000000e+00 : f32
    %1699 = vector.broadcast %cst_591 : f32 to vector<8x128xf32>
    %1700 = arith.cmpf olt, %1696, %1699 : vector<8x128xf32>
    %cst_592 = arith.constant 0.000000e+00 : f32
    %1701 = vector.broadcast %cst_592 : f32 to vector<8x128xf32>
    %1702 = arith.subf %1701, %1698 : vector<8x128xf32>
    %1703 = arith.select %1700, %1702, %1698 : vector<8x128xi1>, vector<8x128xf32>
    %cst_593 = arith.constant dense<0.000000e+00> : vector<128xf32>
    %1704 = vector.multi_reduction <add>, %1703, %cst_593 [0] : vector<8x128xf32> to vector<128xf32>
    %1705 = vector.shape_cast %1704 : vector<128xf32> to vector<1x128xf32>
    %cst_594 = arith.constant dense<0.000000e+00> : vector<1xf32>
    %1706 = vector.multi_reduction <add>, %1705, %cst_594 [1] : vector<1x128xf32> to vector<1xf32>
    %1707 = vector.shape_cast %1706 : vector<1xf32> to vector<1x1xf32>
    %cst_595 = arith.constant 0.000000e+00 : f32
    %1708 = vector.broadcast %cst_595 : f32 to vector<1x1xf32>
    %1709 = arith.cmpf ogt, %1707, %1708 : vector<1x1xf32>
    %1710 = arith.maximumf %1687, %1694 : vector<1x1xf32>
    %1711 = arith.select %1709, %1710, %1687 : vector<1x1xi1>, vector<1x1xf32>
    %cst_596 = arith.constant 0.000000e+00 : f32
    %1712 = vector.broadcast %cst_596 : f32 to vector<1x1xf32>
    %1713 = arith.cmpf ole, %1707, %1712 : vector<1x1xf32>
    %1714 = arith.minimumf %1691, %1694 : vector<1x1xf32>
    %1715 = arith.select %1713, %1714, %1691 : vector<1x1xi1>, vector<1x1xf32>
    %cst_597 = arith.constant 4.375000e-01 : f32
    %1716 = vector.broadcast %cst_597 : f32 to vector<1x1xf32>
    %1717 = arith.mulf %1290, %1716 : vector<1x1xf32>
    %1718 = math.exp %1717 : vector<1x1xf32>
    %1719 = vector.broadcast %1718 : vector<1x1xf32> to vector<8x128xf32>
    %1720 = arith.addf %990, %1719 : vector<8x128xf32>
    %1721 = math.absf %1720 : vector<8x128xf32>
    %1722 = tpu.reciprocal %1721 {approx = true} : vector<8x128xf32> -> vector<8x128xf32>
    %cst_598 = arith.constant 0.000000e+00 : f32
    %1723 = vector.broadcast %cst_598 : f32 to vector<8x128xf32>
    %1724 = arith.cmpf olt, %1720, %1723 : vector<8x128xf32>
    %cst_599 = arith.constant 0.000000e+00 : f32
    %1725 = vector.broadcast %cst_599 : f32 to vector<8x128xf32>
    %1726 = arith.subf %1725, %1722 : vector<8x128xf32>
    %1727 = arith.select %1724, %1726, %1722 : vector<8x128xi1>, vector<8x128xf32>
    %cst_600 = arith.constant dense<0.000000e+00> : vector<128xf32>
    %1728 = vector.multi_reduction <add>, %1727, %cst_600 [0] : vector<8x128xf32> to vector<128xf32>
    %1729 = vector.shape_cast %1728 : vector<128xf32> to vector<1x128xf32>
    %cst_601 = arith.constant dense<0.000000e+00> : vector<1xf32>
    %1730 = vector.multi_reduction <add>, %1729, %cst_601 [1] : vector<1x128xf32> to vector<1xf32>
    %1731 = vector.shape_cast %1730 : vector<1xf32> to vector<1x1xf32>
    %cst_602 = arith.constant 0.000000e+00 : f32
    %1732 = vector.broadcast %cst_602 : f32 to vector<1x1xf32>
    %1733 = arith.cmpf ogt, %1731, %1732 : vector<1x1xf32>
    %1734 = arith.maximumf %1711, %1718 : vector<1x1xf32>
    %1735 = arith.select %1733, %1734, %1711 : vector<1x1xi1>, vector<1x1xf32>
    %cst_603 = arith.constant 0.000000e+00 : f32
    %1736 = vector.broadcast %cst_603 : f32 to vector<1x1xf32>
    %1737 = arith.cmpf ole, %1731, %1736 : vector<1x1xf32>
    %1738 = arith.minimumf %1715, %1718 : vector<1x1xf32>
    %1739 = arith.select %1737, %1738, %1715 : vector<1x1xi1>, vector<1x1xf32>
    %cst_604 = arith.constant 4.062500e-01 : f32
    %1740 = vector.broadcast %cst_604 : f32 to vector<1x1xf32>
    %1741 = arith.mulf %1290, %1740 : vector<1x1xf32>
    %1742 = math.exp %1741 : vector<1x1xf32>
    %1743 = vector.broadcast %1742 : vector<1x1xf32> to vector<8x128xf32>
    %1744 = arith.addf %990, %1743 : vector<8x128xf32>
    %1745 = math.absf %1744 : vector<8x128xf32>
    %1746 = tpu.reciprocal %1745 {approx = true} : vector<8x128xf32> -> vector<8x128xf32>
    %cst_605 = arith.constant 0.000000e+00 : f32
    %1747 = vector.broadcast %cst_605 : f32 to vector<8x128xf32>
    %1748 = arith.cmpf olt, %1744, %1747 : vector<8x128xf32>
    %cst_606 = arith.constant 0.000000e+00 : f32
    %1749 = vector.broadcast %cst_606 : f32 to vector<8x128xf32>
    %1750 = arith.subf %1749, %1746 : vector<8x128xf32>
    %1751 = arith.select %1748, %1750, %1746 : vector<8x128xi1>, vector<8x128xf32>
    %cst_607 = arith.constant dense<0.000000e+00> : vector<128xf32>
    %1752 = vector.multi_reduction <add>, %1751, %cst_607 [0] : vector<8x128xf32> to vector<128xf32>
    %1753 = vector.shape_cast %1752 : vector<128xf32> to vector<1x128xf32>
    %cst_608 = arith.constant dense<0.000000e+00> : vector<1xf32>
    %1754 = vector.multi_reduction <add>, %1753, %cst_608 [1] : vector<1x128xf32> to vector<1xf32>
    %1755 = vector.shape_cast %1754 : vector<1xf32> to vector<1x1xf32>
    %cst_609 = arith.constant 0.000000e+00 : f32
    %1756 = vector.broadcast %cst_609 : f32 to vector<1x1xf32>
    %1757 = arith.cmpf ogt, %1755, %1756 : vector<1x1xf32>
    %1758 = arith.maximumf %1735, %1742 : vector<1x1xf32>
    %1759 = arith.select %1757, %1758, %1735 : vector<1x1xi1>, vector<1x1xf32>
    %cst_610 = arith.constant 0.000000e+00 : f32
    %1760 = vector.broadcast %cst_610 : f32 to vector<1x1xf32>
    %1761 = arith.cmpf ole, %1755, %1760 : vector<1x1xf32>
    %1762 = arith.minimumf %1739, %1742 : vector<1x1xf32>
    %1763 = arith.select %1761, %1762, %1739 : vector<1x1xi1>, vector<1x1xf32>
    %cst_611 = arith.constant 3.750000e-01 : f32
    %1764 = vector.broadcast %cst_611 : f32 to vector<1x1xf32>
    %1765 = arith.mulf %1290, %1764 : vector<1x1xf32>
    %1766 = math.exp %1765 : vector<1x1xf32>
    %1767 = vector.broadcast %1766 : vector<1x1xf32> to vector<8x128xf32>
    %1768 = arith.addf %990, %1767 : vector<8x128xf32>
    %1769 = math.absf %1768 : vector<8x128xf32>
    %1770 = tpu.reciprocal %1769 {approx = true} : vector<8x128xf32> -> vector<8x128xf32>
    %cst_612 = arith.constant 0.000000e+00 : f32
    %1771 = vector.broadcast %cst_612 : f32 to vector<8x128xf32>
    %1772 = arith.cmpf olt, %1768, %1771 : vector<8x128xf32>
    %cst_613 = arith.constant 0.000000e+00 : f32
    %1773 = vector.broadcast %cst_613 : f32 to vector<8x128xf32>
    %1774 = arith.subf %1773, %1770 : vector<8x128xf32>
    %1775 = arith.select %1772, %1774, %1770 : vector<8x128xi1>, vector<8x128xf32>
    %cst_614 = arith.constant dense<0.000000e+00> : vector<128xf32>
    %1776 = vector.multi_reduction <add>, %1775, %cst_614 [0] : vector<8x128xf32> to vector<128xf32>
    %1777 = vector.shape_cast %1776 : vector<128xf32> to vector<1x128xf32>
    %cst_615 = arith.constant dense<0.000000e+00> : vector<1xf32>
    %1778 = vector.multi_reduction <add>, %1777, %cst_615 [1] : vector<1x128xf32> to vector<1xf32>
    %1779 = vector.shape_cast %1778 : vector<1xf32> to vector<1x1xf32>
    %cst_616 = arith.constant 0.000000e+00 : f32
    %1780 = vector.broadcast %cst_616 : f32 to vector<1x1xf32>
    %1781 = arith.cmpf ogt, %1779, %1780 : vector<1x1xf32>
    %1782 = arith.maximumf %1759, %1766 : vector<1x1xf32>
    %1783 = arith.select %1781, %1782, %1759 : vector<1x1xi1>, vector<1x1xf32>
    %cst_617 = arith.constant 0.000000e+00 : f32
    %1784 = vector.broadcast %cst_617 : f32 to vector<1x1xf32>
    %1785 = arith.cmpf ole, %1779, %1784 : vector<1x1xf32>
    %1786 = arith.minimumf %1763, %1766 : vector<1x1xf32>
    %1787 = arith.select %1785, %1786, %1763 : vector<1x1xi1>, vector<1x1xf32>
    %cst_618 = arith.constant 3.437500e-01 : f32
    %1788 = vector.broadcast %cst_618 : f32 to vector<1x1xf32>
    %1789 = arith.mulf %1290, %1788 : vector<1x1xf32>
    %1790 = math.exp %1789 : vector<1x1xf32>
    %1791 = vector.broadcast %1790 : vector<1x1xf32> to vector<8x128xf32>
    %1792 = arith.addf %990, %1791 : vector<8x128xf32>
    %1793 = math.absf %1792 : vector<8x128xf32>
    %1794 = tpu.reciprocal %1793 {approx = true} : vector<8x128xf32> -> vector<8x128xf32>
    %cst_619 = arith.constant 0.000000e+00 : f32
    %1795 = vector.broadcast %cst_619 : f32 to vector<8x128xf32>
    %1796 = arith.cmpf olt, %1792, %1795 : vector<8x128xf32>
    %cst_620 = arith.constant 0.000000e+00 : f32
    %1797 = vector.broadcast %cst_620 : f32 to vector<8x128xf32>
    %1798 = arith.subf %1797, %1794 : vector<8x128xf32>
    %1799 = arith.select %1796, %1798, %1794 : vector<8x128xi1>, vector<8x128xf32>
    %cst_621 = arith.constant dense<0.000000e+00> : vector<128xf32>
    %1800 = vector.multi_reduction <add>, %1799, %cst_621 [0] : vector<8x128xf32> to vector<128xf32>
    %1801 = vector.shape_cast %1800 : vector<128xf32> to vector<1x128xf32>
    %cst_622 = arith.constant dense<0.000000e+00> : vector<1xf32>
    %1802 = vector.multi_reduction <add>, %1801, %cst_622 [1] : vector<1x128xf32> to vector<1xf32>
    %1803 = vector.shape_cast %1802 : vector<1xf32> to vector<1x1xf32>
    %cst_623 = arith.constant 0.000000e+00 : f32
    %1804 = vector.broadcast %cst_623 : f32 to vector<1x1xf32>
    %1805 = arith.cmpf ogt, %1803, %1804 : vector<1x1xf32>
    %1806 = arith.maximumf %1783, %1790 : vector<1x1xf32>
    %1807 = arith.select %1805, %1806, %1783 : vector<1x1xi1>, vector<1x1xf32>
    %cst_624 = arith.constant 0.000000e+00 : f32
    %1808 = vector.broadcast %cst_624 : f32 to vector<1x1xf32>
    %1809 = arith.cmpf ole, %1803, %1808 : vector<1x1xf32>
    %1810 = arith.minimumf %1787, %1790 : vector<1x1xf32>
    %1811 = arith.select %1809, %1810, %1787 : vector<1x1xi1>, vector<1x1xf32>
    %cst_625 = arith.constant 3.125000e-01 : f32
    %1812 = vector.broadcast %cst_625 : f32 to vector<1x1xf32>
    %1813 = arith.mulf %1290, %1812 : vector<1x1xf32>
    %1814 = math.exp %1813 : vector<1x1xf32>
    %1815 = vector.broadcast %1814 : vector<1x1xf32> to vector<8x128xf32>
    %1816 = arith.addf %990, %1815 : vector<8x128xf32>
    %1817 = math.absf %1816 : vector<8x128xf32>
    %1818 = tpu.reciprocal %1817 {approx = true} : vector<8x128xf32> -> vector<8x128xf32>
    %cst_626 = arith.constant 0.000000e+00 : f32
    %1819 = vector.broadcast %cst_626 : f32 to vector<8x128xf32>
    %1820 = arith.cmpf olt, %1816, %1819 : vector<8x128xf32>
    %cst_627 = arith.constant 0.000000e+00 : f32
    %1821 = vector.broadcast %cst_627 : f32 to vector<8x128xf32>
    %1822 = arith.subf %1821, %1818 : vector<8x128xf32>
    %1823 = arith.select %1820, %1822, %1818 : vector<8x128xi1>, vector<8x128xf32>
    %cst_628 = arith.constant dense<0.000000e+00> : vector<128xf32>
    %1824 = vector.multi_reduction <add>, %1823, %cst_628 [0] : vector<8x128xf32> to vector<128xf32>
    %1825 = vector.shape_cast %1824 : vector<128xf32> to vector<1x128xf32>
    %cst_629 = arith.constant dense<0.000000e+00> : vector<1xf32>
    %1826 = vector.multi_reduction <add>, %1825, %cst_629 [1] : vector<1x128xf32> to vector<1xf32>
    %1827 = vector.shape_cast %1826 : vector<1xf32> to vector<1x1xf32>
    %cst_630 = arith.constant 0.000000e+00 : f32
    %1828 = vector.broadcast %cst_630 : f32 to vector<1x1xf32>
    %1829 = arith.cmpf ogt, %1827, %1828 : vector<1x1xf32>
    %1830 = arith.maximumf %1807, %1814 : vector<1x1xf32>
    %1831 = arith.select %1829, %1830, %1807 : vector<1x1xi1>, vector<1x1xf32>
    %cst_631 = arith.constant 0.000000e+00 : f32
    %1832 = vector.broadcast %cst_631 : f32 to vector<1x1xf32>
    %1833 = arith.cmpf ole, %1827, %1832 : vector<1x1xf32>
    %1834 = arith.minimumf %1811, %1814 : vector<1x1xf32>
    %1835 = arith.select %1833, %1834, %1811 : vector<1x1xi1>, vector<1x1xf32>
    %cst_632 = arith.constant 2.812500e-01 : f32
    %1836 = vector.broadcast %cst_632 : f32 to vector<1x1xf32>
    %1837 = arith.mulf %1290, %1836 : vector<1x1xf32>
    %1838 = math.exp %1837 : vector<1x1xf32>
    %1839 = vector.broadcast %1838 : vector<1x1xf32> to vector<8x128xf32>
    %1840 = arith.addf %990, %1839 : vector<8x128xf32>
    %1841 = math.absf %1840 : vector<8x128xf32>
    %1842 = tpu.reciprocal %1841 {approx = true} : vector<8x128xf32> -> vector<8x128xf32>
    %cst_633 = arith.constant 0.000000e+00 : f32
    %1843 = vector.broadcast %cst_633 : f32 to vector<8x128xf32>
    %1844 = arith.cmpf olt, %1840, %1843 : vector<8x128xf32>
    %cst_634 = arith.constant 0.000000e+00 : f32
    %1845 = vector.broadcast %cst_634 : f32 to vector<8x128xf32>
    %1846 = arith.subf %1845, %1842 : vector<8x128xf32>
    %1847 = arith.select %1844, %1846, %1842 : vector<8x128xi1>, vector<8x128xf32>
    %cst_635 = arith.constant dense<0.000000e+00> : vector<128xf32>
    %1848 = vector.multi_reduction <add>, %1847, %cst_635 [0] : vector<8x128xf32> to vector<128xf32>
    %1849 = vector.shape_cast %1848 : vector<128xf32> to vector<1x128xf32>
    %cst_636 = arith.constant dense<0.000000e+00> : vector<1xf32>
    %1850 = vector.multi_reduction <add>, %1849, %cst_636 [1] : vector<1x128xf32> to vector<1xf32>
    %1851 = vector.shape_cast %1850 : vector<1xf32> to vector<1x1xf32>
    %cst_637 = arith.constant 0.000000e+00 : f32
    %1852 = vector.broadcast %cst_637 : f32 to vector<1x1xf32>
    %1853 = arith.cmpf ogt, %1851, %1852 : vector<1x1xf32>
    %1854 = arith.maximumf %1831, %1838 : vector<1x1xf32>
    %1855 = arith.select %1853, %1854, %1831 : vector<1x1xi1>, vector<1x1xf32>
    %cst_638 = arith.constant 0.000000e+00 : f32
    %1856 = vector.broadcast %cst_638 : f32 to vector<1x1xf32>
    %1857 = arith.cmpf ole, %1851, %1856 : vector<1x1xf32>
    %1858 = arith.minimumf %1835, %1838 : vector<1x1xf32>
    %1859 = arith.select %1857, %1858, %1835 : vector<1x1xi1>, vector<1x1xf32>
    %cst_639 = arith.constant 2.500000e-01 : f32
    %1860 = vector.broadcast %cst_639 : f32 to vector<1x1xf32>
    %1861 = arith.mulf %1290, %1860 : vector<1x1xf32>
    %1862 = math.exp %1861 : vector<1x1xf32>
    %1863 = vector.broadcast %1862 : vector<1x1xf32> to vector<8x128xf32>
    %1864 = arith.addf %990, %1863 : vector<8x128xf32>
    %1865 = math.absf %1864 : vector<8x128xf32>
    %1866 = tpu.reciprocal %1865 {approx = true} : vector<8x128xf32> -> vector<8x128xf32>
    %cst_640 = arith.constant 0.000000e+00 : f32
    %1867 = vector.broadcast %cst_640 : f32 to vector<8x128xf32>
    %1868 = arith.cmpf olt, %1864, %1867 : vector<8x128xf32>
    %cst_641 = arith.constant 0.000000e+00 : f32
    %1869 = vector.broadcast %cst_641 : f32 to vector<8x128xf32>
    %1870 = arith.subf %1869, %1866 : vector<8x128xf32>
    %1871 = arith.select %1868, %1870, %1866 : vector<8x128xi1>, vector<8x128xf32>
    %cst_642 = arith.constant dense<0.000000e+00> : vector<128xf32>
    %1872 = vector.multi_reduction <add>, %1871, %cst_642 [0] : vector<8x128xf32> to vector<128xf32>
    %1873 = vector.shape_cast %1872 : vector<128xf32> to vector<1x128xf32>
    %cst_643 = arith.constant dense<0.000000e+00> : vector<1xf32>
    %1874 = vector.multi_reduction <add>, %1873, %cst_643 [1] : vector<1x128xf32> to vector<1xf32>
    %1875 = vector.shape_cast %1874 : vector<1xf32> to vector<1x1xf32>
    %cst_644 = arith.constant 0.000000e+00 : f32
    %1876 = vector.broadcast %cst_644 : f32 to vector<1x1xf32>
    %1877 = arith.cmpf ogt, %1875, %1876 : vector<1x1xf32>
    %1878 = arith.maximumf %1855, %1862 : vector<1x1xf32>
    %1879 = arith.select %1877, %1878, %1855 : vector<1x1xi1>, vector<1x1xf32>
    %cst_645 = arith.constant 0.000000e+00 : f32
    %1880 = vector.broadcast %cst_645 : f32 to vector<1x1xf32>
    %1881 = arith.cmpf ole, %1875, %1880 : vector<1x1xf32>
    %1882 = arith.minimumf %1859, %1862 : vector<1x1xf32>
    %1883 = arith.select %1881, %1882, %1859 : vector<1x1xi1>, vector<1x1xf32>
    %cst_646 = arith.constant 2.187500e-01 : f32
    %1884 = vector.broadcast %cst_646 : f32 to vector<1x1xf32>
    %1885 = arith.mulf %1290, %1884 : vector<1x1xf32>
    %1886 = math.exp %1885 : vector<1x1xf32>
    %1887 = vector.broadcast %1886 : vector<1x1xf32> to vector<8x128xf32>
    %1888 = arith.addf %990, %1887 : vector<8x128xf32>
    %1889 = math.absf %1888 : vector<8x128xf32>
    %1890 = tpu.reciprocal %1889 {approx = true} : vector<8x128xf32> -> vector<8x128xf32>
    %cst_647 = arith.constant 0.000000e+00 : f32
    %1891 = vector.broadcast %cst_647 : f32 to vector<8x128xf32>
    %1892 = arith.cmpf olt, %1888, %1891 : vector<8x128xf32>
    %cst_648 = arith.constant 0.000000e+00 : f32
    %1893 = vector.broadcast %cst_648 : f32 to vector<8x128xf32>
    %1894 = arith.subf %1893, %1890 : vector<8x128xf32>
    %1895 = arith.select %1892, %1894, %1890 : vector<8x128xi1>, vector<8x128xf32>
    %cst_649 = arith.constant dense<0.000000e+00> : vector<128xf32>
    %1896 = vector.multi_reduction <add>, %1895, %cst_649 [0] : vector<8x128xf32> to vector<128xf32>
    %1897 = vector.shape_cast %1896 : vector<128xf32> to vector<1x128xf32>
    %cst_650 = arith.constant dense<0.000000e+00> : vector<1xf32>
    %1898 = vector.multi_reduction <add>, %1897, %cst_650 [1] : vector<1x128xf32> to vector<1xf32>
    %1899 = vector.shape_cast %1898 : vector<1xf32> to vector<1x1xf32>
    %cst_651 = arith.constant 0.000000e+00 : f32
    %1900 = vector.broadcast %cst_651 : f32 to vector<1x1xf32>
    %1901 = arith.cmpf ogt, %1899, %1900 : vector<1x1xf32>
    %1902 = arith.maximumf %1879, %1886 : vector<1x1xf32>
    %1903 = arith.select %1901, %1902, %1879 : vector<1x1xi1>, vector<1x1xf32>
    %cst_652 = arith.constant 0.000000e+00 : f32
    %1904 = vector.broadcast %cst_652 : f32 to vector<1x1xf32>
    %1905 = arith.cmpf ole, %1899, %1904 : vector<1x1xf32>
    %1906 = arith.minimumf %1883, %1886 : vector<1x1xf32>
    %1907 = arith.select %1905, %1906, %1883 : vector<1x1xi1>, vector<1x1xf32>
    %cst_653 = arith.constant 1.875000e-01 : f32
    %1908 = vector.broadcast %cst_653 : f32 to vector<1x1xf32>
    %1909 = arith.mulf %1290, %1908 : vector<1x1xf32>
    %1910 = math.exp %1909 : vector<1x1xf32>
    %1911 = vector.broadcast %1910 : vector<1x1xf32> to vector<8x128xf32>
    %1912 = arith.addf %990, %1911 : vector<8x128xf32>
    %1913 = math.absf %1912 : vector<8x128xf32>
    %1914 = tpu.reciprocal %1913 {approx = true} : vector<8x128xf32> -> vector<8x128xf32>
    %cst_654 = arith.constant 0.000000e+00 : f32
    %1915 = vector.broadcast %cst_654 : f32 to vector<8x128xf32>
    %1916 = arith.cmpf olt, %1912, %1915 : vector<8x128xf32>
    %cst_655 = arith.constant 0.000000e+00 : f32
    %1917 = vector.broadcast %cst_655 : f32 to vector<8x128xf32>
    %1918 = arith.subf %1917, %1914 : vector<8x128xf32>
    %1919 = arith.select %1916, %1918, %1914 : vector<8x128xi1>, vector<8x128xf32>
    %cst_656 = arith.constant dense<0.000000e+00> : vector<128xf32>
    %1920 = vector.multi_reduction <add>, %1919, %cst_656 [0] : vector<8x128xf32> to vector<128xf32>
    %1921 = vector.shape_cast %1920 : vector<128xf32> to vector<1x128xf32>
    %cst_657 = arith.constant dense<0.000000e+00> : vector<1xf32>
    %1922 = vector.multi_reduction <add>, %1921, %cst_657 [1] : vector<1x128xf32> to vector<1xf32>
    %1923 = vector.shape_cast %1922 : vector<1xf32> to vector<1x1xf32>
    %cst_658 = arith.constant 0.000000e+00 : f32
    %1924 = vector.broadcast %cst_658 : f32 to vector<1x1xf32>
    %1925 = arith.cmpf ogt, %1923, %1924 : vector<1x1xf32>
    %1926 = arith.maximumf %1903, %1910 : vector<1x1xf32>
    %1927 = arith.select %1925, %1926, %1903 : vector<1x1xi1>, vector<1x1xf32>
    %cst_659 = arith.constant 0.000000e+00 : f32
    %1928 = vector.broadcast %cst_659 : f32 to vector<1x1xf32>
    %1929 = arith.cmpf ole, %1923, %1928 : vector<1x1xf32>
    %1930 = arith.minimumf %1907, %1910 : vector<1x1xf32>
    %1931 = arith.select %1929, %1930, %1907 : vector<1x1xi1>, vector<1x1xf32>
    %cst_660 = arith.constant 1.562500e-01 : f32
    %1932 = vector.broadcast %cst_660 : f32 to vector<1x1xf32>
    %1933 = arith.mulf %1290, %1932 : vector<1x1xf32>
    %1934 = math.exp %1933 : vector<1x1xf32>
    %1935 = vector.broadcast %1934 : vector<1x1xf32> to vector<8x128xf32>
    %1936 = arith.addf %990, %1935 : vector<8x128xf32>
    %1937 = math.absf %1936 : vector<8x128xf32>
    %1938 = tpu.reciprocal %1937 {approx = true} : vector<8x128xf32> -> vector<8x128xf32>
    %cst_661 = arith.constant 0.000000e+00 : f32
    %1939 = vector.broadcast %cst_661 : f32 to vector<8x128xf32>
    %1940 = arith.cmpf olt, %1936, %1939 : vector<8x128xf32>
    %cst_662 = arith.constant 0.000000e+00 : f32
    %1941 = vector.broadcast %cst_662 : f32 to vector<8x128xf32>
    %1942 = arith.subf %1941, %1938 : vector<8x128xf32>
    %1943 = arith.select %1940, %1942, %1938 : vector<8x128xi1>, vector<8x128xf32>
    %cst_663 = arith.constant dense<0.000000e+00> : vector<128xf32>
    %1944 = vector.multi_reduction <add>, %1943, %cst_663 [0] : vector<8x128xf32> to vector<128xf32>
    %1945 = vector.shape_cast %1944 : vector<128xf32> to vector<1x128xf32>
    %cst_664 = arith.constant dense<0.000000e+00> : vector<1xf32>
    %1946 = vector.multi_reduction <add>, %1945, %cst_664 [1] : vector<1x128xf32> to vector<1xf32>
    %1947 = vector.shape_cast %1946 : vector<1xf32> to vector<1x1xf32>
    %cst_665 = arith.constant 0.000000e+00 : f32
    %1948 = vector.broadcast %cst_665 : f32 to vector<1x1xf32>
    %1949 = arith.cmpf ogt, %1947, %1948 : vector<1x1xf32>
    %1950 = arith.maximumf %1927, %1934 : vector<1x1xf32>
    %1951 = arith.select %1949, %1950, %1927 : vector<1x1xi1>, vector<1x1xf32>
    %cst_666 = arith.constant 0.000000e+00 : f32
    %1952 = vector.broadcast %cst_666 : f32 to vector<1x1xf32>
    %1953 = arith.cmpf ole, %1947, %1952 : vector<1x1xf32>
    %1954 = arith.minimumf %1931, %1934 : vector<1x1xf32>
    %1955 = arith.select %1953, %1954, %1931 : vector<1x1xi1>, vector<1x1xf32>
    %cst_667 = arith.constant 1.250000e-01 : f32
    %1956 = vector.broadcast %cst_667 : f32 to vector<1x1xf32>
    %1957 = arith.mulf %1290, %1956 : vector<1x1xf32>
    %1958 = math.exp %1957 : vector<1x1xf32>
    %1959 = vector.broadcast %1958 : vector<1x1xf32> to vector<8x128xf32>
    %1960 = arith.addf %990, %1959 : vector<8x128xf32>
    %1961 = math.absf %1960 : vector<8x128xf32>
    %1962 = tpu.reciprocal %1961 {approx = true} : vector<8x128xf32> -> vector<8x128xf32>
    %cst_668 = arith.constant 0.000000e+00 : f32
    %1963 = vector.broadcast %cst_668 : f32 to vector<8x128xf32>
    %1964 = arith.cmpf olt, %1960, %1963 : vector<8x128xf32>
    %cst_669 = arith.constant 0.000000e+00 : f32
    %1965 = vector.broadcast %cst_669 : f32 to vector<8x128xf32>
    %1966 = arith.subf %1965, %1962 : vector<8x128xf32>
    %1967 = arith.select %1964, %1966, %1962 : vector<8x128xi1>, vector<8x128xf32>
    %cst_670 = arith.constant dense<0.000000e+00> : vector<128xf32>
    %1968 = vector.multi_reduction <add>, %1967, %cst_670 [0] : vector<8x128xf32> to vector<128xf32>
    %1969 = vector.shape_cast %1968 : vector<128xf32> to vector<1x128xf32>
    %cst_671 = arith.constant dense<0.000000e+00> : vector<1xf32>
    %1970 = vector.multi_reduction <add>, %1969, %cst_671 [1] : vector<1x128xf32> to vector<1xf32>
    %1971 = vector.shape_cast %1970 : vector<1xf32> to vector<1x1xf32>
    %cst_672 = arith.constant 0.000000e+00 : f32
    %1972 = vector.broadcast %cst_672 : f32 to vector<1x1xf32>
    %1973 = arith.cmpf ogt, %1971, %1972 : vector<1x1xf32>
    %1974 = arith.maximumf %1951, %1958 : vector<1x1xf32>
    %1975 = arith.select %1973, %1974, %1951 : vector<1x1xi1>, vector<1x1xf32>
    %cst_673 = arith.constant 0.000000e+00 : f32
    %1976 = vector.broadcast %cst_673 : f32 to vector<1x1xf32>
    %1977 = arith.cmpf ole, %1971, %1976 : vector<1x1xf32>
    %1978 = arith.minimumf %1955, %1958 : vector<1x1xf32>
    %1979 = arith.select %1977, %1978, %1955 : vector<1x1xi1>, vector<1x1xf32>
    %cst_674 = arith.constant 9.375000e-02 : f32
    %1980 = vector.broadcast %cst_674 : f32 to vector<1x1xf32>
    %1981 = arith.mulf %1290, %1980 : vector<1x1xf32>
    %1982 = math.exp %1981 : vector<1x1xf32>
    %1983 = vector.broadcast %1982 : vector<1x1xf32> to vector<8x128xf32>
    %1984 = arith.addf %990, %1983 : vector<8x128xf32>
    %1985 = math.absf %1984 : vector<8x128xf32>
    %1986 = tpu.reciprocal %1985 {approx = true} : vector<8x128xf32> -> vector<8x128xf32>
    %cst_675 = arith.constant 0.000000e+00 : f32
    %1987 = vector.broadcast %cst_675 : f32 to vector<8x128xf32>
    %1988 = arith.cmpf olt, %1984, %1987 : vector<8x128xf32>
    %cst_676 = arith.constant 0.000000e+00 : f32
    %1989 = vector.broadcast %cst_676 : f32 to vector<8x128xf32>
    %1990 = arith.subf %1989, %1986 : vector<8x128xf32>
    %1991 = arith.select %1988, %1990, %1986 : vector<8x128xi1>, vector<8x128xf32>
    %cst_677 = arith.constant dense<0.000000e+00> : vector<128xf32>
    %1992 = vector.multi_reduction <add>, %1991, %cst_677 [0] : vector<8x128xf32> to vector<128xf32>
    %1993 = vector.shape_cast %1992 : vector<128xf32> to vector<1x128xf32>
    %cst_678 = arith.constant dense<0.000000e+00> : vector<1xf32>
    %1994 = vector.multi_reduction <add>, %1993, %cst_678 [1] : vector<1x128xf32> to vector<1xf32>
    %1995 = vector.shape_cast %1994 : vector<1xf32> to vector<1x1xf32>
    %cst_679 = arith.constant 0.000000e+00 : f32
    %1996 = vector.broadcast %cst_679 : f32 to vector<1x1xf32>
    %1997 = arith.cmpf ogt, %1995, %1996 : vector<1x1xf32>
    %1998 = arith.maximumf %1975, %1982 : vector<1x1xf32>
    %1999 = arith.select %1997, %1998, %1975 : vector<1x1xi1>, vector<1x1xf32>
    %cst_680 = arith.constant 0.000000e+00 : f32
    %2000 = vector.broadcast %cst_680 : f32 to vector<1x1xf32>
    %2001 = arith.cmpf ole, %1995, %2000 : vector<1x1xf32>
    %2002 = arith.minimumf %1979, %1982 : vector<1x1xf32>
    %2003 = arith.select %2001, %2002, %1979 : vector<1x1xi1>, vector<1x1xf32>
    %cst_681 = arith.constant 6.250000e-02 : f32
    %2004 = vector.broadcast %cst_681 : f32 to vector<1x1xf32>
    %2005 = arith.mulf %1290, %2004 : vector<1x1xf32>
    %2006 = math.exp %2005 : vector<1x1xf32>
    %2007 = vector.broadcast %2006 : vector<1x1xf32> to vector<8x128xf32>
    %2008 = arith.addf %990, %2007 : vector<8x128xf32>
    %2009 = math.absf %2008 : vector<8x128xf32>
    %2010 = tpu.reciprocal %2009 {approx = true} : vector<8x128xf32> -> vector<8x128xf32>
    %cst_682 = arith.constant 0.000000e+00 : f32
    %2011 = vector.broadcast %cst_682 : f32 to vector<8x128xf32>
    %2012 = arith.cmpf olt, %2008, %2011 : vector<8x128xf32>
    %cst_683 = arith.constant 0.000000e+00 : f32
    %2013 = vector.broadcast %cst_683 : f32 to vector<8x128xf32>
    %2014 = arith.subf %2013, %2010 : vector<8x128xf32>
    %2015 = arith.select %2012, %2014, %2010 : vector<8x128xi1>, vector<8x128xf32>
    %cst_684 = arith.constant dense<0.000000e+00> : vector<128xf32>
    %2016 = vector.multi_reduction <add>, %2015, %cst_684 [0] : vector<8x128xf32> to vector<128xf32>
    %2017 = vector.shape_cast %2016 : vector<128xf32> to vector<1x128xf32>
    %cst_685 = arith.constant dense<0.000000e+00> : vector<1xf32>
    %2018 = vector.multi_reduction <add>, %2017, %cst_685 [1] : vector<1x128xf32> to vector<1xf32>
    %2019 = vector.shape_cast %2018 : vector<1xf32> to vector<1x1xf32>
    %cst_686 = arith.constant 0.000000e+00 : f32
    %2020 = vector.broadcast %cst_686 : f32 to vector<1x1xf32>
    %2021 = arith.cmpf ogt, %2019, %2020 : vector<1x1xf32>
    %2022 = arith.maximumf %1999, %2006 : vector<1x1xf32>
    %2023 = arith.select %2021, %2022, %1999 : vector<1x1xi1>, vector<1x1xf32>
    %cst_687 = arith.constant 0.000000e+00 : f32
    %2024 = vector.broadcast %cst_687 : f32 to vector<1x1xf32>
    %2025 = arith.cmpf ole, %2019, %2024 : vector<1x1xf32>
    %2026 = arith.minimumf %2003, %2006 : vector<1x1xf32>
    %2027 = arith.select %2025, %2026, %2003 : vector<1x1xi1>, vector<1x1xf32>
    %cst_688 = arith.constant 3.125000e-02 : f32
    %2028 = vector.broadcast %cst_688 : f32 to vector<1x1xf32>
    %2029 = arith.mulf %1290, %2028 : vector<1x1xf32>
    %2030 = math.exp %2029 : vector<1x1xf32>
    %2031 = vector.broadcast %2030 : vector<1x1xf32> to vector<8x128xf32>
    %2032 = arith.addf %990, %2031 : vector<8x128xf32>
    %2033 = math.absf %2032 : vector<8x128xf32>
    %2034 = tpu.reciprocal %2033 {approx = true} : vector<8x128xf32> -> vector<8x128xf32>
    %cst_689 = arith.constant 0.000000e+00 : f32
    %2035 = vector.broadcast %cst_689 : f32 to vector<8x128xf32>
    %2036 = arith.cmpf olt, %2032, %2035 : vector<8x128xf32>
    %cst_690 = arith.constant 0.000000e+00 : f32
    %2037 = vector.broadcast %cst_690 : f32 to vector<8x128xf32>
    %2038 = arith.subf %2037, %2034 : vector<8x128xf32>
    %2039 = arith.select %2036, %2038, %2034 : vector<8x128xi1>, vector<8x128xf32>
    %cst_691 = arith.constant dense<0.000000e+00> : vector<128xf32>
    %2040 = vector.multi_reduction <add>, %2039, %cst_691 [0] : vector<8x128xf32> to vector<128xf32>
    %2041 = vector.shape_cast %2040 : vector<128xf32> to vector<1x128xf32>
    %cst_692 = arith.constant dense<0.000000e+00> : vector<1xf32>
    %2042 = vector.multi_reduction <add>, %2041, %cst_692 [1] : vector<1x128xf32> to vector<1xf32>
    %2043 = vector.shape_cast %2042 : vector<1xf32> to vector<1x1xf32>
    %cst_693 = arith.constant 0.000000e+00 : f32
    %2044 = vector.broadcast %cst_693 : f32 to vector<1x1xf32>
    %2045 = arith.cmpf ogt, %2043, %2044 : vector<1x1xf32>
    %2046 = arith.maximumf %2023, %2030 : vector<1x1xf32>
    %2047 = arith.select %2045, %2046, %2023 : vector<1x1xi1>, vector<1x1xf32>
    %cst_694 = arith.constant 0.000000e+00 : f32
    %2048 = vector.broadcast %cst_694 : f32 to vector<1x1xf32>
    %2049 = arith.cmpf ole, %2043, %2048 : vector<1x1xf32>
    %2050 = arith.minimumf %2027, %2030 : vector<1x1xf32>
    %2051 = arith.select %2049, %2050, %2027 : vector<1x1xi1>, vector<1x1xf32>
    %2052 = vector.broadcast %1291 : vector<1x1xf32> to vector<8x128xf32>
    %2053 = arith.addf %990, %2052 : vector<8x128xf32>
    %cst_695 = arith.constant 1.000000e+00 : f32
    %2054 = vector.broadcast %cst_695 : f32 to vector<8x128xf32>
    %2055 = arith.divf %2054, %2053 : vector<8x128xf32>
    %cst_696 = arith.constant dense<0.000000e+00> : vector<128xf32>
    %2056 = vector.multi_reduction <add>, %2055, %cst_696 [0] : vector<8x128xf32> to vector<128xf32>
    %2057 = vector.shape_cast %2056 : vector<128xf32> to vector<1x128xf32>
    %cst_697 = arith.constant dense<0.000000e+00> : vector<1xf32>
    %2058 = vector.multi_reduction <add>, %2057, %cst_697 [1] : vector<1x128xf32> to vector<1xf32>
    %2059 = vector.shape_cast %2058 : vector<1xf32> to vector<1x1xf32>
    %cst_698 = arith.constant 0.000000e+00 : f32
    %2060 = vector.broadcast %cst_698 : f32 to vector<1x1xf32>
    %2061 = arith.cmpf ogt, %2059, %2060 : vector<1x1xf32>
    %2062 = arith.maximumf %2047, %1291 : vector<1x1xf32>
    %2063 = arith.select %2061, %2062, %2047 : vector<1x1xi1>, vector<1x1xf32>
    %cst_699 = arith.constant 0.000000e+00 : f32
    %2064 = vector.broadcast %cst_699 : f32 to vector<1x1xf32>
    %2065 = arith.cmpf ole, %2059, %2064 : vector<1x1xf32>
    %2066 = arith.minimumf %2051, %1291 : vector<1x1xf32>
    %2067 = arith.select %2065, %2066, %2051 : vector<1x1xi1>, vector<1x1xf32>
    %2068 = arith.mulf %2063, %2067 : vector<1x1xf32>
    %2069 = math.sqrt %2068 : vector<1x1xf32>
    %2070 = vector.broadcast %2069 : vector<1x1xf32> to vector<8x128xf32>
    %2071 = arith.addf %990, %2070 : vector<8x128xf32>
    %2072 = math.absf %2071 : vector<8x128xf32>
    %2073 = tpu.reciprocal %2072 {approx = true} : vector<8x128xf32> -> vector<8x128xf32>
    %cst_700 = arith.constant 0.000000e+00 : f32
    %2074 = vector.broadcast %cst_700 : f32 to vector<8x128xf32>
    %2075 = arith.cmpf olt, %2071, %2074 : vector<8x128xf32>
    %cst_701 = arith.constant 0.000000e+00 : f32
    %2076 = vector.broadcast %cst_701 : f32 to vector<8x128xf32>
    %2077 = arith.subf %2076, %2073 : vector<8x128xf32>
    %2078 = arith.select %2075, %2077, %2073 : vector<8x128xi1>, vector<8x128xf32>
    %cst_702 = arith.constant dense<0.000000e+00> : vector<128xf32>
    %2079 = vector.multi_reduction <add>, %2078, %cst_702 [0] : vector<8x128xf32> to vector<128xf32>
    %2080 = vector.shape_cast %2079 : vector<128xf32> to vector<1x128xf32>
    %cst_703 = arith.constant dense<0.000000e+00> : vector<1xf32>
    %2081 = vector.multi_reduction <add>, %2080, %cst_703 [1] : vector<1x128xf32> to vector<1xf32>
    %2082 = vector.shape_cast %2081 : vector<1xf32> to vector<1x1xf32>
    %cst_704 = arith.constant 0.000000e+00 : f32
    %2083 = vector.broadcast %cst_704 : f32 to vector<1x1xf32>
    %2084 = arith.cmpf ogt, %2082, %2083 : vector<1x1xf32>
    %2085 = arith.select %2084, %2069, %2063 : vector<1x1xi1>, vector<1x1xf32>
    %cst_705 = arith.constant 0.000000e+00 : f32
    %2086 = vector.broadcast %cst_705 : f32 to vector<1x1xf32>
    %2087 = arith.cmpf ole, %2082, %2086 : vector<1x1xf32>
    %2088 = arith.select %2087, %2069, %2067 : vector<1x1xi1>, vector<1x1xf32>
    %2089 = arith.mulf %2085, %2088 : vector<1x1xf32>
    %2090 = math.sqrt %2089 : vector<1x1xf32>
    %2091 = vector.broadcast %2090 : vector<1x1xf32> to vector<8x128xf32>
    %2092 = arith.addf %990, %2091 : vector<8x128xf32>
    %2093 = math.absf %2092 : vector<8x128xf32>
    %2094 = tpu.reciprocal %2093 {approx = true} : vector<8x128xf32> -> vector<8x128xf32>
    %cst_706 = arith.constant 0.000000e+00 : f32
    %2095 = vector.broadcast %cst_706 : f32 to vector<8x128xf32>
    %2096 = arith.cmpf olt, %2092, %2095 : vector<8x128xf32>
    %cst_707 = arith.constant 0.000000e+00 : f32
    %2097 = vector.broadcast %cst_707 : f32 to vector<8x128xf32>
    %2098 = arith.subf %2097, %2094 : vector<8x128xf32>
    %2099 = arith.select %2096, %2098, %2094 : vector<8x128xi1>, vector<8x128xf32>
    %cst_708 = arith.constant dense<0.000000e+00> : vector<128xf32>
    %2100 = vector.multi_reduction <add>, %2099, %cst_708 [0] : vector<8x128xf32> to vector<128xf32>
    %2101 = vector.shape_cast %2100 : vector<128xf32> to vector<1x128xf32>
    %cst_709 = arith.constant dense<0.000000e+00> : vector<1xf32>
    %2102 = vector.multi_reduction <add>, %2101, %cst_709 [1] : vector<1x128xf32> to vector<1xf32>
    %2103 = vector.shape_cast %2102 : vector<1xf32> to vector<1x1xf32>
    %cst_710 = arith.constant 0.000000e+00 : f32
    %2104 = vector.broadcast %cst_710 : f32 to vector<1x1xf32>
    %2105 = arith.cmpf ogt, %2103, %2104 : vector<1x1xf32>
    %2106 = arith.select %2105, %2090, %2085 : vector<1x1xi1>, vector<1x1xf32>
    %cst_711 = arith.constant 0.000000e+00 : f32
    %2107 = vector.broadcast %cst_711 : f32 to vector<1x1xf32>
    %2108 = arith.cmpf ole, %2103, %2107 : vector<1x1xf32>
    %2109 = arith.select %2108, %2090, %2088 : vector<1x1xi1>, vector<1x1xf32>
    %2110 = arith.mulf %2106, %2109 : vector<1x1xf32>
    %2111 = math.sqrt %2110 : vector<1x1xf32>
    %2112 = vector.broadcast %2111 : vector<1x1xf32> to vector<8x128xf32>
    %2113 = arith.addf %990, %2112 : vector<8x128xf32>
    %2114 = math.absf %2113 : vector<8x128xf32>
    %2115 = tpu.reciprocal %2114 {approx = true} : vector<8x128xf32> -> vector<8x128xf32>
    %cst_712 = arith.constant 0.000000e+00 : f32
    %2116 = vector.broadcast %cst_712 : f32 to vector<8x128xf32>
    %2117 = arith.cmpf olt, %2113, %2116 : vector<8x128xf32>
    %cst_713 = arith.constant 0.000000e+00 : f32
    %2118 = vector.broadcast %cst_713 : f32 to vector<8x128xf32>
    %2119 = arith.subf %2118, %2115 : vector<8x128xf32>
    %2120 = arith.select %2117, %2119, %2115 : vector<8x128xi1>, vector<8x128xf32>
    %cst_714 = arith.constant dense<0.000000e+00> : vector<128xf32>
    %2121 = vector.multi_reduction <add>, %2120, %cst_714 [0] : vector<8x128xf32> to vector<128xf32>
    %2122 = vector.shape_cast %2121 : vector<128xf32> to vector<1x128xf32>
    %cst_715 = arith.constant dense<0.000000e+00> : vector<1xf32>
    %2123 = vector.multi_reduction <add>, %2122, %cst_715 [1] : vector<1x128xf32> to vector<1xf32>
    %2124 = vector.shape_cast %2123 : vector<1xf32> to vector<1x1xf32>
    %cst_716 = arith.constant 0.000000e+00 : f32
    %2125 = vector.broadcast %cst_716 : f32 to vector<1x1xf32>
    %2126 = arith.cmpf ogt, %2124, %2125 : vector<1x1xf32>
    %2127 = arith.select %2126, %2111, %2106 : vector<1x1xi1>, vector<1x1xf32>
    %cst_717 = arith.constant 0.000000e+00 : f32
    %2128 = vector.broadcast %cst_717 : f32 to vector<1x1xf32>
    %2129 = arith.cmpf ole, %2124, %2128 : vector<1x1xf32>
    %2130 = arith.select %2129, %2111, %2109 : vector<1x1xi1>, vector<1x1xf32>
    %2131 = arith.mulf %2127, %2130 : vector<1x1xf32>
    %2132 = math.sqrt %2131 : vector<1x1xf32>
    %2133 = vector.broadcast %2132 : vector<1x1xf32> to vector<8x128xf32>
    %2134 = arith.addf %990, %2133 : vector<8x128xf32>
    %2135 = math.absf %2134 : vector<8x128xf32>
    %2136 = tpu.reciprocal %2135 {approx = true} : vector<8x128xf32> -> vector<8x128xf32>
    %cst_718 = arith.constant 0.000000e+00 : f32
    %2137 = vector.broadcast %cst_718 : f32 to vector<8x128xf32>
    %2138 = arith.cmpf olt, %2134, %2137 : vector<8x128xf32>
    %cst_719 = arith.constant 0.000000e+00 : f32
    %2139 = vector.broadcast %cst_719 : f32 to vector<8x128xf32>
    %2140 = arith.subf %2139, %2136 : vector<8x128xf32>
    %2141 = arith.select %2138, %2140, %2136 : vector<8x128xi1>, vector<8x128xf32>
    %cst_720 = arith.constant dense<0.000000e+00> : vector<128xf32>
    %2142 = vector.multi_reduction <add>, %2141, %cst_720 [0] : vector<8x128xf32> to vector<128xf32>
    %2143 = vector.shape_cast %2142 : vector<128xf32> to vector<1x128xf32>
    %cst_721 = arith.constant dense<0.000000e+00> : vector<1xf32>
    %2144 = vector.multi_reduction <add>, %2143, %cst_721 [1] : vector<1x128xf32> to vector<1xf32>
    %2145 = vector.shape_cast %2144 : vector<1xf32> to vector<1x1xf32>
    %cst_722 = arith.constant 0.000000e+00 : f32
    %2146 = vector.broadcast %cst_722 : f32 to vector<1x1xf32>
    %2147 = arith.cmpf ogt, %2145, %2146 : vector<1x1xf32>
    %2148 = arith.select %2147, %2132, %2127 : vector<1x1xi1>, vector<1x1xf32>
    %cst_723 = arith.constant 0.000000e+00 : f32
    %2149 = vector.broadcast %cst_723 : f32 to vector<1x1xf32>
    %2150 = arith.cmpf ole, %2145, %2149 : vector<1x1xf32>
    %2151 = arith.select %2150, %2132, %2130 : vector<1x1xi1>, vector<1x1xf32>
    %2152 = arith.mulf %2148, %2151 : vector<1x1xf32>
    %2153 = math.sqrt %2152 : vector<1x1xf32>
    %2154 = vector.broadcast %2153 : vector<1x1xf32> to vector<8x128xf32>
    %2155 = arith.addf %990, %2154 : vector<8x128xf32>
    %2156 = math.absf %2155 : vector<8x128xf32>
    %2157 = tpu.reciprocal %2156 {approx = true} : vector<8x128xf32> -> vector<8x128xf32>
    %cst_724 = arith.constant 0.000000e+00 : f32
    %2158 = vector.broadcast %cst_724 : f32 to vector<8x128xf32>
    %2159 = arith.cmpf olt, %2155, %2158 : vector<8x128xf32>
    %cst_725 = arith.constant 0.000000e+00 : f32
    %2160 = vector.broadcast %cst_725 : f32 to vector<8x128xf32>
    %2161 = arith.subf %2160, %2157 : vector<8x128xf32>
    %2162 = arith.select %2159, %2161, %2157 : vector<8x128xi1>, vector<8x128xf32>
    %cst_726 = arith.constant dense<0.000000e+00> : vector<128xf32>
    %2163 = vector.multi_reduction <add>, %2162, %cst_726 [0] : vector<8x128xf32> to vector<128xf32>
    %2164 = vector.shape_cast %2163 : vector<128xf32> to vector<1x128xf32>
    %cst_727 = arith.constant dense<0.000000e+00> : vector<1xf32>
    %2165 = vector.multi_reduction <add>, %2164, %cst_727 [1] : vector<1x128xf32> to vector<1xf32>
    %2166 = vector.shape_cast %2165 : vector<1xf32> to vector<1x1xf32>
    %cst_728 = arith.constant 0.000000e+00 : f32
    %2167 = vector.broadcast %cst_728 : f32 to vector<1x1xf32>
    %2168 = arith.cmpf ogt, %2166, %2167 : vector<1x1xf32>
    %2169 = arith.select %2168, %2153, %2148 : vector<1x1xi1>, vector<1x1xf32>
    %cst_729 = arith.constant 0.000000e+00 : f32
    %2170 = vector.broadcast %cst_729 : f32 to vector<1x1xf32>
    %2171 = arith.cmpf ole, %2166, %2170 : vector<1x1xf32>
    %2172 = arith.select %2171, %2153, %2151 : vector<1x1xi1>, vector<1x1xf32>
    %2173 = arith.mulf %2169, %2172 : vector<1x1xf32>
    %2174 = math.sqrt %2173 : vector<1x1xf32>
    %2175 = vector.broadcast %2174 : vector<1x1xf32> to vector<8x128xf32>
    %2176 = arith.addf %990, %2175 : vector<8x128xf32>
    %2177 = math.absf %2176 : vector<8x128xf32>
    %2178 = tpu.reciprocal %2177 {approx = true} : vector<8x128xf32> -> vector<8x128xf32>
    %cst_730 = arith.constant 0.000000e+00 : f32
    %2179 = vector.broadcast %cst_730 : f32 to vector<8x128xf32>
    %2180 = arith.cmpf olt, %2176, %2179 : vector<8x128xf32>
    %cst_731 = arith.constant 0.000000e+00 : f32
    %2181 = vector.broadcast %cst_731 : f32 to vector<8x128xf32>
    %2182 = arith.subf %2181, %2178 : vector<8x128xf32>
    %2183 = arith.select %2180, %2182, %2178 : vector<8x128xi1>, vector<8x128xf32>
    %cst_732 = arith.constant dense<0.000000e+00> : vector<128xf32>
    %2184 = vector.multi_reduction <add>, %2183, %cst_732 [0] : vector<8x128xf32> to vector<128xf32>
    %2185 = vector.shape_cast %2184 : vector<128xf32> to vector<1x128xf32>
    %cst_733 = arith.constant dense<0.000000e+00> : vector<1xf32>
    %2186 = vector.multi_reduction <add>, %2185, %cst_733 [1] : vector<1x128xf32> to vector<1xf32>
    %2187 = vector.shape_cast %2186 : vector<1xf32> to vector<1x1xf32>
    %cst_734 = arith.constant 0.000000e+00 : f32
    %2188 = vector.broadcast %cst_734 : f32 to vector<1x1xf32>
    %2189 = arith.cmpf ogt, %2187, %2188 : vector<1x1xf32>
    %2190 = arith.select %2189, %2174, %2169 : vector<1x1xi1>, vector<1x1xf32>
    %cst_735 = arith.constant 0.000000e+00 : f32
    %2191 = vector.broadcast %cst_735 : f32 to vector<1x1xf32>
    %2192 = arith.cmpf ole, %2187, %2191 : vector<1x1xf32>
    %2193 = arith.select %2192, %2174, %2172 : vector<1x1xi1>, vector<1x1xf32>
    %2194 = arith.mulf %2190, %2193 : vector<1x1xf32>
    %2195 = math.sqrt %2194 : vector<1x1xf32>
    %2196 = vector.broadcast %2195 : vector<1x1xf32> to vector<8x128xf32>
    %2197 = arith.addf %990, %2196 : vector<8x128xf32>
    %2198 = math.absf %2197 : vector<8x128xf32>
    %2199 = tpu.reciprocal %2198 {approx = true} : vector<8x128xf32> -> vector<8x128xf32>
    %cst_736 = arith.constant 0.000000e+00 : f32
    %2200 = vector.broadcast %cst_736 : f32 to vector<8x128xf32>
    %2201 = arith.cmpf olt, %2197, %2200 : vector<8x128xf32>
    %cst_737 = arith.constant 0.000000e+00 : f32
    %2202 = vector.broadcast %cst_737 : f32 to vector<8x128xf32>
    %2203 = arith.subf %2202, %2199 : vector<8x128xf32>
    %2204 = arith.select %2201, %2203, %2199 : vector<8x128xi1>, vector<8x128xf32>
    %cst_738 = arith.constant dense<0.000000e+00> : vector<128xf32>
    %2205 = vector.multi_reduction <add>, %2204, %cst_738 [0] : vector<8x128xf32> to vector<128xf32>
    %2206 = vector.shape_cast %2205 : vector<128xf32> to vector<1x128xf32>
    %cst_739 = arith.constant dense<0.000000e+00> : vector<1xf32>
    %2207 = vector.multi_reduction <add>, %2206, %cst_739 [1] : vector<1x128xf32> to vector<1xf32>
    %2208 = vector.shape_cast %2207 : vector<1xf32> to vector<1x1xf32>
    %cst_740 = arith.constant 0.000000e+00 : f32
    %2209 = vector.broadcast %cst_740 : f32 to vector<1x1xf32>
    %2210 = arith.cmpf ogt, %2208, %2209 : vector<1x1xf32>
    %2211 = arith.select %2210, %2195, %2190 : vector<1x1xi1>, vector<1x1xf32>
    %cst_741 = arith.constant 0.000000e+00 : f32
    %2212 = vector.broadcast %cst_741 : f32 to vector<1x1xf32>
    %2213 = arith.cmpf ole, %2208, %2212 : vector<1x1xf32>
    %2214 = arith.select %2213, %2195, %2193 : vector<1x1xi1>, vector<1x1xf32>
    %2215 = arith.mulf %2211, %2214 : vector<1x1xf32>
    %2216 = math.sqrt %2215 : vector<1x1xf32>
    %2217 = vector.broadcast %2216 : vector<1x1xf32> to vector<8x128xf32>
    %2218 = arith.addf %990, %2217 : vector<8x128xf32>
    %2219 = math.absf %2218 : vector<8x128xf32>
    %2220 = tpu.reciprocal %2219 {approx = true} : vector<8x128xf32> -> vector<8x128xf32>
    %cst_742 = arith.constant 0.000000e+00 : f32
    %2221 = vector.broadcast %cst_742 : f32 to vector<8x128xf32>
    %2222 = arith.cmpf olt, %2218, %2221 : vector<8x128xf32>
    %cst_743 = arith.constant 0.000000e+00 : f32
    %2223 = vector.broadcast %cst_743 : f32 to vector<8x128xf32>
    %2224 = arith.subf %2223, %2220 : vector<8x128xf32>
    %2225 = arith.select %2222, %2224, %2220 : vector<8x128xi1>, vector<8x128xf32>
    %cst_744 = arith.constant dense<0.000000e+00> : vector<128xf32>
    %2226 = vector.multi_reduction <add>, %2225, %cst_744 [0] : vector<8x128xf32> to vector<128xf32>
    %2227 = vector.shape_cast %2226 : vector<128xf32> to vector<1x128xf32>
    %cst_745 = arith.constant dense<0.000000e+00> : vector<1xf32>
    %2228 = vector.multi_reduction <add>, %2227, %cst_745 [1] : vector<1x128xf32> to vector<1xf32>
    %2229 = vector.shape_cast %2228 : vector<1xf32> to vector<1x1xf32>
    %cst_746 = arith.constant 0.000000e+00 : f32
    %2230 = vector.broadcast %cst_746 : f32 to vector<1x1xf32>
    %2231 = arith.cmpf ogt, %2229, %2230 : vector<1x1xf32>
    %2232 = arith.select %2231, %2216, %2211 : vector<1x1xi1>, vector<1x1xf32>
    %cst_747 = arith.constant 0.000000e+00 : f32
    %2233 = vector.broadcast %cst_747 : f32 to vector<1x1xf32>
    %2234 = arith.cmpf ole, %2229, %2233 : vector<1x1xf32>
    %2235 = arith.select %2234, %2216, %2214 : vector<1x1xi1>, vector<1x1xf32>
    %2236 = arith.mulf %2232, %2235 : vector<1x1xf32>
    %2237 = math.sqrt %2236 : vector<1x1xf32>
    %2238 = vector.broadcast %2237 : vector<1x1xf32> to vector<8x128xf32>
    %2239 = arith.addf %990, %2238 : vector<8x128xf32>
    %2240 = math.absf %2239 : vector<8x128xf32>
    %2241 = tpu.reciprocal %2240 {approx = true} : vector<8x128xf32> -> vector<8x128xf32>
    %cst_748 = arith.constant 0.000000e+00 : f32
    %2242 = vector.broadcast %cst_748 : f32 to vector<8x128xf32>
    %2243 = arith.cmpf olt, %2239, %2242 : vector<8x128xf32>
    %cst_749 = arith.constant 0.000000e+00 : f32
    %2244 = vector.broadcast %cst_749 : f32 to vector<8x128xf32>
    %2245 = arith.subf %2244, %2241 : vector<8x128xf32>
    %2246 = arith.select %2243, %2245, %2241 : vector<8x128xi1>, vector<8x128xf32>
    %cst_750 = arith.constant dense<0.000000e+00> : vector<128xf32>
    %2247 = vector.multi_reduction <add>, %2246, %cst_750 [0] : vector<8x128xf32> to vector<128xf32>
    %2248 = vector.shape_cast %2247 : vector<128xf32> to vector<1x128xf32>
    %cst_751 = arith.constant dense<0.000000e+00> : vector<1xf32>
    %2249 = vector.multi_reduction <add>, %2248, %cst_751 [1] : vector<1x128xf32> to vector<1xf32>
    %2250 = vector.shape_cast %2249 : vector<1xf32> to vector<1x1xf32>
    %cst_752 = arith.constant 0.000000e+00 : f32
    %2251 = vector.broadcast %cst_752 : f32 to vector<1x1xf32>
    %2252 = arith.cmpf ogt, %2250, %2251 : vector<1x1xf32>
    %2253 = arith.select %2252, %2237, %2232 : vector<1x1xi1>, vector<1x1xf32>
    %cst_753 = arith.constant 0.000000e+00 : f32
    %2254 = vector.broadcast %cst_753 : f32 to vector<1x1xf32>
    %2255 = arith.cmpf ole, %2250, %2254 : vector<1x1xf32>
    %2256 = arith.select %2255, %2237, %2235 : vector<1x1xi1>, vector<1x1xf32>
    %2257 = arith.mulf %2253, %2256 : vector<1x1xf32>
    %2258 = math.sqrt %2257 : vector<1x1xf32>
    %2259 = vector.broadcast %2258 : vector<1x1xf32> to vector<8x128xf32>
    %2260 = arith.addf %990, %2259 : vector<8x128xf32>
    %2261 = math.absf %2260 : vector<8x128xf32>
    %2262 = tpu.reciprocal %2261 {approx = true} : vector<8x128xf32> -> vector<8x128xf32>
    %cst_754 = arith.constant 0.000000e+00 : f32
    %2263 = vector.broadcast %cst_754 : f32 to vector<8x128xf32>
    %2264 = arith.cmpf olt, %2260, %2263 : vector<8x128xf32>
    %cst_755 = arith.constant 0.000000e+00 : f32
    %2265 = vector.broadcast %cst_755 : f32 to vector<8x128xf32>
    %2266 = arith.subf %2265, %2262 : vector<8x128xf32>
    %2267 = arith.select %2264, %2266, %2262 : vector<8x128xi1>, vector<8x128xf32>
    %cst_756 = arith.constant dense<0.000000e+00> : vector<128xf32>
    %2268 = vector.multi_reduction <add>, %2267, %cst_756 [0] : vector<8x128xf32> to vector<128xf32>
    %2269 = vector.shape_cast %2268 : vector<128xf32> to vector<1x128xf32>
    %cst_757 = arith.constant dense<0.000000e+00> : vector<1xf32>
    %2270 = vector.multi_reduction <add>, %2269, %cst_757 [1] : vector<1x128xf32> to vector<1xf32>
    %2271 = vector.shape_cast %2270 : vector<1xf32> to vector<1x1xf32>
    %cst_758 = arith.constant 0.000000e+00 : f32
    %2272 = vector.broadcast %cst_758 : f32 to vector<1x1xf32>
    %2273 = arith.cmpf ogt, %2271, %2272 : vector<1x1xf32>
    %2274 = arith.select %2273, %2258, %2253 : vector<1x1xi1>, vector<1x1xf32>
    %cst_759 = arith.constant 0.000000e+00 : f32
    %2275 = vector.broadcast %cst_759 : f32 to vector<1x1xf32>
    %2276 = arith.cmpf ole, %2271, %2275 : vector<1x1xf32>
    %2277 = arith.select %2276, %2258, %2256 : vector<1x1xi1>, vector<1x1xf32>
    %2278 = arith.mulf %2274, %2277 : vector<1x1xf32>
    %2279 = math.sqrt %2278 : vector<1x1xf32>
    %2280 = vector.broadcast %2279 : vector<1x1xf32> to vector<8x128xf32>
    %2281 = arith.addf %990, %2280 : vector<8x128xf32>
    %cst_760 = arith.constant 1.000000e+00 : f32
    %2282 = vector.broadcast %cst_760 : f32 to vector<8x128xf32>
    %2283 = arith.divf %2282, %2281 : vector<8x128xf32>
    %cst_761 = arith.constant dense<0.000000e+00> : vector<128xf32>
    %2284 = vector.multi_reduction <add>, %2283, %cst_761 [0] : vector<8x128xf32> to vector<128xf32>
    %2285 = vector.shape_cast %2284 : vector<128xf32> to vector<1x128xf32>
    %cst_762 = arith.constant dense<0.000000e+00> : vector<1xf32>
    %2286 = vector.multi_reduction <add>, %2285, %cst_762 [1] : vector<1x128xf32> to vector<1xf32>
    %2287 = vector.shape_cast %2286 : vector<1xf32> to vector<1x1xf32>
    %cst_763 = arith.constant 0.000000e+00 : f32
    %2288 = vector.broadcast %cst_763 : f32 to vector<1x1xf32>
    %2289 = arith.cmpf ogt, %2287, %2288 : vector<1x1xf32>
    %2290 = arith.select %2289, %2279, %2274 : vector<1x1xi1>, vector<1x1xf32>
    %cst_764 = arith.constant 0.000000e+00 : f32
    %2291 = vector.broadcast %cst_764 : f32 to vector<1x1xf32>
    %2292 = arith.cmpf ole, %2287, %2291 : vector<1x1xf32>
    %2293 = arith.select %2292, %2279, %2277 : vector<1x1xi1>, vector<1x1xf32>
    %2294 = arith.mulf %2290, %2293 : vector<1x1xf32>
    %2295 = math.sqrt %2294 : vector<1x1xf32>
    %2296 = vector.broadcast %2295 : vector<1x1xf32> to vector<8x128xf32>
    %2297 = arith.addf %990, %2296 : vector<8x128xf32>
    %cst_765 = arith.constant 1.000000e+00 : f32
    %2298 = vector.broadcast %cst_765 : f32 to vector<8x128xf32>
    %2299 = arith.divf %2298, %2297 : vector<8x128xf32>
    %cst_766 = arith.constant dense<0.000000e+00> : vector<128xf32>
    %2300 = vector.multi_reduction <add>, %2299, %cst_766 [0] : vector<8x128xf32> to vector<128xf32>
    %2301 = vector.shape_cast %2300 : vector<128xf32> to vector<1x128xf32>
    %cst_767 = arith.constant dense<0.000000e+00> : vector<1xf32>
    %2302 = vector.multi_reduction <add>, %2301, %cst_767 [1] : vector<1x128xf32> to vector<1xf32>
    %2303 = vector.shape_cast %2302 : vector<1xf32> to vector<1x1xf32>
    %cst_768 = arith.constant 0.000000e+00 : f32
    %2304 = vector.broadcast %cst_768 : f32 to vector<1x1xf32>
    %2305 = arith.cmpf ogt, %2303, %2304 : vector<1x1xf32>
    %2306 = arith.select %2305, %2295, %2290 : vector<1x1xi1>, vector<1x1xf32>
    %cst_769 = arith.constant 0.000000e+00 : f32
    %2307 = vector.broadcast %cst_769 : f32 to vector<1x1xf32>
    %2308 = arith.cmpf ole, %2303, %2307 : vector<1x1xf32>
    %2309 = arith.select %2308, %2295, %2293 : vector<1x1xi1>, vector<1x1xf32>
    %2310 = arith.mulf %2306, %2309 : vector<1x1xf32>
    %2311 = math.sqrt %2310 : vector<1x1xf32>
    %2312 = vector.broadcast %2311 : vector<1x1xf32> to vector<8x128xf32>
    %2313 = arith.addf %990, %2312 : vector<8x128xf32>
    %cst_770 = arith.constant 1.000000e+00 : f32
    %2314 = vector.broadcast %cst_770 : f32 to vector<8x128xf32>
    %2315 = arith.divf %2314, %2313 : vector<8x128xf32>
    %cst_771 = arith.constant dense<0.000000e+00> : vector<128xf32>
    %2316 = vector.multi_reduction <add>, %2315, %cst_771 [0] : vector<8x128xf32> to vector<128xf32>
    %2317 = vector.shape_cast %2316 : vector<128xf32> to vector<1x128xf32>
    %cst_772 = arith.constant dense<0.000000e+00> : vector<1xf32>
    %2318 = vector.multi_reduction <add>, %2317, %cst_772 [1] : vector<1x128xf32> to vector<1xf32>
    %2319 = vector.shape_cast %2318 : vector<1xf32> to vector<1x1xf32>
    %cst_773 = arith.constant 0.000000e+00 : f32
    %2320 = vector.broadcast %cst_773 : f32 to vector<1x1xf32>
    %2321 = arith.cmpf ogt, %2319, %2320 : vector<1x1xf32>
    %2322 = arith.select %2321, %2311, %2306 : vector<1x1xi1>, vector<1x1xf32>
    %cst_774 = arith.constant 0.000000e+00 : f32
    %2323 = vector.broadcast %cst_774 : f32 to vector<1x1xf32>
    %2324 = arith.cmpf ole, %2319, %2323 : vector<1x1xf32>
    %2325 = arith.select %2324, %2311, %2309 : vector<1x1xi1>, vector<1x1xf32>
    %2326 = arith.mulf %2322, %2325 : vector<1x1xf32>
    %2327 = math.sqrt %2326 : vector<1x1xf32>
    %2328 = vector.broadcast %2327 : vector<1x1xf32> to vector<8x128xf32>
    %2329 = arith.addf %990, %2328 : vector<8x128xf32>
    %cst_775 = arith.constant 1.000000e+00 : f32
    %2330 = vector.broadcast %cst_775 : f32 to vector<8x128xf32>
    %2331 = arith.divf %2330, %2329 : vector<8x128xf32>
    %cst_776 = arith.constant dense<0.000000e+00> : vector<128xf32>
    %2332 = vector.multi_reduction <add>, %2331, %cst_776 [0] : vector<8x128xf32> to vector<128xf32>
    %2333 = vector.shape_cast %2332 : vector<128xf32> to vector<1x128xf32>
    %cst_777 = arith.constant dense<0.000000e+00> : vector<1xf32>
    %2334 = vector.multi_reduction <add>, %2333, %cst_777 [1] : vector<1x128xf32> to vector<1xf32>
    %2335 = vector.shape_cast %2334 : vector<1xf32> to vector<1x1xf32>
    %cst_778 = arith.constant 0.000000e+00 : f32
    %2336 = vector.broadcast %cst_778 : f32 to vector<1x1xf32>
    %2337 = arith.cmpf ogt, %2335, %2336 : vector<1x1xf32>
    %2338 = arith.select %2337, %2327, %2322 : vector<1x1xi1>, vector<1x1xf32>
    %cst_779 = arith.constant 0.000000e+00 : f32
    %2339 = vector.broadcast %cst_779 : f32 to vector<1x1xf32>
    %2340 = arith.cmpf ole, %2335, %2339 : vector<1x1xf32>
    %2341 = arith.select %2340, %2327, %2325 : vector<1x1xi1>, vector<1x1xf32>
    %2342 = arith.mulf %2338, %2341 : vector<1x1xf32>
    %2343 = math.sqrt %2342 : vector<1x1xf32>
    %cst_780 = arith.constant 0.000000e+00 : f32
    %2344 = vector.broadcast %cst_780 : f32 to vector<1x1xf32>
    %2345 = arith.cmpf oge, %2059, %2344 : vector<1x1xf32>
    %cst_781 = arith.constant 0.000000e+00 : f32
    %2346 = vector.broadcast %cst_781 : f32 to vector<1x1xf32>
    %2347 = arith.cmpf ole, %1299, %2346 : vector<1x1xf32>
    %2348 = arith.select %2347, %1289, %2343 : vector<1x1xi1>, vector<1x1xf32>
    %2349 = arith.select %2345, %1291, %2348 : vector<1x1xi1>, vector<1x1xf32>
    %cst_782 = arith.constant 0.000000e+00 : f32
    %2350 = vector.broadcast %cst_782 : f32 to vector<8x128xf32>
    %2351 = arith.cmpf ogt, %0, %2350 : vector<8x128xf32>
    %cst_783 = arith.constant 0.000000e+00 : f32
    %2352 = vector.broadcast %cst_783 : f32 to vector<8x128xf32>
    %2353 = arith.cmpf olt, %0, %2352 : vector<8x128xf32>
    %cst_784 = arith.constant -1.000000e+00 : f32
    %cst_785 = arith.constant 0.000000e+00 : f32
    %2354 = vector.broadcast %cst_784 : f32 to vector<8x128xf32>
    %2355 = vector.broadcast %cst_785 : f32 to vector<8x128xf32>
    %2356 = arith.select %2353, %2354, %2355 : vector<8x128xi1>, vector<8x128xf32>
    %cst_786 = arith.constant 1.000000e+00 : f32
    %2357 = vector.broadcast %cst_786 : f32 to vector<8x128xf32>
    %2358 = arith.select %2351, %2357, %2356 : vector<8x128xi1>, vector<8x128xf32>
    %cst_787 = arith.constant 1.000000e+00 : f32
    %2359 = vector.broadcast %cst_787 : f32 to vector<1x1xf32>
    %2360 = arith.divf %2359, %2349 : vector<1x1xf32>
    %cst_788 = arith.constant 1.000000e+00 : f32
    %2361 = vector.broadcast %cst_788 : f32 to vector<1x1xf32>
    %2362 = arith.subf %2360, %2361 : vector<1x1xf32>
    %2363 = vector.broadcast %2362 : vector<1x1xf32> to vector<8x128xf32>
    %2364 = arith.mulf %958, %2363 : vector<8x128xf32>
    %cst_789 = arith.constant 5.000000e-01 : f32
    %2365 = vector.broadcast %cst_789 : f32 to vector<1x1xf32>
    %2366 = arith.mulf %2365, %670 : vector<1x1xf32>
    %2367 = vector.broadcast %2366 : vector<1x1xf32> to vector<8x128xf32>
    %2368 = arith.divf %2364, %2367 : vector<8x128xf32>
    %2369 = arith.mulf %958, %816 : vector<8x128xf32>
    %2370 = arith.addf %2369, %977 : vector<8x128xf32>
    %cst_790 = arith.constant 5.000000e-01 : f32
    %2371 = vector.broadcast %cst_790 : f32 to vector<8x128xf32>
    %2372 = arith.mulf %2371, %2370 : vector<8x128xf32>
    %2373 = arith.addf %2368, %2372 : vector<8x128xf32>
    %cst_791 = arith.constant 2.500000e+01 : f32
    %2374 = vector.broadcast %cst_791 : f32 to vector<8x128xf32>
    %2375 = arith.cmpf ogt, %680, %2374 : vector<8x128xf32>
    %cst_792 = arith.constant 5.000000e-01 : f32
    %2376 = vector.broadcast %cst_792 : f32 to vector<8x128xf32>
    %2377 = arith.select %2375, %2376, %2373 : vector<8x128xi1>, vector<8x128xf32>
    %cst_793 = arith.constant 1.000000e+00 : f32
    %2378 = vector.broadcast %cst_793 : f32 to vector<8x128xf32>
    %2379 = arith.minimumf %2377, %2378 : vector<8x128xf32>
    %cst_794 = arith.constant 1.000000e-30 : f32
    %cst_795 = arith.constant 0.999998986 : f32
    %2380 = vector.broadcast %cst_794 : f32 to vector<8x128xf32>
    %2381 = arith.maximumf %2380, %2379 : vector<8x128xf32>
    %2382 = vector.broadcast %cst_795 : f32 to vector<8x128xf32>
    %2383 = arith.minimumf %2382, %2381 : vector<8x128xf32>
    %cst_796 = arith.constant 5.000000e-01 : f32
    %2384 = vector.broadcast %cst_796 : f32 to vector<8x128xf32>
    %2385 = arith.subf %2383, %2384 : vector<8x128xf32>
    %2386 = arith.mulf %2385, %2385 : vector<8x128xf32>
    %cst_797 = arith.constant -39.6968307 : f32
    %2387 = vector.broadcast %cst_797 : f32 to vector<8x128xf32>
    %2388 = arith.mulf %2387, %2386 : vector<8x128xf32>
    %cst_798 = arith.constant 220.946106 : f32
    %2389 = vector.broadcast %cst_798 : f32 to vector<8x128xf32>
    %2390 = arith.addf %2388, %2389 : vector<8x128xf32>
    %2391 = arith.mulf %2390, %2386 : vector<8x128xf32>
    %cst_799 = arith.constant -275.928497 : f32
    %2392 = vector.broadcast %cst_799 : f32 to vector<8x128xf32>
    %2393 = arith.addf %2391, %2392 : vector<8x128xf32>
    %2394 = arith.mulf %2393, %2386 : vector<8x128xf32>
    %cst_800 = arith.constant 138.357758 : f32
    %2395 = vector.broadcast %cst_800 : f32 to vector<8x128xf32>
    %2396 = arith.addf %2394, %2395 : vector<8x128xf32>
    %2397 = arith.mulf %2396, %2386 : vector<8x128xf32>
    %cst_801 = arith.constant -30.6647987 : f32
    %2398 = vector.broadcast %cst_801 : f32 to vector<8x128xf32>
    %2399 = arith.addf %2397, %2398 : vector<8x128xf32>
    %2400 = arith.mulf %2399, %2386 : vector<8x128xf32>
    %cst_802 = arith.constant 2.50662827 : f32
    %2401 = vector.broadcast %cst_802 : f32 to vector<8x128xf32>
    %2402 = arith.addf %2400, %2401 : vector<8x128xf32>
    %2403 = arith.mulf %2402, %2385 : vector<8x128xf32>
    %cst_803 = arith.constant -54.4760971 : f32
    %2404 = vector.broadcast %cst_803 : f32 to vector<8x128xf32>
    %2405 = arith.mulf %2404, %2386 : vector<8x128xf32>
    %cst_804 = arith.constant 161.585831 : f32
    %2406 = vector.broadcast %cst_804 : f32 to vector<8x128xf32>
    %2407 = arith.addf %2405, %2406 : vector<8x128xf32>
    %2408 = arith.mulf %2407, %2386 : vector<8x128xf32>
    %cst_805 = arith.constant -155.698975 : f32
    %2409 = vector.broadcast %cst_805 : f32 to vector<8x128xf32>
    %2410 = arith.addf %2408, %2409 : vector<8x128xf32>
    %2411 = arith.mulf %2410, %2386 : vector<8x128xf32>
    %cst_806 = arith.constant 66.8013153 : f32
    %2412 = vector.broadcast %cst_806 : f32 to vector<8x128xf32>
    %2413 = arith.addf %2411, %2412 : vector<8x128xf32>
    %2414 = arith.mulf %2413, %2386 : vector<8x128xf32>
    %cst_807 = arith.constant -13.2806816 : f32
    %2415 = vector.broadcast %cst_807 : f32 to vector<8x128xf32>
    %2416 = arith.addf %2414, %2415 : vector<8x128xf32>
    %2417 = arith.mulf %2416, %2386 : vector<8x128xf32>
    %cst_808 = arith.constant 1.000000e+00 : f32
    %2418 = vector.broadcast %cst_808 : f32 to vector<8x128xf32>
    %2419 = arith.addf %2417, %2418 : vector<8x128xf32>
    %2420 = arith.divf %2403, %2419 : vector<8x128xf32>
    %cst_809 = arith.constant 1.000000e+00 : f32
    %2421 = vector.broadcast %cst_809 : f32 to vector<8x128xf32>
    %2422 = arith.subf %2421, %2383 : vector<8x128xf32>
    %2423 = arith.minimumf %2383, %2422 : vector<8x128xf32>
    %2424 = math.log %2423 : vector<8x128xf32>
    %cst_810 = arith.constant -2.000000e+00 : f32
    %2425 = vector.broadcast %cst_810 : f32 to vector<8x128xf32>
    %2426 = arith.mulf %2425, %2424 : vector<8x128xf32>
    %2427 = math.sqrt %2426 : vector<8x128xf32>
    %cst_811 = arith.constant -0.0077848942 : f32
    %2428 = vector.broadcast %cst_811 : f32 to vector<8x128xf32>
    %2429 = arith.mulf %2428, %2427 : vector<8x128xf32>
    %cst_812 = arith.constant -0.322396457 : f32
    %2430 = vector.broadcast %cst_812 : f32 to vector<8x128xf32>
    %2431 = arith.addf %2429, %2430 : vector<8x128xf32>
    %2432 = arith.mulf %2431, %2427 : vector<8x128xf32>
    %cst_813 = arith.constant -2.40075827 : f32
    %2433 = vector.broadcast %cst_813 : f32 to vector<8x128xf32>
    %2434 = arith.addf %2432, %2433 : vector<8x128xf32>
    %2435 = arith.mulf %2434, %2427 : vector<8x128xf32>
    %cst_814 = arith.constant -2.54973245 : f32
    %2436 = vector.broadcast %cst_814 : f32 to vector<8x128xf32>
    %2437 = arith.addf %2435, %2436 : vector<8x128xf32>
    %2438 = arith.mulf %2437, %2427 : vector<8x128xf32>
    %cst_815 = arith.constant 4.37466431 : f32
    %2439 = vector.broadcast %cst_815 : f32 to vector<8x128xf32>
    %2440 = arith.addf %2438, %2439 : vector<8x128xf32>
    %2441 = arith.mulf %2440, %2427 : vector<8x128xf32>
    %cst_816 = arith.constant 2.938164 : f32
    %2442 = vector.broadcast %cst_816 : f32 to vector<8x128xf32>
    %2443 = arith.addf %2441, %2442 : vector<8x128xf32>
    %cst_817 = arith.constant 0.00778469583 : f32
    %2444 = vector.broadcast %cst_817 : f32 to vector<8x128xf32>
    %2445 = arith.mulf %2444, %2427 : vector<8x128xf32>
    %cst_818 = arith.constant 0.322467119 : f32
    %2446 = vector.broadcast %cst_818 : f32 to vector<8x128xf32>
    %2447 = arith.addf %2445, %2446 : vector<8x128xf32>
    %2448 = arith.mulf %2447, %2427 : vector<8x128xf32>
    %cst_819 = arith.constant 2.44513416 : f32
    %2449 = vector.broadcast %cst_819 : f32 to vector<8x128xf32>
    %2450 = arith.addf %2448, %2449 : vector<8x128xf32>
    %2451 = arith.mulf %2450, %2427 : vector<8x128xf32>
    %cst_820 = arith.constant 3.7544086 : f32
    %2452 = vector.broadcast %cst_820 : f32 to vector<8x128xf32>
    %2453 = arith.addf %2451, %2452 : vector<8x128xf32>
    %2454 = arith.mulf %2453, %2427 : vector<8x128xf32>
    %cst_821 = arith.constant 1.000000e+00 : f32
    %2455 = vector.broadcast %cst_821 : f32 to vector<8x128xf32>
    %2456 = arith.addf %2454, %2455 : vector<8x128xf32>
    %2457 = arith.divf %2443, %2456 : vector<8x128xf32>
    %cst_822 = arith.constant 5.000000e-01 : f32
    %2458 = vector.broadcast %cst_822 : f32 to vector<8x128xf32>
    %2459 = arith.cmpf ogt, %2383, %2458 : vector<8x128xf32>
    %cst_823 = arith.constant 0.000000e+00 : f32
    %2460 = vector.broadcast %cst_823 : f32 to vector<8x128xf32>
    %2461 = arith.subf %2460, %2457 : vector<8x128xf32>
    %2462 = arith.select %2459, %2461, %2457 : vector<8x128xi1>, vector<8x128xf32>
    %cst_824 = arith.constant 2.425000e-02 : f32
    %2463 = vector.broadcast %cst_824 : f32 to vector<8x128xf32>
    %2464 = arith.cmpf olt, %2423, %2463 : vector<8x128xf32>
    %2465 = arith.select %2464, %2462, %2420 : vector<8x128xi1>, vector<8x128xf32>
    %cst_825 = arith.constant 1.000000e+00 : f32
    %2466 = vector.broadcast %cst_825 : f32 to vector<8x128xf32>
    %2467 = arith.cmpf oge, %2379, %2466 : vector<8x128xf32>
    %cst_826 = arith.constant 0.000000e+00 : f32
    %2468 = vector.broadcast %cst_826 : f32 to vector<8x128xf32>
    %2469 = arith.cmpf ole, %2379, %2468 : vector<8x128xf32>
    %cst_827 = arith.constant 0.000000e+00 : f32
    %cst_828 = arith.constant 1.000000e+30 : f32
    %2470 = arith.subf %cst_827, %cst_828 : f32
    %2471 = vector.broadcast %2470 : f32 to vector<8x128xf32>
    %2472 = arith.select %2469, %2471, %2465 : vector<8x128xi1>, vector<8x128xf32>
    %cst_829 = arith.constant 1.000000e+30 : f32
    %2473 = vector.broadcast %cst_829 : f32 to vector<8x128xf32>
    %2474 = arith.select %2467, %2473, %2472 : vector<8x128xi1>, vector<8x128xf32>
    %2475 = arith.subf %680, %2474 : vector<8x128xf32>
    %cst_830 = arith.constant 0.000000e+00 : f32
    %2476 = vector.broadcast %cst_830 : f32 to vector<8x128xf32>
    %2477 = arith.maximumf %2476, %2475 : vector<8x128xf32>
    %2478 = arith.mulf %2358, %2477 : vector<8x128xf32>
    %2479 = vector.broadcast %670 : vector<1x1xf32> to vector<8x128xf32>
    %2480 = arith.mulf %2478, %2479 : vector<8x128xf32>
    %c0_831 = arith.constant 0 : index
    %c0_832 = arith.constant 0 : index
    %2481 = vector.load %arg2[%c0_831, %c0_832] : memref<8x128xf32, #tpu.memory_space<vmem>>, vector<8x128xf32>
    tpu.vector_store %arg2[%c0_831, %c0_832], %2480 {strides = array<i32>} : memref<8x128xf32, #tpu.memory_space<vmem>>, vector<8x128xf32>,
    return
  }
  func.func @transform_0(%arg0: i32) -> (i32, i32) {
    %c0_i32 = arith.constant 0 : i32
    %c0_i32_0 = arith.constant 0 : i32
    %c0_i32_1 = arith.constant 0 : i32
    return %c0_i32, %c0_i32_0 : i32, i32
  }
  func.func @transform_1(%arg0: i32) -> (i32, i32) {
    %c0_i32 = arith.constant 0 : i32
    %c0_i32_0 = arith.constant 0 : i32
    %c0_i32_1 = arith.constant 0 : i32
    return %c0_i32, %c0_i32_0 : i32, i32
  }
}

</mosaic_0001>

<llo_original>
// kernel: ebayesthresh_tpu.1
$region0: #{ebayesthresh_tpu.1}
  #allocation0 [shape = 'u32[]', space=smem, size = 0x4, offset = 0x4, fixed_abs, tag = 'smem constant byte address 0x4 - core index']
  #allocation1 [shape = 'u32[144,128]{1,0:T(1,128)}', space=vmem, size = 0x12000, scoped, tag = 'internal scratch']
  %s0 = inlined_call_operand.vmem [shape: f32[8,128], index: 0, kind: input, shape index: {}]
  %s1 = inlined_call_operand.vmem [shape: f32[8,128], index: 1, kind: output, shape index: {}]
  %s2 = sld [smem:[#allocation0]]
  $region14: #{ebayesthresh_tpu.1} parent=0
    _
  %s4 = ssub.s32 1, %s2
  %s5 = scalar_select 0, %s4, %s2
  // Predicated region
  $region2: #{ebayesthresh_tpu.1} parent=0 // pred_check
    _
  $region3: #{ebayesthresh_tpu.1} parent=0 // pred_check_branch
    %7 = sbr.rel (0) target = $region5
  $region4: #{ebayesthresh_tpu.1} parent=0 // pred_region
    _
  $region5: #{ebayesthresh_tpu.1} parent=0 // pred_fallthru
    _
  %v8 = vld [vmem:[%s0] sm:$0xff]
  %v9 = vand.u32 2147483647, %v8
  %v10 = vlaneseq
  %v11 = vshrl.u32 %v10, 7
  %v12 = vlaneseq
  %v13 = vand.u32 %v12, 127
  %v14 = vmul.u32 %v11, 128
  %v15 = vadd.s32 %v14, %v13
  %vm16 = vcmp.lt.s32.totalorder %v15, 255
  %v17 = vsel %vm16, %v9, inf
  %v18 = vsel %vm16, %v9, 0.0
  %v19 = vrot.slane %v18, 4
  %v20 = vmax.f32 %v18, %v19
  %v21 = vrot.slane %v20, 2
  %v22 = vmax.f32 %v20, %v21
  %v23 = vrot.slane %v22, 1
  %v24 = vmax.f32 %v22, %v23
  %25 = vmax.xlane.f32.xlu0 %v24
  %v26 = vpop.xlane.xlu0 %25
  %v27 = vsub.f32 %v26, -1.0
  %v28 = vmul.f32 %v27, 0.25
  %v29 = vadd.f32 %v28, -1.0
  %v30 = vmul.f32 %v27, 0.5
  %v31 = vadd.f32 %v30, -1.0
  %v32 = vmul.f32 %v27, 0.75
  %v33 = vadd.f32 %v32, -1.0
  %vm34 = vcmp.le.f32.partialorder %v17, %v29
  %v35 = vsel %vm34, 1.0, 0.0
  %v36 = vrot.slane %v35, 4
  %v37 = vadd.f32 %v35, %v36
  %v38 = vrot.slane %v37, 2
  %v39 = vadd.f32 %v37, %v38
  %v40 = vrot.slane %v39, 1
  %v41 = vadd.f32 %v39, %v40
  %42 = vadd.xlane.f32.xlu0 %v41
  %v43 = vpop.xlane.xlu0 %42
  %vm44 = vcmp.le.f32.partialorder %v17, %v31
  %v45 = vsel %vm44, 1.0, 0.0
  %v46 = vrot.slane %v45, 4
  %v47 = vadd.f32 %v45, %v46
  %v48 = vrot.slane %v47, 2
  %v49 = vadd.f32 %v47, %v48
  %v50 = vrot.slane %v49, 1
  %v51 = vadd.f32 %v49, %v50
  %52 = vadd.xlane.f32.xlu0 %v51
  %v53 = vpop.xlane.xlu0 %52
  %vm54 = vcmp.le.f32.partialorder %v17, %v33
  %v55 = vsel %vm54, 1.0, 0.0
  %v56 = vrot.slane %v55, 4
  %v57 = vadd.f32 %v55, %v56
  %v58 = vrot.slane %v57, 2
  %v59 = vadd.f32 %v57, %v58
  %v60 = vrot.slane %v59, 1
  %v61 = vadd.f32 %v59, %v60
  %62 = vadd.xlane.f32.xlu0 %v61
  %v63 = vpop.xlane.xlu0 %62
  %vm64 = vcmp.lt.f32.partialorder %v43, 128.0
  %v65 = vsel %vm64, %v29, -1.0
  %vm66 = vcmp.lt.f32.partialorder %v53, 128.0
  %v67 = vsel %vm66, %v31, %v65
  %vm68 = vcmp.lt.f32.partialorder %v63, 128.0
  %v69 = vsel %vm68, %v33, %v67
  %vm70 = vcmp.ge.f32.partialorder %v63, 128.0
  %v71 = vsel %vm70, %v33, %v26
  %vm72 = vcmp.ge.f32.partialorder %v53, 128.0
  %v73 = vsel %vm72, %v31, %v71
  %vm74 = vcmp.ge.f32.partialorder %v43, 128.0
  %v75 = vsel %vm74, %v29, %v73
  %v76 = vsub.f32 %v75, %v69
  %v77 = vmul.f32 %v76, 0.25
  %v78 = vadd.f32 %v69, %v77
  %v79 = vmul.f32 %v76, 0.5
  %v80 = vadd.f32 %v69, %v79
  %v81 = vmul.f32 %v76, 0.75
  %v82 = vadd.f32 %v69, %v81
  %vm83 = vcmp.le.f32.partialorder %v17, %v78
  %v84 = vsel %vm83, 1.0, 0.0
  %v85 = vrot.slane %v84, 4
  %v86 = vadd.f32 %v84, %v85
  %v87 = vrot.slane %v86, 2
  %v88 = vadd.f32 %v86, %v87
  %v89 = vrot.slane %v88, 1
  %v90 = vadd.f32 %v88, %v89
  %91 = vadd.xlane.f32.xlu0 %v90
  %v92 = vpop.xlane.xlu0 %91
  %vm93 = vcmp.le.f32.partialorder %v17, %v80
  %v94 = vsel %vm93, 1.0, 0.0
  %v95 = vrot.slane %v94, 4
  %v96 = vadd.f32 %v94, %v95
  %v97 = vrot.slane %v96, 2
  %v98 = vadd.f32 %v96, %v97
  %v99 = vrot.slane %v98, 1
  %v100 = vadd.f32 %v98, %v99
  %101 = vadd.xlane.f32.xlu0 %v100
  %v102 = vpop.xlane.xlu0 %101
  %vm103 = vcmp.le.f32.partialorder %v17, %v82
  %v104 = vsel %vm103, 1.0, 0.0
  %v105 = vrot.slane %v104, 4
  %v106 = vadd.f32 %v104, %v105
  %v107 = vrot.slane %v106, 2
  %v108 = vadd.f32 %v106, %v107
  %v109 = vrot.slane %v108, 1
  %v110 = vadd.f32 %v108, %v109
  %111 = vadd.xlane.f32.xlu0 %v110
  %v112 = vpop.xlane.xlu0 %111
  %vm113 = vcmp.lt.f32.partialorder %v92, 128.0
  %v114 = vsel %vm113, %v78, %v69
  %vm115 = vcmp.lt.f32.partialorder %v102, 128.0
  %v116 = vsel %vm115, %v80, %v114
  %vm117 = vcmp.lt.f32.partialorder %v112, 128.0
  %v118 = vsel %vm117, %v82, %v116
  %vm119 = vcmp.ge.f32.partialorder %v112, 128.0
  %v120 = vsel %vm119, %v82, %v75
  %vm121 = vcmp.ge.f32.partialorder %v102, 128.0
  %v122 = vsel %vm121, %v80, %v120
  %vm123 = vcmp.ge.f32.partialorder %v92, 128.0
  %v124 = vsel %vm123, %v78, %v122
  %v125 = vsub.f32 %v124, %v118
  %v126 = vmul.f32 %v125, 0.25
  %v127 = vadd.f32 %v118, %v126
  %v128 = vmul.f32 %v125, 0.5
  %v129 = vadd.f32 %v118, %v128
  %v130 = vmul.f32 %v125, 0.75
  %v131 = vadd.f32 %v118, %v130
  %vm132 = vcmp.le.f32.partialorder %v17, %v127
  %v133 = vsel %vm132, 1.0, 0.0
  %v134 = vrot.slane %v133, 4
  %v135 = vadd.f32 %v133, %v134
  %v136 = vrot.slane %v135, 2
  %v137 = vadd.f32 %v135, %v136
  %v138 = vrot.slane %v137, 1
  %v139 = vadd.f32 %v137, %v138
  %140 = vadd.xlane.f32.xlu0 %v139
  %v141 = vpop.xlane.xlu0 %140
  %vm142 = vcmp.le.f32.partialorder %v17, %v129
  %v143 = vsel %vm142, 1.0, 0.0
  %v144 = vrot.slane %v143, 4
  %v145 = vadd.f32 %v143, %v144
  %v146 = vrot.slane %v145, 2
  %v147 = vadd.f32 %v145, %v146
  %v148 = vrot.slane %v147, 1
  %v149 = vadd.f32 %v147, %v148
  %150 = vadd.xlane.f32.xlu0 %v149
  %v151 = vpop.xlane.xlu0 %150
  %vm152 = vcmp.le.f32.partialorder %v17, %v131
  %v153 = vsel %vm152, 1.0, 0.0
  %v154 = vrot.slane %v153, 4
  %v155 = vadd.f32 %v153, %v154
  %v156 = vrot.slane %v155, 2
  %v157 = vadd.f32 %v155, %v156
  %v158 = vrot.slane %v157, 1
  %v159 = vadd.f32 %v157, %v158
  %160 = vadd.xlane.f32.xlu0 %v159
  %v161 = vpop.xlane.xlu0 %160
  %vm162 = vcmp.lt.f32.partialorder %v141, 128.0
  %v163 = vsel %vm162, %v127, %v118
  %vm164 = vcmp.lt.f32.partialorder %v151, 128.0
  %v165 = vsel %vm164, %v129, %v163
  %vm166 = vcmp.lt.f32.partialorder %v161, 128.0
  %v167 = vsel %vm166, %v131, %v165
  %vm168 = vcmp.ge.f32.partialorder %v161, 128.0
  %v169 = vsel %vm168, %v131, %v124
  %vm170 = vcmp.ge.f32.partialorder %v151, 128.0
  %v171 = vsel %vm170, %v129, %v169
  %vm172 = vcmp.ge.f32.partialorder %v141, 128.0
  %v173 = vsel %vm172, %v127, %v171
  %v174 = vsub.f32 %v173, %v167
  %v175 = vmul.f32 %v174, 0.25
  %v176 = vadd.f32 %v167, %v175
  %v177 = vmul.f32 %v174, 0.5
  %v178 = vadd.f32 %v167, %v177
  %v179 = vmul.f32 %v174, 0.75
  %v180 = vadd.f32 %v167, %v179
  %vm181 = vcmp.le.f32.partialorder %v17, %v176
  %v182 = vsel %vm181, 1.0, 0.0
  %v183 = vrot.slane %v182, 4
  %v184 = vadd.f32 %v182, %v183
  %v185 = vrot.slane %v184, 2
  %v186 = vadd.f32 %v184, %v185
  %v187 = vrot.slane %v186, 1
  %v188 = vadd.f32 %v186, %v187
  %189 = vadd.xlane.f32.xlu0 %v188
  %v190 = vpop.xlane.xlu0 %189
  %vm191 = vcmp.le.f32.partialorder %v17, %v178
  %v192 = vsel %vm191, 1.0, 0.0
  %v193 = vrot.slane %v192, 4
  %v194 = vadd.f32 %v192, %v193
  %v195 = vrot.slane %v194, 2
  %v196 = vadd.f32 %v194, %v195
  %v197 = vrot.slane %v196, 1
  %v198 = vadd.f32 %v196, %v197
  %199 = vadd.xlane.f32.xlu0 %v198
  %v200 = vpop.xlane.xlu0 %199
  %vm201 = vcmp.le.f32.partialorder %v17, %v180
  %v202 = vsel %vm201, 1.0, 0.0
  %v203 = vrot.slane %v202, 4
  %v204 = vadd.f32 %v202, %v203
  %v205 = vrot.slane %v204, 2
  %v206 = vadd.f32 %v204, %v205
  %v207 = vrot.slane %v206, 1
  %v208 = vadd.f32 %v206, %v207
  %209 = vadd.xlane.f32.xlu0 %v208
  %v210 = vpop.xlane.xlu0 %209
  %vm211 = vcmp.lt.f32.partialorder %v190, 128.0
  %v212 = vsel %vm211, %v176, %v167
  %vm213 = vcmp.lt.f32.partialorder %v200, 128.0
  %v214 = vsel %vm213, %v178, %v212
  %vm215 = vcmp.lt.f32.partialorder %v210, 128.0
  %v216 = vsel %vm215, %v180, %v214
  %vm217 = vcmp.ge.f32.partialorder %v210, 128.0
  %v218 = vsel %vm217, %v180, %v173
  %vm219 = vcmp.ge.f32.partialorder %v200, 128.0
  %v220 = vsel %vm219, %v178, %v218
  %vm221 = vcmp.ge.f32.partialorder %v190, 128.0
  %v222 = vsel %vm221, %v176, %v220
  %v223 = vsub.f32 %v222, %v216
  %v224 = vmul.f32 %v223, 0.25
  %v225 = vadd.f32 %v216, %v224
  %v226 = vmul.f32 %v223, 0.5
  %v227 = vadd.f32 %v216, %v226
  %v228 = vmul.f32 %v223, 0.75
  %v229 = vadd.f32 %v216, %v228
  %vm230 = vcmp.le.f32.partialorder %v17, %v225
  %v231 = vsel %vm230, 1.0, 0.0
  %v232 = vrot.slane %v231, 4
  %v233 = vadd.f32 %v231, %v232
  %v234 = vrot.slane %v233, 2
  %v235 = vadd.f32 %v233, %v234
  %v236 = vrot.slane %v235, 1
  %v237 = vadd.f32 %v235, %v236
  %238 = vadd.xlane.f32.xlu0 %v237
  %v239 = vpop.xlane.xlu0 %238
  %vm240 = vcmp.le.f32.partialorder %v17, %v227
  %v241 = vsel %vm240, 1.0, 0.0
  %v242 = vrot.slane %v241, 4
  %v243 = vadd.f32 %v241, %v242
  %v244 = vrot.slane %v243, 2
  %v245 = vadd.f32 %v243, %v244
  %v246 = vrot.slane %v245, 1
  %v247 = vadd.f32 %v245, %v246
  %248 = vadd.xlane.f32.xlu0 %v247
  %v249 = vpop.xlane.xlu0 %248
  %vm250 = vcmp.le.f32.partialorder %v17, %v229
  %v251 = vsel %vm250, 1.0, 0.0
  %v252 = vrot.slane %v251, 4
  %v253 = vadd.f32 %v251, %v252
  %v254 = vrot.slane %v253, 2
  %v255 = vadd.f32 %v253, %v254
  %v256 = vrot.slane %v255, 1
  %v257 = vadd.f32 %v255, %v256
  %258 = vadd.xlane.f32.xlu0 %v257
  %v259 = vpop.xlane.xlu0 %258
  %vm260 = vcmp.lt.f32.partialorder %v239, 128.0
  %v261 = vsel %vm260, %v225, %v216
  %vm262 = vcmp.lt.f32.partialorder %v249, 128.0
  %v263 = vsel %vm262, %v227, %v261
  %vm264 = vcmp.lt.f32.partialorder %v259, 128.0
  %v265 = vsel %vm264, %v229, %v263
  %vm266 = vcmp.ge.f32.partialorder %v259, 128.0
  %v267 = vsel %vm266, %v229, %v222
  %vm268 = vcmp.ge.f32.partialorder %v249, 128.0
  %v269 = vsel %vm268, %v227, %v267
  %vm270 = vcmp.ge.f32.partialorder %v239, 128.0
  %v271 = vsel %vm270, %v225, %v269
  %v272 = vsub.f32 %v271, %v265
  %v273 = vmul.f32 %v272, 0.25
  %v274 = vadd.f32 %v265, %v273
  %v275 = vmul.f32 %v272, 0.5
  %v276 = vadd.f32 %v265, %v275
  %v277 = vmul.f32 %v272, 0.75
  %v278 = vadd.f32 %v265, %v277
  %vm279 = vcmp.le.f32.partialorder %v17, %v274
  %v280 = vsel %vm279, 1.0, 0.0
  %v281 = vrot.slane %v280, 4
  %v282 = vadd.f32 %v280, %v281
  %v283 = vrot.slane %v282, 2
  %v284 = vadd.f32 %v282, %v283
  %v285 = vrot.slane %v284, 1
  %v286 = vadd.f32 %v284, %v285
  %287 = vadd.xlane.f32.xlu0 %v286
  %v288 = vpop.xlane.xlu0 %287
  %vm289 = vcmp.le.f32.partialorder %v17, %v276
  %v290 = vsel %vm289, 1.0, 0.0
  %v291 = vrot.slane %v290, 4
  %v292 = vadd.f32 %v290, %v291
  %v293 = vrot.slane %v292, 2
  %v294 = vadd.f32 %v292, %v293
  %v295 = vrot.slane %v294, 1
  %v296 = vadd.f32 %v294, %v295
  %297 = vadd.xlane.f32.xlu0 %v296
  %v298 = vpop.xlane.xlu0 %297
  %vm299 = vcmp.le.f32.partialorder %v17, %v278
  %v300 = vsel %vm299, 1.0, 0.0
  %v301 = vrot.slane %v300, 4
  %v302 = vadd.f32 %v300, %v301
  %v303 = vrot.slane %v302, 2
  %v304 = vadd.f32 %v302, %v303
  %v305 = vrot.slane %v304, 1
  %v306 = vadd.f32 %v304, %v305
  %307 = vadd.xlane.f32.xlu0 %v306
  %v308 = vpop.xlane.xlu0 %307
  %vm309 = vcmp.lt.f32.partialorder %v288, 128.0
  %v310 = vsel %vm309, %v274, %v265
  %vm311 = vcmp.lt.f32.partialorder %v298, 128.0
  %v312 = vsel %vm311, %v276, %v310
  %vm313 = vcmp.lt.f32.partialorder %v308, 128.0
  %v314 = vsel %vm313, %v278, %v312
  %vm315 = vcmp.ge.f32.partialorder %v308, 128.0
  %v316 = vsel %vm315, %v278, %v271
  %vm317 = vcmp.ge.f32.partialorder %v298, 128.0
  %v318 = vsel %vm317, %v276, %v316
  %vm319 = vcmp.ge.f32.partialorder %v288, 128.0
  %v320 = vsel %vm319, %v274, %v318
  %v321 = vsub.f32 %v320, %v314
  %v322 = vmul.f32 %v321, 0.25
  %v323 = vadd.f32 %v314, %v322
  %v324 = vmul.f32 %v321, 0.5
  %v325 = vadd.f32 %v314, %v324
  %v326 = vmul.f32 %v321, 0.75
  %v327 = vadd.f32 %v314, %v326
  %vm328 = vcmp.le.f32.partialorder %v17, %v323
  %v329 = vsel %vm328, 1.0, 0.0
  %v330 = vrot.slane %v329, 4
  %v331 = vadd.f32 %v329, %v330
  %v332 = vrot.slane %v331, 2
  %v333 = vadd.f32 %v331, %v332
  %v334 = vrot.slane %v333, 1
  %v335 = vadd.f32 %v333, %v334
  %336 = vadd.xlane.f32.xlu0 %v335
  %v337 = vpop.xlane.xlu0 %336
  %vm338 = vcmp.le.f32.partialorder %v17, %v325
  %v339 = vsel %vm338, 1.0, 0.0
  %v340 = vrot.slane %v339, 4
  %v341 = vadd.f32 %v339, %v340
  %v342 = vrot.slane %v341, 2
  %v343 = vadd.f32 %v341, %v342
  %v344 = vrot.slane %v343, 1
  %v345 = vadd.f32 %v343, %v344
  %346 = vadd.xlane.f32.xlu0 %v345
  %v347 = vpop.xlane.xlu0 %346
  %vm348 = vcmp.le.f32.partialorder %v17, %v327
  %v349 = vsel %vm348, 1.0, 0.0
  %v350 = vrot.slane %v349, 4
  %v351 = vadd.f32 %v349, %v350
  %v352 = vrot.slane %v351, 2
  %v353 = vadd.f32 %v351, %v352
  %v354 = vrot.slane %v353, 1
  %v355 = vadd.f32 %v353, %v354
  %356 = vadd.xlane.f32.xlu0 %v355
  %v357 = vpop.xlane.xlu0 %356
  %vm358 = vcmp.lt.f32.partialorder %v337, 128.0
  %v359 = vsel %vm358, %v323, %v314
  %vm360 = vcmp.lt.f32.partialorder %v347, 128.0
  %v361 = vsel %vm360, %v325, %v359
  %vm362 = vcmp.lt.f32.partialorder %v357, 128.0
  %v363 = vsel %vm362, %v327, %v361
  %vm364 = vcmp.ge.f32.partialorder %v357, 128.0
  %v365 = vsel %vm364, %v327, %v320
  %vm366 = vcmp.ge.f32.partialorder %v347, 128.0
  %v367 = vsel %vm366, %v325, %v365
  %vm368 = vcmp.ge.f32.partialorder %v337, 128.0
  %v369 = vsel %vm368, %v323, %v367
  %v370 = vsub.f32 %v369, %v363
  %v371 = vmul.f32 %v370, 0.25
  %v372 = vadd.f32 %v363, %v371
  %v373 = vmul.f32 %v370, 0.5
  %v374 = vadd.f32 %v363, %v373
  %v375 = vmul.f32 %v370, 0.75
  %v376 = vadd.f32 %v363, %v375
  %vm377 = vcmp.le.f32.partialorder %v17, %v372
  %v378 = vsel %vm377, 1.0, 0.0
  %v379 = vrot.slane %v378, 4
  %v380 = vadd.f32 %v378, %v379
  %v381 = vrot.slane %v380, 2
  %v382 = vadd.f32 %v380, %v381
  %v383 = vrot.slane %v382, 1
  %v384 = vadd.f32 %v382, %v383
  %385 = vadd.xlane.f32.xlu0 %v384
  %v386 = vpop.xlane.xlu0 %385
  %vm387 = vcmp.le.f32.partialorder %v17, %v374
  %v388 = vsel %vm387, 1.0, 0.0
  %v389 = vrot.slane %v388, 4
  %v390 = vadd.f32 %v388, %v389
  %v391 = vrot.slane %v390, 2
  %v392 = vadd.f32 %v390, %v391
  %v393 = vrot.slane %v392, 1
  %v394 = vadd.f32 %v392, %v393
  %395 = vadd.xlane.f32.xlu0 %v394
  %v396 = vpop.xlane.xlu0 %395
  %vm397 = vcmp.le.f32.partialorder %v17, %v376
  %v398 = vsel %vm397, 1.0, 0.0
  %v399 = vrot.slane %v398, 4
  %v400 = vadd.f32 %v398, %v399
  %v401 = vrot.slane %v400, 2
  %v402 = vadd.f32 %v400, %v401
  %v403 = vrot.slane %v402, 1
  %v404 = vadd.f32 %v402, %v403
  %405 = vadd.xlane.f32.xlu0 %v404
  %v406 = vpop.xlane.xlu0 %405
  %vm407 = vcmp.lt.f32.partialorder %v386, 128.0
  %v408 = vsel %vm407, %v372, %v363
  %vm409 = vcmp.lt.f32.partialorder %v396, 128.0
  %v410 = vsel %vm409, %v374, %v408
  %vm411 = vcmp.lt.f32.partialorder %v406, 128.0
  %v412 = vsel %vm411, %v376, %v410
  %vm413 = vcmp.ge.f32.partialorder %v406, 128.0
  %v414 = vsel %vm413, %v376, %v369
  %vm415 = vcmp.ge.f32.partialorder %v396, 128.0
  %v416 = vsel %vm415, %v374, %v414
  %vm417 = vcmp.ge.f32.partialorder %v386, 128.0
  %v418 = vsel %vm417, %v372, %v416
  %v419 = vsub.f32 %v418, %v412
  %v420 = vmul.f32 %v419, 0.25
  %v421 = vadd.f32 %v412, %v420
  %v422 = vmul.f32 %v419, 0.5
  %v423 = vadd.f32 %v412, %v422
  %v424 = vmul.f32 %v419, 0.75
  %v425 = vadd.f32 %v412, %v424
  %vm426 = vcmp.le.f32.partialorder %v17, %v421
  %v427 = vsel %vm426, 1.0, 0.0
  %v428 = vrot.slane %v427, 4
  %v429 = vadd.f32 %v427, %v428
  %v430 = vrot.slane %v429, 2
  %v431 = vadd.f32 %v429, %v430
  %v432 = vrot.slane %v431, 1
  %v433 = vadd.f32 %v431, %v432
  %434 = vadd.xlane.f32.xlu0 %v433
  %v435 = vpop.xlane.xlu0 %434
  %vm436 = vcmp.le.f32.partialorder %v17, %v423
  %v437 = vsel %vm436, 1.0, 0.0
  %v438 = vrot.slane %v437, 4
  %v439 = vadd.f32 %v437, %v438
  %v440 = vrot.slane %v439, 2
  %v441 = vadd.f32 %v439, %v440
  %v442 = vrot.slane %v441, 1
  %v443 = vadd.f32 %v441, %v442
  %444 = vadd.xlane.f32.xlu0 %v443
  %v445 = vpop.xlane.xlu0 %444
  %vm446 = vcmp.le.f32.partialorder %v17, %v425
  %v447 = vsel %vm446, 1.0, 0.0
  %v448 = vrot.slane %v447, 4
  %v449 = vadd.f32 %v447, %v448
  %v450 = vrot.slane %v449, 2
  %v451 = vadd.f32 %v449, %v450
  %v452 = vrot.slane %v451, 1
  %v453 = vadd.f32 %v451, %v452
  %454 = vadd.xlane.f32.xlu0 %v453
  %v455 = vpop.xlane.xlu0 %454
  %vm456 = vcmp.lt.f32.partialorder %v435, 128.0
  %v457 = vsel %vm456, %v421, %v412
  %vm458 = vcmp.lt.f32.partialorder %v445, 128.0
  %v459 = vsel %vm458, %v423, %v457
  %vm460 = vcmp.lt.f32.partialorder %v455, 128.0
  %v461 = vsel %vm460, %v425, %v459
  %vm462 = vcmp.ge.f32.partialorder %v455, 128.0
  %v463 = vsel %vm462, %v425, %v418
  %vm464 = vcmp.ge.f32.partialorder %v445, 128.0
  %v465 = vsel %vm464, %v423, %v463
  %vm466 = vcmp.ge.f32.partialorder %v435, 128.0
  %v467 = vsel %vm466, %v421, %v465
  %v468 = vsub.f32 %v467, %v461
  %v469 = vmul.f32 %v468, 0.25
  %v470 = vadd.f32 %v461, %v469
  %v471 = vmul.f32 %v468, 0.5
  %v472 = vadd.f32 %v461, %v471
  %v473 = vmul.f32 %v468, 0.75
  %v474 = vadd.f32 %v461, %v473
  %vm475 = vcmp.le.f32.partialorder %v17, %v470
  %v476 = vsel %vm475, 1.0, 0.0
  %v477 = vrot.slane %v476, 4
  %v478 = vadd.f32 %v476, %v477
  %v479 = vrot.slane %v478, 2
  %v480 = vadd.f32 %v478, %v479
  %v481 = vrot.slane %v480, 1
  %v482 = vadd.f32 %v480, %v481
  %483 = vadd.xlane.f32.xlu0 %v482
  %v484 = vpop.xlane.xlu0 %483
  %vm485 = vcmp.le.f32.partialorder %v17, %v472
  %v486 = vsel %vm485, 1.0, 0.0
  %v487 = vrot.slane %v486, 4
  %v488 = vadd.f32 %v486, %v487
  %v489 = vrot.slane %v488, 2
  %v490 = vadd.f32 %v488, %v489
  %v491 = vrot.slane %v490, 1
  %v492 = vadd.f32 %v490, %v491
  %493 = vadd.xlane.f32.xlu0 %v492
  %v494 = vpop.xlane.xlu0 %493
  %vm495 = vcmp.le.f32.partialorder %v17, %v474
  %v496 = vsel %vm495, 1.0, 0.0
  %v497 = vrot.slane %v496, 4
  %v498 = vadd.f32 %v496, %v497
  %v499 = vrot.slane %v498, 2
  %v500 = vadd.f32 %v498, %v499
  %v501 = vrot.slane %v500, 1
  %v502 = vadd.f32 %v500, %v501
  %503 = vadd.xlane.f32.xlu0 %v502
  %v504 = vpop.xlane.xlu0 %503
  %vm505 = vcmp.lt.f32.partialorder %v484, 128.0
  %v506 = vsel %vm505, %v470, %v461
  %vm507 = vcmp.lt.f32.partialorder %v494, 128.0
  %v508 = vsel %vm507, %v472, %v506
  %vm509 = vcmp.lt.f32.partialorder %v504, 128.0
  %v510 = vsel %vm509, %v474, %v508
  %vm511 = vcmp.ge.f32.partialorder %v504, 128.0
  %v512 = vsel %vm511, %v474, %v467
  %vm513 = vcmp.ge.f32.partialorder %v494, 128.0
  %v514 = vsel %vm513, %v472, %v512
  %vm515 = vcmp.ge.f32.partialorder %v484, 128.0
  %v516 = vsel %vm515, %v470, %v514
  %v517 = vsub.f32 %v516, %v510
  %v518 = vmul.f32 %v517, 0.25
  %v519 = vadd.f32 %v510, %v518
  %v520 = vmul.f32 %v517, 0.5
  %v521 = vadd.f32 %v510, %v520
  %v522 = vmul.f32 %v517, 0.75
  %v523 = vadd.f32 %v510, %v522
  %vm524 = vcmp.le.f32.partialorder %v17, %v519
  %v525 = vsel %vm524, 1.0, 0.0
  %v526 = vrot.slane %v525, 4
  %v527 = vadd.f32 %v525, %v526
  %v528 = vrot.slane %v527, 2
  %v529 = vadd.f32 %v527, %v528
  %v530 = vrot.slane %v529, 1
  %v531 = vadd.f32 %v529, %v530
  %532 = vadd.xlane.f32.xlu0 %v531
  %v533 = vpop.xlane.xlu0 %532
  %vm534 = vcmp.le.f32.partialorder %v17, %v521
  %v535 = vsel %vm534, 1.0, 0.0
  %v536 = vrot.slane %v535, 4
  %v537 = vadd.f32 %v535, %v536
  %v538 = vrot.slane %v537, 2
  %v539 = vadd.f32 %v537, %v538
  %v540 = vrot.slane %v539, 1
  %v541 = vadd.f32 %v539, %v540
  %542 = vadd.xlane.f32.xlu0 %v541
  %v543 = vpop.xlane.xlu0 %542
  %vm544 = vcmp.le.f32.partialorder %v17, %v523
  %v545 = vsel %vm544, 1.0, 0.0
  %v546 = vrot.slane %v545, 4
  %v547 = vadd.f32 %v545, %v546
  %v548 = vrot.slane %v547, 2
  %v549 = vadd.f32 %v547, %v548
  %v550 = vrot.slane %v549, 1
  %v551 = vadd.f32 %v549, %v550
  %552 = vadd.xlane.f32.xlu0 %v551
  %v553 = vpop.xlane.xlu0 %552
  %vm554 = vcmp.lt.f32.partialorder %v533, 128.0
  %v555 = vsel %vm554, %v519, %v510
  %vm556 = vcmp.lt.f32.partialorder %v543, 128.0
  %v557 = vsel %vm556, %v521, %v555
  %vm558 = vcmp.lt.f32.partialorder %v553, 128.0
  %v559 = vsel %vm558, %v523, %v557
  %vm560 = vcmp.ge.f32.partialorder %v553, 128.0
  %v561 = vsel %vm560, %v523, %v516
  %vm562 = vcmp.ge.f32.partialorder %v543, 128.0
  %v563 = vsel %vm562, %v521, %v561
  %vm564 = vcmp.ge.f32.partialorder %v533, 128.0
  %v565 = vsel %vm564, %v519, %v563
  %v566 = vsub.f32 %v565, %v559
  %v567 = vmul.f32 %v566, 0.25
  %v568 = vadd.f32 %v559, %v567
  %v569 = vmul.f32 %v566, 0.5
  %v570 = vadd.f32 %v559, %v569
  %v571 = vmul.f32 %v566, 0.75
  %v572 = vadd.f32 %v559, %v571
  %vm573 = vcmp.le.f32.partialorder %v17, %v568
  %v574 = vsel %vm573, 1.0, 0.0
  %v575 = vrot.slane %v574, 4
  %v576 = vadd.f32 %v574, %v575
  %v577 = vrot.slane %v576, 2
  %v578 = vadd.f32 %v576, %v577
  %v579 = vrot.slane %v578, 1
  %v580 = vadd.f32 %v578, %v579
  %581 = vadd.xlane.f32.xlu0 %v580
  %v582 = vpop.xlane.xlu0 %581
  %vm583 = vcmp.le.f32.partialorder %v17, %v570
  %v584 = vsel %vm583, 1.0, 0.0
  %v585 = vrot.slane %v584, 4
  %v586 = vadd.f32 %v584, %v585
  %v587 = vrot.slane %v586, 2
  %v588 = vadd.f32 %v586, %v587
  %v589 = vrot.slane %v588, 1
  %v590 = vadd.f32 %v588, %v589
  %591 = vadd.xlane.f32.xlu0 %v590
  %v592 = vpop.xlane.xlu0 %591
  %vm593 = vcmp.le.f32.partialorder %v17, %v572
  %v594 = vsel %vm593, 1.0, 0.0
  %v595 = vrot.slane %v594, 4
  %v596 = vadd.f32 %v594, %v595
  %v597 = vrot.slane %v596, 2
  %v598 = vadd.f32 %v596, %v597
  %v599 = vrot.slane %v598, 1
  %v600 = vadd.f32 %v598, %v599
  %601 = vadd.xlane.f32.xlu0 %v600
  %v602 = vpop.xlane.xlu0 %601
  %vm603 = vcmp.ge.f32.partialorder %v602, 128.0
  %v604 = vsel %vm603, %v572, %v565
  %vm605 = vcmp.ge.f32.partialorder %v592, 128.0
  %v606 = vsel %vm605, %v570, %v604
  %vm607 = vcmp.ge.f32.partialorder %v582, 128.0
  %v608 = vsel %vm607, %v568, %v606
  %v609 = vmul.f32 %v608, 1.4826
  %v610 = vmul.f32 %v609, 0.5
  %v611 = vrcp.pop %v609
  %v612 = vmul.f32 1.0, %v611
  %v613 = vmul.f32 %v9, %v612
  %v614 = vadd.f32 %v613, %v610
  %v615 = vsub.f32 %v613, %v610
  %v616 = vmul.f32 %v614, 0.70710677
  %v617 = vmin.f32 %v616, 0.46875
  %v618 = vmul.f32 %v617, %v617
  %v619 = vmul.f32 %v618, 0.18577771
  %v620 = vadd.f32 %v619, 3.1611238
  %v621 = vmul.f32 %v620, %v618
  %v622 = vadd.f32 %v618, 23.601292
  %v623 = vmul.f32 %v622, %v618
  %v624 = vadd.f32 %v621, 113.86415
  %v625 = vmul.f32 %v624, %v618
  %v626 = vadd.f32 %v623, 244.02464
  %v627 = vmul.f32 %v626, %v618
  %v628 = vadd.f32 %v625, 377.48523
  %v629 = vmul.f32 %v628, %v618
  %v630 = vadd.f32 %v627, 1282.6166
  %v631 = vmul.f32 %v630, %v618
  %v632 = vadd.f32 %v629, 3209.3777
  %v633 = vmul.f32 %v617, %v632
  %v634 = vadd.f32 %v631, 2844.2368
  %v635 = vrcp.pop %v634
  %v636 = vmul.f32 %v633, %v635
  %v637 = vmul.f32 %v618, 1.442695
  %v638 = vpow.pop %v637
  %v639 = vsub.f32 1.0, %v636
  %v640 = vmul.f32 %v638, %v639
  %v641 = vmax.f32 %v616, 0.46875
  %v642 = vmin.f32 %v641, 4.0
  %v643 = vmul.f32 %v642, 2.1531154e-08
  %v644 = vadd.f32 %v643, 0.5641885
  %v645 = vmul.f32 %v644, %v642
  %v646 = vadd.f32 %v642, 15.744926
  %v647 = vmul.f32 %v646, %v642
  %v648 = vadd.f32 %v645, 8.88315
  %v649 = vmul.f32 %v648, %v642
  %v650 = vadd.f32 %v647, 117.693954
  %v651 = vmul.f32 %v650, %v642
  %v652 = vadd.f32 %v649, 66.119194
  %v653 = vmul.f32 %v652, %v642
  %v654 = vadd.f32 %v651, 537.1811
  %v655 = vmul.f32 %v654, %v642
  %v656 = vadd.f32 %v653, 298.63513
  %v657 = vmul.f32 %v656, %v642
  %v658 = vadd.f32 %v655, 1621.3895
  %v659 = vmul.f32 %v658, %v642
  %v660 = vadd.f32 %v657, 881.9522
  %v661 = vmul.f32 %v660, %v642
  %v662 = vadd.f32 %v659, 3290.7993
  %v663 = vmul.f32 %v662, %v642
  %v664 = vadd.f32 %v661, 1712.0476
  %v665 = vmul.f32 %v664, %v642
  %v666 = vadd.f32 %v663, 4362.619
  %v667 = vmul.f32 %v666, %v642
  %v668 = vadd.f32 %v665, 2051.0784
  %v669 = vmul.f32 %v668, %v642
  %v670 = vadd.f32 %v667, 3439.3677
  %v671 = vmul.f32 %v670, %v642
  %v672 = vadd.f32 %v669, 1230.3394
  %v673 = vadd.f32 %v671, 1230.3394
  %v674 = vrcp.pop %v673
  %v675 = vmul.f32 %v672, %v674
  %v676 = vmax.f32 %v616, 4.0
  %v677 = vmul.f32 %v676, %v676
  %v678 = vrcp.pop %v677
  %v679 = vmul.f32 1.0, %v678
  %v680 = vmul.f32 %v679, 0.016315388
  %v681 = vadd.f32 %v680, 0.30532664
  %v682 = vmul.f32 %v681, %v679
  %v683 = vadd.f32 %v679, 2.5685203
  %v684 = vmul.f32 %v683, %v679
  %v685 = vadd.f32 %v682, 0.3603449
  %v686 = vmul.f32 %v685, %v679
  %v687 = vadd.f32 %v684, 1.8729528
  %v688 = vmul.f32 %v687, %v679
  %v689 = vadd.f32 %v686, 0.12578173
  %v690 = vmul.f32 %v689, %v679
  %v691 = vadd.f32 %v688, 0.5279051
  %v692 = vmul.f32 %v691, %v679
  %v693 = vadd.f32 %v690, 0.016083784
  %v694 = vmul.f32 %v693, %v679
  %v695 = vadd.f32 %v692, 0.060518343
  %v696 = vmul.f32 %v695, %v679
  %v697 = vadd.f32 %v694, 0.00065874914
  %v698 = vmul.f32 %v679, %v697
  %v699 = vadd.f32 %v696, 0.002335205
  %v700 = vrcp.pop %v699
  %v701 = vmul.f32 %v698, %v700
  %v702 = vsub.f32 0.5641896, %v701
  %v703 = vrcp.pop %v676
  %v704 = vmul.f32 %v702, %v703
  %vm705 = vcmp.le.f32.partialorder %v616, 0.46875
  %vm706 = vcmp.le.f32.partialorder %v616, 4.0
  %v707 = vsel %vm706, %v675, %v704
  %v708 = vsel %vm705, %v640, %v707
  %v709 = vmul.f32 %v708, 1.2533141
  %v710 = vmul.f32 %v615, 0.70710677
  %v711 = vsub.f32 0.0, %v710
  %v712 = vmul.f32 %v711, %v710
  %v713 = vmul.f32 %v712, 1.442695
  %v714 = vpow.pop %v713
  %v715 = vrcp.pop %v714
  %v716 = vmul.f32 1.0, %v715
  %v717 = vand.u32 2147483647, %v710
  %v718 = vmin.f32 %v717, 0.46875
  %v719 = vmul.f32 %v718, %v718
  %v720 = vmul.f32 %v719, 0.18577771
  %v721 = vadd.f32 %v720, 3.1611238
  %v722 = vmul.f32 %v721, %v719
  %v723 = vadd.f32 %v719, 23.601292
  %v724 = vmul.f32 %v723, %v719
  %v725 = vadd.f32 %v722, 113.86415
  %v726 = vmul.f32 %v725, %v719
  %v727 = vadd.f32 %v724, 244.02464
  %v728 = vmul.f32 %v727, %v719
  %v729 = vadd.f32 %v726, 377.48523
  %v730 = vmul.f32 %v729, %v719
  %v731 = vadd.f32 %v728, 1282.6166
  %v732 = vmul.f32 %v731, %v719
  %v733 = vadd.f32 %v730, 3209.3777
  %v734 = vmul.f32 %v718, %v733
  %v735 = vadd.f32 %v732, 2844.2368
  %v736 = vrcp.pop %v735
  %v737 = vmul.f32 %v734, %v736
  %v738 = vsub.f32 1.0, %v737
  %v739 = vmul.f32 %v716, %v738
  %v740 = vmax.f32 %v717, 0.46875
  %v741 = vmin.f32 %v740, 4.0
  %v742 = vmul.f32 %v741, 2.1531154e-08
  %v743 = vadd.f32 %v742, 0.5641885
  %v744 = vmul.f32 %v743, %v741
  %v745 = vadd.f32 %v741, 15.744926
  %v746 = vmul.f32 %v745, %v741
  %v747 = vadd.f32 %v744, 8.88315
  %v748 = vmul.f32 %v747, %v741
  %v749 = vadd.f32 %v746, 117.693954
  %v750 = vmul.f32 %v749, %v741
  %v751 = vadd.f32 %v748, 66.119194
  %v752 = vmul.f32 %v751, %v741
  %v753 = vadd.f32 %v750, 537.1811
  %v754 = vmul.f32 %v753, %v741
  %v755 = vadd.f32 %v752, 298.63513
  %v756 = vmul.f32 %v755, %v741
  %v757 = vadd.f32 %v754, 1621.3895
  %v758 = vmul.f32 %v757, %v741
  %v759 = vadd.f32 %v756, 881.9522
  %v760 = vmul.f32 %v759, %v741
  %v761 = vadd.f32 %v758, 3290.7993
  %v762 = vmul.f32 %v761, %v741
  %v763 = vadd.f32 %v760, 1712.0476
  %v764 = vmul.f32 %v763, %v741
  %v765 = vadd.f32 %v762, 4362.619
  %v766 = vmul.f32 %v765, %v741
  %v767 = vadd.f32 %v764, 2051.0784
  %v768 = vmul.f32 %v767, %v741
  %v769 = vadd.f32 %v766, 3439.3677
  %v770 = vmul.f32 %v769, %v741
  %v771 = vadd.f32 %v768, 1230.3394
  %v772 = vadd.f32 %v770, 1230.3394
  %v773 = vrcp.pop %v772
  %v774 = vmul.f32 %v771, %v773
  %v775 = vmax.f32 %v717, 4.0
  %v776 = vmul.f32 %v775, %v775
  %v777 = vrcp.pop %v776
  %v778 = vmul.f32 1.0, %v777
  %v779 = vmul.f32 %v778, 0.016315388
  %v780 = vadd.f32 %v779, 0.30532664
  %v781 = vmul.f32 %v780, %v778
  %v782 = vadd.f32 %v778, 2.5685203
  %v783 = vmul.f32 %v782, %v778
  %v784 = vadd.f32 %v781, 0.3603449
  %v785 = vmul.f32 %v784, %v778
  %v786 = vadd.f32 %v783, 1.8729528
  %v787 = vmul.f32 %v786, %v778
  %v788 = vadd.f32 %v785, 0.12578173
  %v789 = vmul.f32 %v788, %v778
  %v790 = vadd.f32 %v787, 0.5279051
  %v791 = vmul.f32 %v790, %v778
  %v792 = vadd.f32 %v789, 0.016083784
  %v793 = vmul.f32 %v792, %v778
  %v794 = vadd.f32 %v791, 0.060518343
  %v795 = vmul.f32 %v794, %v778
  %v796 = vadd.f32 %v793, 0.00065874914
  %v797 = vmul.f32 %v778, %v796
  %v798 = vadd.f32 %v795, 0.002335205
  %v799 = vrcp.pop %v798
  %v800 = vmul.f32 %v797, %v799
  %v801 = vsub.f32 0.5641896, %v800
  %v802 = vrcp.pop %v775
  %v803 = vmul.f32 %v801, %v802
  %vm804 = vcmp.le.f32.partialorder %v717, 0.46875
  %vm805 = vcmp.le.f32.partialorder %v717, 4.0
  %v806 = vsel %vm805, %v774, %v803
  %v807 = vsel %vm804, %v739, %v806
  %v808 = vmul.f32 %v714, 0.3989423
  %vm809 = vcmp.le.f32.partialorder %v615, 0.0
  %v810 = vmul.f32 %v716, 2.0
  %v811 = vsub.f32 %v810, %v807
  %v812 = vsel %vm809, %v807, %v811
  %v813 = vmul.f32 %v812, 1.2533141
  %vm814 = vcmp.ge.f32.partialorder %v615, 0.0
  %v815 = vmul.f32 %v807, 0.5
  %v816 = vmul.f32 %v815, %v714
  %v817 = vsub.f32 1.0, %v816
  %v818 = vsel %vm814, %v817, %v816
  %v819 = vmul.f32 %v609, 0.25
  %v820 = vadd.f32 %v709, %v813
  %v821 = vmul.f32 %v819, %v820
  %v822 = vsub.f32 %v821, 1.0
  %v823 = vmin.f32 %v822, 1e+20
  %v824 = vrcp.pop %v823
  %v825 = vmul.f32 1.0, %v824
  %v826 = vsel %vm16, %v825, 1e+30
  %v827 = vadd.f32 %v610, 3.329043
  %v828 = vmul.f32 %v827, 0.70710677
  %v829 = vmin.f32 %v828, 0.46875
  %v830 = vmul.f32 %v829, %v829
  %v831 = vmul.f32 %v830, 0.18577771
  %v832 = vadd.f32 %v831, 3.1611238
  %v833 = vmul.f32 %v832, %v830
  %v834 = vadd.f32 %v830, 23.601292
  %v835 = vmul.f32 %v834, %v830
  %v836 = vadd.f32 %v833, 113.86415
  %v837 = vmul.f32 %v836, %v830
  %v838 = vadd.f32 %v835, 244.02464
  %v839 = vmul.f32 %v838, %v830
  %v840 = vadd.f32 %v837, 377.48523
  %v841 = vmul.f32 %v840, %v830
  %v842 = vadd.f32 %v839, 1282.6166
  %v843 = vmul.f32 %v842, %v830
  %v844 = vadd.f32 %v841, 3209.3777
  %v845 = vmul.f32 %v829, %v844
  %v846 = vadd.f32 %v843, 2844.2368
  %v847 = vrcp.pop %v846
  %v848 = vmul.f32 %v845, %v847
  %v849 = vmul.f32 %v830, 1.442695
  %v850 = vpow.pop %v849
  %v851 = vsub.f32 1.0, %v848
  %v852 = vmul.f32 %v850, %v851
  %v853 = vmax.f32 %v828, 0.46875
  %v854 = vmin.f32 %v853, 4.0
  %v855 = vmul.f32 %v854, 2.1531154e-08
  %v856 = vadd.f32 %v855, 0.5641885
  %v857 = vmul.f32 %v856, %v854
  %v858 = vadd.f32 %v854, 15.744926
  %v859 = vmul.f32 %v858, %v854
  %v860 = vadd.f32 %v857, 8.88315
  %v861 = vmul.f32 %v860, %v854
  %v862 = vadd.f32 %v859, 117.693954
  %v863 = vmul.f32 %v862, %v854
  %v864 = vadd.f32 %v861, 66.119194
  %v865 = vmul.f32 %v864, %v854
  %v866 = vadd.f32 %v863, 537.1811
  %v867 = vmul.f32 %v866, %v854
  %v868 = vadd.f32 %v865, 298.63513
  %v869 = vmul.f32 %v868, %v854
  %v870 = vadd.f32 %v867, 1621.3895
  %v871 = vmul.f32 %v870, %v854
  %v872 = vadd.f32 %v869, 881.9522
  %v873 = vmul.f32 %v872, %v854
  %v874 = vadd.f32 %v871, 3290.7993
  %v875 = vmul.f32 %v874, %v854
  %v876 = vadd.f32 %v873, 1712.0476
  %v877 = vmul.f32 %v876, %v854
  %v878 = vadd.f32 %v875, 4362.619
  %v879 = vmul.f32 %v878, %v854
  %v880 = vadd.f32 %v877, 2051.0784
  %v881 = vmul.f32 %v880, %v854
  %v882 = vadd.f32 %v879, 3439.3677
  %v883 = vmul.f32 %v882, %v854
  %v884 = vadd.f32 %v881, 1230.3394
  %v885 = vadd.f32 %v883, 1230.3394
  %v886 = vrcp.pop %v885
  %v887 = vmul.f32 %v884, %v886
  %v888 = vmax.f32 %v828, 4.0
  %v889 = vmul.f32 %v888, %v888
  %v890 = vrcp.pop %v889
  %v891 = vmul.f32 1.0, %v890
  %v892 = vmul.f32 %v891, 0.016315388
  %v893 = vadd.f32 %v892, 0.30532664
  %v894 = vmul.f32 %v893, %v891
  %v895 = vadd.f32 %v891, 2.5685203
  %v896 = vmul.f32 %v895, %v891
  %v897 = vadd.f32 %v894, 0.3603449
  %v898 = vmul.f32 %v897, %v891
  %v899 = vadd.f32 %v896, 1.8729528
  %v900 = vmul.f32 %v899, %v891
  %v901 = vadd.f32 %v898, 0.12578173
  %v902 = vmul.f32 %v901, %v891
  %v903 = vadd.f32 %v900, 0.5279051
  %v904 = vmul.f32 %v903, %v891
  %v905 = vadd.f32 %v902, 0.016083784
  %v906 = vmul.f32 %v905, %v891
  %v907 = vadd.f32 %v904, 0.060518343
  %v908 = vmul.f32 %v907, %v891
  %v909 = vadd.f32 %v906, 0.00065874914
  %v910 = vmul.f32 %v891, %v909
  %v911 = vadd.f32 %v908, 0.002335205
  %v912 = vrcp.pop %v911
  %v913 = vmul.f32 %v910, %v912
  %v914 = vsub.f32 0.5641896, %v913
  %v915 = vrcp.pop %v888
  %v916 = vmul.f32 %v914, %v915
  %vm917 = vcmp.le.f32.partialorder %v828, 0.46875
  %vm918 = vcmp.le.f32.partialorder %v828, 4.0
  %v919 = vsel %vm918, %v887, %v916
  %v920 = vsel %vm917, %v852, %v919
  %v921 = vmul.f32 %v920, 1.2533141
  %v922 = vsub.f32 3.329043, %v610
  %v923 = vsub.f32 0.0, %v922
  %v924 = vmul.f32 %v923, 0.70710677
  %v925 = vand.u32 2147483647, %v924
  %v926 = vmin.f32 %v925, 0.46875
  %v927 = vmul.f32 %v926, %v926
  %v928 = vmul.f32 %v927, 0.18577771
  %v929 = vadd.f32 %v928, 3.1611238
  %v930 = vmul.f32 %v929, %v927
  %v931 = vadd.f32 %v927, 23.601292
  %v932 = vmul.f32 %v931, %v927
  %v933 = vadd.f32 %v930, 113.86415
  %v934 = vmul.f32 %v933, %v927
  %v935 = vadd.f32 %v932, 244.02464
  %v936 = vmul.f32 %v935, %v927
  %v937 = vadd.f32 %v934, 377.48523
  %v938 = vmul.f32 %v937, %v927
  %v939 = vadd.f32 %v936, 1282.6166
  %v940 = vmul.f32 %v939, %v927
  %v941 = vadd.f32 %v938, 3209.3777
  %v942 = vmul.f32 %v926, %v941
  %v943 = vadd.f32 %v940, 2844.2368
  %v944 = vrcp.pop %v943
  %v945 = vmul.f32 %v942, %v944
  %v946 = vmul.f32 %v927, 1.442695
  %v947 = vpow.pop %v946
  %v948 = vsub.f32 1.0, %v945
  %v949 = vmul.f32 %v947, %v948
  %v950 = vmax.f32 %v925, 0.46875
  %v951 = vmin.f32 %v950, 4.0
  %v952 = vmul.f32 %v951, 2.1531154e-08
  %v953 = vadd.f32 %v952, 0.5641885
  %v954 = vmul.f32 %v953, %v951
  %v955 = vadd.f32 %v951, 15.744926
  %v956 = vmul.f32 %v955, %v951
  %v957 = vadd.f32 %v954, 8.88315
  %v958 = vmul.f32 %v957, %v951
  %v959 = vadd.f32 %v956, 117.693954
  %v960 = vmul.f32 %v959, %v951
  %v961 = vadd.f32 %v958, 66.119194
  %v962 = vmul.f32 %v961, %v951
  %v963 = vadd.f32 %v960, 537.1811
  %v964 = vmul.f32 %v963, %v951
  %v965 = vadd.f32 %v962, 298.63513
  %v966 = vmul.f32 %v965, %v951
  %v967 = vadd.f32 %v964, 1621.3895
  %v968 = vmul.f32 %v967, %v951
  %v969 = vadd.f32 %v966, 881.9522
  %v970 = vmul.f32 %v969, %v951
  %v971 = vadd.f32 %v968, 3290.7993
  %v972 = vmul.f32 %v971, %v951
  %v973 = vadd.f32 %v970, 1712.0476
  %v974 = vmul.f32 %v973, %v951
  %v975 = vadd.f32 %v972, 4362.619
  %v976 = vmul.f32 %v975, %v951
  %v977 = vadd.f32 %v974, 2051.0784
  %v978 = vmul.f32 %v977, %v951
  %v979 = vadd.f32 %v976, 3439.3677
  %v980 = vmul.f32 %v979, %v951
  %v981 = vadd.f32 %v978, 1230.3394
  %v982 = vadd.f32 %v980, 1230.3394
  %v983 = vrcp.pop %v982
  %v984 = vmul.f32 %v981, %v983
  %v985 = vmax.f32 %v925, 4.0
  %v986 = vmul.f32 %v985, %v985
  %v987 = vrcp.pop %v986
  %v988 = vmul.f32 1.0, %v987
  %v989 = vmul.f32 %v988, 0.016315388
  %v990 = vadd.f32 %v989, 0.30532664
  %v991 = vmul.f32 %v990, %v988
  %v992 = vadd.f32 %v988, 2.5685203
  %v993 = vmul.f32 %v992, %v988
  %v994 = vadd.f32 %v991, 0.3603449
  %v995 = vmul.f32 %v994, %v988
  %v996 = vadd.f32 %v993, 1.8729528
  %v997 = vmul.f32 %v996, %v988
  %v998 = vadd.f32 %v995, 0.12578173
  %v999 = vmul.f32 %v998, %v988
  %v1000 = vadd.f32 %v997, 0.5279051
  %v1001 = vmul.f32 %v1000, %v988
  %v1002 = vadd.f32 %v999, 0.016083784
  %v1003 = vmul.f32 %v1002, %v988
  %v1004 = vadd.f32 %v1001, 0.060518343
  %v1005 = vmul.f32 %v1004, %v988
  %v1006 = vadd.f32 %v1003, 0.00065874914
  %v1007 = vmul.f32 %v988, %v1006
  %v1008 = vadd.f32 %v1005, 0.002335205
  %v1009 = vrcp.pop %v1008
  %v1010 = vmul.f32 %v1007, %v1009
  %v1011 = vsub.f32 0.5641896, %v1010
  %v1012 = vrcp.pop %v985
  %v1013 = vmul.f32 %v1011, %v1012
  %vm1014 = vcmp.le.f32.partialorder %v925, 0.46875
  %vm1015 = vcmp.le.f32.partialorder %v925, 4.0
  %v1016 = vsel %vm1015, %v984, %v1013
  %v1017 = vsel %vm1014, %v949, %v1016
  %vm1018 = vcmp.ge.f32.partialorder %v924, 0.0
  %v1019 = vmul.f32 %v925, %v925
  %v1020 = vmul.f32 %v1019, 1.442695
  %v1021 = vpow.pop %v1020
  %v1022 = vmul.f32 %v1021, 2.0
  %v1023 = vsub.f32 %v1022, %v1017
  %v1024 = vsel %vm1018, %v1017, %v1023
  %v1025 = vmul.f32 %v1024, 1.2533141
  %v1026 = vadd.f32 %v921, %v1025
  %v1027 = vmul.f32 %v819, %v1026
  %v1028 = vsub.f32 %v1027, 1.0
  %v1029 = vmul.f32 %v610, %v1025
  %v1030 = vsub.f32 %v1029, %v1028
  %v1031 = vrcp.pop %v1030
  %v1032 = vmul.f32 1.0, %v1031
  %v1033 = vlog2.pop %v1032
  %v1034 = vmul.f32 %v1033, 0.6931472
  %v1035 = vadd.f32 %v826, %v1032
  %v1036 = vrcp.pop %v1035
  %v1037 = vmul.f32 1.0, %v1036
  %v1038 = vrot.slane %v1037, 4
  %v1039 = vadd.f32 %v1037, %v1038
  %v1040 = vrot.slane %v1039, 2
  %v1041 = vadd.f32 %v1039, %v1040
  %v1042 = vrot.slane %v1041, 1
  %v1043 = vadd.f32 %v1041, %v1042
  %1044 = vadd.xlane.f32.xlu0 %v1043
  %v1045 = vpop.xlane.xlu0 %1044
  %vm1046 = vcmp.le.f32.partialorder %v1045, 0.0
  %v1047 = vmin.f32 %v1032, 1.0
  %v1048 = vsel %vm1046, %v1047, 1.0
  %v1049 = vmul.f32 %v1034, 0.96875
  %v1050 = vmul.f32 %v1049, 1.442695
  %v1051 = vpow.pop %v1050
  %v1052 = vadd.f32 %v826, %v1051
  %v1053 = vand.u32 2147483647, %v1052
  %v1054 = vrcp.pop %v1053
  %vm1055 = vcmp.lt.f32.partialorder %v1052, 0.0
  %v1056 = vsub.f32 0.0, %v1054
  %v1057 = vsel %vm1055, %v1056, %v1054
  %v1058 = vrot.slane %v1057, 4
  %v1059 = vadd.f32 %v1057, %v1058
  %v1060 = vrot.slane %v1059, 2
  %v1061 = vadd.f32 %v1059, %v1060
  %v1062 = vrot.slane %v1061, 1
  %v1063 = vadd.f32 %v1061, %v1062
  %1064 = vadd.xlane.f32.xlu0 %v1063
  %v1065 = vpop.xlane.xlu0 %1064
  %vm1066 = vcmp.gt.f32.partialorder %v1065, 0.0
  %v1067 = vmax.f32 %v1032, %v1051
  %v1068 = vsel %vm1066, %v1067, %v1032
  %vm1069 = vcmp.le.f32.partialorder %v1065, 0.0
  %v1070 = vmin.f32 %v1048, %v1051
  %v1071 = vsel %vm1069, %v1070, %v1048
  %v1072 = vmul.f32 %v1034, 0.9375
  %v1073 = vmul.f32 %v1072, 1.442695
  %v1074 = vpow.pop %v1073
  %v1075 = vadd.f32 %v826, %v1074
  %v1076 = vand.u32 2147483647, %v1075
  %v1077 = vrcp.pop %v1076
  %vm1078 = vcmp.lt.f32.partialorder %v1075, 0.0
  %v1079 = vsub.f32 0.0, %v1077
  %v1080 = vsel %vm1078, %v1079, %v1077
  %v1081 = vrot.slane %v1080, 4
  %v1082 = vadd.f32 %v1080, %v1081
  %v1083 = vrot.slane %v1082, 2
  %v1084 = vadd.f32 %v1082, %v1083
  %v1085 = vrot.slane %v1084, 1
  %v1086 = vadd.f32 %v1084, %v1085
  %1087 = vadd.xlane.f32.xlu0 %v1086
  %v1088 = vpop.xlane.xlu0 %1087
  %vm1089 = vcmp.gt.f32.partialorder %v1088, 0.0
  %v1090 = vmax.f32 %v1068, %v1074
  %v1091 = vsel %vm1089, %v1090, %v1068
  %vm1092 = vcmp.le.f32.partialorder %v1088, 0.0
  %v1093 = vmin.f32 %v1071, %v1074
  %v1094 = vsel %vm1092, %v1093, %v1071
  %v1095 = vmul.f32 %v1034, 0.90625
  %v1096 = vmul.f32 %v1095, 1.442695
  %v1097 = vpow.pop %v1096
  %v1098 = vadd.f32 %v826, %v1097
  %v1099 = vand.u32 2147483647, %v1098
  %v1100 = vrcp.pop %v1099
  %vm1101 = vcmp.lt.f32.partialorder %v1098, 0.0
  %v1102 = vsub.f32 0.0, %v1100
  %v1103 = vsel %vm1101, %v1102, %v1100
  %v1104 = vrot.slane %v1103, 4
  %v1105 = vadd.f32 %v1103, %v1104
  %v1106 = vrot.slane %v1105, 2
  %v1107 = vadd.f32 %v1105, %v1106
  %v1108 = vrot.slane %v1107, 1
  %v1109 = vadd.f32 %v1107, %v1108
  %1110 = vadd.xlane.f32.xlu0 %v1109
  %v1111 = vpop.xlane.xlu0 %1110
  %vm1112 = vcmp.gt.f32.partialorder %v1111, 0.0
  %v1113 = vmax.f32 %v1091, %v1097
  %v1114 = vsel %vm1112, %v1113, %v1091
  %vm1115 = vcmp.le.f32.partialorder %v1111, 0.0
  %v1116 = vmin.f32 %v1094, %v1097
  %v1117 = vsel %vm1115, %v1116, %v1094
  %v1118 = vmul.f32 %v1034, 0.875
  %v1119 = vmul.f32 %v1118, 1.442695
  %v1120 = vpow.pop %v1119
  %v1121 = vadd.f32 %v826, %v1120
  %v1122 = vand.u32 2147483647, %v1121
  %v1123 = vrcp.pop %v1122
  %vm1124 = vcmp.lt.f32.partialorder %v1121, 0.0
  %v1125 = vsub.f32 0.0, %v1123
  %v1126 = vsel %vm1124, %v1125, %v1123
  %v1127 = vrot.slane %v1126, 4
  %v1128 = vadd.f32 %v1126, %v1127
  %v1129 = vrot.slane %v1128, 2
  %v1130 = vadd.f32 %v1128, %v1129
  %v1131 = vrot.slane %v1130, 1
  %v1132 = vadd.f32 %v1130, %v1131
  %1133 = vadd.xlane.f32.xlu0 %v1132
  %v1134 = vpop.xlane.xlu0 %1133
  %vm1135 = vcmp.gt.f32.partialorder %v1134, 0.0
  %v1136 = vmax.f32 %v1114, %v1120
  %v1137 = vsel %vm1135, %v1136, %v1114
  %vm1138 = vcmp.le.f32.partialorder %v1134, 0.0
  %v1139 = vmin.f32 %v1117, %v1120
  %v1140 = vsel %vm1138, %v1139, %v1117
  %v1141 = vmul.f32 %v1034, 0.84375
  %v1142 = vmul.f32 %v1141, 1.442695
  %v1143 = vpow.pop %v1142
  %v1144 = vadd.f32 %v826, %v1143
  %v1145 = vand.u32 2147483647, %v1144
  %v1146 = vrcp.pop %v1145
  %vm1147 = vcmp.lt.f32.partialorder %v1144, 0.0
  %v1148 = vsub.f32 0.0, %v1146
  %v1149 = vsel %vm1147, %v1148, %v1146
  %v1150 = vrot.slane %v1149, 4
  %v1151 = vadd.f32 %v1149, %v1150
  %v1152 = vrot.slane %v1151, 2
  %v1153 = vadd.f32 %v1151, %v1152
  %v1154 = vrot.slane %v1153, 1
  %v1155 = vadd.f32 %v1153, %v1154
  %1156 = vadd.xlane.f32.xlu0 %v1155
  %v1157 = vpop.xlane.xlu0 %1156
  %vm1158 = vcmp.gt.f32.partialorder %v1157, 0.0
  %v1159 = vmax.f32 %v1137, %v1143
  %v1160 = vsel %vm1158, %v1159, %v1137
  %vm1161 = vcmp.le.f32.partialorder %v1157, 0.0
  %v1162 = vmin.f32 %v1140, %v1143
  %v1163 = vsel %vm1161, %v1162, %v1140
  %v1164 = vmul.f32 %v1034, 0.8125
  %v1165 = vmul.f32 %v1164, 1.442695
  %v1166 = vpow.pop %v1165
  %v1167 = vadd.f32 %v826, %v1166
  %v1168 = vand.u32 2147483647, %v1167
  %v1169 = vrcp.pop %v1168
  %vm1170 = vcmp.lt.f32.partialorder %v1167, 0.0
  %v1171 = vsub.f32 0.0, %v1169
  %v1172 = vsel %vm1170, %v1171, %v1169
  %v1173 = vrot.slane %v1172, 4
  %v1174 = vadd.f32 %v1172, %v1173
  %v1175 = vrot.slane %v1174, 2
  %v1176 = vadd.f32 %v1174, %v1175
  %v1177 = vrot.slane %v1176, 1
  %v1178 = vadd.f32 %v1176, %v1177
  %1179 = vadd.xlane.f32.xlu0 %v1178
  %v1180 = vpop.xlane.xlu0 %1179
  %vm1181 = vcmp.gt.f32.partialorder %v1180, 0.0
  %v1182 = vmax.f32 %v1160, %v1166
  %v1183 = vsel %vm1181, %v1182, %v1160
  %vm1184 = vcmp.le.f32.partialorder %v1180, 0.0
  %v1185 = vmin.f32 %v1163, %v1166
  %v1186 = vsel %vm1184, %v1185, %v1163
  %v1187 = vmul.f32 %v1034, 0.78125
  %v1188 = vmul.f32 %v1187, 1.442695
  %v1189 = vpow.pop %v1188
  %v1190 = vadd.f32 %v826, %v1189
  %v1191 = vand.u32 2147483647, %v1190
  %v1192 = vrcp.pop %v1191
  %vm1193 = vcmp.lt.f32.partialorder %v1190, 0.0
  %v1194 = vsub.f32 0.0, %v1192
  %v1195 = vsel %vm1193, %v1194, %v1192
  %v1196 = vrot.slane %v1195, 4
  %v1197 = vadd.f32 %v1195, %v1196
  %v1198 = vrot.slane %v1197, 2
  %v1199 = vadd.f32 %v1197, %v1198
  %v1200 = vrot.slane %v1199, 1
  %v1201 = vadd.f32 %v1199, %v1200
  %1202 = vadd.xlane.f32.xlu0 %v1201
  %v1203 = vpop.xlane.xlu0 %1202
  %vm1204 = vcmp.gt.f32.partialorder %v1203, 0.0
  %v1205 = vmax.f32 %v1183, %v1189
  %v1206 = vsel %vm1204, %v1205, %v1183
  %vm1207 = vcmp.le.f32.partialorder %v1203, 0.0
  %v1208 = vmin.f32 %v1186, %v1189
  %v1209 = vsel %vm1207, %v1208, %v1186
  %v1210 = vmul.f32 %v1034, 0.75
  %v1211 = vmul.f32 %v1210, 1.442695
  %v1212 = vpow.pop %v1211
  %v1213 = vadd.f32 %v826, %v1212
  %v1214 = vand.u32 2147483647, %v1213
  %v1215 = vrcp.pop %v1214
  %vm1216 = vcmp.lt.f32.partialorder %v1213, 0.0
  %v1217 = vsub.f32 0.0, %v1215
  %v1218 = vsel %vm1216, %v1217, %v1215
  %v1219 = vrot.slane %v1218, 4
  %v1220 = vadd.f32 %v1218, %v1219
  %v1221 = vrot.slane %v1220, 2
  %v1222 = vadd.f32 %v1220, %v1221
  %v1223 = vrot.slane %v1222, 1
  %v1224 = vadd.f32 %v1222, %v1223
  %1225 = vadd.xlane.f32.xlu0 %v1224
  %v1226 = vpop.xlane.xlu0 %1225
  %vm1227 = vcmp.gt.f32.partialorder %v1226, 0.0
  %v1228 = vmax.f32 %v1206, %v1212
  %v1229 = vsel %vm1227, %v1228, %v1206
  %vm1230 = vcmp.le.f32.partialorder %v1226, 0.0
  %v1231 = vmin.f32 %v1209, %v1212
  %v1232 = vsel %vm1230, %v1231, %v1209
  %v1233 = vmul.f32 %v1034, 0.71875
  %v1234 = vmul.f32 %v1233, 1.442695
  %v1235 = vpow.pop %v1234
  %v1236 = vadd.f32 %v826, %v1235
  %v1237 = vand.u32 2147483647, %v1236
  %v1238 = vrcp.pop %v1237
  %vm1239 = vcmp.lt.f32.partialorder %v1236, 0.0
  %v1240 = vsub.f32 0.0, %v1238
  %v1241 = vsel %vm1239, %v1240, %v1238
  %v1242 = vrot.slane %v1241, 4
  %v1243 = vadd.f32 %v1241, %v1242
  %v1244 = vrot.slane %v1243, 2
  %v1245 = vadd.f32 %v1243, %v1244
  %v1246 = vrot.slane %v1245, 1
  %v1247 = vadd.f32 %v1245, %v1246
  %1248 = vadd.xlane.f32.xlu0 %v1247
  %v1249 = vpop.xlane.xlu0 %1248
  %vm1250 = vcmp.gt.f32.partialorder %v1249, 0.0
  %v1251 = vmax.f32 %v1229, %v1235
  %v1252 = vsel %vm1250, %v1251, %v1229
  %vm1253 = vcmp.le.f32.partialorder %v1249, 0.0
  %v1254 = vmin.f32 %v1232, %v1235
  %v1255 = vsel %vm1253, %v1254, %v1232
  %v1256 = vmul.f32 %v1034, 0.6875
  %v1257 = vmul.f32 %v1256, 1.442695
  %v1258 = vpow.pop %v1257
  %v1259 = vadd.f32 %v826, %v1258
  %v1260 = vand.u32 2147483647, %v1259
  %v1261 = vrcp.pop %v1260
  %vm1262 = vcmp.lt.f32.partialorder %v1259, 0.0
  %v1263 = vsub.f32 0.0, %v1261
  %v1264 = vsel %vm1262, %v1263, %v1261
  %v1265 = vrot.slane %v1264, 4
  %v1266 = vadd.f32 %v1264, %v1265
  %v1267 = vrot.slane %v1266, 2
  %v1268 = vadd.f32 %v1266, %v1267
  %v1269 = vrot.slane %v1268, 1
  %v1270 = vadd.f32 %v1268, %v1269
  %1271 = vadd.xlane.f32.xlu0 %v1270
  %v1272 = vpop.xlane.xlu0 %1271
  %vm1273 = vcmp.gt.f32.partialorder %v1272, 0.0
  %v1274 = vmax.f32 %v1252, %v1258
  %v1275 = vsel %vm1273, %v1274, %v1252
  %vm1276 = vcmp.le.f32.partialorder %v1272, 0.0
  %v1277 = vmin.f32 %v1255, %v1258
  %v1278 = vsel %vm1276, %v1277, %v1255
  %v1279 = vmul.f32 %v1034, 0.65625
  %v1280 = vmul.f32 %v1279, 1.442695
  %v1281 = vpow.pop %v1280
  %v1282 = vadd.f32 %v826, %v1281
  %v1283 = vand.u32 2147483647, %v1282
  %v1284 = vrcp.pop %v1283
  %vm1285 = vcmp.lt.f32.partialorder %v1282, 0.0
  %v1286 = vsub.f32 0.0, %v1284
  %v1287 = vsel %vm1285, %v1286, %v1284
  %v1288 = vrot.slane %v1287, 4
  %v1289 = vadd.f32 %v1287, %v1288
  %v1290 = vrot.slane %v1289, 2
  %v1291 = vadd.f32 %v1289, %v1290
  %v1292 = vrot.slane %v1291, 1
  %v1293 = vadd.f32 %v1291, %v1292
  %1294 = vadd.xlane.f32.xlu0 %v1293
  %v1295 = vpop.xlane.xlu0 %1294
  %vm1296 = vcmp.gt.f32.partialorder %v1295, 0.0
  %v1297 = vmax.f32 %v1275, %v1281
  %v1298 = vsel %vm1296, %v1297, %v1275
  %vm1299 = vcmp.le.f32.partialorder %v1295, 0.0
  %v1300 = vmin.f32 %v1278, %v1281
  %v1301 = vsel %vm1299, %v1300, %v1278
  %v1302 = vmul.f32 %v1034, 0.625
  %v1303 = vmul.f32 %v1302, 1.442695
  %v1304 = vpow.pop %v1303
  %v1305 = vadd.f32 %v826, %v1304
  %v1306 = vand.u32 2147483647, %v1305
  %v1307 = vrcp.pop %v1306
  %vm1308 = vcmp.lt.f32.partialorder %v1305, 0.0
  %v1309 = vsub.f32 0.0, %v1307
  %v1310 = vsel %vm1308, %v1309, %v1307
  %v1311 = vrot.slane %v1310, 4
  %v1312 = vadd.f32 %v1310, %v1311
  %v1313 = vrot.slane %v1312, 2
  %v1314 = vadd.f32 %v1312, %v1313
  %v1315 = vrot.slane %v1314, 1
  %v1316 = vadd.f32 %v1314, %v1315
  %1317 = vadd.xlane.f32.xlu0 %v1316
  %v1318 = vpop.xlane.xlu0 %1317
  %vm1319 = vcmp.gt.f32.partialorder %v1318, 0.0
  %v1320 = vmax.f32 %v1298, %v1304
  %v1321 = vsel %vm1319, %v1320, %v1298
  %vm1322 = vcmp.le.f32.partialorder %v1318, 0.0
  %v1323 = vmin.f32 %v1301, %v1304
  %v1324 = vsel %vm1322, %v1323, %v1301
  %v1325 = vmul.f32 %v1034, 0.59375
  %v1326 = vmul.f32 %v1325, 1.442695
  %v1327 = vpow.pop %v1326
  %v1328 = vadd.f32 %v826, %v1327
  %v1329 = vand.u32 2147483647, %v1328
  %v1330 = vrcp.pop %v1329
  %vm1331 = vcmp.lt.f32.partialorder %v1328, 0.0
  %v1332 = vsub.f32 0.0, %v1330
  %v1333 = vsel %vm1331, %v1332, %v1330
  %v1334 = vrot.slane %v1333, 4
  %v1335 = vadd.f32 %v1333, %v1334
  %v1336 = vrot.slane %v1335, 2
  %v1337 = vadd.f32 %v1335, %v1336
  %v1338 = vrot.slane %v1337, 1
  %v1339 = vadd.f32 %v1337, %v1338
  %1340 = vadd.xlane.f32.xlu0 %v1339
  %v1341 = vpop.xlane.xlu0 %1340
  %vm1342 = vcmp.gt.f32.partialorder %v1341, 0.0
  %v1343 = vmax.f32 %v1321, %v1327
  %v1344 = vsel %vm1342, %v1343, %v1321
  %vm1345 = vcmp.le.f32.partialorder %v1341, 0.0
  %v1346 = vmin.f32 %v1324, %v1327
  %v1347 = vsel %vm1345, %v1346, %v1324
  %v1348 = vmul.f32 %v1034, 0.5625
  %v1349 = vmul.f32 %v1348, 1.442695
  %v1350 = vpow.pop %v1349
  %v1351 = vadd.f32 %v826, %v1350
  %v1352 = vand.u32 2147483647, %v1351
  %v1353 = vrcp.pop %v1352
  %vm1354 = vcmp.lt.f32.partialorder %v1351, 0.0
  %v1355 = vsub.f32 0.0, %v1353
  %v1356 = vsel %vm1354, %v1355, %v1353
  %v1357 = vrot.slane %v1356, 4
  %v1358 = vadd.f32 %v1356, %v1357
  %v1359 = vrot.slane %v1358, 2
  %v1360 = vadd.f32 %v1358, %v1359
  %v1361 = vrot.slane %v1360, 1
  %v1362 = vadd.f32 %v1360, %v1361
  %1363 = vadd.xlane.f32.xlu0 %v1362
  %v1364 = vpop.xlane.xlu0 %1363
  %vm1365 = vcmp.gt.f32.partialorder %v1364, 0.0
  %v1366 = vmax.f32 %v1344, %v1350
  %v1367 = vsel %vm1365, %v1366, %v1344
  %vm1368 = vcmp.le.f32.partialorder %v1364, 0.0
  %v1369 = vmin.f32 %v1347, %v1350
  %v1370 = vsel %vm1368, %v1369, %v1347
  %v1371 = vmul.f32 %v1034, 0.53125
  %v1372 = vmul.f32 %v1371, 1.442695
  %v1373 = vpow.pop %v1372
  %v1374 = vadd.f32 %v826, %v1373
  %v1375 = vand.u32 2147483647, %v1374
  %v1376 = vrcp.pop %v1375
  %vm1377 = vcmp.lt.f32.partialorder %v1374, 0.0
  %v1378 = vsub.f32 0.0, %v1376
  %v1379 = vsel %vm1377, %v1378, %v1376
  %v1380 = vrot.slane %v1379, 4
  %v1381 = vadd.f32 %v1379, %v1380
  %v1382 = vrot.slane %v1381, 2
  %v1383 = vadd.f32 %v1381, %v1382
  %v1384 = vrot.slane %v1383, 1
  %v1385 = vadd.f32 %v1383, %v1384
  %1386 = vadd.xlane.f32.xlu0 %v1385
  %v1387 = vpop.xlane.xlu0 %1386
  %vm1388 = vcmp.gt.f32.partialorder %v1387, 0.0
  %v1389 = vmax.f32 %v1367, %v1373
  %v1390 = vsel %vm1388, %v1389, %v1367
  %vm1391 = vcmp.le.f32.partialorder %v1387, 0.0
  %v1392 = vmin.f32 %v1370, %v1373
  %v1393 = vsel %vm1391, %v1392, %v1370
  %v1394 = vmul.f32 %v1034, 0.5
  %v1395 = vmul.f32 %v1394, 1.442695
  %v1396 = vpow.pop %v1395
  %v1397 = vadd.f32 %v826, %v1396
  %v1398 = vand.u32 2147483647, %v1397
  %v1399 = vrcp.pop %v1398
  %vm1400 = vcmp.lt.f32.partialorder %v1397, 0.0
  %v1401 = vsub.f32 0.0, %v1399
  %v1402 = vsel %vm1400, %v1401, %v1399
  %v1403 = vrot.slane %v1402, 4
  %v1404 = vadd.f32 %v1402, %v1403
  %v1405 = vrot.slane %v1404, 2
  %v1406 = vadd.f32 %v1404, %v1405
  %v1407 = vrot.slane %v1406, 1
  %v1408 = vadd.f32 %v1406, %v1407
  %1409 = vadd.xlane.f32.xlu0 %v1408
  %v1410 = vpop.xlane.xlu0 %1409
  %vm1411 = vcmp.gt.f32.partialorder %v1410, 0.0
  %v1412 = vmax.f32 %v1390, %v1396
  %v1413 = vsel %vm1411, %v1412, %v1390
  %vm1414 = vcmp.le.f32.partialorder %v1410, 0.0
  %v1415 = vmin.f32 %v1393, %v1396
  %v1416 = vsel %vm1414, %v1415, %v1393
  %v1417 = vmul.f32 %v1034, 0.46875
  %v1418 = vmul.f32 %v1417, 1.442695
  %v1419 = vpow.pop %v1418
  %v1420 = vadd.f32 %v826, %v1419
  %v1421 = vand.u32 2147483647, %v1420
  %v1422 = vrcp.pop %v1421
  %vm1423 = vcmp.lt.f32.partialorder %v1420, 0.0
  %v1424 = vsub.f32 0.0, %v1422
  %v1425 = vsel %vm1423, %v1424, %v1422
  %v1426 = vrot.slane %v1425, 4
  %v1427 = vadd.f32 %v1425, %v1426
  %v1428 = vrot.slane %v1427, 2
  %v1429 = vadd.f32 %v1427, %v1428
  %v1430 = vrot.slane %v1429, 1
  %v1431 = vadd.f32 %v1429, %v1430
  %1432 = vadd.xlane.f32.xlu0 %v1431
  %v1433 = vpop.xlane.xlu0 %1432
  %vm1434 = vcmp.gt.f32.partialorder %v1433, 0.0
  %v1435 = vmax.f32 %v1413, %v1419
  %v1436 = vsel %vm1434, %v1435, %v1413
  %vm1437 = vcmp.le.f32.partialorder %v1433, 0.0
  %v1438 = vmin.f32 %v1416, %v1419
  %v1439 = vsel %vm1437, %v1438, %v1416
  %v1440 = vmul.f32 %v1034, 0.4375
  %v1441 = vmul.f32 %v1440, 1.442695
  %v1442 = vpow.pop %v1441
  %v1443 = vadd.f32 %v826, %v1442
  %v1444 = vand.u32 2147483647, %v1443
  %v1445 = vrcp.pop %v1444
  %vm1446 = vcmp.lt.f32.partialorder %v1443, 0.0
  %v1447 = vsub.f32 0.0, %v1445
  %v1448 = vsel %vm1446, %v1447, %v1445
  %v1449 = vrot.slane %v1448, 4
  %v1450 = vadd.f32 %v1448, %v1449
  %v1451 = vrot.slane %v1450, 2
  %v1452 = vadd.f32 %v1450, %v1451
  %v1453 = vrot.slane %v1452, 1
  %v1454 = vadd.f32 %v1452, %v1453
  %1455 = vadd.xlane.f32.xlu0 %v1454
  %v1456 = vpop.xlane.xlu0 %1455
  %vm1457 = vcmp.gt.f32.partialorder %v1456, 0.0
  %v1458 = vmax.f32 %v1436, %v1442
  %v1459 = vsel %vm1457, %v1458, %v1436
  %vm1460 = vcmp.le.f32.partialorder %v1456, 0.0
  %v1461 = vmin.f32 %v1439, %v1442
  %v1462 = vsel %vm1460, %v1461, %v1439
  %v1463 = vmul.f32 %v1034, 0.40625
  %v1464 = vmul.f32 %v1463, 1.442695
  %v1465 = vpow.pop %v1464
  %v1466 = vadd.f32 %v826, %v1465
  %v1467 = vand.u32 2147483647, %v1466
  %v1468 = vrcp.pop %v1467
  %vm1469 = vcmp.lt.f32.partialorder %v1466, 0.0
  %v1470 = vsub.f32 0.0, %v1468
  %v1471 = vsel %vm1469, %v1470, %v1468
  %v1472 = vrot.slane %v1471, 4
  %v1473 = vadd.f32 %v1471, %v1472
  %v1474 = vrot.slane %v1473, 2
  %v1475 = vadd.f32 %v1473, %v1474
  %v1476 = vrot.slane %v1475, 1
  %v1477 = vadd.f32 %v1475, %v1476
  %1478 = vadd.xlane.f32.xlu0 %v1477
  %v1479 = vpop.xlane.xlu0 %1478
  %vm1480 = vcmp.gt.f32.partialorder %v1479, 0.0
  %v1481 = vmax.f32 %v1459, %v1465
  %v1482 = vsel %vm1480, %v1481, %v1459
  %vm1483 = vcmp.le.f32.partialorder %v1479, 0.0
  %v1484 = vmin.f32 %v1462, %v1465
  %v1485 = vsel %vm1483, %v1484, %v1462
  %v1486 = vmul.f32 %v1034, 0.375
  %v1487 = vmul.f32 %v1486, 1.442695
  %v1488 = vpow.pop %v1487
  %v1489 = vadd.f32 %v826, %v1488
  %v1490 = vand.u32 2147483647, %v1489
  %v1491 = vrcp.pop %v1490
  %vm1492 = vcmp.lt.f32.partialorder %v1489, 0.0
  %v1493 = vsub.f32 0.0, %v1491
  %v1494 = vsel %vm1492, %v1493, %v1491
  %v1495 = vrot.slane %v1494, 4
  %v1496 = vadd.f32 %v1494, %v1495
  %v1497 = vrot.slane %v1496, 2
  %v1498 = vadd.f32 %v1496, %v1497
  %v1499 = vrot.slane %v1498, 1
  %v1500 = vadd.f32 %v1498, %v1499
  %1501 = vadd.xlane.f32.xlu0 %v1500
  %v1502 = vpop.xlane.xlu0 %1501
  %vm1503 = vcmp.gt.f32.partialorder %v1502, 0.0
  %v1504 = vmax.f32 %v1482, %v1488
  %v1505 = vsel %vm1503, %v1504, %v1482
  %vm1506 = vcmp.le.f32.partialorder %v1502, 0.0
  %v1507 = vmin.f32 %v1485, %v1488
  %v1508 = vsel %vm1506, %v1507, %v1485
  %v1509 = vmul.f32 %v1034, 0.34375
  %v1510 = vmul.f32 %v1509, 1.442695
  %v1511 = vpow.pop %v1510
  %v1512 = vadd.f32 %v826, %v1511
  %v1513 = vand.u32 2147483647, %v1512
  %v1514 = vrcp.pop %v1513
  %vm1515 = vcmp.lt.f32.partialorder %v1512, 0.0
  %v1516 = vsub.f32 0.0, %v1514
  %v1517 = vsel %vm1515, %v1516, %v1514
  %v1518 = vrot.slane %v1517, 4
  %v1519 = vadd.f32 %v1517, %v1518
  %v1520 = vrot.slane %v1519, 2
  %v1521 = vadd.f32 %v1519, %v1520
  %v1522 = vrot.slane %v1521, 1
  %v1523 = vadd.f32 %v1521, %v1522
  %1524 = vadd.xlane.f32.xlu0 %v1523
  %v1525 = vpop.xlane.xlu0 %1524
  %vm1526 = vcmp.gt.f32.partialorder %v1525, 0.0
  %v1527 = vmax.f32 %v1505, %v1511
  %v1528 = vsel %vm1526, %v1527, %v1505
  %vm1529 = vcmp.le.f32.partialorder %v1525, 0.0
  %v1530 = vmin.f32 %v1508, %v1511
  %v1531 = vsel %vm1529, %v1530, %v1508
  %v1532 = vmul.f32 %v1034, 0.3125
  %v1533 = vmul.f32 %v1532, 1.442695
  %v1534 = vpow.pop %v1533
  %v1535 = vadd.f32 %v826, %v1534
  %v1536 = vand.u32 2147483647, %v1535
  %v1537 = vrcp.pop %v1536
  %vm1538 = vcmp.lt.f32.partialorder %v1535, 0.0
  %v1539 = vsub.f32 0.0, %v1537
  %v1540 = vsel %vm1538, %v1539, %v1537
  %v1541 = vrot.slane %v1540, 4
  %v1542 = vadd.f32 %v1540, %v1541
  %v1543 = vrot.slane %v1542, 2
  %v1544 = vadd.f32 %v1542, %v1543
  %v1545 = vrot.slane %v1544, 1
  %v1546 = vadd.f32 %v1544, %v1545
  %1547 = vadd.xlane.f32.xlu0 %v1546
  %v1548 = vpop.xlane.xlu0 %1547
  %vm1549 = vcmp.gt.f32.partialorder %v1548, 0.0
  %v1550 = vmax.f32 %v1528, %v1534
  %v1551 = vsel %vm1549, %v1550, %v1528
  %vm1552 = vcmp.le.f32.partialorder %v1548, 0.0
  %v1553 = vmin.f32 %v1531, %v1534
  %v1554 = vsel %vm1552, %v1553, %v1531
  %v1555 = vmul.f32 %v1034, 0.28125
  %v1556 = vmul.f32 %v1555, 1.442695
  %v1557 = vpow.pop %v1556
  %v1558 = vadd.f32 %v826, %v1557
  %v1559 = vand.u32 2147483647, %v1558
  %v1560 = vrcp.pop %v1559
  %vm1561 = vcmp.lt.f32.partialorder %v1558, 0.0
  %v1562 = vsub.f32 0.0, %v1560
  %v1563 = vsel %vm1561, %v1562, %v1560
  %v1564 = vrot.slane %v1563, 4
  %v1565 = vadd.f32 %v1563, %v1564
  %v1566 = vrot.slane %v1565, 2
  %v1567 = vadd.f32 %v1565, %v1566
  %v1568 = vrot.slane %v1567, 1
  %v1569 = vadd.f32 %v1567, %v1568
  %1570 = vadd.xlane.f32.xlu0 %v1569
  %v1571 = vpop.xlane.xlu0 %1570
  %vm1572 = vcmp.gt.f32.partialorder %v1571, 0.0
  %v1573 = vmax.f32 %v1551, %v1557
  %v1574 = vsel %vm1572, %v1573, %v1551
  %vm1575 = vcmp.le.f32.partialorder %v1571, 0.0
  %v1576 = vmin.f32 %v1554, %v1557
  %v1577 = vsel %vm1575, %v1576, %v1554
  %v1578 = vmul.f32 %v1034, 0.25
  %v1579 = vmul.f32 %v1578, 1.442695
  %v1580 = vpow.pop %v1579
  %v1581 = vadd.f32 %v826, %v1580
  %v1582 = vand.u32 2147483647, %v1581
  %v1583 = vrcp.pop %v1582
  %vm1584 = vcmp.lt.f32.partialorder %v1581, 0.0
  %v1585 = vsub.f32 0.0, %v1583
  %v1586 = vsel %vm1584, %v1585, %v1583
  %v1587 = vrot.slane %v1586, 4
  %v1588 = vadd.f32 %v1586, %v1587
  %v1589 = vrot.slane %v1588, 2
  %v1590 = vadd.f32 %v1588, %v1589
  %v1591 = vrot.slane %v1590, 1
  %v1592 = vadd.f32 %v1590, %v1591
  %1593 = vadd.xlane.f32.xlu0 %v1592
  %v1594 = vpop.xlane.xlu0 %1593
  %vm1595 = vcmp.gt.f32.partialorder %v1594, 0.0
  %v1596 = vmax.f32 %v1574, %v1580
  %v1597 = vsel %vm1595, %v1596, %v1574
  %vm1598 = vcmp.le.f32.partialorder %v1594, 0.0
  %v1599 = vmin.f32 %v1577, %v1580
  %v1600 = vsel %vm1598, %v1599, %v1577
  %v1601 = vmul.f32 %v1034, 0.21875
  %v1602 = vmul.f32 %v1601, 1.442695
  %v1603 = vpow.pop %v1602
  %v1604 = vadd.f32 %v826, %v1603
  %v1605 = vand.u32 2147483647, %v1604
  %v1606 = vrcp.pop %v1605
  %vm1607 = vcmp.lt.f32.partialorder %v1604, 0.0
  %v1608 = vsub.f32 0.0, %v1606
  %v1609 = vsel %vm1607, %v1608, %v1606
  %v1610 = vrot.slane %v1609, 4
  %v1611 = vadd.f32 %v1609, %v1610
  %v1612 = vrot.slane %v1611, 2
  %v1613 = vadd.f32 %v1611, %v1612
  %v1614 = vrot.slane %v1613, 1
  %v1615 = vadd.f32 %v1613, %v1614
  %1616 = vadd.xlane.f32.xlu0 %v1615
  %v1617 = vpop.xlane.xlu0 %1616
  %vm1618 = vcmp.gt.f32.partialorder %v1617, 0.0
  %v1619 = vmax.f32 %v1597, %v1603
  %v1620 = vsel %vm1618, %v1619, %v1597
  %vm1621 = vcmp.le.f32.partialorder %v1617, 0.0
  %v1622 = vmin.f32 %v1600, %v1603
  %v1623 = vsel %vm1621, %v1622, %v1600
  %v1624 = vmul.f32 %v1034, 0.1875
  %v1625 = vmul.f32 %v1624, 1.442695
  %v1626 = vpow.pop %v1625
  %v1627 = vadd.f32 %v826, %v1626
  %v1628 = vand.u32 2147483647, %v1627
  %v1629 = vrcp.pop %v1628
  %vm1630 = vcmp.lt.f32.partialorder %v1627, 0.0
  %v1631 = vsub.f32 0.0, %v1629
  %v1632 = vsel %vm1630, %v1631, %v1629
  %v1633 = vrot.slane %v1632, 4
  %v1634 = vadd.f32 %v1632, %v1633
  %v1635 = vrot.slane %v1634, 2
  %v1636 = vadd.f32 %v1634, %v1635
  %v1637 = vrot.slane %v1636, 1
  %v1638 = vadd.f32 %v1636, %v1637
  %1639 = vadd.xlane.f32.xlu0 %v1638
  %v1640 = vpop.xlane.xlu0 %1639
  %vm1641 = vcmp.gt.f32.partialorder %v1640, 0.0
  %v1642 = vmax.f32 %v1620, %v1626
  %v1643 = vsel %vm1641, %v1642, %v1620
  %vm1644 = vcmp.le.f32.partialorder %v1640, 0.0
  %v1645 = vmin.f32 %v1623, %v1626
  %v1646 = vsel %vm1644, %v1645, %v1623
  %v1647 = vmul.f32 %v1034, 0.15625
  %v1648 = vmul.f32 %v1647, 1.442695
  %v1649 = vpow.pop %v1648
  %v1650 = vadd.f32 %v826, %v1649
  %v1651 = vand.u32 2147483647, %v1650
  %v1652 = vrcp.pop %v1651
  %vm1653 = vcmp.lt.f32.partialorder %v1650, 0.0
  %v1654 = vsub.f32 0.0, %v1652
  %v1655 = vsel %vm1653, %v1654, %v1652
  %v1656 = vrot.slane %v1655, 4
  %v1657 = vadd.f32 %v1655, %v1656
  %v1658 = vrot.slane %v1657, 2
  %v1659 = vadd.f32 %v1657, %v1658
  %v1660 = vrot.slane %v1659, 1
  %v1661 = vadd.f32 %v1659, %v1660
  %1662 = vadd.xlane.f32.xlu0 %v1661
  %v1663 = vpop.xlane.xlu0 %1662
  %vm1664 = vcmp.gt.f32.partialorder %v1663, 0.0
  %v1665 = vmax.f32 %v1643, %v1649
  %v1666 = vsel %vm1664, %v1665, %v1643
  %vm1667 = vcmp.le.f32.partialorder %v1663, 0.0
  %v1668 = vmin.f32 %v1646, %v1649
  %v1669 = vsel %vm1667, %v1668, %v1646
  %v1670 = vmul.f32 %v1034, 0.125
  %v1671 = vmul.f32 %v1670, 1.442695
  %v1672 = vpow.pop %v1671
  %v1673 = vadd.f32 %v826, %v1672
  %v1674 = vand.u32 2147483647, %v1673
  %v1675 = vrcp.pop %v1674
  %vm1676 = vcmp.lt.f32.partialorder %v1673, 0.0
  %v1677 = vsub.f32 0.0, %v1675
  %v1678 = vsel %vm1676, %v1677, %v1675
  %v1679 = vrot.slane %v1678, 4
  %v1680 = vadd.f32 %v1678, %v1679
  %v1681 = vrot.slane %v1680, 2
  %v1682 = vadd.f32 %v1680, %v1681
  %v1683 = vrot.slane %v1682, 1
  %v1684 = vadd.f32 %v1682, %v1683
  %1685 = vadd.xlane.f32.xlu0 %v1684
  %v1686 = vpop.xlane.xlu0 %1685
  %vm1687 = vcmp.gt.f32.partialorder %v1686, 0.0
  %v1688 = vmax.f32 %v1666, %v1672
  %v1689 = vsel %vm1687, %v1688, %v1666
  %vm1690 = vcmp.le.f32.partialorder %v1686, 0.0
  %v1691 = vmin.f32 %v1669, %v1672
  %v1692 = vsel %vm1690, %v1691, %v1669
  %v1693 = vmul.f32 %v1034, 0.09375
  %v1694 = vmul.f32 %v1693, 1.442695
  %v1695 = vpow.pop %v1694
  %v1696 = vadd.f32 %v826, %v1695
  %v1697 = vand.u32 2147483647, %v1696
  %v1698 = vrcp.pop %v1697
  %vm1699 = vcmp.lt.f32.partialorder %v1696, 0.0
  %v1700 = vsub.f32 0.0, %v1698
  %v1701 = vsel %vm1699, %v1700, %v1698
  %v1702 = vrot.slane %v1701, 4
  %v1703 = vadd.f32 %v1701, %v1702
  %v1704 = vrot.slane %v1703, 2
  %v1705 = vadd.f32 %v1703, %v1704
  %v1706 = vrot.slane %v1705, 1
  %v1707 = vadd.f32 %v1705, %v1706
  %1708 = vadd.xlane.f32.xlu0 %v1707
  %v1709 = vpop.xlane.xlu0 %1708
  %vm1710 = vcmp.gt.f32.partialorder %v1709, 0.0
  %v1711 = vmax.f32 %v1689, %v1695
  %v1712 = vsel %vm1710, %v1711, %v1689
  %vm1713 = vcmp.le.f32.partialorder %v1709, 0.0
  %v1714 = vmin.f32 %v1692, %v1695
  %v1715 = vsel %vm1713, %v1714, %v1692
  %v1716 = vmul.f32 %v1034, 0.0625
  %v1717 = vmul.f32 %v1716, 1.442695
  %v1718 = vpow.pop %v1717
  %v1719 = vadd.f32 %v826, %v1718
  %v1720 = vand.u32 2147483647, %v1719
  %v1721 = vrcp.pop %v1720
  %vm1722 = vcmp.lt.f32.partialorder %v1719, 0.0
  %v1723 = vsub.f32 0.0, %v1721
  %v1724 = vsel %vm1722, %v1723, %v1721
  %v1725 = vrot.slane %v1724, 4
  %v1726 = vadd.f32 %v1724, %v1725
  %v1727 = vrot.slane %v1726, 2
  %v1728 = vadd.f32 %v1726, %v1727
  %v1729 = vrot.slane %v1728, 1
  %v1730 = vadd.f32 %v1728, %v1729
  %1731 = vadd.xlane.f32.xlu0 %v1730
  %v1732 = vpop.xlane.xlu0 %1731
  %vm1733 = vcmp.gt.f32.partialorder %v1732, 0.0
  %v1734 = vmax.f32 %v1712, %v1718
  %v1735 = vsel %vm1733, %v1734, %v1712
  %vm1736 = vcmp.le.f32.partialorder %v1732, 0.0
  %v1737 = vmin.f32 %v1715, %v1718
  %v1738 = vsel %vm1736, %v1737, %v1715
  %v1739 = vmul.f32 %v1034, 0.03125
  %v1740 = vmul.f32 %v1739, 1.442695
  %v1741 = vpow.pop %v1740
  %v1742 = vadd.f32 %v826, %v1741
  %v1743 = vand.u32 2147483647, %v1742
  %v1744 = vrcp.pop %v1743
  %vm1745 = vcmp.lt.f32.partialorder %v1742, 0.0
  %v1746 = vsub.f32 0.0, %v1744
  %v1747 = vsel %vm1745, %v1746, %v1744
  %v1748 = vrot.slane %v1747, 4
  %v1749 = vadd.f32 %v1747, %v1748
  %v1750 = vrot.slane %v1749, 2
  %v1751 = vadd.f32 %v1749, %v1750
  %v1752 = vrot.slane %v1751, 1
  %v1753 = vadd.f32 %v1751, %v1752
  %1754 = vadd.xlane.f32.xlu0 %v1753
  %v1755 = vpop.xlane.xlu0 %1754
  %vm1756 = vcmp.gt.f32.partialorder %v1755, 0.0
  %v1757 = vmax.f32 %v1735, %v1741
  %v1758 = vsel %vm1756, %v1757, %v1735
  %vm1759 = vcmp.le.f32.partialorder %v1755, 0.0
  %v1760 = vmin.f32 %v1738, %v1741
  %v1761 = vsel %vm1759, %v1760, %v1738
  %v1762 = vadd.f32 %v826, 1.0
  %v1763 = vrcp.pop %v1762
  %v1764 = vmul.f32 1.0, %v1763
  %v1765 = vrot.slane %v1764, 4
  %v1766 = vadd.f32 %v1764, %v1765
  %v1767 = vrot.slane %v1766, 2
  %v1768 = vadd.f32 %v1766, %v1767
  %v1769 = vrot.slane %v1768, 1
  %v1770 = vadd.f32 %v1768, %v1769
  %1771 = vadd.xlane.f32.xlu0 %v1770
  %v1772 = vpop.xlane.xlu0 %1771
  %vm1773 = vcmp.gt.f32.partialorder %v1772, 0.0
  %v1774 = vmax.f32 %v1758, 1.0
  %v1775 = vsel %vm1773, %v1774, %v1758
  %vm1776 = vcmp.le.f32.partialorder %v1772, 0.0
  %v1777 = vmin.f32 %v1761, 1.0
  %v1778 = vsel %vm1776, %v1777, %v1761
  %v1779 = vmul.f32 %v1775, %v1778
  %v1780 = vrsqrt.pop %v1779
  %v1781 = vmul.f32 %v1779, %v1780
  %vm1782 = vcmp.eq.f32.partialorder %v1779, inf
  %v1783 = vsel %vm1782, %v1779, %v1781
  %vm1784 = vcmp.eq.f32.partialorder %v1779, 0.0
  %v1785 = vand.u32 %v1779, 2147483648
  %v1786 = vsel %vm1784, %v1785, %v1783
  %v1787 = vadd.f32 %v826, %v1786
  %v1788 = vand.u32 2147483647, %v1787
  %v1789 = vrcp.pop %v1788
  %vm1790 = vcmp.lt.f32.partialorder %v1787, 0.0
  %v1791 = vsub.f32 0.0, %v1789
  %v1792 = vsel %vm1790, %v1791, %v1789
  %v1793 = vrot.slane %v1792, 4
  %v1794 = vadd.f32 %v1792, %v1793
  %v1795 = vrot.slane %v1794, 2
  %v1796 = vadd.f32 %v1794, %v1795
  %v1797 = vrot.slane %v1796, 1
  %v1798 = vadd.f32 %v1796, %v1797
  %1799 = vadd.xlane.f32.xlu0 %v1798
  %v1800 = vpop.xlane.xlu0 %1799
  %vm1801 = vcmp.gt.f32.partialorder %v1800, 0.0
  %v1802 = vsel %vm1801, %v1786, %v1775
  %vm1803 = vcmp.le.f32.partialorder %v1800, 0.0
  %v1804 = vsel %vm1803, %v1786, %v1778
  %v1805 = vmul.f32 %v1802, %v1804
  %v1806 = vrsqrt.pop %v1805
  %v1807 = vmul.f32 %v1805, %v1806
  %vm1808 = vcmp.eq.f32.partialorder %v1805, inf
  %v1809 = vsel %vm1808, %v1805, %v1807
  %vm1810 = vcmp.eq.f32.partialorder %v1805, 0.0
  %v1811 = vand.u32 %v1805, 2147483648
  %v1812 = vsel %vm1810, %v1811, %v1809
  %v1813 = vadd.f32 %v826, %v1812
  %v1814 = vand.u32 2147483647, %v1813
  %v1815 = vrcp.pop %v1814
  %vm1816 = vcmp.lt.f32.partialorder %v1813, 0.0
  %v1817 = vsub.f32 0.0, %v1815
  %v1818 = vsel %vm1816, %v1817, %v1815
  %v1819 = vrot.slane %v1818, 4
  %v1820 = vadd.f32 %v1818, %v1819
  %v1821 = vrot.slane %v1820, 2
  %v1822 = vadd.f32 %v1820, %v1821
  %v1823 = vrot.slane %v1822, 1
  %v1824 = vadd.f32 %v1822, %v1823
  %1825 = vadd.xlane.f32.xlu0 %v1824
  %v1826 = vpop.xlane.xlu0 %1825
  %vm1827 = vcmp.gt.f32.partialorder %v1826, 0.0
  %v1828 = vsel %vm1827, %v1812, %v1802
  %vm1829 = vcmp.le.f32.partialorder %v1826, 0.0
  %v1830 = vsel %vm1829, %v1812, %v1804
  %v1831 = vmul.f32 %v1828, %v1830
  %v1832 = vrsqrt.pop %v1831
  %v1833 = vmul.f32 %v1831, %v1832
  %vm1834 = vcmp.eq.f32.partialorder %v1831, inf
  %v1835 = vsel %vm1834, %v1831, %v1833
  %vm1836 = vcmp.eq.f32.partialorder %v1831, 0.0
  %v1837 = vand.u32 %v1831, 2147483648
  %v1838 = vsel %vm1836, %v1837, %v1835
  %v1839 = vadd.f32 %v826, %v1838
  %v1840 = vand.u32 2147483647, %v1839
  %v1841 = vrcp.pop %v1840
  %vm1842 = vcmp.lt.f32.partialorder %v1839, 0.0
  %v1843 = vsub.f32 0.0, %v1841
  %v1844 = vsel %vm1842, %v1843, %v1841
  %v1845 = vrot.slane %v1844, 4
  %v1846 = vadd.f32 %v1844, %v1845
  %v1847 = vrot.slane %v1846, 2
  %v1848 = vadd.f32 %v1846, %v1847
  %v1849 = vrot.slane %v1848, 1
  %v1850 = vadd.f32 %v1848, %v1849
  %1851 = vadd.xlane.f32.xlu0 %v1850
  %v1852 = vpop.xlane.xlu0 %1851
  %vm1853 = vcmp.gt.f32.partialorder %v1852, 0.0
  %v1854 = vsel %vm1853, %v1838, %v1828
  %vm1855 = vcmp.le.f32.partialorder %v1852, 0.0
  %v1856 = vsel %vm1855, %v1838, %v1830
  %v1857 = vmul.f32 %v1854, %v1856
  %v1858 = vrsqrt.pop %v1857
  %v1859 = vmul.f32 %v1857, %v1858
  %vm1860 = vcmp.eq.f32.partialorder %v1857, inf
  %v1861 = vsel %vm1860, %v1857, %v1859
  %vm1862 = vcmp.eq.f32.partialorder %v1857, 0.0
  %v1863 = vand.u32 %v1857, 2147483648
  %v1864 = vsel %vm1862, %v1863, %v1861
  %v1865 = vadd.f32 %v826, %v1864
  %v1866 = vand.u32 2147483647, %v1865
  %v1867 = vrcp.pop %v1866
  %vm1868 = vcmp.lt.f32.partialorder %v1865, 0.0
  %v1869 = vsub.f32 0.0, %v1867
  %v1870 = vsel %vm1868, %v1869, %v1867
  %v1871 = vrot.slane %v1870, 4
  %v1872 = vadd.f32 %v1870, %v1871
  %v1873 = vrot.slane %v1872, 2
  %v1874 = vadd.f32 %v1872, %v1873
  %v1875 = vrot.slane %v1874, 1
  %v1876 = vadd.f32 %v1874, %v1875
  %1877 = vadd.xlane.f32.xlu0 %v1876
  %v1878 = vpop.xlane.xlu0 %1877
  %vm1879 = vcmp.gt.f32.partialorder %v1878, 0.0
  %v1880 = vsel %vm1879, %v1864, %v1854
  %vm1881 = vcmp.le.f32.partialorder %v1878, 0.0
  %v1882 = vsel %vm1881, %v1864, %v1856
  %v1883 = vmul.f32 %v1880, %v1882
  %v1884 = vrsqrt.pop %v1883
  %v1885 = vmul.f32 %v1883, %v1884
  %vm1886 = vcmp.eq.f32.partialorder %v1883, inf
  %v1887 = vsel %vm1886, %v1883, %v1885
  %vm1888 = vcmp.eq.f32.partialorder %v1883, 0.0
  %v1889 = vand.u32 %v1883, 2147483648
  %v1890 = vsel %vm1888, %v1889, %v1887
  %v1891 = vadd.f32 %v826, %v1890
  %v1892 = vand.u32 2147483647, %v1891
  %v1893 = vrcp.pop %v1892
  %vm1894 = vcmp.lt.f32.partialorder %v1891, 0.0
  %v1895 = vsub.f32 0.0, %v1893
  %v1896 = vsel %vm1894, %v1895, %v1893
  %v1897 = vrot.slane %v1896, 4
  %v1898 = vadd.f32 %v1896, %v1897
  %v1899 = vrot.slane %v1898, 2
  %v1900 = vadd.f32 %v1898, %v1899
  %v1901 = vrot.slane %v1900, 1
  %v1902 = vadd.f32 %v1900, %v1901
  %1903 = vadd.xlane.f32.xlu0 %v1902
  %v1904 = vpop.xlane.xlu0 %1903
  %vm1905 = vcmp.gt.f32.partialorder %v1904, 0.0
  %v1906 = vsel %vm1905, %v1890, %v1880
  %vm1907 = vcmp.le.f32.partialorder %v1904, 0.0
  %v1908 = vsel %vm1907, %v1890, %v1882
  %v1909 = vmul.f32 %v1906, %v1908
  %v1910 = vrsqrt.pop %v1909
  %v1911 = vmul.f32 %v1909, %v1910
  %vm1912 = vcmp.eq.f32.partialorder %v1909, inf
  %v1913 = vsel %vm1912, %v1909, %v1911
  %vm1914 = vcmp.eq.f32.partialorder %v1909, 0.0
  %v1915 = vand.u32 %v1909, 2147483648
  %v1916 = vsel %vm1914, %v1915, %v1913
  %v1917 = vadd.f32 %v826, %v1916
  %v1918 = vand.u32 2147483647, %v1917
  %v1919 = vrcp.pop %v1918
  %vm1920 = vcmp.lt.f32.partialorder %v1917, 0.0
  %v1921 = vsub.f32 0.0, %v1919
  %v1922 = vsel %vm1920, %v1921, %v1919
  %v1923 = vrot.slane %v1922, 4
  %v1924 = vadd.f32 %v1922, %v1923
  %v1925 = vrot.slane %v1924, 2
  %v1926 = vadd.f32 %v1924, %v1925
  %v1927 = vrot.slane %v1926, 1
  %v1928 = vadd.f32 %v1926, %v1927
  %1929 = vadd.xlane.f32.xlu0 %v1928
  %v1930 = vpop.xlane.xlu0 %1929
  %vm1931 = vcmp.gt.f32.partialorder %v1930, 0.0
  %v1932 = vsel %vm1931, %v1916, %v1906
  %vm1933 = vcmp.le.f32.partialorder %v1930, 0.0
  %v1934 = vsel %vm1933, %v1916, %v1908
  %v1935 = vmul.f32 %v1932, %v1934
  %v1936 = vrsqrt.pop %v1935
  %v1937 = vmul.f32 %v1935, %v1936
  %vm1938 = vcmp.eq.f32.partialorder %v1935, inf
  %v1939 = vsel %vm1938, %v1935, %v1937
  %vm1940 = vcmp.eq.f32.partialorder %v1935, 0.0
  %v1941 = vand.u32 %v1935, 2147483648
  %v1942 = vsel %vm1940, %v1941, %v1939
  %v1943 = vadd.f32 %v826, %v1942
  %v1944 = vand.u32 2147483647, %v1943
  %v1945 = vrcp.pop %v1944
  %vm1946 = vcmp.lt.f32.partialorder %v1943, 0.0
  %v1947 = vsub.f32 0.0, %v1945
  %v1948 = vsel %vm1946, %v1947, %v1945
  %v1949 = vrot.slane %v1948, 4
  %v1950 = vadd.f32 %v1948, %v1949
  %v1951 = vrot.slane %v1950, 2
  %v1952 = vadd.f32 %v1950, %v1951
  %v1953 = vrot.slane %v1952, 1
  %v1954 = vadd.f32 %v1952, %v1953
  %1955 = vadd.xlane.f32.xlu0 %v1954
  %v1956 = vpop.xlane.xlu0 %1955
  %vm1957 = vcmp.gt.f32.partialorder %v1956, 0.0
  %v1958 = vsel %vm1957, %v1942, %v1932
  %vm1959 = vcmp.le.f32.partialorder %v1956, 0.0
  %v1960 = vsel %vm1959, %v1942, %v1934
  %v1961 = vmul.f32 %v1958, %v1960
  %v1962 = vrsqrt.pop %v1961
  %v1963 = vmul.f32 %v1961, %v1962
  %vm1964 = vcmp.eq.f32.partialorder %v1961, inf
  %v1965 = vsel %vm1964, %v1961, %v1963
  %vm1966 = vcmp.eq.f32.partialorder %v1961, 0.0
  %v1967 = vand.u32 %v1961, 2147483648
  %v1968 = vsel %vm1966, %v1967, %v1965
  %v1969 = vadd.f32 %v826, %v1968
  %v1970 = vand.u32 2147483647, %v1969
  %v1971 = vrcp.pop %v1970
  %vm1972 = vcmp.lt.f32.partialorder %v1969, 0.0
  %v1973 = vsub.f32 0.0, %v1971
  %v1974 = vsel %vm1972, %v1973, %v1971
  %v1975 = vrot.slane %v1974, 4
  %v1976 = vadd.f32 %v1974, %v1975
  %v1977 = vrot.slane %v1976, 2
  %v1978 = vadd.f32 %v1976, %v1977
  %v1979 = vrot.slane %v1978, 1
  %v1980 = vadd.f32 %v1978, %v1979
  %1981 = vadd.xlane.f32.xlu0 %v1980
  %v1982 = vpop.xlane.xlu0 %1981
  %vm1983 = vcmp.gt.f32.partialorder %v1982, 0.0
  %v1984 = vsel %vm1983, %v1968, %v1958
  %vm1985 = vcmp.le.f32.partialorder %v1982, 0.0
  %v1986 = vsel %vm1985, %v1968, %v1960
  %v1987 = vmul.f32 %v1984, %v1986
  %v1988 = vrsqrt.pop %v1987
  %v1989 = vmul.f32 %v1987, %v1988
  %vm1990 = vcmp.eq.f32.partialorder %v1987, inf
  %v1991 = vsel %vm1990, %v1987, %v1989
  %vm1992 = vcmp.eq.f32.partialorder %v1987, 0.0
  %v1993 = vand.u32 %v1987, 2147483648
  %v1994 = vsel %vm1992, %v1993, %v1991
  %v1995 = vadd.f32 %v826, %v1994
  %v1996 = vand.u32 2147483647, %v1995
  %v1997 = vrcp.pop %v1996
  %vm1998 = vcmp.lt.f32.partialorder %v1995, 0.0
  %v1999 = vsub.f32 0.0, %v1997
  %v2000 = vsel %vm1998, %v1999, %v1997
  %v2001 = vrot.slane %v2000, 4
  %v2002 = vadd.f32 %v2000, %v2001
  %v2003 = vrot.slane %v2002, 2
  %v2004 = vadd.f32 %v2002, %v2003
  %v2005 = vrot.slane %v2004, 1
  %v2006 = vadd.f32 %v2004, %v2005
  %2007 = vadd.xlane.f32.xlu0 %v2006
  %v2008 = vpop.xlane.xlu0 %2007
  %vm2009 = vcmp.gt.f32.partialorder %v2008, 0.0
  %v2010 = vsel %vm2009, %v1994, %v1984
  %vm2011 = vcmp.le.f32.partialorder %v2008, 0.0
  %v2012 = vsel %vm2011, %v1994, %v1986
  %v2013 = vmul.f32 %v2010, %v2012
  %v2014 = vrsqrt.pop %v2013
  %v2015 = vmul.f32 %v2013, %v2014
  %vm2016 = vcmp.eq.f32.partialorder %v2013, inf
  %v2017 = vsel %vm2016, %v2013, %v2015
  %vm2018 = vcmp.eq.f32.partialorder %v2013, 0.0
  %v2019 = vand.u32 %v2013, 2147483648
  %v2020 = vsel %vm2018, %v2019, %v2017
  %v2021 = vadd.f32 %v826, %v2020
  %v2022 = vand.u32 2147483647, %v2021
  %v2023 = vrcp.pop %v2022
  %vm2024 = vcmp.lt.f32.partialorder %v2021, 0.0
  %v2025 = vsub.f32 0.0, %v2023
  %v2026 = vsel %vm2024, %v2025, %v2023
  %v2027 = vrot.slane %v2026, 4
  %v2028 = vadd.f32 %v2026, %v2027
  %v2029 = vrot.slane %v2028, 2
  %v2030 = vadd.f32 %v2028, %v2029
  %v2031 = vrot.slane %v2030, 1
  %v2032 = vadd.f32 %v2030, %v2031
  %2033 = vadd.xlane.f32.xlu0 %v2032
  %v2034 = vpop.xlane.xlu0 %2033
  %vm2035 = vcmp.gt.f32.partialorder %v2034, 0.0
  %v2036 = vsel %vm2035, %v2020, %v2010
  %vm2037 = vcmp.le.f32.partialorder %v2034, 0.0
  %v2038 = vsel %vm2037, %v2020, %v2012
  %v2039 = vmul.f32 %v2036, %v2038
  %v2040 = vrsqrt.pop %v2039
  %v2041 = vmul.f32 %v2039, %v2040
  %vm2042 = vcmp.eq.f32.partialorder %v2039, inf
  %v2043 = vsel %vm2042, %v2039, %v2041
  %vm2044 = vcmp.eq.f32.partialorder %v2039, 0.0
  %v2045 = vand.u32 %v2039, 2147483648
  %v2046 = vsel %vm2044, %v2045, %v2043
  %v2047 = vadd.f32 %v826, %v2046
  %v2048 = vrcp.pop %v2047
  %v2049 = vmul.f32 1.0, %v2048
  %v2050 = vrot.slane %v2049, 4
  %v2051 = vadd.f32 %v2049, %v2050
  %v2052 = vrot.slane %v2051, 2
  %v2053 = vadd.f32 %v2051, %v2052
  %v2054 = vrot.slane %v2053, 1
  %v2055 = vadd.f32 %v2053, %v2054
  %2056 = vadd.xlane.f32.xlu0 %v2055
  %v2057 = vpop.xlane.xlu0 %2056
  %vm2058 = vcmp.gt.f32.partialorder %v2057, 0.0
  %v2059 = vsel %vm2058, %v2046, %v2036
  %vm2060 = vcmp.le.f32.partialorder %v2057, 0.0
  %v2061 = vsel %vm2060, %v2046, %v2038
  %v2062 = vmul.f32 %v2059, %v2061
  %v2063 = vrsqrt.pop %v2062
  %v2064 = vmul.f32 %v2062, %v2063
  %vm2065 = vcmp.eq.f32.partialorder %v2062, inf
  %v2066 = vsel %vm2065, %v2062, %v2064
  %vm2067 = vcmp.eq.f32.partialorder %v2062, 0.0
  %v2068 = vand.u32 %v2062, 2147483648
  %v2069 = vsel %vm2067, %v2068, %v2066
  %v2070 = vadd.f32 %v826, %v2069
  %v2071 = vrcp.pop %v2070
  %v2072 = vmul.f32 1.0, %v2071
  %v2073 = vrot.slane %v2072, 4
  %v2074 = vadd.f32 %v2072, %v2073
  %v2075 = vrot.slane %v2074, 2
  %v2076 = vadd.f32 %v2074, %v2075
  %v2077 = vrot.slane %v2076, 1
  %v2078 = vadd.f32 %v2076, %v2077
  %2079 = vadd.xlane.f32.xlu0 %v2078
  %v2080 = vpop.xlane.xlu0 %2079
  %vm2081 = vcmp.gt.f32.partialorder %v2080, 0.0
  %v2082 = vsel %vm2081, %v2069, %v2059
  %vm2083 = vcmp.le.f32.partialorder %v2080, 0.0
  %v2084 = vsel %vm2083, %v2069, %v2061
  %v2085 = vmul.f32 %v2082, %v2084
  %v2086 = vrsqrt.pop %v2085
  %v2087 = vmul.f32 %v2085, %v2086
  %vm2088 = vcmp.eq.f32.partialorder %v2085, inf
  %v2089 = vsel %vm2088, %v2085, %v2087
  %vm2090 = vcmp.eq.f32.partialorder %v2085, 0.0
  %v2091 = vand.u32 %v2085, 2147483648
  %v2092 = vsel %vm2090, %v2091, %v2089
  %v2093 = vadd.f32 %v826, %v2092
  %v2094 = vrcp.pop %v2093
  %v2095 = vmul.f32 1.0, %v2094
  %v2096 = vrot.slane %v2095, 4
  %v2097 = vadd.f32 %v2095, %v2096
  %v2098 = vrot.slane %v2097, 2
  %v2099 = vadd.f32 %v2097, %v2098
  %v2100 = vrot.slane %v2099, 1
  %v2101 = vadd.f32 %v2099, %v2100
  %2102 = vadd.xlane.f32.xlu0 %v2101
  %v2103 = vpop.xlane.xlu0 %2102
  %vm2104 = vcmp.gt.f32.partialorder %v2103, 0.0
  %v2105 = vsel %vm2104, %v2092, %v2082
  %vm2106 = vcmp.le.f32.partialorder %v2103, 0.0
  %v2107 = vsel %vm2106, %v2092, %v2084
  %v2108 = vmul.f32 %v2105, %v2107
  %v2109 = vrsqrt.pop %v2108
  %v2110 = vmul.f32 %v2108, %v2109
  %vm2111 = vcmp.eq.f32.partialorder %v2108, inf
  %v2112 = vsel %vm2111, %v2108, %v2110
  %vm2113 = vcmp.eq.f32.partialorder %v2108, 0.0
  %v2114 = vand.u32 %v2108, 2147483648
  %v2115 = vsel %vm2113, %v2114, %v2112
  %v2116 = vadd.f32 %v826, %v2115
  %v2117 = vrcp.pop %v2116
  %v2118 = vmul.f32 1.0, %v2117
  %v2119 = vrot.slane %v2118, 4
  %v2120 = vadd.f32 %v2118, %v2119
  %v2121 = vrot.slane %v2120, 2
  %v2122 = vadd.f32 %v2120, %v2121
  %v2123 = vrot.slane %v2122, 1
  %v2124 = vadd.f32 %v2122, %v2123
  %2125 = vadd.xlane.f32.xlu0 %v2124
  %v2126 = vpop.xlane.xlu0 %2125
  %vm2127 = vcmp.gt.f32.partialorder %v2126, 0.0
  %v2128 = vsel %vm2127, %v2115, %v2105
  %vm2129 = vcmp.le.f32.partialorder %v2126, 0.0
  %v2130 = vsel %vm2129, %v2115, %v2107
  %v2131 = vmul.f32 %v2128, %v2130
  %v2132 = vrsqrt.pop %v2131
  %v2133 = vmul.f32 %v2131, %v2132
  %vm2134 = vcmp.eq.f32.partialorder %v2131, inf
  %v2135 = vsel %vm2134, %v2131, %v2133
  %vm2136 = vcmp.eq.f32.partialorder %v2131, 0.0
  %v2137 = vand.u32 %v2131, 2147483648
  %v2138 = vsel %vm2136, %v2137, %v2135
  %vm2139 = vcmp.ge.f32.partialorder %v1772, 0.0
  %v2140 = vsel %vm1046, %v1032, %v2138
  %v2141 = vsel %vm2139, 1.0, %v2140
  %vm2142 = vcmp.gt.f32.partialorder %v8, 0.0
  %vm2143 = vcmp.lt.f32.partialorder %v8, 0.0
  %v2144 = vsel %vm2143, -1.0, 0.0
  %v2145 = vsel %vm2142, 1.0, %v2144
  %v2146 = vrcp.pop %v2141
  %v2147 = vmul.f32 1.0, %v2146
  %v2148 = vsub.f32 %v2147, 1.0
  %v2149 = vmul.f32 %v808, %v2148
  %v2150 = vrcp.pop %v610
  %v2151 = vmul.f32 %v2149, %v2150
  %v2152 = vmul.f32 %v808, %v709
  %v2153 = vadd.f32 %v2152, %v818
  %v2154 = vmul.f32 %v2153, 0.5
  %v2155 = vadd.f32 %v2151, %v2154
  %vm2156 = vcmp.gt.f32.partialorder %v615, 25.0
  %v2157 = vsel %vm2156, 0.5, %v2155
  %v2158 = vmin.f32 %v2157, 1.0
  %v2159 = vmax.f32 %v2158, 1e-30
  %v2160 = vmin.f32 %v2159, 0.999999
  %v2161 = vsub.f32 %v2160, 0.5
  %v2162 = vmul.f32 %v2161, %v2161
  %v2163 = vmul.f32 %v2162, -39.69683
  %v2164 = vadd.f32 %v2163, 220.9461
  %v2165 = vmul.f32 %v2164, %v2162
  %v2166 = vadd.f32 %v2165, -275.9285
  %v2167 = vmul.f32 %v2166, %v2162
  %v2168 = vadd.f32 %v2167, 138.35776
  %v2169 = vmul.f32 %v2168, %v2162
  %v2170 = vadd.f32 %v2169, -30.664799
  %v2171 = vmul.f32 %v2170, %v2162
  %v2172 = vadd.f32 %v2171, 2.5066283
  %v2173 = vmul.f32 %v2172, %v2161
  %v2174 = vmul.f32 %v2162, -54.476097
  %v2175 = vadd.f32 %v2174, 161.58583
  %v2176 = vmul.f32 %v2175, %v2162
  %v2177 = vadd.f32 %v2176, -155.69897
  %v2178 = vmul.f32 %v2177, %v2162
  %v2179 = vadd.f32 %v2178, 66.801315
  %v2180 = vmul.f32 %v2179, %v2162
  %v2181 = vadd.f32 %v2180, -13.280682
  %v2182 = vmul.f32 %v2181, %v2162
  %v2183 = vadd.f32 %v2182, 1.0
  %v2184 = vrcp.pop %v2183
  %v2185 = vmul.f32 %v2173, %v2184
  %v2186 = vsub.f32 1.0, %v2160
  %v2187 = vmin.f32 %v2160, %v2186
  %v2188 = vlog2.pop %v2187
  %v2189 = vmul.f32 %v2188, 0.6931472
  %v2190 = vmul.f32 %v2189, -2.0
  %v2191 = vrsqrt.pop %v2190
  %v2192 = vmul.f32 %v2190, %v2191
  %vm2193 = vcmp.eq.f32.partialorder %v2190, inf
  %v2194 = vsel %vm2193, %v2190, %v2192
  %vm2195 = vcmp.eq.f32.partialorder %v2190, 0.0
  %v2196 = vand.u32 %v2190, 2147483648
  %v2197 = vsel %vm2195, %v2196, %v2194
  %v2198 = vmul.f32 %v2197, -0.007784894
  %v2199 = vadd.f32 %v2198, -0.32239646
  %v2200 = vmul.f32 %v2199, %v2197
  %v2201 = vadd.f32 %v2200, -2.4007583
  %v2202 = vmul.f32 %v2201, %v2197
  %v2203 = vadd.f32 %v2202, -2.5497324
  %v2204 = vmul.f32 %v2203, %v2197
  %v2205 = vadd.f32 %v2204, 4.3746643
  %v2206 = vmul.f32 %v2205, %v2197
  %v2207 = vadd.f32 %v2206, 2.938164
  %v2208 = vmul.f32 %v2197, 0.007784696
  %v2209 = vadd.f32 %v2208, 0.32246712
  %v2210 = vmul.f32 %v2209, %v2197
  %v2211 = vadd.f32 %v2210, 2.4451342
  %v2212 = vmul.f32 %v2211, %v2197
  %v2213 = vadd.f32 %v2212, 3.7544086
  %v2214 = vmul.f32 %v2213, %v2197
  %v2215 = vadd.f32 %v2214, 1.0
  %v2216 = vrcp.pop %v2215
  %v2217 = vmul.f32 %v2207, %v2216
  %vm2218 = vcmp.gt.f32.partialorder %v2160, 0.5
  %v2219 = vsub.f32 0.0, %v2217
  %v2220 = vsel %vm2218, %v2219, %v2217
  %vm2221 = vcmp.lt.f32.partialorder %v2187, 0.02425
  %v2222 = vsel %vm2221, %v2220, %v2185
  %vm2223 = vcmp.ge.f32.partialorder %v2158, 1.0
  %vm2224 = vcmp.le.f32.partialorder %v2158, 0.0
  %v2225 = vsel %vm2224, -1e+30, %v2222
  %v2226 = vsel %vm2223, 1e+30, %v2225
  %v2227 = vsub.f32 %v615, %v2226
  %v2228 = vmax.f32 %v2227, 0.0
  %v2229 = vmul.f32 %v2145, %v2228
  %v2230 = vmul.f32 %v2229, %v609
  %2231 = vst [vmem:[%s1] sm:$0xff] %v2230
  // Predicated region
  $region6: #{ebayesthresh_tpu.1} parent=0 // pred_check
    _
  $region7: #{ebayesthresh_tpu.1} parent=0 // pred_check_branch
    %2233 = sbr.rel (0) target = $region9
  $region8: #{ebayesthresh_tpu.1} parent=0 // pred_region
    _
  $region9: #{ebayesthresh_tpu.1} parent=0 // pred_fallthru
    _
  // Predicated region
  $region10: #{ebayesthresh_tpu.1} parent=0 // pred_check
    _
  $region11: #{ebayesthresh_tpu.1} parent=0 // pred_check_branch
    %2235 = sbr.rel (0) target = $region13
  $region12: #{ebayesthresh_tpu.1} parent=0 // pred_region
    _
  $region13: #{ebayesthresh_tpu.1} parent=0 // pred_fallthru
    _

</llo_original>
